<compile_context>
chip_gen: v5e
topology: v5e:2x2
jax: 0.10.0
libtpu: 0.0.40
codegen_flags: <defaults>
</compile_context>

<pallas_src>
import functools

import jax
import jax.numpy as jnp
from jax.experimental import pallas as pl
from jax.experimental.pallas import tpu as pltpu

_EPS = 1e-5
_LANE = 128
_VMEM_LIMIT = 32 * 1024 * 1024   # explicit scoped-VMEM budget (fits v5e/v6e/v7x)


def _round_up(x, m):
    return (x + m - 1) // m * m


# ---------------------------------------------------------------------------
# Pass A: training-mode BatchNorm statistics (cross-batch reduction).
#   Grid over N ("arbitrary" = sequential reduction axis). Per-channel sum and
#   sum-of-squares accumulate in VMEM scratch; the last step folds gamma/beta and
#   the stats into per-channel (scale, shift) so the apply pass is one FMA/elem.
#   Spatial zero-padding contributes 0 to both sums, so the halo-padded input is
#   used directly with the true element count.
# ---------------------------------------------------------------------------
def _bn_stats_kernel(x_ref, g_ref, b_ref, scale_ref, shift_ref, sum_ref, sq_ref,
                     *, count):
    n = pl.program_id(0)

    @pl.when(n == 0)
    def _init():
        sum_ref[...] = jnp.zeros_like(sum_ref)
        sq_ref[...] = jnp.zeros_like(sq_ref)

    x = x_ref[...].astype(jnp.float32)                                  # (1,Hp,Wp,C)
    sum_ref[...] += jnp.sum(x, axis=(0, 1, 2), keepdims=True).reshape(1, -1)
    sq_ref[...] += jnp.sum(x * x, axis=(0, 1, 2), keepdims=True).reshape(1, -1)

    @pl.when(n == pl.num_programs(0) - 1)
    def _finalize():
        inv_n = jnp.float32(1.0 / count)
        mean = sum_ref[...] * inv_n
        var = sq_ref[...] * inv_n - mean * mean
        scale = g_ref[...] * jax.lax.rsqrt(var + _EPS)
        scale_ref[...] = scale
        shift_ref[...] = b_ref[...] - mean * scale


def _bn_scale_shift(xp, gamma, beta, *, count):
    n, hp, wp, c = xp.shape
    kernel = functools.partial(_bn_stats_kernel, count=count)
    return pl.pallas_call(
        kernel,
        grid=(n,),
        in_specs=[
            pl.BlockSpec((1, hp, wp, c), lambda i: (i, 0, 0, 0)),
            pl.BlockSpec((1, c), lambda i: (0, 0)),
            pl.BlockSpec((1, c), lambda i: (0, 0)),
        ],
        out_specs=(pl.BlockSpec((1, c), lambda i: (0, 0)),
                   pl.BlockSpec((1, c), lambda i: (0, 0))),
        out_shape=(jax.ShapeDtypeStruct((1, c), jnp.float32),
                   jax.ShapeDtypeStruct((1, c), jnp.float32)),
        scratch_shapes=[pltpu.VMEM((1, c), jnp.float32),
                        pltpu.VMEM((1, c), jnp.float32)],
        compiler_params=pltpu.CompilerParams(
            dimension_semantics=("arbitrary",),            # batch reduction axis
            vmem_limit_bytes=_VMEM_LIMIT),
        cost_estimate=pl.CostEstimate(
            flops=3 * n * hp * wp * c,
            transcendentals=c,
            bytes_accessed=n * hp * wp * c * 4 + 6 * c * 4),
    )(xp, gamma, beta)


# ---------------------------------------------------------------------------
# Pass B: fused BN-apply + ReLU + 3x3 conv (im2col, single fat MXU matmul),
#   with optional 1x1-conv / identity shortcut emission or residual add.
#   Grid over N ("parallel"): per-image tiles are pipelined and megacore-splittable.
# ---------------------------------------------------------------------------
def _bn_relu_conv3x3_kernel(xp_ref, scale_ref, shift_ref, w_ref, *refs,
                            shortcut, add_residual):
    # xp_ref:      (1, H+2, W+2, Ci) activation with a 1-px spatial halo (lane-dense Ci)
    # scale/shift: (1, Ci) folded BN affine from the stats pass
    # w_ref:       (9*Ci, Co) bf16, 3x3 weights with all 9 taps folded into K (im2col)
    # refs:        [wsc (Ci,Co)] if shortcut=="conv", [res (1,H,W,Co)] if add_residual,
    #              then out (1,H,W,Co) and, if shortcut is not None, sc (1,H,W,Co)
    rest = list(refs)
    wsc_ref = rest.pop(0) if shortcut == "conv" else None
    res_ref = rest.pop(0) if add_residual else None
    out_ref = rest.pop(0)
    sc_ref = rest.pop(0) if shortcut is not None else None

    hp, wp, ci = xp_ref.shape[1], xp_ref.shape[2], xp_ref.shape[3]
    h, w = hp - 2, wp - 2
    co = out_ref.shape[-1]

    # BN as a single FMA + ReLU, fp32 on the VPU.
    y = jnp.maximum(xp_ref[0].astype(jnp.float32) * scale_ref[...] + shift_ref[...], 0.0)

    # Re-zero the 1-px halo (BN's shift makes the zero padding nonzero otherwise).
    hh = jax.lax.broadcasted_iota(jnp.int32, y.shape, 0)
    ww = jax.lax.broadcasted_iota(jnp.int32, y.shape, 1)
    inside = (hh >= 1) & (hh <= h) & (ww >= 1) & (ww <= w)
    y = jnp.where(inside, y, 0.0)

    # im2col: fold the 9 taps into the contraction dim -> one fat bf16 MXU matmul.
    taps = [y[kh:kh + h, kw:kw + w, :] for kh in range(3) for kw in range(3)]
    patch = jnp.concatenate(taps, axis=-1).astype(jnp.bfloat16).reshape(h * w, 9 * ci)
    acc = jnp.dot(patch, w_ref[...], preferred_element_type=jnp.float32)     # (h*w, co)

    o = acc.reshape(h, w, co)
    if add_residual:
        o = o + res_ref[0].astype(jnp.float32)
    out_ref[0] = o.astype(out_ref.dtype)

    if shortcut == "conv":
        yin = y[1:h + 1, 1:w + 1, :].astype(jnp.bfloat16).reshape(h * w, ci)
        sc = jnp.dot(yin, wsc_ref[...], preferred_element_type=jnp.float32)
        sc_ref[0] = sc.reshape(h, w, co).astype(sc_ref.dtype)
    elif shortcut == "identity":
        sc_ref[0] = y[1:h + 1, 1:w + 1, :].astype(sc_ref.dtype)


def _bn_relu_conv(xp, scale, shift, w, *, shortcut, out_channels,
                  wsc=None, residual=None):
    n, hp, wp, ci = xp.shape
    h, wd = hp - 2, wp - 2
    co = out_channels

    in_specs = [
        pl.BlockSpec((1, hp, wp, ci), lambda i: (i, 0, 0, 0)),
        pl.BlockSpec((1, ci), lambda i: (0, 0)),
        pl.BlockSpec((1, ci), lambda i: (0, 0)),
        pl.BlockSpec((9 * ci, co), lambda i: (0, 0)),
    ]
    args = [xp, scale, shift, w]
    if shortcut == "conv":
        in_specs.append(pl.BlockSpec((ci, co), lambda i: (0, 0)))
        args.append(wsc)
    if residual is not None:
        in_specs.append(pl.BlockSpec((1, h, wd, co), lambda i: (i, 0, 0, 0)))
        args.append(residual)

    n_out = 2 if shortcut is not None else 1
    out_shape = tuple(jax.ShapeDtypeStruct((n, h, wd, co), jnp.float32)
                      for _ in range(n_out))
    out_specs = tuple(pl.BlockSpec((1, h, wd, co), lambda i: (i, 0, 0, 0))
                      for _ in range(n_out))

    flops = 2 * n * h * wd * 9 * ci * co
    if shortcut == "conv":
        flops += 2 * n * h * wd * ci * co
    bytes_accessed = (n * hp * wp * ci * 4 + 9 * ci * co * 2
                      + (ci * co * 2 if shortcut == "conv" else 0)
                      + (n * h * wd * co * 4 if residual is not None else 0)
                      + n_out * n * h * wd * co * 4 + 4 * ci * 4)

    kernel = functools.partial(_bn_relu_conv3x3_kernel, shortcut=shortcut,
                               add_residual=residual is not None)
    return pl.pallas_call(
        kernel,
        grid=(n,),
        in_specs=in_specs,
        out_specs=out_specs,
        out_shape=out_shape,
        compiler_params=pltpu.CompilerParams(
            dimension_semantics=("parallel",),   # per-image tiles; splits across v7x's 2 TCs
            vmem_limit_bytes=_VMEM_LIMIT),
        cost_estimate=pl.CostEstimate(flops=flops, transcendentals=0,
                                      bytes_accessed=bytes_accessed),
    )(*args)


# ---------------------------------------------------------------------------
# Parameter preparation (lane-dense padding, im2col weight folding) + wrapper.
# ---------------------------------------------------------------------------
def _prep_bn_params(gamma, beta, cp):
    pad = cp - gamma.shape[0]
    g = jnp.pad(gamma.astype(jnp.float32), (0, pad)).reshape(1, cp)
    b = jnp.pad(beta.astype(jnp.float32), (0, pad)).reshape(1, cp)
    return g, b


def _prep_conv3x3_w(w_oihw, ci_p, co_p):
    # (O, I, 3, 3) -> HWIO -> zero-pad channels to lane width -> (9*ci_p, co_p) bf16
    o, i = w_oihw.shape[0], w_oihw.shape[1]
    w = jnp.transpose(w_oihw.astype(jnp.float32), (2, 3, 1, 0))
    w = jnp.pad(w, ((0, 0), (0, 0), (0, ci_p - i), (0, co_p - o)))
    return w.reshape(9 * ci_p, co_p).astype(jnp.bfloat16)


def _prep_conv1x1_w(w_oihw, ci_p, co_p):
    o, i = w_oihw.shape[0], w_oihw.shape[1]
    w = jnp.transpose(w_oihw.reshape(o, i).astype(jnp.float32), (1, 0))
    w = jnp.pad(w, ((0, ci_p - i), (0, co_p - o)))
    return w.astype(jnp.bfloat16)


def preact_block(x_nchw, params, *, stride=1):
    """PreActBlock forward. NCHW in / NCHW out; lane-dense NHWC inside the kernels."""
    if stride != 1:
        # TODO(synk): stride > 1 (spatial downsampling) path not implemented in this kernel.
        raise NotImplementedError("stride > 1 not supported by this Pallas kernel")
    n, cin, h, w = x_nchw.shape
    p = params["conv1_w"].shape[0]
    has_sc = (stride != 1) or (cin != p)
    ci = _round_up(cin, _LANE)
    co = _round_up(p, _LANE)

    # NCHW -> NHWC, pad channels to the 128-lane width, add the 1-px spatial halo once.
    x = jnp.transpose(x_nchw, (0, 2, 3, 1)).astype(jnp.float32)
    xp = jnp.pad(x, ((0, 0), (1, 1), (1, 1), (0, ci - cin)))

    g1, b1 = _prep_bn_params(params["bn1_gamma"], params["bn1_beta"], ci)
    g2, b2 = _prep_bn_params(params["bn2_gamma"], params["bn2_beta"], co)
    w1 = _prep_conv3x3_w(params["conv1_w"], ci, co)
    w2 = _prep_conv3x3_w(params["conv2_w"], co, co)

    count = n * h * w
    s1, t1 = _bn_scale_shift(xp, g1, b1, count=count)
    if has_sc:
        wsc = _prep_conv1x1_w(params["shortcut_w"], ci, co)
        o1, sc = _bn_relu_conv(xp, s1, t1, w1, shortcut="conv",
                               out_channels=co, wsc=wsc)
    else:
        o1, sc = _bn_relu_conv(xp, s1, t1, w1, shortcut="identity", out_channels=co)

    o1p = jnp.pad(o1, ((0, 0), (1, 1), (1, 1), (0, 0)))
    s2, t2 = _bn_scale_shift(o1p, g2, b2, count=count)
    (out,) = _bn_relu_conv(o1p, s2, t2, w2, shortcut=None,
                           out_channels=co, residual=sc)

    out = out[..., :p]
    return jnp.transpose(out, (0, 3, 1, 2))


# ---------------------------------------------------------------------------
# Pure-JAX (NCHW, fp32) reference matching the PyTorch forward.
# ---------------------------------------------------------------------------
def _reference(x, params, eps=_EPS):
    def bn_relu(v, g, b):
        mean = v.mean(axis=(0, 2, 3), keepdims=True)
        var = ((v - mean) ** 2).mean(axis=(0, 2, 3), keepdims=True)
        y = (v - mean) / jnp.sqrt(var + eps) * g.reshape(1, -1, 1, 1) + b.reshape(1, -1, 1, 1)
        return jax.nn.relu(y)

    def conv(v, w, pad):
        return jax.lax.conv_general_dilated(
            v, w, (1, 1), [(pad, pad), (pad, pad)],
            dimension_numbers=("NCHW", "OIHW", "NCHW"))

    y = bn_relu(x, params["bn1_gamma"], params["bn1_beta"])
    sc = conv(y, params["shortcut_w"], 0) if "shortcut_w" in params else y
    o = conv(y, params["conv1_w"], 1)
    o = conv(bn_relu(o, params["bn2_gamma"], params["bn2_beta"]), params["conv2_w"], 1)
    return o + sc


def init_params(key, in_planes, planes):
    ks = jax.random.split(key, 7)
    p = {
        "bn1_gamma": 1.0 + 0.1 * jax.random.normal(ks[0], (in_planes,), jnp.float32),
        "bn1_beta": 0.1 * jax.random.normal(ks[1], (in_planes,), jnp.float32),
        "conv1_w": 0.1 * jax.random.normal(ks[2], (planes, in_planes, 3, 3), jnp.float32),
        "bn2_gamma": 1.0 + 0.1 * jax.random.normal(ks[3], (planes,), jnp.float32),
        "bn2_beta": 0.1 * jax.random.normal(ks[4], (planes,), jnp.float32),
        "conv2_w": 0.1 * jax.random.normal(ks[5], (planes, planes, 3, 3), jnp.float32),
    }
    if in_planes != planes:  # PreActBlock inserts a 1x1 conv shortcut
        p["shortcut_w"] = 0.1 * jax.random.normal(
            ks[6], (planes, in_planes, 1, 1), jnp.float32)
    return p


if __name__ == "__main__":
    key = jax.random.PRNGKey(0)
    kx, kp, kp2 = jax.random.split(key, 3)
    fwd = jax.jit(functools.partial(preact_block, stride=1))
    # Tolerance: kernel uses bf16 MXU operands (fp32 accumulation) vs. an fp32 reference.
    tol = dict(atol=3e-2, rtol=3e-2)

    # Test 1: channel-expanding block -> 1x1-conv shortcut path (ResNet stage boundary).
    in_planes, planes = 4, 8
    x = jax.random.normal(kx, (2, in_planes, 16, 16), jnp.float32)
    params = init_params(kp, in_planes, planes)
    out = jax.block_until_ready(fwd(x, params))
    ref = jax.block_until_ready(_reference(x, params))
    assert out.shape == ref.shape == (2, planes, 16, 16), (out.shape, ref.shape)
    err1 = float(jnp.max(jnp.abs(out - ref)))
    assert jnp.allclose(out, ref, **tol), f"shortcut-conv path: max abs err = {err1}"

    # Test 2: identity-shortcut block (in_planes == planes), no dummy shortcut weight.
    x2 = jax.random.normal(kx, (2, planes, 16, 16), jnp.float32)
    params2 = init_params(kp2, planes, planes)
    out2 = jax.block_until_ready(fwd(x2, params2))
    ref2 = jax.block_until_ready(_reference(x2, params2))
    err2 = float(jnp.max(jnp.abs(out2 - ref2)))
    assert jnp.allclose(out2, ref2, **tol), f"identity path: max abs err = {err2}"

    print("KERNEL_OK")
</pallas_src>

<mosaic_0001>
module attributes {stable_mosaic.version = 11 : i64} {
  func.func @_bn_stats_kernel(%arg0: i32, %arg1: memref<1x18x18x128xf32, #tpu.memory_space<vmem>>, %arg2: memref<1x128xf32, #tpu.memory_space<vmem>>, %arg3: memref<1x128xf32, #tpu.memory_space<vmem>>, %arg4: memref<1x128xf32, #tpu.memory_space<vmem>>, %arg5: memref<1x128xf32, #tpu.memory_space<vmem>>, %arg6: memref<1x128xf32, #tpu.memory_space<vmem>>, %arg7: memref<1x128xf32, #tpu.memory_space<vmem>>) attributes {dimension_semantics = [#tpu.dimension_semantics<arbitrary>], iteration_bounds = array<i64: 2>, scalar_prefetch = 0 : i64, scratch_operands = 2 : i64, tpu.core_type = #tpu.core_type<tc>, window_params = [{transform_indices = @transform_0, window_bounds = array<i64: 1, 18, 18, 128>}, {pipeline_mode = #tpu.pipeline_mode<synchronous>, transform_indices = @transform_1, window_bounds = array<i64: 1, 128>}, {pipeline_mode = #tpu.pipeline_mode<synchronous>, transform_indices = @transform_2, window_bounds = array<i64: 1, 128>}, {pipeline_mode = #tpu.pipeline_mode<synchronous>, transform_indices = @transform_3, window_bounds = array<i64: 1, 128>}, {pipeline_mode = #tpu.pipeline_mode<synchronous>, transform_indices = @transform_4, window_bounds = array<i64: 1, 128>}]} {
    %c0_i32 = arith.constant 0 : i32
    %0 = arith.cmpi eq, %arg0, %c0_i32 : i32
    %1 = arith.extui %0 : i1 to i32
    %c0_i32_0 = arith.constant 0 : i32
    %2 = arith.cmpi ne, %1, %c0_i32_0 : i32
    scf.if %2 {
      %cst_14 = arith.constant 0.000000e+00 : f32
      %20 = vector.broadcast %cst_14 : f32 to vector<1x128xf32>
      %c0_15 = arith.constant 0 : index
      %c0_16 = arith.constant 0 : index
      %21 = vector.load %arg6[%c0_15, %c0_16] : memref<1x128xf32, #tpu.memory_space<vmem>>, vector<1x128xf32>
      tpu.vector_store %arg6[%c0_15, %c0_16], %20 {strides = array<i32>} : memref<1x128xf32, #tpu.memory_space<vmem>>, vector<1x128xf32>,
      %cst_17 = arith.constant 0.000000e+00 : f32
      %22 = vector.broadcast %cst_17 : f32 to vector<1x128xf32>
      %c0_18 = arith.constant 0 : index
      %c0_19 = arith.constant 0 : index
      %23 = vector.load %arg7[%c0_18, %c0_19] : memref<1x128xf32, #tpu.memory_space<vmem>>, vector<1x128xf32>
      tpu.vector_store %arg7[%c0_18, %c0_19], %22 {strides = array<i32>} : memref<1x128xf32, #tpu.memory_space<vmem>>, vector<1x128xf32>,
    } else {
    }
    %c0 = arith.constant 0 : index
    %c0_1 = arith.constant 0 : index
    %c0_2 = arith.constant 0 : index
    %c0_3 = arith.constant 0 : index
    %3 = vector.load %arg1[%c0, %c0_1, %c0_2, %c0_3] : memref<1x18x18x128xf32, #tpu.memory_space<vmem>>, vector<1x18x18x128xf32>
    %c0_4 = arith.constant 0 : index
    %c0_5 = arith.constant 0 : index
    %4 = vector.load %arg6[%c0_4, %c0_5] : memref<1x128xf32, #tpu.memory_space<vmem>>, vector<1x128xf32>
    %cst = arith.constant dense<0.000000e+00> : vector<128xf32>
    %5 = vector.multi_reduction <add>, %3, %cst [0, 1, 2] : vector<1x18x18x128xf32> to vector<128xf32>
    %6 = vector.shape_cast %5 : vector<128xf32> to vector<1x1x1x128xf32>
    %7 = vector.shape_cast %6 : vector<1x1x1x128xf32> to vector<1x128xf32>
    %8 = arith.addf %4, %7 : vector<1x128xf32>
    %c0_6 = arith.constant 0 : index
    %c0_7 = arith.constant 0 : index
    %9 = vector.load %arg6[%c0_6, %c0_7] : memref<1x128xf32, #tpu.memory_space<vmem>>, vector<1x128xf32>
    tpu.vector_store %arg6[%c0_6, %c0_7], %8 {strides = array<i32>} : memref<1x128xf32, #tpu.memory_space<vmem>>, vector<1x128xf32>,
    %c0_8 = arith.constant 0 : index
    %c0_9 = arith.constant 0 : index
    %10 = vector.load %arg7[%c0_8, %c0_9] : memref<1x128xf32, #tpu.memory_space<vmem>>, vector<1x128xf32>
    %11 = arith.mulf %3, %3 : vector<1x18x18x128xf32>
    %cst_10 = arith.constant dense<0.000000e+00> : vector<128xf32>
    %12 = vector.multi_reduction <add>, %11, %cst_10 [0, 1, 2] : vector<1x18x18x128xf32> to vector<128xf32>
    %13 = vector.shape_cast %12 : vector<128xf32> to vector<1x1x1x128xf32>
    %14 = vector.shape_cast %13 : vector<1x1x1x128xf32> to vector<1x128xf32>
    %15 = arith.addf %10, %14 : vector<1x128xf32>
    %c0_11 = arith.constant 0 : index
    %c0_12 = arith.constant 0 : index
    %16 = vector.load %arg7[%c0_11, %c0_12] : memref<1x128xf32, #tpu.memory_space<vmem>>, vector<1x128xf32>
    tpu.vector_store %arg7[%c0_11, %c0_12], %15 {strides = array<i32>} : memref<1x128xf32, #tpu.memory_space<vmem>>, vector<1x128xf32>,
    %c1_i32 = arith.constant 1 : i32
    %17 = arith.cmpi eq, %arg0, %c1_i32 : i32
    %18 = arith.extui %17 : i1 to i32
    %c0_i32_13 = arith.constant 0 : i32
    %19 = arith.cmpi ne, %18, %c0_i32_13 : i32
    scf.if %19 {
      %c0_14 = arith.constant 0 : index
      %c0_15 = arith.constant 0 : index
      %20 = vector.load %arg6[%c0_14, %c0_15] : memref<1x128xf32, #tpu.memory_space<vmem>>, vector<1x128xf32>
      %cst_16 = arith.constant 0.001953125 : f32
      %21 = vector.broadcast %cst_16 : f32 to vector<1x128xf32>
      %22 = arith.mulf %20, %21 : vector<1x128xf32>
      %c0_17 = arith.constant 0 : index
      %c0_18 = arith.constant 0 : index
      %23 = vector.load %arg7[%c0_17, %c0_18] : memref<1x128xf32, #tpu.memory_space<vmem>>, vector<1x128xf32>
      %cst_19 = arith.constant 0.001953125 : f32
      %24 = vector.broadcast %cst_19 : f32 to vector<1x128xf32>
      %25 = arith.mulf %23, %24 : vector<1x128xf32>
      %26 = arith.mulf %22, %22 : vector<1x128xf32>
      %27 = arith.subf %25, %26 : vector<1x128xf32>
      %c0_20 = arith.constant 0 : index
      %c0_21 = arith.constant 0 : index
      %28 = vector.load %arg2[%c0_20, %c0_21] : memref<1x128xf32, #tpu.memory_space<vmem>>, vector<1x128xf32>
      %cst_22 = arith.constant 9.99999974E-6 : f32
      %29 = vector.broadcast %cst_22 : f32 to vector<1x128xf32>
      %30 = arith.addf %27, %29 : vector<1x128xf32>
      %31 = math.rsqrt %30 : vector<1x128xf32>
      %32 = arith.mulf %28, %31 : vector<1x128xf32>
      %c0_23 = arith.constant 0 : index
      %c0_24 = arith.constant 0 : index
      %33 = vector.load %arg4[%c0_23, %c0_24] : memref<1x128xf32, #tpu.memory_space<vmem>>, vector<1x128xf32>
      tpu.vector_store %arg4[%c0_23, %c0_24], %32 {strides = array<i32>} : memref<1x128xf32, #tpu.memory_space<vmem>>, vector<1x128xf32>,
      %c0_25 = arith.constant 0 : index
      %c0_26 = arith.constant 0 : index
      %34 = vector.load %arg3[%c0_25, %c0_26] : memref<1x128xf32, #tpu.memory_space<vmem>>, vector<1x128xf32>
      %35 = arith.mulf %22, %32 : vector<1x128xf32>
      %36 = arith.subf %34, %35 : vector<1x128xf32>
      %c0_27 = arith.constant 0 : index
      %c0_28 = arith.constant 0 : index
      %37 = vector.load %arg5[%c0_27, %c0_28] : memref<1x128xf32, #tpu.memory_space<vmem>>, vector<1x128xf32>
      tpu.vector_store %arg5[%c0_27, %c0_28], %36 {strides = array<i32>} : memref<1x128xf32, #tpu.memory_space<vmem>>, vector<1x128xf32>,
    } else {
    }
    return
  }
  func.func @transform_0(%arg0: i32) -> (i32, i32, i32, i32) {
    %c0_i32 = arith.constant 0 : i32
    %c0_i32_0 = arith.constant 0 : i32
    %c0_i32_1 = arith.constant 0 : i32
    %c0_i32_2 = arith.constant 0 : i32
    return %arg0, %c0_i32, %c0_i32_0, %c0_i32_1 : i32, i32, i32, i32
  }
  func.func @transform_1(%arg0: i32) -> (i32, i32) {
    %c0_i32 = arith.constant 0 : i32
    %c0_i32_0 = arith.constant 0 : i32
    %c0_i32_1 = arith.constant 0 : i32
    return %c0_i32, %c0_i32_0 : i32, i32
  }
  func.func @transform_2(%arg0: i32) -> (i32, i32) {
    %c0_i32 = arith.constant 0 : i32
    %c0_i32_0 = arith.constant 0 : i32
    %c0_i32_1 = arith.constant 0 : i32
    return %c0_i32, %c0_i32_0 : i32, i32
  }
  func.func @transform_3(%arg0: i32) -> (i32, i32) {
    %c0_i32 = arith.constant 0 : i32
    %c0_i32_0 = arith.constant 0 : i32
    %c0_i32_1 = arith.constant 0 : i32
    return %c0_i32, %c0_i32_0 : i32, i32
  }
  func.func @transform_4(%arg0: i32) -> (i32, i32) {
    %c0_i32 = arith.constant 0 : i32
    %c0_i32_0 = arith.constant 0 : i32
    %c0_i32_1 = arith.constant 0 : i32
    return %c0_i32, %c0_i32_0 : i32, i32
  }
}

module attributes {stable_mosaic.version = 11 : i64} {
  func.func @_bn_relu_conv3x3_kernel(%arg0: i32, %arg1: memref<1x18x18x128xf32, #tpu.memory_space<vmem>>, %arg2: memref<1x128xf32, #tpu.memory_space<vmem>>, %arg3: memref<1x128xf32, #tpu.memory_space<vmem>>, %arg4: memref<1152x128xbf16, #tpu.memory_space<vmem>>, %arg5: memref<128x128xbf16, #tpu.memory_space<vmem>>, %arg6: memref<1x16x16x128xf32, #tpu.memory_space<vmem>>, %arg7: memref<1x16x16x128xf32, #tpu.memory_space<vmem>>) attributes {dimension_semantics = [#tpu.dimension_semantics<parallel>], iteration_bounds = array<i64: 2>, scalar_prefetch = 0 : i64, scratch_operands = 0 : i64, tpu.core_type = #tpu.core_type<tc>, window_params = [{transform_indices = @transform_0, window_bounds = array<i64: 1, 18, 18, 128>}, {pipeline_mode = #tpu.pipeline_mode<synchronous>, transform_indices = @transform_1, window_bounds = array<i64: 1, 128>}, {pipeline_mode = #tpu.pipeline_mode<synchronous>, transform_indices = @transform_2, window_bounds = array<i64: 1, 128>}, {pipeline_mode = #tpu.pipeline_mode<synchronous>, transform_indices = @transform_3, window_bounds = array<i64: 1152, 128>}, {pipeline_mode = #tpu.pipeline_mode<synchronous>, transform_indices = @transform_4, window_bounds = array<i64: 128, 128>}, {transform_indices = @transform_5, window_bounds = array<i64: 1, 16, 16, 128>}, {transform_indices = @transform_6, window_bounds = array<i64: 1, 16, 16, 128>}]} {
    %c0 = arith.constant 0 : index
    %c0_0 = arith.constant 0 : index
    %c0_1 = arith.constant 0 : index
    %c0_2 = arith.constant 0 : index
    %0 = vector.load %arg1[%c0, %c0_0, %c0_1, %c0_2] : memref<1x18x18x128xf32, #tpu.memory_space<vmem>>, vector<1x18x18x128xf32>
    %1 = vector.shape_cast %0 : vector<1x18x18x128xf32> to vector<18x18x128xf32>
    %c0_3 = arith.constant 0 : index
    %c0_4 = arith.constant 0 : index
    %2 = vector.load %arg2[%c0_3, %c0_4] : memref<1x128xf32, #tpu.memory_space<vmem>>, vector<1x128xf32>
    %3 = vector.shape_cast %2 : vector<1x128xf32> to vector<1x1x128xf32>
    %4 = vector.broadcast %3 : vector<1x1x128xf32> to vector<18x18x128xf32>
    %5 = arith.mulf %1, %4 : vector<18x18x128xf32>
    %c0_5 = arith.constant 0 : index
    %c0_6 = arith.constant 0 : index
    %6 = vector.load %arg3[%c0_5, %c0_6] : memref<1x128xf32, #tpu.memory_space<vmem>>, vector<1x128xf32>
    %7 = vector.shape_cast %6 : vector<1x128xf32> to vector<1x1x128xf32>
    %8 = vector.broadcast %7 : vector<1x1x128xf32> to vector<18x18x128xf32>
    %9 = arith.addf %5, %8 : vector<18x18x128xf32>
    %cst = arith.constant 0.000000e+00 : f32
    %10 = vector.broadcast %cst : f32 to vector<18x18x128xf32>
    %11 = arith.maximumf %9, %10 : vector<18x18x128xf32>
    %12 = tpu.iota {dimensions = array<i32: 0>} : vector<18x18x128xi32>
    %13 = tpu.iota {dimensions = array<i32: 1>} : vector<18x18x128xi32>
    %c1_i32 = arith.constant 1 : i32
    %14 = vector.broadcast %c1_i32 : i32 to vector<18x18x128xi32>
    %15 = arith.cmpi sge, %12, %14 : vector<18x18x128xi32>
    %c16_i32 = arith.constant 16 : i32
    %16 = vector.broadcast %c16_i32 : i32 to vector<18x18x128xi32>
    %17 = arith.cmpi sle, %12, %16 : vector<18x18x128xi32>
    %18 = arith.andi %15, %17 : vector<18x18x128xi1>
    %c1_i32_7 = arith.constant 1 : i32
    %19 = vector.broadcast %c1_i32_7 : i32 to vector<18x18x128xi32>
    %20 = arith.cmpi sge, %13, %19 : vector<18x18x128xi32>
    %21 = arith.andi %18, %20 : vector<18x18x128xi1>
    %c16_i32_8 = arith.constant 16 : i32
    %22 = vector.broadcast %c16_i32_8 : i32 to vector<18x18x128xi32>
    %23 = arith.cmpi sle, %13, %22 : vector<18x18x128xi32>
    %24 = arith.andi %21, %23 : vector<18x18x128xi1>
    %cst_9 = arith.constant 0.000000e+00 : f32
    %25 = vector.broadcast %cst_9 : f32 to vector<18x18x128xf32>
    %26 = arith.select %24, %11, %25 : vector<18x18x128xi1>, vector<18x18x128xf32>
    %27 = vector.extract_strided_slice %26 {offsets = [0, 0, 0], sizes = [16, 16, 128], strides = [1, 1, 1]} : vector<18x18x128xf32> to vector<16x16x128xf32>
    %28 = vector.extract_strided_slice %26 {offsets = [0, 1, 0], sizes = [16, 16, 128], strides = [1, 1, 1]} : vector<18x18x128xf32> to vector<16x16x128xf32>
    %29 = vector.extract_strided_slice %26 {offsets = [0, 2, 0], sizes = [16, 16, 128], strides = [1, 1, 1]} : vector<18x18x128xf32> to vector<16x16x128xf32>
    %30 = vector.extract_strided_slice %26 {offsets = [1, 0, 0], sizes = [16, 16, 128], strides = [1, 1, 1]} : vector<18x18x128xf32> to vector<16x16x128xf32>
    %31 = vector.extract_strided_slice %26 {offsets = [1, 1, 0], sizes = [16, 16, 128], strides = [1, 1, 1]} : vector<18x18x128xf32> to vector<16x16x128xf32>
    %32 = vector.extract_strided_slice %26 {offsets = [1, 2, 0], sizes = [16, 16, 128], strides = [1, 1, 1]} : vector<18x18x128xf32> to vector<16x16x128xf32>
    %33 = vector.extract_strided_slice %26 {offsets = [2, 0, 0], sizes = [16, 16, 128], strides = [1, 1, 1]} : vector<18x18x128xf32> to vector<16x16x128xf32>
    %34 = vector.extract_strided_slice %26 {offsets = [2, 1, 0], sizes = [16, 16, 128], strides = [1, 1, 1]} : vector<18x18x128xf32> to vector<16x16x128xf32>
    %35 = vector.extract_strided_slice %26 {offsets = [2, 2, 0], sizes = [16, 16, 128], strides = [1, 1, 1]} : vector<18x18x128xf32> to vector<16x16x128xf32>
    %36 = tpu.concatenate %27, %28, %29, %30, %31, %32, %33, %34, %35 in 2 : vector<16x16x128xf32>, vector<16x16x128xf32>, vector<16x16x128xf32>, vector<16x16x128xf32>, vector<16x16x128xf32>, vector<16x16x128xf32>, vector<16x16x128xf32>, vector<16x16x128xf32>, vector<16x16x128xf32> -> vector<16x16x1152xf32>
    %37 = arith.truncf %36 : vector<16x16x1152xf32> to vector<16x16x1152xbf16>
    %38 = vector.shape_cast %37 : vector<16x16x1152xbf16> to vector<256x1152xbf16>
    %c0_10 = arith.constant 0 : index
    %c0_11 = arith.constant 0 : index
    %39 = vector.load %arg4[%c0_10, %c0_11] : memref<1152x128xbf16, #tpu.memory_space<vmem>>, vector<1152x128xbf16>
    %cst_12 = arith.constant dense<0.000000e+00> : vector<256x128xf32>
    %40 = tpu.matmul %38, %39, %cst_12 {dimension_numbers = #tpu.dot_dimension_numbers<[1], [0], [0], [1], [0, 0, 1, 1], [], []>} : vector<256x1152xbf16>, vector<1152x128xbf16>, vector<256x128xf32> -> vector<256x128xf32>
    %41 = vector.shape_cast %40 : vector<256x128xf32> to vector<16x16x128xf32>
    %c0_13 = arith.constant 0 : index
    %c0_14 = arith.constant 0 : index
    %c0_15 = arith.constant 0 : index
    %c0_16 = arith.constant 0 : index
    %42 = vector.load %arg6[%c0_13, %c0_14, %c0_15, %c0_16] : memref<1x16x16x128xf32, #tpu.memory_space<vmem>>, vector<1x16x16x128xf32>
    %43 = vector.shape_cast %42 : vector<1x16x16x128xf32> to vector<16x16x128xf32>
    %44 = vector.shape_cast %41 : vector<16x16x128xf32> to vector<1x16x16x128xf32>
    tpu.vector_store %arg6[%c0_13, %c0_14, %c0_15, %c0_16], %44 {strides = array<i32>} : memref<1x16x16x128xf32, #tpu.memory_space<vmem>>, vector<1x16x16x128xf32>,
    %45 = vector.extract_strided_slice %26 {offsets = [1, 1, 0], sizes = [16, 16, 128], strides = [1, 1, 1]} : vector<18x18x128xf32> to vector<16x16x128xf32>
    %46 = arith.truncf %45 : vector<16x16x128xf32> to vector<16x16x128xbf16>
    %47 = vector.shape_cast %46 : vector<16x16x128xbf16> to vector<256x128xbf16>
    %c0_17 = arith.constant 0 : index
    %c0_18 = arith.constant 0 : index
    %48 = vector.load %arg5[%c0_17, %c0_18] : memref<128x128xbf16, #tpu.memory_space<vmem>>, vector<128x128xbf16>
    %cst_19 = arith.constant dense<0.000000e+00> : vector<256x128xf32>
    %49 = tpu.matmul %47, %48, %cst_19 {dimension_numbers = #tpu.dot_dimension_numbers<[1], [0], [0], [1], [0, 0, 1, 1], [], []>} : vector<256x128xbf16>, vector<128x128xbf16>, vector<256x128xf32> -> vector<256x128xf32>
    %50 = vector.shape_cast %49 : vector<256x128xf32> to vector<16x16x128xf32>
    %c0_20 = arith.constant 0 : index
    %c0_21 = arith.constant 0 : index
    %c0_22 = arith.constant 0 : index
    %c0_23 = arith.constant 0 : index
    %51 = vector.load %arg7[%c0_20, %c0_21, %c0_22, %c0_23] : memref<1x16x16x128xf32, #tpu.memory_space<vmem>>, vector<1x16x16x128xf32>
    %52 = vector.shape_cast %51 : vector<1x16x16x128xf32> to vector<16x16x128xf32>
    %53 = vector.shape_cast %50 : vector<16x16x128xf32> to vector<1x16x16x128xf32>
    tpu.vector_store %arg7[%c0_20, %c0_21, %c0_22, %c0_23], %53 {strides = array<i32>} : memref<1x16x16x128xf32, #tpu.memory_space<vmem>>, vector<1x16x16x128xf32>,
    return
  }
  func.func @transform_0(%arg0: i32) -> (i32, i32, i32, i32) {
    %c0_i32 = arith.constant 0 : i32
    %c0_i32_0 = arith.constant 0 : i32
    %c0_i32_1 = arith.constant 0 : i32
    %c0_i32_2 = arith.constant 0 : i32
    return %arg0, %c0_i32, %c0_i32_0, %c0_i32_1 : i32, i32, i32, i32
  }
  func.func @transform_1(%arg0: i32) -> (i32, i32) {
    %c0_i32 = arith.constant 0 : i32
    %c0_i32_0 = arith.constant 0 : i32
    %c0_i32_1 = arith.constant 0 : i32
    return %c0_i32, %c0_i32_0 : i32, i32
  }
  func.func @transform_2(%arg0: i32) -> (i32, i32) {
    %c0_i32 = arith.constant 0 : i32
    %c0_i32_0 = arith.constant 0 : i32
    %c0_i32_1 = arith.constant 0 : i32
    return %c0_i32, %c0_i32_0 : i32, i32
  }
  func.func @transform_3(%arg0: i32) -> (i32, i32) {
    %c0_i32 = arith.constant 0 : i32
    %c0_i32_0 = arith.constant 0 : i32
    %c0_i32_1 = arith.constant 0 : i32
    return %c0_i32, %c0_i32_0 : i32, i32
  }
  func.func @transform_4(%arg0: i32) -> (i32, i32) {
    %c0_i32 = arith.constant 0 : i32
    %c0_i32_0 = arith.constant 0 : i32
    %c0_i32_1 = arith.constant 0 : i32
    return %c0_i32, %c0_i32_0 : i32, i32
  }
  func.func @transform_5(%arg0: i32) -> (i32, i32, i32, i32) {
    %c0_i32 = arith.constant 0 : i32
    %c0_i32_0 = arith.constant 0 : i32
    %c0_i32_1 = arith.constant 0 : i32
    %c0_i32_2 = arith.constant 0 : i32
    return %arg0, %c0_i32, %c0_i32_0, %c0_i32_1 : i32, i32, i32, i32
  }
  func.func @transform_6(%arg0: i32) -> (i32, i32, i32, i32) {
    %c0_i32 = arith.constant 0 : i32
    %c0_i32_0 = arith.constant 0 : i32
    %c0_i32_1 = arith.constant 0 : i32
    %c0_i32_2 = arith.constant 0 : i32
    return %arg0, %c0_i32, %c0_i32_0, %c0_i32_1 : i32, i32, i32, i32
  }
}

module attributes {stable_mosaic.version = 11 : i64} {
  func.func @_bn_relu_conv3x3_kernel(%arg0: i32, %arg1: memref<1x18x18x128xf32, #tpu.memory_space<vmem>>, %arg2: memref<1x128xf32, #tpu.memory_space<vmem>>, %arg3: memref<1x128xf32, #tpu.memory_space<vmem>>, %arg4: memref<1152x128xbf16, #tpu.memory_space<vmem>>, %arg5: memref<1x16x16x128xf32, #tpu.memory_space<vmem>>, %arg6: memref<1x16x16x128xf32, #tpu.memory_space<vmem>>) attributes {dimension_semantics = [#tpu.dimension_semantics<parallel>], iteration_bounds = array<i64: 2>, scalar_prefetch = 0 : i64, scratch_operands = 0 : i64, tpu.core_type = #tpu.core_type<tc>, window_params = [{transform_indices = @transform_0, window_bounds = array<i64: 1, 18, 18, 128>}, {pipeline_mode = #tpu.pipeline_mode<synchronous>, transform_indices = @transform_1, window_bounds = array<i64: 1, 128>}, {pipeline_mode = #tpu.pipeline_mode<synchronous>, transform_indices = @transform_2, window_bounds = array<i64: 1, 128>}, {pipeline_mode = #tpu.pipeline_mode<synchronous>, transform_indices = @transform_3, window_bounds = array<i64: 1152, 128>}, {transform_indices = @transform_4, window_bounds = array<i64: 1, 16, 16, 128>}, {transform_indices = @transform_5, window_bounds = array<i64: 1, 16, 16, 128>}]} {
    %c0 = arith.constant 0 : index
    %c0_0 = arith.constant 0 : index
    %c0_1 = arith.constant 0 : index
    %c0_2 = arith.constant 0 : index
    %0 = vector.load %arg1[%c0, %c0_0, %c0_1, %c0_2] : memref<1x18x18x128xf32, #tpu.memory_space<vmem>>, vector<1x18x18x128xf32>
    %1 = vector.shape_cast %0 : vector<1x18x18x128xf32> to vector<18x18x128xf32>
    %c0_3 = arith.constant 0 : index
    %c0_4 = arith.constant 0 : index
    %2 = vector.load %arg2[%c0_3, %c0_4] : memref<1x128xf32, #tpu.memory_space<vmem>>, vector<1x128xf32>
    %3 = vector.shape_cast %2 : vector<1x128xf32> to vector<1x1x128xf32>
    %4 = vector.broadcast %3 : vector<1x1x128xf32> to vector<18x18x128xf32>
    %5 = arith.mulf %1, %4 : vector<18x18x128xf32>
    %c0_5 = arith.constant 0 : index
    %c0_6 = arith.constant 0 : index
    %6 = vector.load %arg3[%c0_5, %c0_6] : memref<1x128xf32, #tpu.memory_space<vmem>>, vector<1x128xf32>
    %7 = vector.shape_cast %6 : vector<1x128xf32> to vector<1x1x128xf32>
    %8 = vector.broadcast %7 : vector<1x1x128xf32> to vector<18x18x128xf32>
    %9 = arith.addf %5, %8 : vector<18x18x128xf32>
    %cst = arith.constant 0.000000e+00 : f32
    %10 = vector.broadcast %cst : f32 to vector<18x18x128xf32>
    %11 = arith.maximumf %9, %10 : vector<18x18x128xf32>
    %12 = tpu.iota {dimensions = array<i32: 0>} : vector<18x18x128xi32>
    %13 = tpu.iota {dimensions = array<i32: 1>} : vector<18x18x128xi32>
    %c1_i32 = arith.constant 1 : i32
    %14 = vector.broadcast %c1_i32 : i32 to vector<18x18x128xi32>
    %15 = arith.cmpi sge, %12, %14 : vector<18x18x128xi32>
    %c16_i32 = arith.constant 16 : i32
    %16 = vector.broadcast %c16_i32 : i32 to vector<18x18x128xi32>
    %17 = arith.cmpi sle, %12, %16 : vector<18x18x128xi32>
    %18 = arith.andi %15, %17 : vector<18x18x128xi1>
    %c1_i32_7 = arith.constant 1 : i32
    %19 = vector.broadcast %c1_i32_7 : i32 to vector<18x18x128xi32>
    %20 = arith.cmpi sge, %13, %19 : vector<18x18x128xi32>
    %21 = arith.andi %18, %20 : vector<18x18x128xi1>
    %c16_i32_8 = arith.constant 16 : i32
    %22 = vector.broadcast %c16_i32_8 : i32 to vector<18x18x128xi32>
    %23 = arith.cmpi sle, %13, %22 : vector<18x18x128xi32>
    %24 = arith.andi %21, %23 : vector<18x18x128xi1>
    %cst_9 = arith.constant 0.000000e+00 : f32
    %25 = vector.broadcast %cst_9 : f32 to vector<18x18x128xf32>
    %26 = arith.select %24, %11, %25 : vector<18x18x128xi1>, vector<18x18x128xf32>
    %27 = vector.extract_strided_slice %26 {offsets = [0, 0, 0], sizes = [16, 16, 128], strides = [1, 1, 1]} : vector<18x18x128xf32> to vector<16x16x128xf32>
    %28 = vector.extract_strided_slice %26 {offsets = [0, 1, 0], sizes = [16, 16, 128], strides = [1, 1, 1]} : vector<18x18x128xf32> to vector<16x16x128xf32>
    %29 = vector.extract_strided_slice %26 {offsets = [0, 2, 0], sizes = [16, 16, 128], strides = [1, 1, 1]} : vector<18x18x128xf32> to vector<16x16x128xf32>
    %30 = vector.extract_strided_slice %26 {offsets = [1, 0, 0], sizes = [16, 16, 128], strides = [1, 1, 1]} : vector<18x18x128xf32> to vector<16x16x128xf32>
    %31 = vector.extract_strided_slice %26 {offsets = [1, 1, 0], sizes = [16, 16, 128], strides = [1, 1, 1]} : vector<18x18x128xf32> to vector<16x16x128xf32>
    %32 = vector.extract_strided_slice %26 {offsets = [1, 2, 0], sizes = [16, 16, 128], strides = [1, 1, 1]} : vector<18x18x128xf32> to vector<16x16x128xf32>
    %33 = vector.extract_strided_slice %26 {offsets = [2, 0, 0], sizes = [16, 16, 128], strides = [1, 1, 1]} : vector<18x18x128xf32> to vector<16x16x128xf32>
    %34 = vector.extract_strided_slice %26 {offsets = [2, 1, 0], sizes = [16, 16, 128], strides = [1, 1, 1]} : vector<18x18x128xf32> to vector<16x16x128xf32>
    %35 = vector.extract_strided_slice %26 {offsets = [2, 2, 0], sizes = [16, 16, 128], strides = [1, 1, 1]} : vector<18x18x128xf32> to vector<16x16x128xf32>
    %36 = tpu.concatenate %27, %28, %29, %30, %31, %32, %33, %34, %35 in 2 : vector<16x16x128xf32>, vector<16x16x128xf32>, vector<16x16x128xf32>, vector<16x16x128xf32>, vector<16x16x128xf32>, vector<16x16x128xf32>, vector<16x16x128xf32>, vector<16x16x128xf32>, vector<16x16x128xf32> -> vector<16x16x1152xf32>
    %37 = arith.truncf %36 : vector<16x16x1152xf32> to vector<16x16x1152xbf16>
    %38 = vector.shape_cast %37 : vector<16x16x1152xbf16> to vector<256x1152xbf16>
    %c0_10 = arith.constant 0 : index
    %c0_11 = arith.constant 0 : index
    %39 = vector.load %arg4[%c0_10, %c0_11] : memref<1152x128xbf16, #tpu.memory_space<vmem>>, vector<1152x128xbf16>
    %cst_12 = arith.constant dense<0.000000e+00> : vector<256x128xf32>
    %40 = tpu.matmul %38, %39, %cst_12 {dimension_numbers = #tpu.dot_dimension_numbers<[1], [0], [0], [1], [0, 0, 1, 1], [], []>} : vector<256x1152xbf16>, vector<1152x128xbf16>, vector<256x128xf32> -> vector<256x128xf32>
    %41 = vector.shape_cast %40 : vector<256x128xf32> to vector<16x16x128xf32>
    %c0_13 = arith.constant 0 : index
    %c0_14 = arith.constant 0 : index
    %c0_15 = arith.constant 0 : index
    %c0_16 = arith.constant 0 : index
    %42 = vector.load %arg5[%c0_13, %c0_14, %c0_15, %c0_16] : memref<1x16x16x128xf32, #tpu.memory_space<vmem>>, vector<1x16x16x128xf32>
    %43 = vector.shape_cast %42 : vector<1x16x16x128xf32> to vector<16x16x128xf32>
    %44 = arith.addf %41, %43 : vector<16x16x128xf32>
    %c0_17 = arith.constant 0 : index
    %c0_18 = arith.constant 0 : index
    %c0_19 = arith.constant 0 : index
    %c0_20 = arith.constant 0 : index
    %45 = vector.load %arg6[%c0_17, %c0_18, %c0_19, %c0_20] : memref<1x16x16x128xf32, #tpu.memory_space<vmem>>, vector<1x16x16x128xf32>
    %46 = vector.shape_cast %45 : vector<1x16x16x128xf32> to vector<16x16x128xf32>
    %47 = vector.shape_cast %44 : vector<16x16x128xf32> to vector<1x16x16x128xf32>
    tpu.vector_store %arg6[%c0_17, %c0_18, %c0_19, %c0_20], %47 {strides = array<i32>} : memref<1x16x16x128xf32, #tpu.memory_space<vmem>>, vector<1x16x16x128xf32>,
    return
  }
  func.func @transform_0(%arg0: i32) -> (i32, i32, i32, i32) {
    %c0_i32 = arith.constant 0 : i32
    %c0_i32_0 = arith.constant 0 : i32
    %c0_i32_1 = arith.constant 0 : i32
    %c0_i32_2 = arith.constant 0 : i32
    return %arg0, %c0_i32, %c0_i32_0, %c0_i32_1 : i32, i32, i32, i32
  }
  func.func @transform_1(%arg0: i32) -> (i32, i32) {
    %c0_i32 = arith.constant 0 : i32
    %c0_i32_0 = arith.constant 0 : i32
    %c0_i32_1 = arith.constant 0 : i32
    return %c0_i32, %c0_i32_0 : i32, i32
  }
  func.func @transform_2(%arg0: i32) -> (i32, i32) {
    %c0_i32 = arith.constant 0 : i32
    %c0_i32_0 = arith.constant 0 : i32
    %c0_i32_1 = arith.constant 0 : i32
    return %c0_i32, %c0_i32_0 : i32, i32
  }
  func.func @transform_3(%arg0: i32) -> (i32, i32) {
    %c0_i32 = arith.constant 0 : i32
    %c0_i32_0 = arith.constant 0 : i32
    %c0_i32_1 = arith.constant 0 : i32
    return %c0_i32, %c0_i32_0 : i32, i32
  }
  func.func @transform_4(%arg0: i32) -> (i32, i32, i32, i32) {
    %c0_i32 = arith.constant 0 : i32
    %c0_i32_0 = arith.constant 0 : i32
    %c0_i32_1 = arith.constant 0 : i32
    %c0_i32_2 = arith.constant 0 : i32
    return %arg0, %c0_i32, %c0_i32_0, %c0_i32_1 : i32, i32, i32, i32
  }
  func.func @transform_5(%arg0: i32) -> (i32, i32, i32, i32) {
    %c0_i32 = arith.constant 0 : i32
    %c0_i32_0 = arith.constant 0 : i32
    %c0_i32_1 = arith.constant 0 : i32
    %c0_i32_2 = arith.constant 0 : i32
    return %arg0, %c0_i32, %c0_i32_0, %c0_i32_1 : i32, i32, i32, i32
  }
}

</mosaic_0001>

<llo_original>
// kernel: preact_block.4
$region0: #{preact_block.4}
  #allocation0 [shape = 'u32[]', space=smem, size = 0x4, offset = 0x4, fixed_abs, tag = 'smem constant byte address 0x4 - core index']
  #allocation1 [shape = 'u32[72,128]{1,0:T(1,128)}', space=vmem, size = 0x9000, scoped, tag = 'internal scratch']
  #allocation2 [shape = 'f32[1,128]{1,0:T(1,128)}', space=vmem, size = 0x200, scoped, tag = 'scratch operand']
  #allocation3 [shape = 'f32[1,128]{1,0:T(1,128)}', space=vmem, size = 0x200, scoped, tag = 'scratch operand']
  %s0 = inlined_call_operand.vmem [shape: f32[2,18,18,128], index: 0, kind: input, shape index: {}]
  %s1 = inlined_call_operand.vmem [shape: f32[1,128], index: 1, kind: input, shape index: {}]
  %s2 = inlined_call_operand.vmem [shape: f32[1,128], index: 2, kind: input, shape index: {}]
  %s3 = inlined_call_operand.vmem [shape: f32[1,128], index: 3, kind: output, shape index: {0}]
  %s4 = inlined_call_operand.vmem [shape: f32[1,128], index: 4, kind: output, shape index: {1}]
  %5 = xla_tuple %s3, %s4
  %s6 = sld [smem:[#allocation0]]
  $region61: #{preact_block.4} parent=0
    _
  %s8 = ssub.s32 1, %s6
  %s9 = scalar_select 0, %s8, %s6
  loop: start=0, step=1, limit=4
  $region2: #{preact_block.4} parent=0 // loop_pre_header
    _
  $region3: #{preact_block.4} parent=0 // loop_header
    %s11 = sphi 0, %s15
    %p12 = scmp.ge.s32.totalorder %s11, 4
    %s21 = sphi 0, %s23
    %s24 = sphi 0, %s21
    %s25 = sphi 0, %s24
    %s41 = sphi 0, %s25
    %s45 = sphi 0, %s45
    %s47 = sphi 0, %s45
    %s48 = sphi 0, %s47
    %s62 = sphi 0, %s48
    %s66 = sphi 0, %s66
    %s68 = sphi 0, %s66
    %s69 = sphi 0, %s68
    %s83 = sphi 0, %s69
    %s87 = sphi 0, %s87
    %s89 = sphi 0, %s87
    %s90 = sphi 0, %s89
    %s104 = sphi 0, %s90
    %s108 = sphi 0, %s108
    %s110 = sphi 0, %s108
    %s111 = sphi 0, %s110
    %s125 = sphi 0, %s111
  $region4: #{preact_block.4} parent=0 // loop_header_branch
    %14 = sbr.rel (%p12) target = $region8
  $region5: #{preact_block.4} parent=0 // loop_body
    %s16 = ssub.s32 %s11, 1
    %s17 = ssub.s32 %s11, 2
    %s18 = sadd.s32 %s11, 1
    %s19 = ssub.s32 %s11, %s18
    %p20 = scmp.eq.s32.totalorder %s19, 0
    %s22 = sadd.s32 %s21, 1
    %s23 = scalar_select %p20, %s21, %s22
    %p26 = pneg %p20
    %p27 = scmp.eq.s32.totalorder %s11, 1
    %p28 = por %p26, %p27
    %p29 = scmp.ne.s32.totalorder %s21, %s24
    %p30 = scmp.eq.s32.totalorder %s11, 0
    %p31 = por %p29, %p30
    %p32 = scmp.ne.s32.totalorder %s21, %s24
    %p33 = scmp.eq.s32.totalorder %s16, 1
    %p34 = por %p32, %p33
    %p35 = scmp.ne.s32.totalorder %s24, %s25
    %p36 = scmp.eq.s32.totalorder %s16, 0
    %p37 = por %p35, %p36
    %p38 = scmp.ne.s32.totalorder %s24, %s25
    %p39 = scmp.eq.s32.totalorder %s17, 1
    %p40 = por %p38, %p39
    %p42 = scmp.ne.s32.totalorder %s25, %s41
    %p43 = scmp.eq.s32.totalorder %s17, 0
    %p44 = por %p42, %p43
    %s46 = sadd.s32 %s45, 1
    %p49 = scmp.eq.s32.totalorder %s11, 1
    %p50 = scmp.ne.s32.totalorder %s45, %s47
    %p51 = scmp.eq.s32.totalorder %s11, 0
    %p52 = por %p50, %p51
    %p53 = scmp.ne.s32.totalorder %s45, %s47
    %p54 = scmp.eq.s32.totalorder %s16, 1
    %p55 = por %p53, %p54
    %p56 = scmp.ne.s32.totalorder %s47, %s48
    %p57 = scmp.eq.s32.totalorder %s16, 0
    %p58 = por %p56, %p57
    %p59 = scmp.ne.s32.totalorder %s47, %s48
    %p60 = scmp.eq.s32.totalorder %s17, 1
    %p61 = por %p59, %p60
    %p63 = scmp.ne.s32.totalorder %s48, %s62
    %p64 = scmp.eq.s32.totalorder %s17, 0
    %p65 = por %p63, %p64
    %s67 = sadd.s32 %s66, 1
    %p70 = scmp.eq.s32.totalorder %s11, 1
    %p71 = scmp.ne.s32.totalorder %s66, %s68
    %p72 = scmp.eq.s32.totalorder %s11, 0
    %p73 = por %p71, %p72
    %p74 = scmp.ne.s32.totalorder %s66, %s68
    %p75 = scmp.eq.s32.totalorder %s16, 1
    %p76 = por %p74, %p75
    %p77 = scmp.ne.s32.totalorder %s68, %s69
    %p78 = scmp.eq.s32.totalorder %s16, 0
    %p79 = por %p77, %p78
    %p80 = scmp.ne.s32.totalorder %s68, %s69
    %p81 = scmp.eq.s32.totalorder %s17, 1
    %p82 = por %p80, %p81
    %p84 = scmp.ne.s32.totalorder %s69, %s83
    %p85 = scmp.eq.s32.totalorder %s17, 0
    %p86 = por %p84, %p85
    %s88 = sadd.s32 %s87, 1
    %p91 = scmp.eq.s32.totalorder %s11, 1
    %p92 = scmp.ne.s32.totalorder %s87, %s89
    %p93 = scmp.eq.s32.totalorder %s11, 0
    %p94 = por %p92, %p93
    %p95 = scmp.ne.s32.totalorder %s87, %s89
    %p96 = scmp.eq.s32.totalorder %s16, 1
    %p97 = por %p95, %p96
    %p98 = scmp.ne.s32.totalorder %s89, %s90
    %p99 = scmp.eq.s32.totalorder %s16, 0
    %p100 = por %p98, %p99
    %p101 = scmp.ne.s32.totalorder %s89, %s90
    %p102 = scmp.eq.s32.totalorder %s17, 1
    %p103 = por %p101, %p102
    %p105 = scmp.ne.s32.totalorder %s90, %s104
    %p106 = scmp.eq.s32.totalorder %s17, 0
    %p107 = por %p105, %p106
    %s109 = sadd.s32 %s108, 1
    %p112 = scmp.eq.s32.totalorder %s11, 1
    %p113 = scmp.ne.s32.totalorder %s108, %s110
    %p114 = scmp.eq.s32.totalorder %s11, 0
    %p115 = por %p113, %p114
    %p116 = scmp.ne.s32.totalorder %s108, %s110
    %p117 = scmp.eq.s32.totalorder %s16, 1
    %p118 = por %p116, %p117
    %p119 = scmp.ne.s32.totalorder %s110, %s111
    %p120 = scmp.eq.s32.totalorder %s16, 0
    %p121 = por %p119, %p120
    %p122 = scmp.ne.s32.totalorder %s110, %s111
    %p123 = scmp.eq.s32.totalorder %s17, 1
    %p124 = por %p122, %p123
    %p126 = scmp.ne.s32.totalorder %s111, %s125
    %p127 = scmp.eq.s32.totalorder %s17, 0
    %p128 = por %p126, %p127
    %p129 = scmp.le.s32.totalorder 1, %s11
    %p130 = scmp.lt.s32.totalorder %s11, 3
    %p131 = pnand %p129, %p130
    %p132 = pneg %p131
    // Predicated region
    $region9: #{preact_block.4} parent=5 // pred_check
      _
    $region10: #{preact_block.4} parent=5 // pred_check_branch
      %134 = sbr.rel (%p131) target = $region12
    $region11: #{preact_block.4} parent=5 // pred_region
      %s135 = ssub.s32 %s11, 1
      // Predicated region
      $region13: #{preact_block.4} parent=11 // pred_check
        %p136 = pneg %p58
      $region14: #{preact_block.4} parent=11 // pred_check_branch
        %138 = sbr.rel (%p136) target = $region16
      $region15: #{preact_block.4} parent=11 // pred_region
        _
      $region16: #{preact_block.4} parent=11 // pred_fallthru
        _
      // Predicated region
      $region17: #{preact_block.4} parent=11 // pred_check
        %p139 = pneg %p79
      $region18: #{preact_block.4} parent=11 // pred_check_branch
        %141 = sbr.rel (%p139) target = $region20
      $region19: #{preact_block.4} parent=11 // pred_region
        _
      $region20: #{preact_block.4} parent=11 // pred_fallthru
        _
    $region12: #{preact_block.4} parent=5 // pred_fallthru
      _
    %p142 = scmp.lt.s32.totalorder %s11, 2
    // Predicated region
    $region21: #{preact_block.4} parent=5 // pred_check
      %p143 = pneg %p142
    $region22: #{preact_block.4} parent=5 // pred_check_branch
      %145 = sbr.rel (%p143) target = $region24
    $region23: #{preact_block.4} parent=5 // pred_region
      // Predicated region
      $region25: #{preact_block.4} parent=23 // pred_check
        %p146 = pneg %p31
      $region26: #{preact_block.4} parent=23 // pred_check_branch
        %148 = sbr.rel (%p146) target = $region28
      $region27: #{preact_block.4} parent=23 // pred_region
        %p149 = scmp.lt.s32.totalorder %s11, 1
        %s150 = scalar_select %p149, %s11, 1
        %s151 = smul.addr %s150, 54
        %s152 = smul.addr %s151, 8
        %s153 = scalar_lea.vmem %s0, %s152
      $region28: #{preact_block.4} parent=23 // pred_fallthru
        _
    $region24: #{preact_block.4} parent=5 // pred_fallthru
      _
    %p154 = scmp.le.s32.totalorder 1, %s11
    %p155 = scmp.lt.s32.totalorder %s11, 3
    %p156 = pnand %p154, %p155
    %p157 = pneg %p156
    // Predicated region
    $region29: #{preact_block.4} parent=5 // pred_check
      _
    $region30: #{preact_block.4} parent=5 // pred_check_branch
      %159 = sbr.rel (%p156) target = $region32
    $region31: #{preact_block.4} parent=5 // pred_region
      %s160 = ssub.s32 %s11, 1
      %p161 = scmp.lt.s32.totalorder %s16, 1
      %s162 = scalar_select %p161, %s16, 1
      %s163 = smul.addr %s162, 54
      %s164 = smul.addr %s163, 8
      %s165 = scalar_lea.vmem %s0, %s164
      %p166 = pneg %p37
      %p167 = pneg %p34
      %p168 = pneg %p58
      %p169 = pneg %p55
      %p170 = pneg %p79
      %p171 = pneg %p76
      %p172 = pneg %p100
      %p173 = pneg %p97
      %p174 = pneg %p121
      %p175 = pneg %p118
      %p176 = scmp.lt.s32.totalorder %s16, 1
      %s177 = scalar_select %p176, %s16, 1
      %s178 = smul.addr %s177, 54
      %s179 = smul.addr %s178, 8
      %s180 = scalar_lea.vmem %s0, %s179
      %p181 = scmp.eq.s32.totalorder %s16, 0
      // Predicated region
      $region33: #{preact_block.4} parent=31 // pred_check
        %p182 = pneg %p181
      $region34: #{preact_block.4} parent=31 // pred_check_branch
        %184 = sbr.rel (%p182) target = $region36
      $region35: #{preact_block.4} parent=31 // pred_region
        %185 = vst [vmem:[#allocation2] sm:$0x1] 0.0
        %186 = vst [vmem:[#allocation3] sm:$0x1] 0.0
      $region36: #{preact_block.4} parent=31 // pred_fallthru
        _
      %v187 = vld [vmem:[%s180] sm:$0xff]
      %v188 = vld [vmem:[%s180 + $0x8] sm:$0xff]
      %v189 = vld [vmem:[%s180 + $0x10] sm:$0x3]
      %v190 = vld [vmem:[%s180 + $0x18] sm:$0xff]
      %v191 = vld [vmem:[%s180 + $0x20] sm:$0xff]
      %v192 = vld [vmem:[%s180 + $0x28] sm:$0x3]
      %v193 = vld [vmem:[%s180 + $0x30] sm:$0xff]
      %v194 = vld [vmem:[%s180 + $0x38] sm:$0xff]
      %v195 = vld [vmem:[%s180 + $0x40] sm:$0x3]
      %v196 = vld [vmem:[%s180 + $0x48] sm:$0xff]
      %v197 = vld [vmem:[%s180 + $0x50] sm:$0xff]
      %v198 = vld [vmem:[%s180 + $0x58] sm:$0x3]
      %v199 = vld [vmem:[%s180 + $0x60] sm:$0xff]
      %v200 = vld [vmem:[%s180 + $0x68] sm:$0xff]
      %v201 = vld [vmem:[%s180 + $0x70] sm:$0x3]
      %v202 = vld [vmem:[%s180 + $0x78] sm:$0xff]
      %v203 = vld [vmem:[%s180 + $0x80] sm:$0xff]
      %v204 = vld [vmem:[%s180 + $0x88] sm:$0x3]
      %v205 = vld [vmem:[%s180 + $0x90] sm:$0xff]
      %v206 = vld [vmem:[%s180 + $0x98] sm:$0xff]
      %v207 = vld [vmem:[%s180 + $0xa0] sm:$0x3]
      %v208 = vld [vmem:[%s180 + $0xa8] sm:$0xff]
      %v209 = vld [vmem:[%s180 + $0xb0] sm:$0xff]
      %v210 = vld [vmem:[%s180 + $0xb8] sm:$0x3]
      %v211 = vld [vmem:[%s180 + $0xc0] sm:$0xff]
      %v212 = vld [vmem:[%s180 + $0xc8] sm:$0xff]
      %v213 = vld [vmem:[%s180 + $0xd0] sm:$0x3]
      %v214 = vld [vmem:[%s180 + $0xd8] sm:$0xff]
      %v215 = vld [vmem:[%s180 + $0xe0] sm:$0xff]
      %v216 = vld [vmem:[%s180 + $0xe8] sm:$0x3]
      %v217 = vld [vmem:[%s180 + $0xf0] sm:$0xff]
      %v218 = vld [vmem:[%s180 + $0xf8] sm:$0xff]
      %v219 = vld [vmem:[%s180 + $0x100] sm:$0x3]
      %v220 = vld [vmem:[%s180 + $0x108] sm:$0xff]
      %v221 = vld [vmem:[%s180 + $0x110] sm:$0xff]
      %v222 = vld [vmem:[%s180 + $0x118] sm:$0x3]
      %v223 = vld [vmem:[%s180 + $0x120] sm:$0xff]
      %v224 = vld [vmem:[%s180 + $0x128] sm:$0xff]
      %v225 = vld [vmem:[%s180 + $0x130] sm:$0x3]
      %v226 = vld [vmem:[%s180 + $0x138] sm:$0xff]
      %v227 = vld [vmem:[%s180 + $0x140] sm:$0xff]
      %v228 = vld [vmem:[%s180 + $0x148] sm:$0x3]
      %v229 = vld [vmem:[%s180 + $0x150] sm:$0xff]
      %v230 = vld [vmem:[%s180 + $0x158] sm:$0xff]
      %v231 = vld [vmem:[%s180 + $0x160] sm:$0x3]
      %v232 = vld [vmem:[%s180 + $0x168] sm:$0xff]
      %v233 = vld [vmem:[%s180 + $0x170] sm:$0xff]
      %v234 = vld [vmem:[%s180 + $0x178] sm:$0x3]
      %v235 = vld [vmem:[%s180 + $0x180] sm:$0xff]
      %v236 = vld [vmem:[%s180 + $0x188] sm:$0xff]
      %v237 = vld [vmem:[%s180 + $0x190] sm:$0x3]
      %v238 = vld [vmem:[%s180 + $0x198] sm:$0xff]
      %v239 = vld [vmem:[%s180 + $0x1a0] sm:$0xff]
      %v240 = vld [vmem:[%s180 + $0x1a8] sm:$0x3]
      %v241 = vld [vmem:[#allocation2] sm:$0x1]
      %v242 = vadd.f32 %v187, %v188
      %vm243 = vcmask 1041408
      %v244 = vsel %vm243, %v189, 0.0
      %v245 = vadd.f32 %v242, %v244
      %v246 = vadd.f32 %v245, %v190
      %v247 = vadd.f32 %v246, %v191
      %v248 = vsel %vm243, %v192, 0.0
      %v249 = vadd.f32 %v247, %v248
      %v250 = vadd.f32 %v249, %v193
      %v251 = vadd.f32 %v250, %v194
      %v252 = vsel %vm243, %v195, 0.0
      %v253 = vadd.f32 %v251, %v252
      %v254 = vadd.f32 %v253, %v196
      %v255 = vadd.f32 %v254, %v197
      %v256 = vsel %vm243, %v198, 0.0
      %v257 = vadd.f32 %v255, %v256
      %v258 = vadd.f32 %v257, %v199
      %v259 = vadd.f32 %v258, %v200
      %v260 = vsel %vm243, %v201, 0.0
      %v261 = vadd.f32 %v259, %v260
      %v262 = vadd.f32 %v261, %v202
      %v263 = vadd.f32 %v262, %v203
      %v264 = vsel %vm243, %v204, 0.0
      %v265 = vadd.f32 %v263, %v264
      %v266 = vadd.f32 %v265, %v205
      %v267 = vadd.f32 %v266, %v206
      %v268 = vsel %vm243, %v207, 0.0
      %v269 = vadd.f32 %v267, %v268
      %v270 = vadd.f32 %v269, %v208
      %v271 = vadd.f32 %v270, %v209
      %v272 = vsel %vm243, %v210, 0.0
      %v273 = vadd.f32 %v271, %v272
      %v274 = vadd.f32 %v273, %v211
      %v275 = vadd.f32 %v274, %v212
      %v276 = vsel %vm243, %v213, 0.0
      %v277 = vadd.f32 %v275, %v276
      %v278 = vadd.f32 %v277, %v214
      %v279 = vadd.f32 %v278, %v215
      %v280 = vsel %vm243, %v216, 0.0
      %v281 = vadd.f32 %v279, %v280
      %v282 = vadd.f32 %v281, %v217
      %v283 = vadd.f32 %v282, %v218
      %v284 = vsel %vm243, %v219, 0.0
      %v285 = vadd.f32 %v283, %v284
      %v286 = vadd.f32 %v285, %v220
      %v287 = vadd.f32 %v286, %v221
      %v288 = vsel %vm243, %v222, 0.0
      %v289 = vadd.f32 %v287, %v288
      %v290 = vadd.f32 %v289, %v223
      %v291 = vadd.f32 %v290, %v224
      %v292 = vsel %vm243, %v225, 0.0
      %v293 = vadd.f32 %v291, %v292
      %v294 = vadd.f32 %v293, %v226
      %v295 = vadd.f32 %v294, %v227
      %v296 = vsel %vm243, %v228, 0.0
      %v297 = vadd.f32 %v295, %v296
      %v298 = vadd.f32 %v297, %v229
      %v299 = vadd.f32 %v298, %v230
      %v300 = vsel %vm243, %v231, 0.0
      %v301 = vadd.f32 %v299, %v300
      %v302 = vadd.f32 %v301, %v232
      %v303 = vadd.f32 %v302, %v233
      %v304 = vsel %vm243, %v234, 0.0
      %v305 = vadd.f32 %v303, %v304
      %v306 = vadd.f32 %v305, %v235
      %v307 = vadd.f32 %v306, %v236
      %v308 = vsel %vm243, %v237, 0.0
      %v309 = vadd.f32 %v307, %v308
      %v310 = vadd.f32 %v309, %v238
      %v311 = vadd.f32 %v310, %v239
      %v312 = vsel %vm243, %v240, 0.0
      %v313 = vadd.f32 %v311, %v312
      %v314 = vrot.slane %v313, 4
      %v315 = vadd.f32 %v313, %v314
      %v316 = vrot.slane %v315, 2
      %v317 = vadd.f32 %v315, %v316
      %v318 = vrot.slane %v317, 1
      %v319 = vadd.f32 %v317, %v318
      %v320 = vadd.f32 %v241, %v319
      %321 = vst [vmem:[#allocation2] sm:$0x1] %v320
      %v322 = vld [vmem:[#allocation3] sm:$0x1]
      %v323 = vmul.f32 %v187, %v187
      %v324 = vmul.f32 %v188, %v188
      %v325 = vmul.f32 %v189, %v189
      %v326 = vmul.f32 %v190, %v190
      %v327 = vmul.f32 %v191, %v191
      %v328 = vmul.f32 %v192, %v192
      %v329 = vmul.f32 %v193, %v193
      %v330 = vmul.f32 %v194, %v194
      %v331 = vmul.f32 %v195, %v195
      %v332 = vmul.f32 %v196, %v196
      %v333 = vmul.f32 %v197, %v197
      %v334 = vmul.f32 %v198, %v198
      %v335 = vmul.f32 %v199, %v199
      %v336 = vmul.f32 %v200, %v200
      %v337 = vmul.f32 %v201, %v201
      %v338 = vmul.f32 %v202, %v202
      %v339 = vmul.f32 %v203, %v203
      %v340 = vmul.f32 %v204, %v204
      %v341 = vmul.f32 %v205, %v205
      %v342 = vmul.f32 %v206, %v206
      %v343 = vmul.f32 %v207, %v207
      %v344 = vmul.f32 %v208, %v208
      %v345 = vmul.f32 %v209, %v209
      %v346 = vmul.f32 %v210, %v210
      %v347 = vmul.f32 %v211, %v211
      %v348 = vmul.f32 %v212, %v212
      %v349 = vmul.f32 %v213, %v213
      %v350 = vmul.f32 %v214, %v214
      %v351 = vmul.f32 %v215, %v215
      %v352 = vmul.f32 %v216, %v216
      %v353 = vmul.f32 %v217, %v217
      %v354 = vmul.f32 %v218, %v218
      %v355 = vmul.f32 %v219, %v219
      %v356 = vmul.f32 %v220, %v220
      %v357 = vmul.f32 %v221, %v221
      %v358 = vmul.f32 %v222, %v222
      %v359 = vmul.f32 %v223, %v223
      %v360 = vmul.f32 %v224, %v224
      %v361 = vmul.f32 %v225, %v225
      %v362 = vmul.f32 %v226, %v226
      %v363 = vmul.f32 %v227, %v227
      %v364 = vmul.f32 %v228, %v228
      %v365 = vmul.f32 %v229, %v229
      %v366 = vmul.f32 %v230, %v230
      %v367 = vmul.f32 %v231, %v231
      %v368 = vmul.f32 %v232, %v232
      %v369 = vmul.f32 %v233, %v233
      %v370 = vmul.f32 %v234, %v234
      %v371 = vmul.f32 %v235, %v235
      %v372 = vmul.f32 %v236, %v236
      %v373 = vmul.f32 %v237, %v237
      %v374 = vmul.f32 %v238, %v238
      %v375 = vmul.f32 %v239, %v239
      %v376 = vmul.f32 %v240, %v240
      %v377 = vadd.f32 %v323, %v324
      %v378 = vsel %vm243, %v325, 0.0
      %v379 = vadd.f32 %v377, %v378
      %v380 = vadd.f32 %v379, %v326
      %v381 = vadd.f32 %v380, %v327
      %v382 = vsel %vm243, %v328, 0.0
      %v383 = vadd.f32 %v381, %v382
      %v384 = vadd.f32 %v383, %v329
      %v385 = vadd.f32 %v384, %v330
      %v386 = vsel %vm243, %v331, 0.0
      %v387 = vadd.f32 %v385, %v386
      %v388 = vadd.f32 %v387, %v332
      %v389 = vadd.f32 %v388, %v333
      %v390 = vsel %vm243, %v334, 0.0
      %v391 = vadd.f32 %v389, %v390
      %v392 = vadd.f32 %v391, %v335
      %v393 = vadd.f32 %v392, %v336
      %v394 = vsel %vm243, %v337, 0.0
      %v395 = vadd.f32 %v393, %v394
      %v396 = vadd.f32 %v395, %v338
      %v397 = vadd.f32 %v396, %v339
      %v398 = vsel %vm243, %v340, 0.0
      %v399 = vadd.f32 %v397, %v398
      %v400 = vadd.f32 %v399, %v341
      %v401 = vadd.f32 %v400, %v342
      %v402 = vsel %vm243, %v343, 0.0
      %v403 = vadd.f32 %v401, %v402
      %v404 = vadd.f32 %v403, %v344
      %v405 = vadd.f32 %v404, %v345
      %v406 = vsel %vm243, %v346, 0.0
      %v407 = vadd.f32 %v405, %v406
      %v408 = vadd.f32 %v407, %v347
      %v409 = vadd.f32 %v408, %v348
      %v410 = vsel %vm243, %v349, 0.0
      %v411 = vadd.f32 %v409, %v410
      %v412 = vadd.f32 %v411, %v350
      %v413 = vadd.f32 %v412, %v351
      %v414 = vsel %vm243, %v352, 0.0
      %v415 = vadd.f32 %v413, %v414
      %v416 = vadd.f32 %v415, %v353
      %v417 = vadd.f32 %v416, %v354
      %v418 = vsel %vm243, %v355, 0.0
      %v419 = vadd.f32 %v417, %v418
      %v420 = vadd.f32 %v419, %v356
      %v421 = vadd.f32 %v420, %v357
      %v422 = vsel %vm243, %v358, 0.0
      %v423 = vadd.f32 %v421, %v422
      %v424 = vadd.f32 %v423, %v359
      %v425 = vadd.f32 %v424, %v360
      %v426 = vsel %vm243, %v361, 0.0
      %v427 = vadd.f32 %v425, %v426
      %v428 = vadd.f32 %v427, %v362
      %v429 = vadd.f32 %v428, %v363
      %v430 = vsel %vm243, %v364, 0.0
      %v431 = vadd.f32 %v429, %v430
      %v432 = vadd.f32 %v431, %v365
      %v433 = vadd.f32 %v432, %v366
      %v434 = vsel %vm243, %v367, 0.0
      %v435 = vadd.f32 %v433, %v434
      %v436 = vadd.f32 %v435, %v368
      %v437 = vadd.f32 %v436, %v369
      %v438 = vsel %vm243, %v370, 0.0
      %v439 = vadd.f32 %v437, %v438
      %v440 = vadd.f32 %v439, %v371
      %v441 = vadd.f32 %v440, %v372
      %v442 = vsel %vm243, %v373, 0.0
      %v443 = vadd.f32 %v441, %v442
      %v444 = vadd.f32 %v443, %v374
      %v445 = vadd.f32 %v444, %v375
      %v446 = vsel %vm243, %v376, 0.0
      %v447 = vadd.f32 %v445, %v446
      %v448 = vrot.slane %v447, 4
      %v449 = vadd.f32 %v447, %v448
      %v450 = vrot.slane %v449, 2
      %v451 = vadd.f32 %v449, %v450
      %v452 = vrot.slane %v451, 1
      %v453 = vadd.f32 %v451, %v452
      %v454 = vadd.f32 %v322, %v453
      %455 = vst [vmem:[#allocation3] sm:$0x1] %v454
      %p456 = scmp.eq.s32.totalorder %s16, 1
      // Predicated region
      $region37: #{preact_block.4} parent=31 // pred_check
        %p457 = pneg %p456
      $region38: #{preact_block.4} parent=31 // pred_check_branch
        %459 = sbr.rel (%p457) target = $region40
      $region39: #{preact_block.4} parent=31 // pred_region
        %v460 = vld [vmem:[#allocation2] sm:$0x1]
        %v461 = vmul.f32 %v460, 0.001953125
        %v462 = vld [vmem:[#allocation3] sm:$0x1]
        %v463 = vmul.f32 %v462, 0.001953125
        %v464 = vmul.f32 %v461, %v461
        %v465 = vsub.f32 %v463, %v464
        %v466 = vld [vmem:[%s1] sm:$0x1]
        %v467 = vadd.f32 %v465, 1e-05
        %v468 = vrsqrt.pop %v467
        %v469 = vmul.f32 %v468, %v467
        %v470 = vmul.f32 %v469, %v468
        %v471 = vmul.f32 0.5, %v470
        %v472 = vsub.f32 1.5, %v471
        %v473 = vmul.f32 %v468, %v472
        %vm474 = vweird.f32 %v467
        %vm475 = vweird.f32 %v468
        %vm476 = vmor %vm474, %vm475
        %v477 = vsel %vm476, %v468, %v473
        %v478 = vmul.f32 %v466, %v477
        %479 = vst [vmem:[%s3] sm:$0x1] %v478
        %v480 = vld [vmem:[%s2] sm:$0x1]
        %v481 = vmul.f32 %v461, %v478
        %v482 = vsub.f32 %v480, %v481
        %483 = vst [vmem:[%s4] sm:$0x1] %v482
      $region40: #{preact_block.4} parent=31 // pred_fallthru
        _
      // Predicated region
      $region41: #{preact_block.4} parent=31 // pred_check
        %p484 = pneg %p97
      $region42: #{preact_block.4} parent=31 // pred_check_branch
        %486 = sbr.rel (%p484) target = $region44
      $region43: #{preact_block.4} parent=31 // pred_region
        _
      $region44: #{preact_block.4} parent=31 // pred_fallthru
        _
      // Predicated region
      $region45: #{preact_block.4} parent=31 // pred_check
        %p487 = pneg %p118
      $region46: #{preact_block.4} parent=31 // pred_check_branch
        %489 = sbr.rel (%p487) target = $region48
      $region47: #{preact_block.4} parent=31 // pred_region
        _
      $region48: #{preact_block.4} parent=31 // pred_fallthru
        _
      // Predicated region
      $region49: #{preact_block.4} parent=31 // pred_check
        %p490 = pneg %p97
      $region50: #{preact_block.4} parent=31 // pred_check_branch
        %492 = sbr.rel (%p490) target = $region52
      $region51: #{preact_block.4} parent=31 // pred_region
        _
      $region52: #{preact_block.4} parent=31 // pred_fallthru
        _
      // Predicated region
      $region53: #{preact_block.4} parent=31 // pred_check
        %p493 = pneg %p118
      $region54: #{preact_block.4} parent=31 // pred_check_branch
        %495 = sbr.rel (%p493) target = $region56
      $region55: #{preact_block.4} parent=31 // pred_region
        _
      $region56: #{preact_block.4} parent=31 // pred_fallthru
        _
    $region32: #{preact_block.4} parent=5 // pred_fallthru
      _
    %p496 = scmp.le.s32.totalorder 2, %s11
    // Predicated region
    $region57: #{preact_block.4} parent=5 // pred_check
      %p497 = pneg %p496
    $region58: #{preact_block.4} parent=5 // pred_check_branch
      %499 = sbr.rel (%p497) target = $region60
    $region59: #{preact_block.4} parent=5 // pred_region
      %s500 = ssub.s32 %s11, 2
    $region60: #{preact_block.4} parent=5 // pred_fallthru
      _
  $region6: #{preact_block.4} parent=0 // loop_footer
    %s15 = sadd.s32 1, %s11
  $region7: #{preact_block.4} parent=0 // loop_footer_branch
    %10 = sbr.rel target = $region3
  $region8: #{preact_block.4} parent=0 // loop_exit
    _

// kernel: preact_block.5
$region0: #{preact_block.5}
  #allocation0 [shape = 'u32[]', space=smem, size = 0x4, offset = 0x4, fixed_abs, tag = 'smem constant byte address 0x4 - core index']
  #allocation1 [shape = 'u32[72,128]{1,0:T(1,128)}', space=vmem, size = 0x9000, scoped, tag = 'internal scratch']
  %s0 = inlined_call_operand.vmem [shape: f32[2,18,18,128], index: 0, kind: input, shape index: {}]
  %s1 = inlined_call_operand.vmem [shape: f32[1,128], index: 1, kind: input, shape index: {}]
  %s2 = inlined_call_operand.vmem [shape: f32[1,128], index: 2, kind: input, shape index: {}]
  %s3 = inlined_call_operand.vmem [shape: bf16[1152,128], index: 3, kind: input, shape index: {}]
  %s4 = inlined_call_operand.vmem [shape: bf16[128,128], index: 4, kind: input, shape index: {}]
  %s5 = inlined_call_operand.vmem [shape: f32[2,16,16,128], index: 5, kind: output, shape index: {0}]
  %s6 = inlined_call_operand.vmem [shape: f32[2,16,16,128], index: 6, kind: output, shape index: {1}]
  %7 = xla_tuple %s5, %s6
  %s8 = sld [smem:[#allocation0]]
  $region61: #{preact_block.5} parent=0
    _
  %s10 = ssub.s32 1, %s8
  %s11 = scalar_select 0, %s10, %s8
  loop: start=0, step=1, limit=4
  $region2: #{preact_block.5} parent=0 // loop_pre_header
    _
  $region3: #{preact_block.5} parent=0 // loop_header
    %s13 = sphi 0, %s17
    %p14 = scmp.ge.s32.totalorder %s13, 4
    %s23 = sphi 0, %s25
    %s26 = sphi 0, %s23
    %s27 = sphi 0, %s26
    %s43 = sphi 0, %s27
    %s47 = sphi 0, %s47
    %s49 = sphi 0, %s47
    %s50 = sphi 0, %s49
    %s64 = sphi 0, %s50
    %s68 = sphi 0, %s68
    %s70 = sphi 0, %s68
    %s71 = sphi 0, %s70
    %s85 = sphi 0, %s71
    %s89 = sphi 0, %s89
    %s91 = sphi 0, %s89
    %s92 = sphi 0, %s91
    %s106 = sphi 0, %s92
    %s110 = sphi 0, %s110
    %s112 = sphi 0, %s110
    %s113 = sphi 0, %s112
    %s127 = sphi 0, %s113
    %s133 = sphi 0, %s135
    %s136 = sphi 0, %s133
    %s137 = sphi 0, %s136
    %s153 = sphi 0, %s137
    %s159 = sphi 0, %s161
    %s162 = sphi 0, %s159
    %s163 = sphi 0, %s162
    %s179 = sphi 0, %s163
  $region4: #{preact_block.5} parent=0 // loop_header_branch
    %16 = sbr.rel (%p14) target = $region8
  $region5: #{preact_block.5} parent=0 // loop_body
    %s18 = ssub.s32 %s13, 1
    %s19 = ssub.s32 %s13, 2
    %s20 = sadd.s32 %s13, 1
    %s21 = ssub.s32 %s13, %s20
    %p22 = scmp.eq.s32.totalorder %s21, 0
    %s24 = sadd.s32 %s23, 1
    %s25 = scalar_select %p22, %s23, %s24
    %p28 = pneg %p22
    %p29 = scmp.eq.s32.totalorder %s13, 1
    %p30 = por %p28, %p29
    %p31 = scmp.ne.s32.totalorder %s23, %s26
    %p32 = scmp.eq.s32.totalorder %s13, 0
    %p33 = por %p31, %p32
    %p34 = scmp.ne.s32.totalorder %s23, %s26
    %p35 = scmp.eq.s32.totalorder %s18, 1
    %p36 = por %p34, %p35
    %p37 = scmp.ne.s32.totalorder %s26, %s27
    %p38 = scmp.eq.s32.totalorder %s18, 0
    %p39 = por %p37, %p38
    %p40 = scmp.ne.s32.totalorder %s26, %s27
    %p41 = scmp.eq.s32.totalorder %s19, 1
    %p42 = por %p40, %p41
    %p44 = scmp.ne.s32.totalorder %s27, %s43
    %p45 = scmp.eq.s32.totalorder %s19, 0
    %p46 = por %p44, %p45
    %s48 = sadd.s32 %s47, 1
    %p51 = scmp.eq.s32.totalorder %s13, 1
    %p52 = scmp.ne.s32.totalorder %s47, %s49
    %p53 = scmp.eq.s32.totalorder %s13, 0
    %p54 = por %p52, %p53
    %p55 = scmp.ne.s32.totalorder %s47, %s49
    %p56 = scmp.eq.s32.totalorder %s18, 1
    %p57 = por %p55, %p56
    %p58 = scmp.ne.s32.totalorder %s49, %s50
    %p59 = scmp.eq.s32.totalorder %s18, 0
    %p60 = por %p58, %p59
    %p61 = scmp.ne.s32.totalorder %s49, %s50
    %p62 = scmp.eq.s32.totalorder %s19, 1
    %p63 = por %p61, %p62
    %p65 = scmp.ne.s32.totalorder %s50, %s64
    %p66 = scmp.eq.s32.totalorder %s19, 0
    %p67 = por %p65, %p66
    %s69 = sadd.s32 %s68, 1
    %p72 = scmp.eq.s32.totalorder %s13, 1
    %p73 = scmp.ne.s32.totalorder %s68, %s70
    %p74 = scmp.eq.s32.totalorder %s13, 0
    %p75 = por %p73, %p74
    %p76 = scmp.ne.s32.totalorder %s68, %s70
    %p77 = scmp.eq.s32.totalorder %s18, 1
    %p78 = por %p76, %p77
    %p79 = scmp.ne.s32.totalorder %s70, %s71
    %p80 = scmp.eq.s32.totalorder %s18, 0
    %p81 = por %p79, %p80
    %p82 = scmp.ne.s32.totalorder %s70, %s71
    %p83 = scmp.eq.s32.totalorder %s19, 1
    %p84 = por %p82, %p83
    %p86 = scmp.ne.s32.totalorder %s71, %s85
    %p87 = scmp.eq.s32.totalorder %s19, 0
    %p88 = por %p86, %p87
    %s90 = sadd.s32 %s89, 1
    %p93 = scmp.eq.s32.totalorder %s13, 1
    %p94 = scmp.ne.s32.totalorder %s89, %s91
    %p95 = scmp.eq.s32.totalorder %s13, 0
    %p96 = por %p94, %p95
    %p97 = scmp.ne.s32.totalorder %s89, %s91
    %p98 = scmp.eq.s32.totalorder %s18, 1
    %p99 = por %p97, %p98
    %p100 = scmp.ne.s32.totalorder %s91, %s92
    %p101 = scmp.eq.s32.totalorder %s18, 0
    %p102 = por %p100, %p101
    %p103 = scmp.ne.s32.totalorder %s91, %s92
    %p104 = scmp.eq.s32.totalorder %s19, 1
    %p105 = por %p103, %p104
    %p107 = scmp.ne.s32.totalorder %s92, %s106
    %p108 = scmp.eq.s32.totalorder %s19, 0
    %p109 = por %p107, %p108
    %s111 = sadd.s32 %s110, 1
    %p114 = scmp.eq.s32.totalorder %s13, 1
    %p115 = scmp.ne.s32.totalorder %s110, %s112
    %p116 = scmp.eq.s32.totalorder %s13, 0
    %p117 = por %p115, %p116
    %p118 = scmp.ne.s32.totalorder %s110, %s112
    %p119 = scmp.eq.s32.totalorder %s18, 1
    %p120 = por %p118, %p119
    %p121 = scmp.ne.s32.totalorder %s112, %s113
    %p122 = scmp.eq.s32.totalorder %s18, 0
    %p123 = por %p121, %p122
    %p124 = scmp.ne.s32.totalorder %s112, %s113
    %p125 = scmp.eq.s32.totalorder %s19, 1
    %p126 = por %p124, %p125
    %p128 = scmp.ne.s32.totalorder %s113, %s127
    %p129 = scmp.eq.s32.totalorder %s19, 0
    %p130 = por %p128, %p129
    %s131 = ssub.s32 %s13, %s20
    %p132 = scmp.eq.s32.totalorder %s131, 0
    %s134 = sadd.s32 %s133, 1
    %s135 = scalar_select %p132, %s133, %s134
    %p138 = pneg %p132
    %p139 = scmp.eq.s32.totalorder %s13, 1
    %p140 = por %p138, %p139
    %p141 = scmp.ne.s32.totalorder %s133, %s136
    %p142 = scmp.eq.s32.totalorder %s13, 0
    %p143 = por %p141, %p142
    %p144 = scmp.ne.s32.totalorder %s133, %s136
    %p145 = scmp.eq.s32.totalorder %s18, 1
    %p146 = por %p144, %p145
    %p147 = scmp.ne.s32.totalorder %s136, %s137
    %p148 = scmp.eq.s32.totalorder %s18, 0
    %p149 = por %p147, %p148
    %p150 = scmp.ne.s32.totalorder %s136, %s137
    %p151 = scmp.eq.s32.totalorder %s19, 1
    %p152 = por %p150, %p151
    %p154 = scmp.ne.s32.totalorder %s137, %s153
    %p155 = scmp.eq.s32.totalorder %s19, 0
    %p156 = por %p154, %p155
    %s157 = ssub.s32 %s13, %s20
    %p158 = scmp.eq.s32.totalorder %s157, 0
    %s160 = sadd.s32 %s159, 1
    %s161 = scalar_select %p158, %s159, %s160
    %p164 = pneg %p158
    %p165 = scmp.eq.s32.totalorder %s13, 1
    %p166 = por %p164, %p165
    %p167 = scmp.ne.s32.totalorder %s159, %s162
    %p168 = scmp.eq.s32.totalorder %s13, 0
    %p169 = por %p167, %p168
    %p170 = scmp.ne.s32.totalorder %s159, %s162
    %p171 = scmp.eq.s32.totalorder %s18, 1
    %p172 = por %p170, %p171
    %p173 = scmp.ne.s32.totalorder %s162, %s163
    %p174 = scmp.eq.s32.totalorder %s18, 0
    %p175 = por %p173, %p174
    %p176 = scmp.ne.s32.totalorder %s162, %s163
    %p177 = scmp.eq.s32.totalorder %s19, 1
    %p178 = por %p176, %p177
    %p180 = scmp.ne.s32.totalorder %s163, %s179
    %p181 = scmp.eq.s32.totalorder %s19, 0
    %p182 = por %p180, %p181
    %p183 = scmp.le.s32.totalorder 1, %s13
    %p184 = scmp.lt.s32.totalorder %s13, 3
    %p185 = pnand %p183, %p184
    %p186 = pneg %p185
    // Predicated region
    $region9: #{preact_block.5} parent=5 // pred_check
      _
    $region10: #{preact_block.5} parent=5 // pred_check_branch
      %188 = sbr.rel (%p185) target = $region12
    $region11: #{preact_block.5} parent=5 // pred_region
      %s189 = ssub.s32 %s13, 1
      // Predicated region
      $region13: #{preact_block.5} parent=11 // pred_check
        %p190 = pneg %p60
      $region14: #{preact_block.5} parent=11 // pred_check_branch
        %192 = sbr.rel (%p190) target = $region16
      $region15: #{preact_block.5} parent=11 // pred_region
        _
      $region16: #{preact_block.5} parent=11 // pred_fallthru
        _
      // Predicated region
      $region17: #{preact_block.5} parent=11 // pred_check
        %p193 = pneg %p81
      $region18: #{preact_block.5} parent=11 // pred_check_branch
        %195 = sbr.rel (%p193) target = $region20
      $region19: #{preact_block.5} parent=11 // pred_region
        _
      $region20: #{preact_block.5} parent=11 // pred_fallthru
        _
      // Predicated region
      $region21: #{preact_block.5} parent=11 // pred_check
        %p196 = pneg %p102
      $region22: #{preact_block.5} parent=11 // pred_check_branch
        %198 = sbr.rel (%p196) target = $region24
      $region23: #{preact_block.5} parent=11 // pred_region
        _
      $region24: #{preact_block.5} parent=11 // pred_fallthru
        _
      // Predicated region
      $region25: #{preact_block.5} parent=11 // pred_check
        %p199 = pneg %p123
      $region26: #{preact_block.5} parent=11 // pred_check_branch
        %201 = sbr.rel (%p199) target = $region28
      $region27: #{preact_block.5} parent=11 // pred_region
        _
      $region28: #{preact_block.5} parent=11 // pred_fallthru
        _
    $region12: #{preact_block.5} parent=5 // pred_fallthru
      _
    %p202 = scmp.lt.s32.totalorder %s13, 2
    // Predicated region
    $region29: #{preact_block.5} parent=5 // pred_check
      %p203 = pneg %p202
    $region30: #{preact_block.5} parent=5 // pred_check_branch
      %205 = sbr.rel (%p203) target = $region32
    $region31: #{preact_block.5} parent=5 // pred_region
      // Predicated region
      $region33: #{preact_block.5} parent=31 // pred_check
        %p206 = pneg %p33
      $region34: #{preact_block.5} parent=31 // pred_check_branch
        %208 = sbr.rel (%p206) target = $region36
      $region35: #{preact_block.5} parent=31 // pred_region
        %p209 = scmp.lt.s32.totalorder %s13, 1
        %s210 = scalar_select %p209, %s13, 1
        %s211 = smul.addr %s210, 54
        %s212 = smul.addr %s211, 8
        %s213 = scalar_lea.vmem %s0, %s212
      $region36: #{preact_block.5} parent=31 // pred_fallthru
        _
    $region32: #{preact_block.5} parent=5 // pred_fallthru
      _
    %p214 = scmp.le.s32.totalorder 1, %s13
    %p215 = scmp.lt.s32.totalorder %s13, 3
    %p216 = pnand %p214, %p215
    %p217 = pneg %p216
    // Predicated region
    $region37: #{preact_block.5} parent=5 // pred_check
      _
    $region38: #{preact_block.5} parent=5 // pred_check_branch
      %219 = sbr.rel (%p216) target = $region40
    $region39: #{preact_block.5} parent=5 // pred_region
      %s220 = ssub.s32 %s13, 1
      %p221 = scmp.lt.s32.totalorder %s18, 1
      %s222 = scalar_select %p221, %s18, 1
      %s223 = smul.addr %s222, 54
      %s224 = smul.addr %s223, 8
      %s225 = scalar_lea.vmem %s0, %s224
      %p226 = pneg %p39
      %p227 = pneg %p36
      %p228 = pneg %p60
      %p229 = pneg %p57
      %p230 = pneg %p81
      %p231 = pneg %p78
      %p232 = pneg %p102
      %p233 = pneg %p99
      %p234 = pneg %p123
      %p235 = pneg %p120
      %p236 = pneg %p149
      %p237 = pneg %p146
      %p238 = scmp.lt.s32.totalorder %s18, 1
      %s239 = scalar_select %p238, %s18, 1
      %s240 = smul.addr %s239, 32
      %s241 = smul.addr %s240, 8
      %s242 = scalar_lea.vmem %s5, %s241
      %p243 = pneg %p175
      %p244 = pneg %p172
      %p245 = scmp.lt.s32.totalorder %s18, 1
      %s246 = scalar_select %p245, %s18, 1
      %s247 = smul.addr %s246, 32
      %s248 = smul.addr %s247, 8
      %s249 = scalar_lea.vmem %s6, %s248
      %p250 = scmp.lt.s32.totalorder %s18, 1
      %s251 = scalar_select %p250, %s18, 1
      %s252 = smul.addr %s251, 54
      %s253 = smul.addr %s252, 8
      %s254 = scalar_lea.vmem %s0, %s253
      %p255 = scmp.lt.s32.totalorder %s18, 1
      %s256 = scalar_select %p255, %s18, 1
      %s257 = smul.addr %s256, 32
      %s258 = smul.addr %s257, 8
      %s259 = scalar_lea.vmem %s5, %s258
      %p260 = scmp.lt.s32.totalorder %s18, 1
      %s261 = scalar_select %p260, %s18, 1
      %s262 = smul.addr %s261, 32
      %s263 = smul.addr %s262, 8
      %s264 = scalar_lea.vmem %s6, %s263
      %v265 = vld [vmem:[%s254] sm:$0xff]
      %v266 = vld [vmem:[%s254 + $0x8] sm:$0xff]
      %v267 = vld [vmem:[%s254 + $0x10] sm:$0x3]
      %v268 = vld [vmem:[%s254 + $0x18] sm:$0xff]
      %v269 = vld [vmem:[%s254 + $0x20] sm:$0xff]
      %v270 = vld [vmem:[%s254 + $0x28] sm:$0x3]
      %v271 = vld [vmem:[%s254 + $0x30] sm:$0xff]
      %v272 = vld [vmem:[%s254 + $0x38] sm:$0xff]
      %v273 = vld [vmem:[%s254 + $0x40] sm:$0x3]
      %v274 = vld [vmem:[%s254 + $0x48] sm:$0xff]
      %v275 = vld [vmem:[%s254 + $0x50] sm:$0xff]
      %v276 = vld [vmem:[%s254 + $0x58] sm:$0x3]
      %v277 = vld [vmem:[%s254 + $0x60] sm:$0xff]
      %v278 = vld [vmem:[%s254 + $0x68] sm:$0xff]
      %v279 = vld [vmem:[%s254 + $0x70] sm:$0x3]
      %v280 = vld [vmem:[%s254 + $0x78] sm:$0xff]
      %v281 = vld [vmem:[%s254 + $0x80] sm:$0xff]
      %v282 = vld [vmem:[%s254 + $0x88] sm:$0x3]
      %v283 = vld [vmem:[%s254 + $0x90] sm:$0xff]
      %v284 = vld [vmem:[%s254 + $0x98] sm:$0xff]
      %v285 = vld [vmem:[%s254 + $0xa0] sm:$0x3]
      %v286 = vld [vmem:[%s254 + $0xa8] sm:$0xff]
      %v287 = vld [vmem:[%s254 + $0xb0] sm:$0xff]
      %v288 = vld [vmem:[%s254 + $0xb8] sm:$0x3]
      %v289 = vld [vmem:[%s254 + $0xc0] sm:$0xff]
      %v290 = vld [vmem:[%s254 + $0xc8] sm:$0xff]
      %v291 = vld [vmem:[%s254 + $0xd0] sm:$0x3]
      %v292 = vld [vmem:[%s254 + $0xd8] sm:$0xff]
      %v293 = vld [vmem:[%s254 + $0xe0] sm:$0xff]
      %v294 = vld [vmem:[%s254 + $0xe8] sm:$0x3]
      %v295 = vld [vmem:[%s254 + $0xf0] sm:$0xff]
      %v296 = vld [vmem:[%s254 + $0xf8] sm:$0xff]
      %v297 = vld [vmem:[%s254 + $0x100] sm:$0x3]
      %v298 = vld [vmem:[%s254 + $0x108] sm:$0xff]
      %v299 = vld [vmem:[%s254 + $0x110] sm:$0xff]
      %v300 = vld [vmem:[%s254 + $0x118] sm:$0x3]
      %v301 = vld [vmem:[%s254 + $0x120] sm:$0xff]
      %v302 = vld [vmem:[%s254 + $0x128] sm:$0xff]
      %v303 = vld [vmem:[%s254 + $0x130] sm:$0x3]
      %v304 = vld [vmem:[%s254 + $0x138] sm:$0xff]
      %v305 = vld [vmem:[%s254 + $0x140] sm:$0xff]
      %v306 = vld [vmem:[%s254 + $0x148] sm:$0x3]
      %v307 = vld [vmem:[%s254 + $0x150] sm:$0xff]
      %v308 = vld [vmem:[%s254 + $0x158] sm:$0xff]
      %v309 = vld [vmem:[%s254 + $0x160] sm:$0x3]
      %v310 = vld [vmem:[%s254 + $0x168] sm:$0xff]
      %v311 = vld [vmem:[%s254 + $0x170] sm:$0xff]
      %v312 = vld [vmem:[%s254 + $0x178] sm:$0x3]
      %v313 = vld [vmem:[%s254 + $0x180] sm:$0xff]
      %v314 = vld [vmem:[%s254 + $0x188] sm:$0xff]
      %v315 = vld [vmem:[%s254 + $0x190] sm:$0x3]
      %v316 = vld [vmem:[%s254 + $0x198] sm:$0xff]
      %v317 = vld [vmem:[%s254 + $0x1a0] sm:$0xff]
      %v318 = vld [vmem:[%s254 + $0x1a8] sm:$0x3]
      %v319 = vld [vmem:[%s1] sm:$0x1]
      %v321 = vperm.slane %v319, 0
      %v323 = vmul.f32 %v265, %v321
      %v324 = vmul.f32 %v266, %v321
      %v325 = vmul.f32 %v267, %v321
      %v326 = vmul.f32 %v268, %v321
      %v327 = vmul.f32 %v269, %v321
      %v328 = vmul.f32 %v270, %v321
      %v329 = vmul.f32 %v271, %v321
      %v330 = vmul.f32 %v272, %v321
      %v331 = vmul.f32 %v273, %v321
      %v332 = vmul.f32 %v274, %v321
      %v333 = vmul.f32 %v275, %v321
      %v334 = vmul.f32 %v276, %v321
      %v335 = vmul.f32 %v277, %v321
      %v336 = vmul.f32 %v278, %v321
      %v337 = vmul.f32 %v279, %v321
      %v338 = vmul.f32 %v280, %v321
      %v339 = vmul.f32 %v281, %v321
      %v340 = vmul.f32 %v282, %v321
      %v341 = vmul.f32 %v283, %v321
      %v342 = vmul.f32 %v284, %v321
      %v343 = vmul.f32 %v285, %v321
      %v344 = vmul.f32 %v286, %v321
      %v345 = vmul.f32 %v287, %v321
      %v346 = vmul.f32 %v288, %v321
      %v347 = vmul.f32 %v289, %v321
      %v348 = vmul.f32 %v290, %v321
      %v349 = vmul.f32 %v291, %v321
      %v350 = vmul.f32 %v292, %v321
      %v351 = vmul.f32 %v293, %v321
      %v352 = vmul.f32 %v294, %v321
      %v353 = vmul.f32 %v295, %v321
      %v354 = vmul.f32 %v296, %v321
      %v355 = vmul.f32 %v297, %v321
      %v356 = vmul.f32 %v298, %v321
      %v357 = vmul.f32 %v299, %v321
      %v358 = vmul.f32 %v300, %v321
      %v359 = vmul.f32 %v301, %v321
      %v360 = vmul.f32 %v302, %v321
      %v361 = vmul.f32 %v303, %v321
      %v362 = vmul.f32 %v304, %v321
      %v363 = vmul.f32 %v305, %v321
      %v364 = vmul.f32 %v306, %v321
      %v365 = vmul.f32 %v307, %v321
      %v366 = vmul.f32 %v308, %v321
      %v367 = vmul.f32 %v309, %v321
      %v368 = vmul.f32 %v310, %v321
      %v369 = vmul.f32 %v311, %v321
      %v370 = vmul.f32 %v312, %v321
      %v371 = vmul.f32 %v313, %v321
      %v372 = vmul.f32 %v314, %v321
      %v373 = vmul.f32 %v315, %v321
      %v374 = vmul.f32 %v316, %v321
      %v375 = vmul.f32 %v317, %v321
      %v376 = vmul.f32 %v318, %v321
      %v377 = vld [vmem:[%s2] sm:$0x1]
      %v379 = vperm.slane %v377, 0
      %v381 = vadd.f32 %v323, %v379
      %v382 = vadd.f32 %v324, %v379
      %v383 = vadd.f32 %v325, %v379
      %v384 = vadd.f32 %v326, %v379
      %v385 = vadd.f32 %v327, %v379
      %v386 = vadd.f32 %v328, %v379
      %v387 = vadd.f32 %v329, %v379
      %v388 = vadd.f32 %v330, %v379
      %v389 = vadd.f32 %v331, %v379
      %v390 = vadd.f32 %v332, %v379
      %v391 = vadd.f32 %v333, %v379
      %v392 = vadd.f32 %v334, %v379
      %v393 = vadd.f32 %v335, %v379
      %v394 = vadd.f32 %v336, %v379
      %v395 = vadd.f32 %v337, %v379
      %v396 = vadd.f32 %v338, %v379
      %v397 = vadd.f32 %v339, %v379
      %v398 = vadd.f32 %v340, %v379
      %v399 = vadd.f32 %v341, %v379
      %v400 = vadd.f32 %v342, %v379
      %v401 = vadd.f32 %v343, %v379
      %v402 = vadd.f32 %v344, %v379
      %v403 = vadd.f32 %v345, %v379
      %v404 = vadd.f32 %v346, %v379
      %v405 = vadd.f32 %v347, %v379
      %v406 = vadd.f32 %v348, %v379
      %v407 = vadd.f32 %v349, %v379
      %v408 = vadd.f32 %v350, %v379
      %v409 = vadd.f32 %v351, %v379
      %v410 = vadd.f32 %v352, %v379
      %v411 = vadd.f32 %v353, %v379
      %v412 = vadd.f32 %v354, %v379
      %v413 = vadd.f32 %v355, %v379
      %v414 = vadd.f32 %v356, %v379
      %v415 = vadd.f32 %v357, %v379
      %v416 = vadd.f32 %v358, %v379
      %v417 = vadd.f32 %v359, %v379
      %v418 = vadd.f32 %v360, %v379
      %v419 = vadd.f32 %v361, %v379
      %v420 = vadd.f32 %v362, %v379
      %v421 = vadd.f32 %v363, %v379
      %v422 = vadd.f32 %v364, %v379
      %v423 = vadd.f32 %v365, %v379
      %v424 = vadd.f32 %v366, %v379
      %v425 = vadd.f32 %v367, %v379
      %v426 = vadd.f32 %v368, %v379
      %v427 = vadd.f32 %v369, %v379
      %v428 = vadd.f32 %v370, %v379
      %v429 = vadd.f32 %v371, %v379
      %v430 = vadd.f32 %v372, %v379
      %v431 = vadd.f32 %v373, %v379
      %v432 = vadd.f32 %v374, %v379
      %v433 = vadd.f32 %v375, %v379
      %v434 = vadd.f32 %v376, %v379
      %v435 = vmax.f32 %v381, 0.0
      %v436 = vmax.f32 %v382, 0.0
      %v437 = vmax.f32 %v383, 0.0
      %v438 = vmax.f32 %v384, 0.0
      %v439 = vmax.f32 %v385, 0.0
      %v440 = vmax.f32 %v386, 0.0
      %v441 = vmax.f32 %v387, 0.0
      %v442 = vmax.f32 %v388, 0.0
      %v443 = vmax.f32 %v389, 0.0
      %v444 = vmax.f32 %v390, 0.0
      %v445 = vmax.f32 %v391, 0.0
      %v446 = vmax.f32 %v392, 0.0
      %v447 = vmax.f32 %v393, 0.0
      %v448 = vmax.f32 %v394, 0.0
      %v449 = vmax.f32 %v395, 0.0
      %v450 = vmax.f32 %v396, 0.0
      %v451 = vmax.f32 %v397, 0.0
      %v452 = vmax.f32 %v398, 0.0
      %v453 = vmax.f32 %v399, 0.0
      %v454 = vmax.f32 %v400, 0.0
      %v455 = vmax.f32 %v401, 0.0
      %v456 = vmax.f32 %v402, 0.0
      %v457 = vmax.f32 %v403, 0.0
      %v458 = vmax.f32 %v404, 0.0
      %v459 = vmax.f32 %v405, 0.0
      %v460 = vmax.f32 %v406, 0.0
      %v461 = vmax.f32 %v407, 0.0
      %v462 = vmax.f32 %v408, 0.0
      %v463 = vmax.f32 %v409, 0.0
      %v464 = vmax.f32 %v410, 0.0
      %v465 = vmax.f32 %v411, 0.0
      %v466 = vmax.f32 %v412, 0.0
      %v467 = vmax.f32 %v413, 0.0
      %v468 = vmax.f32 %v414, 0.0
      %v469 = vmax.f32 %v415, 0.0
      %v470 = vmax.f32 %v416, 0.0
      %v471 = vmax.f32 %v417, 0.0
      %v472 = vmax.f32 %v418, 0.0
      %v473 = vmax.f32 %v419, 0.0
      %v474 = vmax.f32 %v420, 0.0
      %v475 = vmax.f32 %v421, 0.0
      %v476 = vmax.f32 %v422, 0.0
      %v477 = vmax.f32 %v423, 0.0
      %v478 = vmax.f32 %v424, 0.0
      %v479 = vmax.f32 %v425, 0.0
      %v480 = vmax.f32 %v426, 0.0
      %v481 = vmax.f32 %v427, 0.0
      %v482 = vmax.f32 %v428, 0.0
      %v483 = vmax.f32 %v429, 0.0
      %v484 = vmax.f32 %v430, 0.0
      %v485 = vmax.f32 %v431, 0.0
      %v486 = vmax.f32 %v432, 0.0
      %v487 = vmax.f32 %v433, 0.0
      %v488 = vmax.f32 %v434, 0.0
      %v489 = vlaneseq
      %v490 = vshrl.u32 %v489, 7
      %v491 = vadd.s32 %v490, 8
      %v492 = vadd.s32 %v490, 16
      %vm493 = vcmp.ge.s32.totalorder %v490, 1
      %vm494 = vcmp.ge.s32.totalorder %v491, 1
      %vm495 = vcmp.ge.s32.totalorder %v492, 1
      %vm496 = vmand 0, %vm493
      %vm497 = vmand 0, %vm494
      %vm498 = vmand 0, %vm495
      %vm499 = vmand 1, %vm493
      %vm500 = vmand 1, %vm494
      %vm501 = vmand 1, %vm495
      %vm502 = vcmp.le.s32.totalorder %v490, 16
      %vm503 = vcmp.le.s32.totalorder %v491, 16
      %vm504 = vcmp.le.s32.totalorder %v492, 16
      %vm505 = vmand %vm496, %vm502
      %vm506 = vmand %vm497, %vm503
      %vm507 = vmand %vm498, %vm504
      %vm508 = vmand %vm499, %vm502
      %vm509 = vmand %vm500, %vm503
      %vm510 = vmand %vm501, %vm504
      %v511 = vsel %vm505, %v435, 0.0
      %v512 = vsel %vm506, %v436, 0.0
      %v513 = vsel %vm507, %v437, 0.0
      %v514 = vsel %vm508, %v438, 0.0
      %v515 = vsel %vm509, %v439, 0.0
      %v516 = vsel %vm510, %v440, 0.0
      %v517 = vsel %vm508, %v441, 0.0
      %v518 = vsel %vm509, %v442, 0.0
      %v519 = vsel %vm510, %v443, 0.0
      %v520 = vsel %vm508, %v444, 0.0
      %v521 = vsel %vm509, %v445, 0.0
      %v522 = vsel %vm510, %v446, 0.0
      %v523 = vsel %vm508, %v447, 0.0
      %v524 = vsel %vm509, %v448, 0.0
      %v525 = vsel %vm510, %v449, 0.0
      %v526 = vsel %vm508, %v450, 0.0
      %v527 = vsel %vm509, %v451, 0.0
      %v528 = vsel %vm510, %v452, 0.0
      %v529 = vsel %vm508, %v453, 0.0
      %v530 = vsel %vm509, %v454, 0.0
      %v531 = vsel %vm510, %v455, 0.0
      %v532 = vsel %vm508, %v456, 0.0
      %v533 = vsel %vm509, %v457, 0.0
      %v534 = vsel %vm510, %v458, 0.0
      %v535 = vsel %vm508, %v459, 0.0
      %v536 = vsel %vm509, %v460, 0.0
      %v537 = vsel %vm510, %v461, 0.0
      %v538 = vsel %vm508, %v462, 0.0
      %v539 = vsel %vm509, %v463, 0.0
      %v540 = vsel %vm510, %v464, 0.0
      %v541 = vsel %vm508, %v465, 0.0
      %v542 = vsel %vm509, %v466, 0.0
      %v543 = vsel %vm510, %v467, 0.0
      %v544 = vsel %vm508, %v468, 0.0
      %v545 = vsel %vm509, %v469, 0.0
      %v546 = vsel %vm510, %v470, 0.0
      %v547 = vsel %vm508, %v471, 0.0
      %v548 = vsel %vm509, %v472, 0.0
      %v549 = vsel %vm510, %v473, 0.0
      %v550 = vsel %vm508, %v474, 0.0
      %v551 = vsel %vm509, %v475, 0.0
      %v552 = vsel %vm510, %v476, 0.0
      %v553 = vsel %vm508, %v477, 0.0
      %v554 = vsel %vm509, %v478, 0.0
      %v555 = vsel %vm510, %v479, 0.0
      %v556 = vsel %vm508, %v480, 0.0
      %v557 = vsel %vm509, %v481, 0.0
      %v558 = vsel %vm510, %v482, 0.0
      %v559 = vsel %vm508, %v483, 0.0
      %v560 = vsel %vm509, %v484, 0.0
      %v561 = vsel %vm510, %v485, 0.0
      %v562 = vsel %vm505, %v486, 0.0
      %v563 = vsel %vm506, %v487, 0.0
      %v564 = vsel %vm507, %v488, 0.0
      %vm613 = vcmask 1046528
      %v614 = vrot.slane %v511, 1
      %v615 = vrot.slane %v512, 1
      %v616 = vsel %vm613, %v614, %v615
      %v617 = vrot.slane %v513, 1
      %v618 = vsel %vm613, %v615, %v617
      %v619 = vrot.slane %v514, 1
      %v620 = vrot.slane %v515, 1
      %v621 = vsel %vm613, %v619, %v620
      %v622 = vrot.slane %v516, 1
      %v623 = vsel %vm613, %v620, %v622
      %v624 = vrot.slane %v517, 1
      %v625 = vrot.slane %v518, 1
      %v626 = vsel %vm613, %v624, %v625
      %v627 = vrot.slane %v519, 1
      %v628 = vsel %vm613, %v625, %v627
      %v629 = vrot.slane %v520, 1
      %v630 = vrot.slane %v521, 1
      %v631 = vsel %vm613, %v629, %v630
      %v632 = vrot.slane %v522, 1
      %v633 = vsel %vm613, %v630, %v632
      %v634 = vrot.slane %v523, 1
      %v635 = vrot.slane %v524, 1
      %v636 = vsel %vm613, %v634, %v635
      %v637 = vrot.slane %v525, 1
      %v638 = vsel %vm613, %v635, %v637
      %v639 = vrot.slane %v526, 1
      %v640 = vrot.slane %v527, 1
      %v641 = vsel %vm613, %v639, %v640
      %v642 = vrot.slane %v528, 1
      %v643 = vsel %vm613, %v640, %v642
      %v644 = vrot.slane %v529, 1
      %v645 = vrot.slane %v530, 1
      %v646 = vsel %vm613, %v644, %v645
      %v647 = vrot.slane %v531, 1
      %v648 = vsel %vm613, %v645, %v647
      %v649 = vrot.slane %v532, 1
      %v650 = vrot.slane %v533, 1
      %v651 = vsel %vm613, %v649, %v650
      %v652 = vrot.slane %v534, 1
      %v653 = vsel %vm613, %v650, %v652
      %v654 = vrot.slane %v535, 1
      %v655 = vrot.slane %v536, 1
      %v656 = vsel %vm613, %v654, %v655
      %v657 = vrot.slane %v537, 1
      %v658 = vsel %vm613, %v655, %v657
      %v659 = vrot.slane %v538, 1
      %v660 = vrot.slane %v539, 1
      %v661 = vsel %vm613, %v659, %v660
      %v662 = vrot.slane %v540, 1
      %v663 = vsel %vm613, %v660, %v662
      %v664 = vrot.slane %v541, 1
      %v665 = vrot.slane %v542, 1
      %v666 = vsel %vm613, %v664, %v665
      %v667 = vrot.slane %v543, 1
      %v668 = vsel %vm613, %v665, %v667
      %v669 = vrot.slane %v544, 1
      %v670 = vrot.slane %v545, 1
      %v671 = vsel %vm613, %v669, %v670
      %v672 = vrot.slane %v546, 1
      %v673 = vsel %vm613, %v670, %v672
      %v674 = vrot.slane %v547, 1
      %v675 = vrot.slane %v548, 1
      %v676 = vsel %vm613, %v674, %v675
      %v677 = vrot.slane %v549, 1
      %v678 = vsel %vm613, %v675, %v677
      %v679 = vrot.slane %v550, 1
      %v680 = vrot.slane %v551, 1
      %v681 = vsel %vm613, %v679, %v680
      %v682 = vrot.slane %v552, 1
      %v683 = vsel %vm613, %v680, %v682
      %v684 = vrot.slane %v553, 1
      %v685 = vrot.slane %v554, 1
      %v686 = vsel %vm613, %v684, %v685
      %v687 = vrot.slane %v555, 1
      %v688 = vsel %vm613, %v685, %v687
      %v689 = vrot.slane %v556, 1
      %v690 = vrot.slane %v557, 1
      %v691 = vsel %vm613, %v689, %v690
      %v692 = vrot.slane %v558, 1
      %v693 = vsel %vm613, %v690, %v692
      %vm726 = vcmask 1045504
      %v727 = vrot.slane %v511, 2
      %v728 = vrot.slane %v512, 2
      %v729 = vsel %vm726, %v727, %v728
      %v730 = vrot.slane %v513, 2
      %v731 = vsel %vm726, %v728, %v730
      %v732 = vrot.slane %v514, 2
      %v733 = vrot.slane %v515, 2
      %v734 = vsel %vm726, %v732, %v733
      %v735 = vrot.slane %v516, 2
      %v736 = vsel %vm726, %v733, %v735
      %v737 = vrot.slane %v517, 2
      %v738 = vrot.slane %v518, 2
      %v739 = vsel %vm726, %v737, %v738
      %v740 = vrot.slane %v519, 2
      %v741 = vsel %vm726, %v738, %v740
      %v742 = vrot.slane %v520, 2
      %v743 = vrot.slane %v521, 2
      %v744 = vsel %vm726, %v742, %v743
      %v745 = vrot.slane %v522, 2
      %v746 = vsel %vm726, %v743, %v745
      %v747 = vrot.slane %v523, 2
      %v748 = vrot.slane %v524, 2
      %v749 = vsel %vm726, %v747, %v748
      %v750 = vrot.slane %v525, 2
      %v751 = vsel %vm726, %v748, %v750
      %v752 = vrot.slane %v526, 2
      %v753 = vrot.slane %v527, 2
      %v754 = vsel %vm726, %v752, %v753
      %v755 = vrot.slane %v528, 2
      %v756 = vsel %vm726, %v753, %v755
      %v757 = vrot.slane %v529, 2
      %v758 = vrot.slane %v530, 2
      %v759 = vsel %vm726, %v757, %v758
      %v760 = vrot.slane %v531, 2
      %v761 = vsel %vm726, %v758, %v760
      %v762 = vrot.slane %v532, 2
      %v763 = vrot.slane %v533, 2
      %v764 = vsel %vm726, %v762, %v763
      %v765 = vrot.slane %v534, 2
      %v766 = vsel %vm726, %v763, %v765
      %v767 = vrot.slane %v535, 2
      %v768 = vrot.slane %v536, 2
      %v769 = vsel %vm726, %v767, %v768
      %v770 = vrot.slane %v537, 2
      %v771 = vsel %vm726, %v768, %v770
      %v772 = vrot.slane %v538, 2
      %v773 = vrot.slane %v539, 2
      %v774 = vsel %vm726, %v772, %v773
      %v775 = vrot.slane %v540, 2
      %v776 = vsel %vm726, %v773, %v775
      %v777 = vrot.slane %v541, 2
      %v778 = vrot.slane %v542, 2
      %v779 = vsel %vm726, %v777, %v778
      %v780 = vrot.slane %v543, 2
      %v781 = vsel %vm726, %v778, %v780
      %v782 = vrot.slane %v544, 2
      %v783 = vrot.slane %v545, 2
      %v784 = vsel %vm726, %v782, %v783
      %v785 = vrot.slane %v546, 2
      %v786 = vsel %vm726, %v783, %v785
      %v787 = vrot.slane %v547, 2
      %v788 = vrot.slane %v548, 2
      %v789 = vsel %vm726, %v787, %v788
      %v790 = vrot.slane %v549, 2
      %v791 = vsel %vm726, %v788, %v790
      %v792 = vrot.slane %v550, 2
      %v793 = vrot.slane %v551, 2
      %v794 = vsel %vm726, %v792, %v793
      %v795 = vrot.slane %v552, 2
      %v796 = vsel %vm726, %v793, %v795
      %v797 = vrot.slane %v553, 2
      %v798 = vrot.slane %v554, 2
      %v799 = vsel %vm726, %v797, %v798
      %v800 = vrot.slane %v555, 2
      %v801 = vsel %vm726, %v798, %v800
      %v802 = vrot.slane %v556, 2
      %v803 = vrot.slane %v557, 2
      %v804 = vsel %vm726, %v802, %v803
      %v805 = vrot.slane %v558, 2
      %v806 = vsel %vm726, %v803, %v805
      %v842 = vrot.slane %v559, 1
      %v843 = vrot.slane %v560, 1
      %v844 = vsel %vm613, %v842, %v843
      %v845 = vrot.slane %v561, 1
      %v846 = vsel %vm613, %v843, %v845
      %v849 = vrot.slane %v559, 2
      %v850 = vrot.slane %v560, 2
      %v851 = vsel %vm726, %v849, %v850
      %v852 = vrot.slane %v561, 2
      %v853 = vsel %vm726, %v850, %v852
      %v859 = vrot.slane %v562, 1
      %v860 = vrot.slane %v563, 1
      %v861 = vsel %vm613, %v859, %v860
      %v862 = vrot.slane %v564, 1
      %v863 = vsel %vm613, %v860, %v862
      %v866 = vrot.slane %v562, 2
      %v867 = vrot.slane %v563, 2
      %v868 = vsel %vm726, %v866, %v867
      %v869 = vrot.slane %v564, 2
      %v870 = vsel %vm726, %v867, %v869
      %v873 = vpack.c.bf16 %v616, %v511
      %v874 = vpack.c.bf16 %v514, %v729
      %v875 = vpack.c.bf16 %v734, %v621
      %v876 = vpack.c.bf16 %v626, %v517
      %v877 = vpack.c.bf16 %v739, %v739
      %v878 = vpack.c.bf16 %v618, %v512
      %v879 = vpack.c.bf16 %v515, %v731
      %v880 = vpack.c.bf16 %v736, %v623
      %v881 = vpack.c.bf16 %v628, %v518
      %v882 = vpack.c.bf16 %v741, %v741
      %v883 = vpack.c.bf16 %v621, %v514
      %v884 = vpack.c.bf16 %v517, %v734
      %v885 = vpack.c.bf16 %v739, %v626
      %v886 = vpack.c.bf16 %v631, %v520
      %v887 = vpack.c.bf16 %v744, %v744
      %v888 = vpack.c.bf16 %v623, %v515
      %v889 = vpack.c.bf16 %v518, %v736
      %v890 = vpack.c.bf16 %v741, %v628
      %v891 = vpack.c.bf16 %v633, %v521
      %v892 = vpack.c.bf16 %v746, %v746
      %v893 = vpack.c.bf16 %v520, %v739
      %v894 = vpack.c.bf16 %v744, %v631
      %v895 = vpack.c.bf16 %v636, %v523
      %v896 = vpack.c.bf16 %v749, %v749
      %v897 = vpack.c.bf16 %v521, %v741
      %v898 = vpack.c.bf16 %v746, %v633
      %v899 = vpack.c.bf16 %v638, %v524
      %v900 = vpack.c.bf16 %v751, %v751
      %v901 = vpack.c.bf16 %v523, %v744
      %v902 = vpack.c.bf16 %v749, %v636
      %v903 = vpack.c.bf16 %v641, %v526
      %v904 = vpack.c.bf16 %v754, %v754
      %v905 = vpack.c.bf16 %v524, %v746
      %v906 = vpack.c.bf16 %v751, %v638
      %v907 = vpack.c.bf16 %v643, %v527
      %v908 = vpack.c.bf16 %v756, %v756
      %v909 = vpack.c.bf16 %v526, %v749
      %v910 = vpack.c.bf16 %v754, %v641
      %v911 = vpack.c.bf16 %v646, %v529
      %v912 = vpack.c.bf16 %v759, %v759
      %v913 = vpack.c.bf16 %v527, %v751
      %v914 = vpack.c.bf16 %v756, %v643
      %v915 = vpack.c.bf16 %v648, %v530
      %v916 = vpack.c.bf16 %v761, %v761
      %v917 = vpack.c.bf16 %v529, %v754
      %v918 = vpack.c.bf16 %v759, %v646
      %v919 = vpack.c.bf16 %v651, %v532
      %v920 = vpack.c.bf16 %v764, %v764
      %v921 = vpack.c.bf16 %v530, %v756
      %v922 = vpack.c.bf16 %v761, %v648
      %v923 = vpack.c.bf16 %v653, %v533
      %v924 = vpack.c.bf16 %v766, %v766
      %v925 = vpack.c.bf16 %v532, %v759
      %v926 = vpack.c.bf16 %v764, %v651
      %v927 = vpack.c.bf16 %v656, %v535
      %v928 = vpack.c.bf16 %v769, %v769
      %v929 = vpack.c.bf16 %v533, %v761
      %v930 = vpack.c.bf16 %v766, %v653
      %v931 = vpack.c.bf16 %v658, %v536
      %v932 = vpack.c.bf16 %v771, %v771
      %v933 = vpack.c.bf16 %v535, %v764
      %v934 = vpack.c.bf16 %v769, %v656
      %v935 = vpack.c.bf16 %v661, %v538
      %v936 = vpack.c.bf16 %v774, %v774
      %v937 = vpack.c.bf16 %v536, %v766
      %v938 = vpack.c.bf16 %v771, %v658
      %v939 = vpack.c.bf16 %v663, %v539
      %v940 = vpack.c.bf16 %v776, %v776
      %v941 = vpack.c.bf16 %v538, %v769
      %v942 = vpack.c.bf16 %v774, %v661
      %v943 = vpack.c.bf16 %v666, %v541
      %v944 = vpack.c.bf16 %v779, %v779
      %v945 = vpack.c.bf16 %v539, %v771
      %v946 = vpack.c.bf16 %v776, %v663
      %v947 = vpack.c.bf16 %v668, %v542
      %v948 = vpack.c.bf16 %v781, %v781
      %v949 = vpack.c.bf16 %v541, %v774
      %v950 = vpack.c.bf16 %v779, %v666
      %v951 = vpack.c.bf16 %v671, %v544
      %v952 = vpack.c.bf16 %v784, %v784
      %v953 = vpack.c.bf16 %v542, %v776
      %v954 = vpack.c.bf16 %v781, %v668
      %v955 = vpack.c.bf16 %v673, %v545
      %v956 = vpack.c.bf16 %v786, %v786
      %v957 = vpack.c.bf16 %v544, %v779
      %v958 = vpack.c.bf16 %v784, %v671
      %v959 = vpack.c.bf16 %v676, %v547
      %v960 = vpack.c.bf16 %v789, %v789
      %v961 = vpack.c.bf16 %v545, %v781
      %v962 = vpack.c.bf16 %v786, %v673
      %v963 = vpack.c.bf16 %v678, %v548
      %v964 = vpack.c.bf16 %v791, %v791
      %v965 = vpack.c.bf16 %v547, %v784
      %v966 = vpack.c.bf16 %v789, %v676
      %v967 = vpack.c.bf16 %v681, %v550
      %v968 = vpack.c.bf16 %v794, %v794
      %v969 = vpack.c.bf16 %v548, %v786
      %v970 = vpack.c.bf16 %v791, %v678
      %v971 = vpack.c.bf16 %v683, %v551
      %v972 = vpack.c.bf16 %v796, %v796
      %v973 = vpack.c.bf16 %v550, %v789
      %v974 = vpack.c.bf16 %v794, %v681
      %v975 = vpack.c.bf16 %v686, %v553
      %v976 = vpack.c.bf16 %v799, %v799
      %v977 = vpack.c.bf16 %v551, %v791
      %v978 = vpack.c.bf16 %v796, %v683
      %v979 = vpack.c.bf16 %v688, %v554
      %v980 = vpack.c.bf16 %v801, %v801
      %v981 = vpack.c.bf16 %v553, %v794
      %v982 = vpack.c.bf16 %v799, %v686
      %v983 = vpack.c.bf16 %v691, %v556
      %v984 = vpack.c.bf16 %v804, %v804
      %v985 = vpack.c.bf16 %v554, %v796
      %v986 = vpack.c.bf16 %v801, %v688
      %v987 = vpack.c.bf16 %v693, %v557
      %v988 = vpack.c.bf16 %v806, %v806
      %v989 = vpack.c.bf16 %v556, %v799
      %v990 = vpack.c.bf16 %v804, %v691
      %v991 = vpack.c.bf16 %v844, %v559
      %v992 = vpack.c.bf16 %v851, %v851
      %v993 = vpack.c.bf16 %v557, %v801
      %v994 = vpack.c.bf16 %v806, %v693
      %v995 = vpack.c.bf16 %v846, %v560
      %v996 = vpack.c.bf16 %v853, %v853
      %v997 = vpack.c.bf16 %v559, %v804
      %v998 = vpack.c.bf16 %v851, %v844
      %v999 = vpack.c.bf16 %v861, %v562
      %v1000 = vpack.c.bf16 %v868, %v868
      %v1001 = vpack.c.bf16 %v560, %v806
      %v1002 = vpack.c.bf16 %v853, %v846
      %v1003 = vpack.c.bf16 %v863, %v563
      %v1004 = vpack.c.bf16 %v870, %v870
      %v1005 = vld [vmem:[%s3] sm:$0xf]
      %v1006 = vld [vmem:[%s3 + $0x4] sm:$0xf]
      %v1007 = vld [vmem:[%s3 + $0x8] sm:$0xf]
      %v1008 = vld [vmem:[%s3 + $0xc] sm:$0xf]
      %v1009 = vld [vmem:[%s3 + $0x10] sm:$0xf]
      %v1010 = vld [vmem:[%s3 + $0x14] sm:$0xf]
      %v1011 = vld [vmem:[%s3 + $0x18] sm:$0xf]
      %v1012 = vld [vmem:[%s3 + $0x1c] sm:$0xf]
      %v1013 = vld [vmem:[%s3 + $0x20] sm:$0xf]
      %v1014 = vld [vmem:[%s3 + $0x24] sm:$0xf]
      %v1015 = vld [vmem:[%s3 + $0x28] sm:$0xf]
      %v1016 = vld [vmem:[%s3 + $0x2c] sm:$0xf]
      %v1017 = vld [vmem:[%s3 + $0x30] sm:$0xf]
      %v1018 = vld [vmem:[%s3 + $0x34] sm:$0xf]
      %v1019 = vld [vmem:[%s3 + $0x38] sm:$0xf]
      %v1020 = vld [vmem:[%s3 + $0x3c] sm:$0xf]
      %v1021 = vld [vmem:[%s3 + $0x40] sm:$0xf]
      %v1022 = vld [vmem:[%s3 + $0x44] sm:$0xf]
      %v1023 = vld [vmem:[%s3 + $0x48] sm:$0xf]
      %v1024 = vld [vmem:[%s3 + $0x4c] sm:$0xf]
      %v1025 = vld [vmem:[%s3 + $0x50] sm:$0xf]
      %v1026 = vld [vmem:[%s3 + $0x54] sm:$0xf]
      %v1027 = vld [vmem:[%s3 + $0x58] sm:$0xf]
      %v1028 = vld [vmem:[%s3 + $0x5c] sm:$0xf]
      %v1029 = vld [vmem:[%s3 + $0x60] sm:$0xf]
      %v1030 = vld [vmem:[%s3 + $0x64] sm:$0xf]
      %v1031 = vld [vmem:[%s3 + $0x68] sm:$0xf]
      %v1032 = vld [vmem:[%s3 + $0x6c] sm:$0xf]
      %v1033 = vld [vmem:[%s3 + $0x70] sm:$0xf]
      %v1034 = vld [vmem:[%s3 + $0x74] sm:$0xf]
      %v1035 = vld [vmem:[%s3 + $0x78] sm:$0xf]
      %v1036 = vld [vmem:[%s3 + $0x7c] sm:$0xf]
      %v1037 = vld [vmem:[%s3 + $0x80] sm:$0xf]
      %v1038 = vld [vmem:[%s3 + $0x84] sm:$0xf]
      %v1039 = vld [vmem:[%s3 + $0x88] sm:$0xf]
      %v1040 = vld [vmem:[%s3 + $0x8c] sm:$0xf]
      %v1041 = vld [vmem:[%s3 + $0x90] sm:$0xf]
      %v1042 = vld [vmem:[%s3 + $0x94] sm:$0xf]
      %v1043 = vld [vmem:[%s3 + $0x98] sm:$0xf]
      %v1044 = vld [vmem:[%s3 + $0x9c] sm:$0xf]
      %v1045 = vld [vmem:[%s3 + $0xa0] sm:$0xf]
      %v1046 = vld [vmem:[%s3 + $0xa4] sm:$0xf]
      %v1047 = vld [vmem:[%s3 + $0xa8] sm:$0xf]
      %v1048 = vld [vmem:[%s3 + $0xac] sm:$0xf]
      %v1049 = vld [vmem:[%s3 + $0xb0] sm:$0xf]
      %v1050 = vld [vmem:[%s3 + $0xb4] sm:$0xf]
      %v1051 = vld [vmem:[%s3 + $0xb8] sm:$0xf]
      %v1052 = vld [vmem:[%s3 + $0xbc] sm:$0xf]
      %v1053 = vld [vmem:[%s3 + $0xc0] sm:$0xf]
      %v1054 = vld [vmem:[%s3 + $0xc4] sm:$0xf]
      %v1055 = vld [vmem:[%s3 + $0xc8] sm:$0xf]
      %v1056 = vld [vmem:[%s3 + $0xcc] sm:$0xf]
      %v1057 = vld [vmem:[%s3 + $0xd0] sm:$0xf]
      %v1058 = vld [vmem:[%s3 + $0xd4] sm:$0xf]
      %v1059 = vld [vmem:[%s3 + $0xd8] sm:$0xf]
      %v1060 = vld [vmem:[%s3 + $0xdc] sm:$0xf]
      %v1061 = vld [vmem:[%s3 + $0xe0] sm:$0xf]
      %v1062 = vld [vmem:[%s3 + $0xe4] sm:$0xf]
      %v1063 = vld [vmem:[%s3 + $0xe8] sm:$0xf]
      %v1064 = vld [vmem:[%s3 + $0xec] sm:$0xf]
      %v1065 = vld [vmem:[%s3 + $0xf0] sm:$0xf]
      %v1066 = vld [vmem:[%s3 + $0xf4] sm:$0xf]
      %v1067 = vld [vmem:[%s3 + $0xf8] sm:$0xf]
      %v1068 = vld [vmem:[%s3 + $0xfc] sm:$0xf]
      %v1069 = vld [vmem:[%s3 + $0x100] sm:$0xf]
      %v1070 = vld [vmem:[%s3 + $0x104] sm:$0xf]
      %v1071 = vld [vmem:[%s3 + $0x108] sm:$0xf]
      %v1072 = vld [vmem:[%s3 + $0x10c] sm:$0xf]
      %v1073 = vld [vmem:[%s3 + $0x110] sm:$0xf]
      %v1074 = vld [vmem:[%s3 + $0x114] sm:$0xf]
      %v1075 = vld [vmem:[%s3 + $0x118] sm:$0xf]
      %v1076 = vld [vmem:[%s3 + $0x11c] sm:$0xf]
      %v1077 = vld [vmem:[%s3 + $0x120] sm:$0xf]
      %v1078 = vld [vmem:[%s3 + $0x124] sm:$0xf]
      %v1079 = vld [vmem:[%s3 + $0x128] sm:$0xf]
      %v1080 = vld [vmem:[%s3 + $0x12c] sm:$0xf]
      %v1081 = vld [vmem:[%s3 + $0x130] sm:$0xf]
      %v1082 = vld [vmem:[%s3 + $0x134] sm:$0xf]
      %v1083 = vld [vmem:[%s3 + $0x138] sm:$0xf]
      %v1084 = vld [vmem:[%s3 + $0x13c] sm:$0xf]
      %v1085 = vld [vmem:[%s3 + $0x140] sm:$0xf]
      %v1086 = vld [vmem:[%s3 + $0x144] sm:$0xf]
      %v1087 = vld [vmem:[%s3 + $0x148] sm:$0xf]
      %v1088 = vld [vmem:[%s3 + $0x14c] sm:$0xf]
      %v1089 = vld [vmem:[%s3 + $0x150] sm:$0xf]
      %v1090 = vld [vmem:[%s3 + $0x154] sm:$0xf]
      %v1091 = vld [vmem:[%s3 + $0x158] sm:$0xf]
      %v1092 = vld [vmem:[%s3 + $0x15c] sm:$0xf]
      %v1093 = vld [vmem:[%s3 + $0x160] sm:$0xf]
      %v1094 = vld [vmem:[%s3 + $0x164] sm:$0xf]
      %v1095 = vld [vmem:[%s3 + $0x168] sm:$0xf]
      %v1096 = vld [vmem:[%s3 + $0x16c] sm:$0xf]
      %v1097 = vld [vmem:[%s3 + $0x170] sm:$0xf]
      %v1098 = vld [vmem:[%s3 + $0x174] sm:$0xf]
      %v1099 = vld [vmem:[%s3 + $0x178] sm:$0xf]
      %v1100 = vld [vmem:[%s3 + $0x17c] sm:$0xf]
      %v1101 = vld [vmem:[%s3 + $0x180] sm:$0xf]
      %v1102 = vld [vmem:[%s3 + $0x184] sm:$0xf]
      %v1103 = vld [vmem:[%s3 + $0x188] sm:$0xf]
      %v1104 = vld [vmem:[%s3 + $0x18c] sm:$0xf]
      %v1105 = vld [vmem:[%s3 + $0x190] sm:$0xf]
      %v1106 = vld [vmem:[%s3 + $0x194] sm:$0xf]
      %v1107 = vld [vmem:[%s3 + $0x198] sm:$0xf]
      %v1108 = vld [vmem:[%s3 + $0x19c] sm:$0xf]
      %v1109 = vld [vmem:[%s3 + $0x1a0] sm:$0xf]
      %v1110 = vld [vmem:[%s3 + $0x1a4] sm:$0xf]
      %v1111 = vld [vmem:[%s3 + $0x1a8] sm:$0xf]
      %v1112 = vld [vmem:[%s3 + $0x1ac] sm:$0xf]
      %v1113 = vld [vmem:[%s3 + $0x1b0] sm:$0xf]
      %v1114 = vld [vmem:[%s3 + $0x1b4] sm:$0xf]
      %v1115 = vld [vmem:[%s3 + $0x1b8] sm:$0xf]
      %v1116 = vld [vmem:[%s3 + $0x1bc] sm:$0xf]
      %v1117 = vld [vmem:[%s3 + $0x1c0] sm:$0xf]
      %v1118 = vld [vmem:[%s3 + $0x1c4] sm:$0xf]
      %v1119 = vld [vmem:[%s3 + $0x1c8] sm:$0xf]
      %v1120 = vld [vmem:[%s3 + $0x1cc] sm:$0xf]
      %v1121 = vld [vmem:[%s3 + $0x1d0] sm:$0xf]
      %v1122 = vld [vmem:[%s3 + $0x1d4] sm:$0xf]
      %v1123 = vld [vmem:[%s3 + $0x1d8] sm:$0xf]
      %v1124 = vld [vmem:[%s3 + $0x1dc] sm:$0xf]
      %v1125 = vld [vmem:[%s3 + $0x1e0] sm:$0xf]
      %v1126 = vld [vmem:[%s3 + $0x1e4] sm:$0xf]
      %v1127 = vld [vmem:[%s3 + $0x1e8] sm:$0xf]
      %v1128 = vld [vmem:[%s3 + $0x1ec] sm:$0xf]
      %v1129 = vld [vmem:[%s3 + $0x1f0] sm:$0xf]
      %v1130 = vld [vmem:[%s3 + $0x1f4] sm:$0xf]
      %v1131 = vld [vmem:[%s3 + $0x1f8] sm:$0xf]
      %v1132 = vld [vmem:[%s3 + $0x1fc] sm:$0xf]
      %v1133 = vld [vmem:[%s3 + $0x200] sm:$0xf]
      %v1134 = vld [vmem:[%s3 + $0x204] sm:$0xf]
      %v1135 = vld [vmem:[%s3 + $0x208] sm:$0xf]
      %v1136 = vld [vmem:[%s3 + $0x20c] sm:$0xf]
      %v1137 = vld [vmem:[%s3 + $0x210] sm:$0xf]
      %v1138 = vld [vmem:[%s3 + $0x214] sm:$0xf]
      %v1139 = vld [vmem:[%s3 + $0x218] sm:$0xf]
      %v1140 = vld [vmem:[%s3 + $0x21c] sm:$0xf]
      %v1141 = vld [vmem:[%s3 + $0x220] sm:$0xf]
      %v1142 = vld [vmem:[%s3 + $0x224] sm:$0xf]
      %v1143 = vld [vmem:[%s3 + $0x228] sm:$0xf]
      %v1144 = vld [vmem:[%s3 + $0x22c] sm:$0xf]
      %v1145 = vld [vmem:[%s3 + $0x230] sm:$0xf]
      %v1146 = vld [vmem:[%s3 + $0x234] sm:$0xf]
      %v1147 = vld [vmem:[%s3 + $0x238] sm:$0xf]
      %v1148 = vld [vmem:[%s3 + $0x23c] sm:$0xf]
      %v1281 = vunpack.c.l.b16 %v873
      %v1282 = vunpack.c.h.b16 %v873
      %v1283 = vunpack.c.l.b16 %v874
      %v1284 = vunpack.c.h.b16 %v874
      %v1285 = vunpack.c.l.b16 %v875
      %v1286 = vunpack.c.h.b16 %v875
      %v1287 = vunpack.c.l.b16 %v876
      %v1288 = vunpack.c.h.b16 %v876
      %v1289 = vunpack.c.l.b16 %v877
      %v1290 = vunpack.c.l.b16 %v878
      %v1291 = vunpack.c.h.b16 %v878
      %v1292 = vunpack.c.l.b16 %v879
      %v1293 = vunpack.c.h.b16 %v879
      %v1294 = vunpack.c.l.b16 %v880
      %v1295 = vunpack.c.h.b16 %v880
      %v1296 = vunpack.c.l.b16 %v881
      %v1297 = vunpack.c.h.b16 %v881
      %v1298 = vunpack.c.l.b16 %v882
      %v1299 = vunpack.c.l.b16 %v883
      %v1300 = vunpack.c.h.b16 %v883
      %v1301 = vunpack.c.l.b16 %v884
      %v1302 = vunpack.c.h.b16 %v884
      %v1303 = vunpack.c.l.b16 %v885
      %v1304 = vunpack.c.h.b16 %v885
      %v1305 = vunpack.c.l.b16 %v886
      %v1306 = vunpack.c.h.b16 %v886
      %v1307 = vunpack.c.l.b16 %v887
      %v1308 = vunpack.c.l.b16 %v888
      %v1309 = vunpack.c.h.b16 %v888
      %v1310 = vunpack.c.l.b16 %v889
      %v1311 = vunpack.c.h.b16 %v889
      %v1312 = vunpack.c.l.b16 %v890
      %v1313 = vunpack.c.h.b16 %v890
      %v1314 = vunpack.c.l.b16 %v891
      %v1315 = vunpack.c.h.b16 %v891
      %v1316 = vunpack.c.l.b16 %v892
      %v1317 = vunpack.c.l.b16 %v893
      %v1318 = vunpack.c.h.b16 %v893
      %v1319 = vunpack.c.l.b16 %v894
      %v1320 = vunpack.c.h.b16 %v894
      %v1321 = vunpack.c.l.b16 %v895
      %v1322 = vunpack.c.h.b16 %v895
      %v1323 = vunpack.c.l.b16 %v896
      %v1324 = vunpack.c.l.b16 %v897
      %v1325 = vunpack.c.h.b16 %v897
      %v1326 = vunpack.c.l.b16 %v898
      %v1327 = vunpack.c.h.b16 %v898
      %v1328 = vunpack.c.l.b16 %v899
      %v1329 = vunpack.c.h.b16 %v899
      %v1330 = vunpack.c.l.b16 %v900
      %v1331 = vunpack.c.l.b16 %v901
      %v1332 = vunpack.c.h.b16 %v901
      %v1333 = vunpack.c.l.b16 %v902
      %v1334 = vunpack.c.h.b16 %v902
      %v1335 = vunpack.c.l.b16 %v903
      %v1336 = vunpack.c.h.b16 %v903
      %v1337 = vunpack.c.l.b16 %v904
      %v1338 = vunpack.c.l.b16 %v905
      %v1339 = vunpack.c.h.b16 %v905
      %v1340 = vunpack.c.l.b16 %v906
      %v1341 = vunpack.c.h.b16 %v906
      %v1342 = vunpack.c.l.b16 %v907
      %v1343 = vunpack.c.h.b16 %v907
      %v1344 = vunpack.c.l.b16 %v908
      %v1345 = vunpack.c.l.b16 %v909
      %v1346 = vunpack.c.h.b16 %v909
      %v1347 = vunpack.c.l.b16 %v910
      %v1348 = vunpack.c.h.b16 %v910
      %v1349 = vunpack.c.l.b16 %v911
      %v1350 = vunpack.c.h.b16 %v911
      %v1351 = vunpack.c.l.b16 %v912
      %v1352 = vunpack.c.l.b16 %v913
      %v1353 = vunpack.c.h.b16 %v913
      %v1354 = vunpack.c.l.b16 %v914
      %v1355 = vunpack.c.h.b16 %v914
      %v1356 = vunpack.c.l.b16 %v915
      %v1357 = vunpack.c.h.b16 %v915
      %v1358 = vunpack.c.l.b16 %v916
      %v1359 = vunpack.c.l.b16 %v917
      %v1360 = vunpack.c.h.b16 %v917
      %v1361 = vunpack.c.l.b16 %v918
      %v1362 = vunpack.c.h.b16 %v918
      %v1363 = vunpack.c.l.b16 %v919
      %v1364 = vunpack.c.h.b16 %v919
      %v1365 = vunpack.c.l.b16 %v920
      %v1366 = vunpack.c.l.b16 %v921
      %v1367 = vunpack.c.h.b16 %v921
      %v1368 = vunpack.c.l.b16 %v922
      %v1369 = vunpack.c.h.b16 %v922
      %v1370 = vunpack.c.l.b16 %v923
      %v1371 = vunpack.c.h.b16 %v923
      %v1372 = vunpack.c.l.b16 %v924
      %v1373 = vunpack.c.l.b16 %v925
      %v1374 = vunpack.c.h.b16 %v925
      %v1375 = vunpack.c.l.b16 %v926
      %v1376 = vunpack.c.h.b16 %v926
      %v1377 = vunpack.c.l.b16 %v927
      %v1378 = vunpack.c.h.b16 %v927
      %v1379 = vunpack.c.l.b16 %v928
      %v1380 = vunpack.c.l.b16 %v929
      %v1381 = vunpack.c.h.b16 %v929
      %v1382 = vunpack.c.l.b16 %v930
      %v1383 = vunpack.c.h.b16 %v930
      %v1384 = vunpack.c.l.b16 %v931
      %v1385 = vunpack.c.h.b16 %v931
      %v1386 = vunpack.c.l.b16 %v932
      %v1387 = vunpack.c.l.b16 %v933
      %v1388 = vunpack.c.h.b16 %v933
      %v1389 = vunpack.c.l.b16 %v934
      %v1390 = vunpack.c.h.b16 %v934
      %v1391 = vunpack.c.l.b16 %v935
      %v1392 = vunpack.c.h.b16 %v935
      %v1393 = vunpack.c.l.b16 %v936
      %v1394 = vunpack.c.l.b16 %v937
      %v1395 = vunpack.c.h.b16 %v937
      %v1396 = vunpack.c.l.b16 %v938
      %v1397 = vunpack.c.h.b16 %v938
      %v1398 = vunpack.c.l.b16 %v939
      %v1399 = vunpack.c.h.b16 %v939
      %v1400 = vunpack.c.l.b16 %v940
      %v1401 = vunpack.c.l.b16 %v941
      %v1402 = vunpack.c.h.b16 %v941
      %v1403 = vunpack.c.l.b16 %v942
      %v1404 = vunpack.c.h.b16 %v942
      %v1405 = vunpack.c.l.b16 %v943
      %v1406 = vunpack.c.h.b16 %v943
      %v1407 = vunpack.c.l.b16 %v944
      %v1408 = vunpack.c.l.b16 %v945
      %v1409 = vunpack.c.h.b16 %v945
      %v1410 = vunpack.c.l.b16 %v946
      %v1411 = vunpack.c.h.b16 %v946
      %v1412 = vunpack.c.l.b16 %v947
      %v1413 = vunpack.c.h.b16 %v947
      %v1414 = vunpack.c.l.b16 %v948
      %v1415 = vunpack.c.l.b16 %v949
      %v1416 = vunpack.c.h.b16 %v949
      %v1417 = vunpack.c.l.b16 %v950
      %v1418 = vunpack.c.h.b16 %v950
      %v1419 = vunpack.c.l.b16 %v951
      %v1420 = vunpack.c.h.b16 %v951
      %v1421 = vunpack.c.l.b16 %v952
      %v1422 = vunpack.c.l.b16 %v953
      %v1423 = vunpack.c.h.b16 %v953
      %v1424 = vunpack.c.l.b16 %v954
      %v1425 = vunpack.c.h.b16 %v954
      %v1426 = vunpack.c.l.b16 %v955
      %v1427 = vunpack.c.h.b16 %v955
      %v1428 = vunpack.c.l.b16 %v956
      %v1429 = vunpack.c.l.b16 %v957
      %v1430 = vunpack.c.h.b16 %v957
      %v1431 = vunpack.c.l.b16 %v958
      %v1432 = vunpack.c.h.b16 %v958
      %v1433 = vunpack.c.l.b16 %v959
      %v1434 = vunpack.c.h.b16 %v959
      %v1435 = vunpack.c.l.b16 %v960
      %v1436 = vunpack.c.l.b16 %v961
      %v1437 = vunpack.c.h.b16 %v961
      %v1438 = vunpack.c.l.b16 %v962
      %v1439 = vunpack.c.h.b16 %v962
      %v1440 = vunpack.c.l.b16 %v963
      %v1441 = vunpack.c.h.b16 %v963
      %v1442 = vunpack.c.l.b16 %v964
      %v1443 = vunpack.c.l.b16 %v965
      %v1444 = vunpack.c.h.b16 %v965
      %v1445 = vunpack.c.l.b16 %v966
      %v1446 = vunpack.c.h.b16 %v966
      %v1447 = vunpack.c.l.b16 %v967
      %v1448 = vunpack.c.h.b16 %v967
      %v1449 = vunpack.c.l.b16 %v968
      %v1450 = vunpack.c.l.b16 %v969
      %v1451 = vunpack.c.h.b16 %v969
      %v1452 = vunpack.c.l.b16 %v970
      %v1453 = vunpack.c.h.b16 %v970
      %v1454 = vunpack.c.l.b16 %v971
      %v1455 = vunpack.c.h.b16 %v971
      %v1456 = vunpack.c.l.b16 %v972
      %v1457 = vunpack.c.l.b16 %v973
      %v1458 = vunpack.c.h.b16 %v973
      %v1459 = vunpack.c.l.b16 %v974
      %v1460 = vunpack.c.h.b16 %v974
      %v1461 = vunpack.c.l.b16 %v975
      %v1462 = vunpack.c.h.b16 %v975
      %v1463 = vunpack.c.l.b16 %v976
      %v1464 = vunpack.c.l.b16 %v977
      %v1465 = vunpack.c.h.b16 %v977
      %v1466 = vunpack.c.l.b16 %v978
      %v1467 = vunpack.c.h.b16 %v978
      %v1468 = vunpack.c.l.b16 %v979
      %v1469 = vunpack.c.h.b16 %v979
      %v1470 = vunpack.c.l.b16 %v980
      %v1471 = vunpack.c.l.b16 %v981
      %v1472 = vunpack.c.h.b16 %v981
      %v1473 = vunpack.c.l.b16 %v982
      %v1474 = vunpack.c.h.b16 %v982
      %v1475 = vunpack.c.l.b16 %v983
      %v1476 = vunpack.c.h.b16 %v983
      %v1477 = vunpack.c.l.b16 %v984
      %v1478 = vunpack.c.l.b16 %v985
      %v1479 = vunpack.c.h.b16 %v985
      %v1480 = vunpack.c.l.b16 %v986
      %v1481 = vunpack.c.h.b16 %v986
      %v1482 = vunpack.c.l.b16 %v987
      %v1483 = vunpack.c.h.b16 %v987
      %v1484 = vunpack.c.l.b16 %v988
      %v1485 = vunpack.c.l.b16 %v989
      %v1486 = vunpack.c.h.b16 %v989
      %v1487 = vunpack.c.l.b16 %v990
      %v1488 = vunpack.c.h.b16 %v990
      %v1489 = vunpack.c.l.b16 %v991
      %v1490 = vunpack.c.h.b16 %v991
      %v1491 = vunpack.c.l.b16 %v992
      %v1492 = vunpack.c.l.b16 %v993
      %v1493 = vunpack.c.h.b16 %v993
      %v1494 = vunpack.c.l.b16 %v994
      %v1495 = vunpack.c.h.b16 %v994
      %v1496 = vunpack.c.l.b16 %v995
      %v1497 = vunpack.c.h.b16 %v995
      %v1498 = vunpack.c.l.b16 %v996
      %v1499 = vunpack.c.l.b16 %v997
      %v1500 = vunpack.c.h.b16 %v997
      %v1501 = vunpack.c.l.b16 %v998
      %v1502 = vunpack.c.h.b16 %v998
      %v1503 = vunpack.c.l.b16 %v999
      %v1504 = vunpack.c.h.b16 %v999
      %v1505 = vunpack.c.l.b16 %v1000
      %v1506 = vunpack.c.l.b16 %v1001
      %v1507 = vunpack.c.h.b16 %v1001
      %v1508 = vunpack.c.l.b16 %v1002
      %v1509 = vunpack.c.h.b16 %v1002
      %v1510 = vunpack.c.l.b16 %v1003
      %v1511 = vunpack.c.h.b16 %v1003
      %v1512 = vunpack.c.l.b16 %v1004
      %v1513 = vpack.c.b16 %v1290, %v1281
      %v1514 = vpack.c.b16 %v1291, %v1282
      %v1515 = vpack.c.b16 %v1292, %v1283
      %v1516 = vpack.c.b16 %v1293, %v1284
      %v1517 = vpack.c.b16 %v1294, %v1285
      %v1518 = vpack.c.b16 %v1295, %v1286
      %v1519 = vpack.c.b16 %v1296, %v1287
      %v1520 = vpack.c.b16 %v1297, %v1288
      %v1521 = vpack.c.b16 %v1298, %v1289
      %v1522 = vpack.c.b16 %v1308, %v1299
      %v1523 = vpack.c.b16 %v1309, %v1300
      %v1524 = vpack.c.b16 %v1310, %v1301
      %v1525 = vpack.c.b16 %v1311, %v1302
      %v1526 = vpack.c.b16 %v1312, %v1303
      %v1527 = vpack.c.b16 %v1313, %v1304
      %v1528 = vpack.c.b16 %v1314, %v1305
      %v1529 = vpack.c.b16 %v1315, %v1306
      %v1530 = vpack.c.b16 %v1316, %v1307
      %v1531 = vpack.c.b16 %v1324, %v1317
      %v1532 = vpack.c.b16 %v1325, %v1318
      %v1533 = vpack.c.b16 %v1326, %v1319
      %v1534 = vpack.c.b16 %v1327, %v1320
      %v1535 = vpack.c.b16 %v1328, %v1321
      %v1536 = vpack.c.b16 %v1329, %v1322
      %v1537 = vpack.c.b16 %v1330, %v1323
      %v1538 = vpack.c.b16 %v1338, %v1331
      %v1539 = vpack.c.b16 %v1339, %v1332
      %v1540 = vpack.c.b16 %v1340, %v1333
      %v1541 = vpack.c.b16 %v1341, %v1334
      %v1542 = vpack.c.b16 %v1342, %v1335
      %v1543 = vpack.c.b16 %v1343, %v1336
      %v1544 = vpack.c.b16 %v1344, %v1337
      %v1545 = vpack.c.b16 %v1352, %v1345
      %v1546 = vpack.c.b16 %v1353, %v1346
      %v1547 = vpack.c.b16 %v1354, %v1347
      %v1548 = vpack.c.b16 %v1355, %v1348
      %v1549 = vpack.c.b16 %v1356, %v1349
      %v1550 = vpack.c.b16 %v1357, %v1350
      %v1551 = vpack.c.b16 %v1358, %v1351
      %v1552 = vpack.c.b16 %v1366, %v1359
      %v1553 = vpack.c.b16 %v1367, %v1360
      %v1554 = vpack.c.b16 %v1368, %v1361
      %v1555 = vpack.c.b16 %v1369, %v1362
      %v1556 = vpack.c.b16 %v1370, %v1363
      %v1557 = vpack.c.b16 %v1371, %v1364
      %v1558 = vpack.c.b16 %v1372, %v1365
      %v1559 = vpack.c.b16 %v1380, %v1373
      %v1560 = vpack.c.b16 %v1381, %v1374
      %v1561 = vpack.c.b16 %v1382, %v1375
      %v1562 = vpack.c.b16 %v1383, %v1376
      %v1563 = vpack.c.b16 %v1384, %v1377
      %v1564 = vpack.c.b16 %v1385, %v1378
      %v1565 = vpack.c.b16 %v1386, %v1379
      %v1566 = vpack.c.b16 %v1394, %v1387
      %v1567 = vpack.c.b16 %v1395, %v1388
      %v1568 = vpack.c.b16 %v1396, %v1389
      %v1569 = vpack.c.b16 %v1397, %v1390
      %v1570 = vpack.c.b16 %v1398, %v1391
      %v1571 = vpack.c.b16 %v1399, %v1392
      %v1572 = vpack.c.b16 %v1400, %v1393
      %v1573 = vpack.c.b16 %v1408, %v1401
      %v1574 = vpack.c.b16 %v1409, %v1402
      %v1575 = vpack.c.b16 %v1410, %v1403
      %v1576 = vpack.c.b16 %v1411, %v1404
      %v1577 = vpack.c.b16 %v1412, %v1405
      %v1578 = vpack.c.b16 %v1413, %v1406
      %v1579 = vpack.c.b16 %v1414, %v1407
      %v1580 = vpack.c.b16 %v1422, %v1415
      %v1581 = vpack.c.b16 %v1423, %v1416
      %v1582 = vpack.c.b16 %v1424, %v1417
      %v1583 = vpack.c.b16 %v1425, %v1418
      %v1584 = vpack.c.b16 %v1426, %v1419
      %v1585 = vpack.c.b16 %v1427, %v1420
      %v1586 = vpack.c.b16 %v1428, %v1421
      %v1587 = vpack.c.b16 %v1436, %v1429
      %v1588 = vpack.c.b16 %v1437, %v1430
      %v1589 = vpack.c.b16 %v1438, %v1431
      %v1590 = vpack.c.b16 %v1439, %v1432
      %v1591 = vpack.c.b16 %v1440, %v1433
      %v1592 = vpack.c.b16 %v1441, %v1434
      %v1593 = vpack.c.b16 %v1442, %v1435
      %v1594 = vpack.c.b16 %v1450, %v1443
      %v1595 = vpack.c.b16 %v1451, %v1444
      %v1596 = vpack.c.b16 %v1452, %v1445
      %v1597 = vpack.c.b16 %v1453, %v1446
      %v1598 = vpack.c.b16 %v1454, %v1447
      %v1599 = vpack.c.b16 %v1455, %v1448
      %v1600 = vpack.c.b16 %v1456, %v1449
      %v1601 = vpack.c.b16 %v1464, %v1457
      %v1602 = vpack.c.b16 %v1465, %v1458
      %v1603 = vpack.c.b16 %v1466, %v1459
      %v1604 = vpack.c.b16 %v1467, %v1460
      %v1605 = vpack.c.b16 %v1468, %v1461
      %v1606 = vpack.c.b16 %v1469, %v1462
      %v1607 = vpack.c.b16 %v1470, %v1463
      %v1608 = vpack.c.b16 %v1478, %v1471
      %v1609 = vpack.c.b16 %v1479, %v1472
      %v1610 = vpack.c.b16 %v1480, %v1473
      %v1611 = vpack.c.b16 %v1481, %v1474
      %v1612 = vpack.c.b16 %v1482, %v1475
      %v1613 = vpack.c.b16 %v1483, %v1476
      %v1614 = vpack.c.b16 %v1484, %v1477
      %v1615 = vpack.c.b16 %v1492, %v1485
      %v1616 = vpack.c.b16 %v1493, %v1486
      %v1617 = vpack.c.b16 %v1494, %v1487
      %v1618 = vpack.c.b16 %v1495, %v1488
      %v1619 = vpack.c.b16 %v1496, %v1489
      %v1620 = vpack.c.b16 %v1497, %v1490
      %v1621 = vpack.c.b16 %v1498, %v1491
      %v1622 = vpack.c.b16 %v1506, %v1499
      %v1623 = vpack.c.b16 %v1507, %v1500
      %v1624 = vpack.c.b16 %v1508, %v1501
      %v1625 = vpack.c.b16 %v1509, %v1502
      %v1626 = vpack.c.b16 %v1510, %v1503
      %v1627 = vpack.c.b16 %v1511, %v1504
      %v1628 = vpack.c.b16 %v1512, %v1505
      %v1889 = vunpack.c.l.b16 %v1005
      %v1890 = vunpack.c.l.b16 %v1006
      %v1891 = vunpack.c.l.b16 %v1007
      %v1892 = vunpack.c.l.b16 %v1008
      %v1893 = vunpack.c.l.b16 %v1009
      %v1894 = vunpack.c.l.b16 %v1010
      %v1895 = vunpack.c.l.b16 %v1011
      %v1896 = vunpack.c.l.b16 %v1012
      %v1897 = vunpack.c.l.b16 %v1013
      %v1898 = vunpack.c.l.b16 %v1014
      %v1899 = vunpack.c.l.b16 %v1015
      %v1900 = vunpack.c.l.b16 %v1016
      %v1901 = vunpack.c.l.b16 %v1017
      %v1902 = vunpack.c.l.b16 %v1018
      %v1903 = vunpack.c.l.b16 %v1019
      %v1904 = vunpack.c.l.b16 %v1020
      %v1905 = vunpack.c.l.b16 %v1021
      %v1906 = vunpack.c.l.b16 %v1022
      %v1907 = vunpack.c.l.b16 %v1023
      %v1908 = vunpack.c.l.b16 %v1024
      %v1909 = vunpack.c.l.b16 %v1025
      %v1910 = vunpack.c.l.b16 %v1026
      %v1911 = vunpack.c.l.b16 %v1027
      %v1912 = vunpack.c.l.b16 %v1028
      %v1913 = vunpack.c.l.b16 %v1029
      %v1914 = vunpack.c.l.b16 %v1030
      %v1915 = vunpack.c.l.b16 %v1031
      %v1916 = vunpack.c.l.b16 %v1032
      %v1917 = vunpack.c.l.b16 %v1033
      %v1918 = vunpack.c.l.b16 %v1034
      %v1919 = vunpack.c.l.b16 %v1035
      %v1920 = vunpack.c.l.b16 %v1036
      %v1921 = vunpack.c.l.b16 %v1037
      %v1922 = vunpack.c.l.b16 %v1038
      %v1923 = vunpack.c.l.b16 %v1039
      %v1924 = vunpack.c.l.b16 %v1040
      %v1925 = vunpack.c.l.b16 %v1041
      %v1926 = vunpack.c.l.b16 %v1042
      %v1927 = vunpack.c.l.b16 %v1043
      %v1928 = vunpack.c.l.b16 %v1044
      %v1929 = vunpack.c.l.b16 %v1045
      %v1930 = vunpack.c.l.b16 %v1046
      %v1931 = vunpack.c.l.b16 %v1047
      %v1932 = vunpack.c.l.b16 %v1048
      %v1933 = vunpack.c.l.b16 %v1049
      %v1934 = vunpack.c.l.b16 %v1050
      %v1935 = vunpack.c.l.b16 %v1051
      %v1936 = vunpack.c.l.b16 %v1052
      %v1937 = vunpack.c.l.b16 %v1053
      %v1938 = vunpack.c.l.b16 %v1054
      %v1939 = vunpack.c.l.b16 %v1055
      %v1940 = vunpack.c.l.b16 %v1056
      %v1941 = vunpack.c.l.b16 %v1057
      %v1942 = vunpack.c.l.b16 %v1058
      %v1943 = vunpack.c.l.b16 %v1059
      %v1944 = vunpack.c.l.b16 %v1060
      %v1945 = vunpack.c.l.b16 %v1061
      %v1946 = vunpack.c.l.b16 %v1062
      %v1947 = vunpack.c.l.b16 %v1063
      %v1948 = vunpack.c.l.b16 %v1064
      %v1949 = vunpack.c.l.b16 %v1065
      %v1950 = vunpack.c.l.b16 %v1066
      %v1951 = vunpack.c.l.b16 %v1067
      %v1952 = vunpack.c.l.b16 %v1068
      %v1953 = vunpack.c.l.b16 %v1069
      %v1954 = vunpack.c.l.b16 %v1070
      %v1955 = vunpack.c.l.b16 %v1071
      %v1956 = vunpack.c.l.b16 %v1072
      %v1957 = vunpack.c.l.b16 %v1073
      %v1958 = vunpack.c.l.b16 %v1074
      %v1959 = vunpack.c.l.b16 %v1075
      %v1960 = vunpack.c.l.b16 %v1076
      %v1961 = vunpack.c.l.b16 %v1077
      %v1962 = vunpack.c.l.b16 %v1078
      %v1963 = vunpack.c.l.b16 %v1079
      %v1964 = vunpack.c.l.b16 %v1080
      %v1965 = vunpack.c.l.b16 %v1081
      %v1966 = vunpack.c.l.b16 %v1082
      %v1967 = vunpack.c.l.b16 %v1083
      %v1968 = vunpack.c.l.b16 %v1084
      %v1969 = vunpack.c.l.b16 %v1085
      %v1970 = vunpack.c.l.b16 %v1086
      %v1971 = vunpack.c.l.b16 %v1087
      %v1972 = vunpack.c.l.b16 %v1088
      %v1973 = vunpack.c.l.b16 %v1089
      %v1974 = vunpack.c.l.b16 %v1090
      %v1975 = vunpack.c.l.b16 %v1091
      %v1976 = vunpack.c.l.b16 %v1092
      %v1977 = vunpack.c.l.b16 %v1093
      %v1978 = vunpack.c.l.b16 %v1094
      %v1979 = vunpack.c.l.b16 %v1095
      %v1980 = vunpack.c.l.b16 %v1096
      %v1981 = vunpack.c.l.b16 %v1097
      %v1982 = vunpack.c.l.b16 %v1098
      %v1983 = vunpack.c.l.b16 %v1099
      %v1984 = vunpack.c.l.b16 %v1100
      %v1985 = vunpack.c.l.b16 %v1101
      %v1986 = vunpack.c.l.b16 %v1102
      %v1987 = vunpack.c.l.b16 %v1103
      %v1988 = vunpack.c.l.b16 %v1104
      %v1989 = vunpack.c.l.b16 %v1105
      %v1990 = vunpack.c.l.b16 %v1106
      %v1991 = vunpack.c.l.b16 %v1107
      %v1992 = vunpack.c.l.b16 %v1108
      %v1993 = vunpack.c.l.b16 %v1109
      %v1994 = vunpack.c.l.b16 %v1110
      %v1995 = vunpack.c.l.b16 %v1111
      %v1996 = vunpack.c.l.b16 %v1112
      %v1997 = vunpack.c.l.b16 %v1113
      %v1998 = vunpack.c.l.b16 %v1114
      %v1999 = vunpack.c.l.b16 %v1115
      %v2000 = vunpack.c.l.b16 %v1116
      %v2001 = vunpack.c.l.b16 %v1117
      %v2002 = vunpack.c.l.b16 %v1118
      %v2003 = vunpack.c.l.b16 %v1119
      %v2004 = vunpack.c.l.b16 %v1120
      %v2005 = vunpack.c.l.b16 %v1121
      %v2006 = vunpack.c.l.b16 %v1122
      %v2007 = vunpack.c.l.b16 %v1123
      %v2008 = vunpack.c.l.b16 %v1124
      %v2009 = vunpack.c.l.b16 %v1125
      %v2010 = vunpack.c.l.b16 %v1126
      %v2011 = vunpack.c.l.b16 %v1127
      %v2012 = vunpack.c.l.b16 %v1128
      %v2013 = vunpack.c.l.b16 %v1129
      %v2014 = vunpack.c.l.b16 %v1130
      %v2015 = vunpack.c.l.b16 %v1131
      %v2016 = vunpack.c.l.b16 %v1132
      %v2017 = vunpack.c.l.b16 %v1133
      %v2018 = vunpack.c.l.b16 %v1134
      %v2019 = vunpack.c.l.b16 %v1135
      %v2020 = vunpack.c.l.b16 %v1136
      %v2021 = vunpack.c.l.b16 %v1137
      %v2022 = vunpack.c.l.b16 %v1138
      %v2023 = vunpack.c.l.b16 %v1139
      %v2024 = vunpack.c.l.b16 %v1140
      %v2025 = vunpack.c.l.b16 %v1141
      %v2026 = vunpack.c.l.b16 %v1142
      %v2027 = vunpack.c.l.b16 %v1143
      %v2028 = vunpack.c.l.b16 %v1144
      %v2029 = vunpack.c.l.b16 %v1145
      %v2030 = vunpack.c.l.b16 %v1146
      %v2031 = vunpack.c.l.b16 %v1147
      %v2032 = vunpack.c.l.b16 %v1148
      %v2033 = vpack.c.b16 %v1890, %v1889
      %v2034 = vpack.c.b16 %v1892, %v1891
      %v2035 = vpack.c.b16 %v1894, %v1893
      %v2036 = vpack.c.b16 %v1896, %v1895
      %v2037 = vpack.c.b16 %v1898, %v1897
      %v2038 = vpack.c.b16 %v1900, %v1899
      %v2039 = vpack.c.b16 %v1902, %v1901
      %v2040 = vpack.c.b16 %v1904, %v1903
      %v2041 = vpack.c.b16 %v1906, %v1905
      %v2042 = vpack.c.b16 %v1908, %v1907
      %v2043 = vpack.c.b16 %v1910, %v1909
      %v2044 = vpack.c.b16 %v1912, %v1911
      %v2045 = vpack.c.b16 %v1914, %v1913
      %v2046 = vpack.c.b16 %v1916, %v1915
      %v2047 = vpack.c.b16 %v1918, %v1917
      %v2048 = vpack.c.b16 %v1920, %v1919
      %v2049 = vpack.c.b16 %v1922, %v1921
      %v2050 = vpack.c.b16 %v1924, %v1923
      %v2051 = vpack.c.b16 %v1926, %v1925
      %v2052 = vpack.c.b16 %v1928, %v1927
      %v2053 = vpack.c.b16 %v1930, %v1929
      %v2054 = vpack.c.b16 %v1932, %v1931
      %v2055 = vpack.c.b16 %v1934, %v1933
      %v2056 = vpack.c.b16 %v1936, %v1935
      %v2057 = vpack.c.b16 %v1938, %v1937
      %v2058 = vpack.c.b16 %v1940, %v1939
      %v2059 = vpack.c.b16 %v1942, %v1941
      %v2060 = vpack.c.b16 %v1944, %v1943
      %v2061 = vpack.c.b16 %v1946, %v1945
      %v2062 = vpack.c.b16 %v1948, %v1947
      %v2063 = vpack.c.b16 %v1950, %v1949
      %v2064 = vpack.c.b16 %v1952, %v1951
      %v2065 = vpack.c.b16 %v1954, %v1953
      %v2066 = vpack.c.b16 %v1956, %v1955
      %v2067 = vpack.c.b16 %v1958, %v1957
      %v2068 = vpack.c.b16 %v1960, %v1959
      %v2069 = vpack.c.b16 %v1962, %v1961
      %v2070 = vpack.c.b16 %v1964, %v1963
      %v2071 = vpack.c.b16 %v1966, %v1965
      %v2072 = vpack.c.b16 %v1968, %v1967
      %v2073 = vpack.c.b16 %v1970, %v1969
      %v2074 = vpack.c.b16 %v1972, %v1971
      %v2075 = vpack.c.b16 %v1974, %v1973
      %v2076 = vpack.c.b16 %v1976, %v1975
      %v2077 = vpack.c.b16 %v1978, %v1977
      %v2078 = vpack.c.b16 %v1980, %v1979
      %v2079 = vpack.c.b16 %v1982, %v1981
      %v2080 = vpack.c.b16 %v1984, %v1983
      %v2081 = vpack.c.b16 %v1986, %v1985
      %v2082 = vpack.c.b16 %v1988, %v1987
      %v2083 = vpack.c.b16 %v1990, %v1989
      %v2084 = vpack.c.b16 %v1992, %v1991
      %v2085 = vpack.c.b16 %v1994, %v1993
      %v2086 = vpack.c.b16 %v1996, %v1995
      %v2087 = vpack.c.b16 %v1998, %v1997
      %v2088 = vpack.c.b16 %v2000, %v1999
      %v2089 = vpack.c.b16 %v2002, %v2001
      %v2090 = vpack.c.b16 %v2004, %v2003
      %v2091 = vpack.c.b16 %v2006, %v2005
      %v2092 = vpack.c.b16 %v2008, %v2007
      %v2093 = vpack.c.b16 %v2010, %v2009
      %v2094 = vpack.c.b16 %v2012, %v2011
      %v2095 = vpack.c.b16 %v2014, %v2013
      %v2096 = vpack.c.b16 %v2016, %v2015
      %v2097 = vpack.c.b16 %v2018, %v2017
      %v2098 = vpack.c.b16 %v2020, %v2019
      %v2099 = vpack.c.b16 %v2022, %v2021
      %v2100 = vpack.c.b16 %v2024, %v2023
      %v2101 = vpack.c.b16 %v2026, %v2025
      %v2102 = vpack.c.b16 %v2028, %v2027
      %v2103 = vpack.c.b16 %v2030, %v2029
      %v2104 = vpack.c.b16 %v2032, %v2031
      %2177 = vmatpush.bf16.msra.mxu0 %v2040
      %2178 = vmatpush.bf16.msra.mxu0 %v2039
      %2179 = vmatpush.bf16.msra.mxu0 %v2038
      %2180 = vmatpush.bf16.msra.mxu0 %v2037
      %2181 = vmatpush.bf16.msra.mxu0 %v2036
      %2182 = vmatpush.bf16.msra.mxu0 %v2035
      %2183 = vmatpush.bf16.msra.mxu0 %v2034
      %2184 = vmatpush.bf16.msra.mxu0 %v2033
      %2185 = vmatmul.bf16.gmra.mxu0 %v1513
      %v2186 = vpop.f32.mrf.mxu0
      %v2187 = vadd.f32 0.0, %v2186
      %v2188 = vpop.f32.mrf.mxu0
      %v2189 = vadd.f32 0.0, %v2188
      %2190 = vmatmul.bf16.gmra.mxu0 %v1522
      %v2191 = vpop.f32.mrf.mxu0
      %v2192 = vadd.f32 0.0, %v2191
      %v2193 = vpop.f32.mrf.mxu0
      %v2194 = vadd.f32 0.0, %v2193
      %2195 = vmatmul.bf16.gmra.mxu0 %v1519
      %v2196 = vpop.f32.mrf.mxu0
      %v2197 = vadd.f32 0.0, %v2196
      %v2198 = vpop.f32.mrf.mxu0
      %v2199 = vadd.f32 0.0, %v2198
      %2200 = vmatmul.bf16.gmra.mxu0 %v1528
      %v2201 = vpop.f32.mrf.mxu0
      %v2202 = vadd.f32 0.0, %v2201
      %v2203 = vpop.f32.mrf.mxu0
      %v2204 = vadd.f32 0.0, %v2203
      %2205 = vmatmul.bf16.gmra.mxu0 %v1535
      %v2206 = vpop.f32.mrf.mxu0
      %v2207 = vadd.f32 0.0, %v2206
      %v2208 = vpop.f32.mrf.mxu0
      %v2209 = vadd.f32 0.0, %v2208
      %2210 = vmatmul.bf16.gmra.mxu0 %v1542
      %v2211 = vpop.f32.mrf.mxu0
      %v2212 = vadd.f32 0.0, %v2211
      %v2213 = vpop.f32.mrf.mxu0
      %v2214 = vadd.f32 0.0, %v2213
      %2215 = vmatmul.bf16.gmra.mxu0 %v1549
      %v2216 = vpop.f32.mrf.mxu0
      %v2217 = vadd.f32 0.0, %v2216
      %v2218 = vpop.f32.mrf.mxu0
      %v2219 = vadd.f32 0.0, %v2218
      %2220 = vmatmul.bf16.gmra.mxu0 %v1556
      %v2221 = vpop.f32.mrf.mxu0
      %v2222 = vadd.f32 0.0, %v2221
      %v2223 = vpop.f32.mrf.mxu0
      %v2224 = vadd.f32 0.0, %v2223
      %2225 = vmatmul.bf16.gmra.mxu0 %v1563
      %v2226 = vpop.f32.mrf.mxu0
      %v2227 = vadd.f32 0.0, %v2226
      %v2228 = vpop.f32.mrf.mxu0
      %v2229 = vadd.f32 0.0, %v2228
      %2230 = vmatmul.bf16.gmra.mxu0 %v1570
      %v2231 = vpop.f32.mrf.mxu0
      %v2232 = vadd.f32 0.0, %v2231
      %v2233 = vpop.f32.mrf.mxu0
      %v2234 = vadd.f32 0.0, %v2233
      %2235 = vmatmul.bf16.gmra.mxu0 %v1577
      %v2236 = vpop.f32.mrf.mxu0
      %v2237 = vadd.f32 0.0, %v2236
      %v2238 = vpop.f32.mrf.mxu0
      %v2239 = vadd.f32 0.0, %v2238
      %2240 = vmatmul.bf16.gmra.mxu0 %v1584
      %v2241 = vpop.f32.mrf.mxu0
      %v2242 = vadd.f32 0.0, %v2241
      %v2243 = vpop.f32.mrf.mxu0
      %v2244 = vadd.f32 0.0, %v2243
      %2245 = vmatmul.bf16.gmra.mxu0 %v1591
      %v2246 = vpop.f32.mrf.mxu0
      %v2247 = vadd.f32 0.0, %v2246
      %v2248 = vpop.f32.mrf.mxu0
      %v2249 = vadd.f32 0.0, %v2248
      %2250 = vmatmul.bf16.gmra.mxu0 %v1598
      %v2251 = vpop.f32.mrf.mxu0
      %v2252 = vadd.f32 0.0, %v2251
      %v2253 = vpop.f32.mrf.mxu0
      %v2254 = vadd.f32 0.0, %v2253
      %2255 = vmatmul.bf16.gmra.mxu0 %v1605
      %v2256 = vpop.f32.mrf.mxu0
      %v2257 = vadd.f32 0.0, %v2256
      %v2258 = vpop.f32.mrf.mxu0
      %v2259 = vadd.f32 0.0, %v2258
      %2260 = vmatmul.bf16.gmra.mxu0 %v1612
      %v2261 = vpop.f32.mrf.mxu0
      %v2262 = vadd.f32 0.0, %v2261
      %v2263 = vpop.f32.mrf.mxu0
      %v2264 = vadd.f32 0.0, %v2263
      %2265 = vdwg.mxu0
      %2266 = vmatpush.bf16.msra.mxu0 %v2048
      %2267 = vmatpush.bf16.msra.mxu0 %v2047
      %2268 = vmatpush.bf16.msra.mxu0 %v2046
      %2269 = vmatpush.bf16.msra.mxu0 %v2045
      %2270 = vmatpush.bf16.msra.mxu0 %v2044
      %2271 = vmatpush.bf16.msra.mxu0 %v2043
      %2272 = vmatpush.bf16.msra.mxu0 %v2042
      %2273 = vmatpush.bf16.msra.mxu0 %v2041
      %2274 = vmatmul.bf16.gmra.mxu0 %v1514
      %v2275 = vpop.f32.mrf.mxu0
      %v2276 = vadd.f32 %v2187, %v2275
      %v2277 = vpop.f32.mrf.mxu0
      %v2278 = vadd.f32 %v2189, %v2277
      %2279 = vmatmul.bf16.gmra.mxu0 %v1523
      %v2280 = vpop.f32.mrf.mxu0
      %v2281 = vadd.f32 %v2192, %v2280
      %v2282 = vpop.f32.mrf.mxu0
      %v2283 = vadd.f32 %v2194, %v2282
      %2284 = vmatmul.bf16.gmra.mxu0 %v1520
      %v2285 = vpop.f32.mrf.mxu0
      %v2286 = vadd.f32 %v2197, %v2285
      %v2287 = vpop.f32.mrf.mxu0
      %v2288 = vadd.f32 %v2199, %v2287
      %2289 = vmatmul.bf16.gmra.mxu0 %v1529
      %v2290 = vpop.f32.mrf.mxu0
      %v2291 = vadd.f32 %v2202, %v2290
      %v2292 = vpop.f32.mrf.mxu0
      %v2293 = vadd.f32 %v2204, %v2292
      %2294 = vmatmul.bf16.gmra.mxu0 %v1536
      %v2295 = vpop.f32.mrf.mxu0
      %v2296 = vadd.f32 %v2207, %v2295
      %v2297 = vpop.f32.mrf.mxu0
      %v2298 = vadd.f32 %v2209, %v2297
      %2299 = vmatmul.bf16.gmra.mxu0 %v1543
      %v2300 = vpop.f32.mrf.mxu0
      %v2301 = vadd.f32 %v2212, %v2300
      %v2302 = vpop.f32.mrf.mxu0
      %v2303 = vadd.f32 %v2214, %v2302
      %2304 = vmatmul.bf16.gmra.mxu0 %v1550
      %v2305 = vpop.f32.mrf.mxu0
      %v2306 = vadd.f32 %v2217, %v2305
      %v2307 = vpop.f32.mrf.mxu0
      %v2308 = vadd.f32 %v2219, %v2307
      %2309 = vmatmul.bf16.gmra.mxu0 %v1557
      %v2310 = vpop.f32.mrf.mxu0
      %v2311 = vadd.f32 %v2222, %v2310
      %v2312 = vpop.f32.mrf.mxu0
      %v2313 = vadd.f32 %v2224, %v2312
      %2314 = vmatmul.bf16.gmra.mxu0 %v1564
      %v2315 = vpop.f32.mrf.mxu0
      %v2316 = vadd.f32 %v2227, %v2315
      %v2317 = vpop.f32.mrf.mxu0
      %v2318 = vadd.f32 %v2229, %v2317
      %2319 = vmatmul.bf16.gmra.mxu0 %v1571
      %v2320 = vpop.f32.mrf.mxu0
      %v2321 = vadd.f32 %v2232, %v2320
      %v2322 = vpop.f32.mrf.mxu0
      %v2323 = vadd.f32 %v2234, %v2322
      %2324 = vmatmul.bf16.gmra.mxu0 %v1578
      %v2325 = vpop.f32.mrf.mxu0
      %v2326 = vadd.f32 %v2237, %v2325
      %v2327 = vpop.f32.mrf.mxu0
      %v2328 = vadd.f32 %v2239, %v2327
      %2329 = vmatmul.bf16.gmra.mxu0 %v1585
      %v2330 = vpop.f32.mrf.mxu0
      %v2331 = vadd.f32 %v2242, %v2330
      %v2332 = vpop.f32.mrf.mxu0
      %v2333 = vadd.f32 %v2244, %v2332
      %2334 = vmatmul.bf16.gmra.mxu0 %v1592
      %v2335 = vpop.f32.mrf.mxu0
      %v2336 = vadd.f32 %v2247, %v2335
      %v2337 = vpop.f32.mrf.mxu0
      %v2338 = vadd.f32 %v2249, %v2337
      %2339 = vmatmul.bf16.gmra.mxu0 %v1599
      %v2340 = vpop.f32.mrf.mxu0
      %v2341 = vadd.f32 %v2252, %v2340
      %v2342 = vpop.f32.mrf.mxu0
      %v2343 = vadd.f32 %v2254, %v2342
      %2344 = vmatmul.bf16.gmra.mxu0 %v1606
      %v2345 = vpop.f32.mrf.mxu0
      %v2346 = vadd.f32 %v2257, %v2345
      %v2347 = vpop.f32.mrf.mxu0
      %v2348 = vadd.f32 %v2259, %v2347
      %2349 = vmatmul.bf16.gmra.mxu0 %v1613
      %v2350 = vpop.f32.mrf.mxu0
      %v2351 = vadd.f32 %v2262, %v2350
      %v2352 = vpop.f32.mrf.mxu0
      %v2353 = vadd.f32 %v2264, %v2352
      %2354 = vdwg.mxu0
      %2355 = vmatpush.bf16.msra.mxu0 %v2056
      %2356 = vmatpush.bf16.msra.mxu0 %v2055
      %2357 = vmatpush.bf16.msra.mxu0 %v2054
      %2358 = vmatpush.bf16.msra.mxu0 %v2053
      %2359 = vmatpush.bf16.msra.mxu0 %v2052
      %2360 = vmatpush.bf16.msra.mxu0 %v2051
      %2361 = vmatpush.bf16.msra.mxu0 %v2050
      %2362 = vmatpush.bf16.msra.mxu0 %v2049
      %2363 = vmatmul.bf16.gmra.mxu0 %v1515
      %v2364 = vpop.f32.mrf.mxu0
      %v2365 = vadd.f32 %v2276, %v2364
      %v2366 = vpop.f32.mrf.mxu0
      %v2367 = vadd.f32 %v2278, %v2366
      %2368 = vmatmul.bf16.gmra.mxu0 %v1524
      %v2369 = vpop.f32.mrf.mxu0
      %v2370 = vadd.f32 %v2281, %v2369
      %v2371 = vpop.f32.mrf.mxu0
      %v2372 = vadd.f32 %v2283, %v2371
      %2373 = vmatmul.bf16.gmra.mxu0 %v1531
      %v2374 = vpop.f32.mrf.mxu0
      %v2375 = vadd.f32 %v2286, %v2374
      %v2376 = vpop.f32.mrf.mxu0
      %v2377 = vadd.f32 %v2288, %v2376
      %2378 = vmatmul.bf16.gmra.mxu0 %v1538
      %v2379 = vpop.f32.mrf.mxu0
      %v2380 = vadd.f32 %v2291, %v2379
      %v2381 = vpop.f32.mrf.mxu0
      %v2382 = vadd.f32 %v2293, %v2381
      %2383 = vmatmul.bf16.gmra.mxu0 %v1545
      %v2384 = vpop.f32.mrf.mxu0
      %v2385 = vadd.f32 %v2296, %v2384
      %v2386 = vpop.f32.mrf.mxu0
      %v2387 = vadd.f32 %v2298, %v2386
      %2388 = vmatmul.bf16.gmra.mxu0 %v1552
      %v2389 = vpop.f32.mrf.mxu0
      %v2390 = vadd.f32 %v2301, %v2389
      %v2391 = vpop.f32.mrf.mxu0
      %v2392 = vadd.f32 %v2303, %v2391
      %2393 = vmatmul.bf16.gmra.mxu0 %v1559
      %v2394 = vpop.f32.mrf.mxu0
      %v2395 = vadd.f32 %v2306, %v2394
      %v2396 = vpop.f32.mrf.mxu0
      %v2397 = vadd.f32 %v2308, %v2396
      %2398 = vmatmul.bf16.gmra.mxu0 %v1566
      %v2399 = vpop.f32.mrf.mxu0
      %v2400 = vadd.f32 %v2311, %v2399
      %v2401 = vpop.f32.mrf.mxu0
      %v2402 = vadd.f32 %v2313, %v2401
      %2403 = vmatmul.bf16.gmra.mxu0 %v1573
      %v2404 = vpop.f32.mrf.mxu0
      %v2405 = vadd.f32 %v2316, %v2404
      %v2406 = vpop.f32.mrf.mxu0
      %v2407 = vadd.f32 %v2318, %v2406
      %2408 = vmatmul.bf16.gmra.mxu0 %v1580
      %v2409 = vpop.f32.mrf.mxu0
      %v2410 = vadd.f32 %v2321, %v2409
      %v2411 = vpop.f32.mrf.mxu0
      %v2412 = vadd.f32 %v2323, %v2411
      %2413 = vmatmul.bf16.gmra.mxu0 %v1587
      %v2414 = vpop.f32.mrf.mxu0
      %v2415 = vadd.f32 %v2326, %v2414
      %v2416 = vpop.f32.mrf.mxu0
      %v2417 = vadd.f32 %v2328, %v2416
      %2418 = vmatmul.bf16.gmra.mxu0 %v1594
      %v2419 = vpop.f32.mrf.mxu0
      %v2420 = vadd.f32 %v2331, %v2419
      %v2421 = vpop.f32.mrf.mxu0
      %v2422 = vadd.f32 %v2333, %v2421
      %2423 = vmatmul.bf16.gmra.mxu0 %v1601
      %v2424 = vpop.f32.mrf.mxu0
      %v2425 = vadd.f32 %v2336, %v2424
      %v2426 = vpop.f32.mrf.mxu0
      %v2427 = vadd.f32 %v2338, %v2426
      %2428 = vmatmul.bf16.gmra.mxu0 %v1608
      %v2429 = vpop.f32.mrf.mxu0
      %v2430 = vadd.f32 %v2341, %v2429
      %v2431 = vpop.f32.mrf.mxu0
      %v2432 = vadd.f32 %v2343, %v2431
      %2433 = vmatmul.bf16.gmra.mxu0 %v1615
      %v2434 = vpop.f32.mrf.mxu0
      %v2435 = vadd.f32 %v2346, %v2434
      %v2436 = vpop.f32.mrf.mxu0
      %v2437 = vadd.f32 %v2348, %v2436
      %2438 = vmatmul.bf16.gmra.mxu0 %v1622
      %v2439 = vpop.f32.mrf.mxu0
      %v2440 = vadd.f32 %v2351, %v2439
      %v2441 = vpop.f32.mrf.mxu0
      %v2442 = vadd.f32 %v2353, %v2441
      %2443 = vdwg.mxu0
      %2444 = vmatpush.bf16.msra.mxu0 %v2064
      %2445 = vmatpush.bf16.msra.mxu0 %v2063
      %2446 = vmatpush.bf16.msra.mxu0 %v2062
      %2447 = vmatpush.bf16.msra.mxu0 %v2061
      %2448 = vmatpush.bf16.msra.mxu0 %v2060
      %2449 = vmatpush.bf16.msra.mxu0 %v2059
      %2450 = vmatpush.bf16.msra.mxu0 %v2058
      %2451 = vmatpush.bf16.msra.mxu0 %v2057
      %2452 = vmatmul.bf16.gmra.mxu0 %v1516
      %v2453 = vpop.f32.mrf.mxu0
      %v2454 = vadd.f32 %v2365, %v2453
      %v2455 = vpop.f32.mrf.mxu0
      %v2456 = vadd.f32 %v2367, %v2455
      %2457 = vmatmul.bf16.gmra.mxu0 %v1525
      %v2458 = vpop.f32.mrf.mxu0
      %v2459 = vadd.f32 %v2370, %v2458
      %v2460 = vpop.f32.mrf.mxu0
      %v2461 = vadd.f32 %v2372, %v2460
      %2462 = vmatmul.bf16.gmra.mxu0 %v1532
      %v2463 = vpop.f32.mrf.mxu0
      %v2464 = vadd.f32 %v2375, %v2463
      %v2465 = vpop.f32.mrf.mxu0
      %v2466 = vadd.f32 %v2377, %v2465
      %2467 = vmatmul.bf16.gmra.mxu0 %v1539
      %v2468 = vpop.f32.mrf.mxu0
      %v2469 = vadd.f32 %v2380, %v2468
      %v2470 = vpop.f32.mrf.mxu0
      %v2471 = vadd.f32 %v2382, %v2470
      %2472 = vmatmul.bf16.gmra.mxu0 %v1546
      %v2473 = vpop.f32.mrf.mxu0
      %v2474 = vadd.f32 %v2385, %v2473
      %v2475 = vpop.f32.mrf.mxu0
      %v2476 = vadd.f32 %v2387, %v2475
      %2477 = vmatmul.bf16.gmra.mxu0 %v1553
      %v2478 = vpop.f32.mrf.mxu0
      %v2479 = vadd.f32 %v2390, %v2478
      %v2480 = vpop.f32.mrf.mxu0
      %v2481 = vadd.f32 %v2392, %v2480
      %2482 = vmatmul.bf16.gmra.mxu0 %v1560
      %v2483 = vpop.f32.mrf.mxu0
      %v2484 = vadd.f32 %v2395, %v2483
      %v2485 = vpop.f32.mrf.mxu0
      %v2486 = vadd.f32 %v2397, %v2485
      %2487 = vmatmul.bf16.gmra.mxu0 %v1567
      %v2488 = vpop.f32.mrf.mxu0
      %v2489 = vadd.f32 %v2400, %v2488
      %v2490 = vpop.f32.mrf.mxu0
      %v2491 = vadd.f32 %v2402, %v2490
      %2492 = vmatmul.bf16.gmra.mxu0 %v1574
      %v2493 = vpop.f32.mrf.mxu0
      %v2494 = vadd.f32 %v2405, %v2493
      %v2495 = vpop.f32.mrf.mxu0
      %v2496 = vadd.f32 %v2407, %v2495
      %2497 = vmatmul.bf16.gmra.mxu0 %v1581
      %v2498 = vpop.f32.mrf.mxu0
      %v2499 = vadd.f32 %v2410, %v2498
      %v2500 = vpop.f32.mrf.mxu0
      %v2501 = vadd.f32 %v2412, %v2500
      %2502 = vmatmul.bf16.gmra.mxu0 %v1588
      %v2503 = vpop.f32.mrf.mxu0
      %v2504 = vadd.f32 %v2415, %v2503
      %v2505 = vpop.f32.mrf.mxu0
      %v2506 = vadd.f32 %v2417, %v2505
      %2507 = vmatmul.bf16.gmra.mxu0 %v1595
      %v2508 = vpop.f32.mrf.mxu0
      %v2509 = vadd.f32 %v2420, %v2508
      %v2510 = vpop.f32.mrf.mxu0
      %v2511 = vadd.f32 %v2422, %v2510
      %2512 = vmatmul.bf16.gmra.mxu0 %v1602
      %v2513 = vpop.f32.mrf.mxu0
      %v2514 = vadd.f32 %v2425, %v2513
      %v2515 = vpop.f32.mrf.mxu0
      %v2516 = vadd.f32 %v2427, %v2515
      %2517 = vmatmul.bf16.gmra.mxu0 %v1609
      %v2518 = vpop.f32.mrf.mxu0
      %v2519 = vadd.f32 %v2430, %v2518
      %v2520 = vpop.f32.mrf.mxu0
      %v2521 = vadd.f32 %v2432, %v2520
      %2522 = vmatmul.bf16.gmra.mxu0 %v1616
      %v2523 = vpop.f32.mrf.mxu0
      %v2524 = vadd.f32 %v2435, %v2523
      %v2525 = vpop.f32.mrf.mxu0
      %v2526 = vadd.f32 %v2437, %v2525
      %2527 = vmatmul.bf16.gmra.mxu0 %v1623
      %v2528 = vpop.f32.mrf.mxu0
      %v2529 = vadd.f32 %v2440, %v2528
      %v2530 = vpop.f32.mrf.mxu0
      %v2531 = vadd.f32 %v2442, %v2530
      %2532 = vdwg.mxu0
      %2533 = vmatpush.bf16.msra.mxu0 %v2072
      %2534 = vmatpush.bf16.msra.mxu0 %v2071
      %2535 = vmatpush.bf16.msra.mxu0 %v2070
      %2536 = vmatpush.bf16.msra.mxu0 %v2069
      %2537 = vmatpush.bf16.msra.mxu0 %v2068
      %2538 = vmatpush.bf16.msra.mxu0 %v2067
      %2539 = vmatpush.bf16.msra.mxu0 %v2066
      %2540 = vmatpush.bf16.msra.mxu0 %v2065
      %2541 = vmatmul.bf16.gmra.mxu0 %v1517
      %v2542 = vpop.f32.mrf.mxu0
      %v2543 = vadd.f32 %v2454, %v2542
      %v2544 = vpop.f32.mrf.mxu0
      %v2545 = vadd.f32 %v2456, %v2544
      %2546 = vmatmul.bf16.gmra.mxu0 %v1526
      %v2547 = vpop.f32.mrf.mxu0
      %v2548 = vadd.f32 %v2459, %v2547
      %v2549 = vpop.f32.mrf.mxu0
      %v2550 = vadd.f32 %v2461, %v2549
      %2551 = vmatmul.bf16.gmra.mxu0 %v1533
      %v2552 = vpop.f32.mrf.mxu0
      %v2553 = vadd.f32 %v2464, %v2552
      %v2554 = vpop.f32.mrf.mxu0
      %v2555 = vadd.f32 %v2466, %v2554
      %2556 = vmatmul.bf16.gmra.mxu0 %v1540
      %v2557 = vpop.f32.mrf.mxu0
      %v2558 = vadd.f32 %v2469, %v2557
      %v2559 = vpop.f32.mrf.mxu0
      %v2560 = vadd.f32 %v2471, %v2559
      %2561 = vmatmul.bf16.gmra.mxu0 %v1547
      %v2562 = vpop.f32.mrf.mxu0
      %v2563 = vadd.f32 %v2474, %v2562
      %v2564 = vpop.f32.mrf.mxu0
      %v2565 = vadd.f32 %v2476, %v2564
      %2566 = vmatmul.bf16.gmra.mxu0 %v1554
      %v2567 = vpop.f32.mrf.mxu0
      %v2568 = vadd.f32 %v2479, %v2567
      %v2569 = vpop.f32.mrf.mxu0
      %v2570 = vadd.f32 %v2481, %v2569
      %2571 = vmatmul.bf16.gmra.mxu0 %v1561
      %v2572 = vpop.f32.mrf.mxu0
      %v2573 = vadd.f32 %v2484, %v2572
      %v2574 = vpop.f32.mrf.mxu0
      %v2575 = vadd.f32 %v2486, %v2574
      %2576 = vmatmul.bf16.gmra.mxu0 %v1568
      %v2577 = vpop.f32.mrf.mxu0
      %v2578 = vadd.f32 %v2489, %v2577
      %v2579 = vpop.f32.mrf.mxu0
      %v2580 = vadd.f32 %v2491, %v2579
      %2581 = vmatmul.bf16.gmra.mxu0 %v1575
      %v2582 = vpop.f32.mrf.mxu0
      %v2583 = vadd.f32 %v2494, %v2582
      %v2584 = vpop.f32.mrf.mxu0
      %v2585 = vadd.f32 %v2496, %v2584
      %2586 = vmatmul.bf16.gmra.mxu0 %v1582
      %v2587 = vpop.f32.mrf.mxu0
      %v2588 = vadd.f32 %v2499, %v2587
      %v2589 = vpop.f32.mrf.mxu0
      %v2590 = vadd.f32 %v2501, %v2589
      %2591 = vmatmul.bf16.gmra.mxu0 %v1589
      %v2592 = vpop.f32.mrf.mxu0
      %v2593 = vadd.f32 %v2504, %v2592
      %v2594 = vpop.f32.mrf.mxu0
      %v2595 = vadd.f32 %v2506, %v2594
      %2596 = vmatmul.bf16.gmra.mxu0 %v1596
      %v2597 = vpop.f32.mrf.mxu0
      %v2598 = vadd.f32 %v2509, %v2597
      %v2599 = vpop.f32.mrf.mxu0
      %v2600 = vadd.f32 %v2511, %v2599
      %2601 = vmatmul.bf16.gmra.mxu0 %v1603
      %v2602 = vpop.f32.mrf.mxu0
      %v2603 = vadd.f32 %v2514, %v2602
      %v2604 = vpop.f32.mrf.mxu0
      %v2605 = vadd.f32 %v2516, %v2604
      %2606 = vmatmul.bf16.gmra.mxu0 %v1610
      %v2607 = vpop.f32.mrf.mxu0
      %v2608 = vadd.f32 %v2519, %v2607
      %v2609 = vpop.f32.mrf.mxu0
      %v2610 = vadd.f32 %v2521, %v2609
      %2611 = vmatmul.bf16.gmra.mxu0 %v1617
      %v2612 = vpop.f32.mrf.mxu0
      %v2613 = vadd.f32 %v2524, %v2612
      %v2614 = vpop.f32.mrf.mxu0
      %v2615 = vadd.f32 %v2526, %v2614
      %2616 = vmatmul.bf16.gmra.mxu0 %v1624
      %v2617 = vpop.f32.mrf.mxu0
      %v2618 = vadd.f32 %v2529, %v2617
      %v2619 = vpop.f32.mrf.mxu0
      %v2620 = vadd.f32 %v2531, %v2619
      %2621 = vdwg.mxu0
      %2622 = vmatpush.bf16.msra.mxu0 %v2080
      %2623 = vmatpush.bf16.msra.mxu0 %v2079
      %2624 = vmatpush.bf16.msra.mxu0 %v2078
      %2625 = vmatpush.bf16.msra.mxu0 %v2077
      %2626 = vmatpush.bf16.msra.mxu0 %v2076
      %2627 = vmatpush.bf16.msra.mxu0 %v2075
      %2628 = vmatpush.bf16.msra.mxu0 %v2074
      %2629 = vmatpush.bf16.msra.mxu0 %v2073
      %2630 = vmatmul.bf16.gmra.mxu0 %v1518
      %v2631 = vpop.f32.mrf.mxu0
      %v2632 = vadd.f32 %v2543, %v2631
      %v2633 = vpop.f32.mrf.mxu0
      %v2634 = vadd.f32 %v2545, %v2633
      %2635 = vmatmul.bf16.gmra.mxu0 %v1527
      %v2636 = vpop.f32.mrf.mxu0
      %v2637 = vadd.f32 %v2548, %v2636
      %v2638 = vpop.f32.mrf.mxu0
      %v2639 = vadd.f32 %v2550, %v2638
      %2640 = vmatmul.bf16.gmra.mxu0 %v1534
      %v2641 = vpop.f32.mrf.mxu0
      %v2642 = vadd.f32 %v2553, %v2641
      %v2643 = vpop.f32.mrf.mxu0
      %v2644 = vadd.f32 %v2555, %v2643
      %2645 = vmatmul.bf16.gmra.mxu0 %v1541
      %v2646 = vpop.f32.mrf.mxu0
      %v2647 = vadd.f32 %v2558, %v2646
      %v2648 = vpop.f32.mrf.mxu0
      %v2649 = vadd.f32 %v2560, %v2648
      %2650 = vmatmul.bf16.gmra.mxu0 %v1548
      %v2651 = vpop.f32.mrf.mxu0
      %v2652 = vadd.f32 %v2563, %v2651
      %v2653 = vpop.f32.mrf.mxu0
      %v2654 = vadd.f32 %v2565, %v2653
      %2655 = vmatmul.bf16.gmra.mxu0 %v1555
      %v2656 = vpop.f32.mrf.mxu0
      %v2657 = vadd.f32 %v2568, %v2656
      %v2658 = vpop.f32.mrf.mxu0
      %v2659 = vadd.f32 %v2570, %v2658
      %2660 = vmatmul.bf16.gmra.mxu0 %v1562
      %v2661 = vpop.f32.mrf.mxu0
      %v2662 = vadd.f32 %v2573, %v2661
      %v2663 = vpop.f32.mrf.mxu0
      %v2664 = vadd.f32 %v2575, %v2663
      %2665 = vmatmul.bf16.gmra.mxu0 %v1569
      %v2666 = vpop.f32.mrf.mxu0
      %v2667 = vadd.f32 %v2578, %v2666
      %v2668 = vpop.f32.mrf.mxu0
      %v2669 = vadd.f32 %v2580, %v2668
      %2670 = vmatmul.bf16.gmra.mxu0 %v1576
      %v2671 = vpop.f32.mrf.mxu0
      %v2672 = vadd.f32 %v2583, %v2671
      %v2673 = vpop.f32.mrf.mxu0
      %v2674 = vadd.f32 %v2585, %v2673
      %2675 = vmatmul.bf16.gmra.mxu0 %v1583
      %v2676 = vpop.f32.mrf.mxu0
      %v2677 = vadd.f32 %v2588, %v2676
      %v2678 = vpop.f32.mrf.mxu0
      %v2679 = vadd.f32 %v2590, %v2678
      %2680 = vmatmul.bf16.gmra.mxu0 %v1590
      %v2681 = vpop.f32.mrf.mxu0
      %v2682 = vadd.f32 %v2593, %v2681
      %v2683 = vpop.f32.mrf.mxu0
      %v2684 = vadd.f32 %v2595, %v2683
      %2685 = vmatmul.bf16.gmra.mxu0 %v1597
      %v2686 = vpop.f32.mrf.mxu0
      %v2687 = vadd.f32 %v2598, %v2686
      %v2688 = vpop.f32.mrf.mxu0
      %v2689 = vadd.f32 %v2600, %v2688
      %2690 = vmatmul.bf16.gmra.mxu0 %v1604
      %v2691 = vpop.f32.mrf.mxu0
      %v2692 = vadd.f32 %v2603, %v2691
      %v2693 = vpop.f32.mrf.mxu0
      %v2694 = vadd.f32 %v2605, %v2693
      %2695 = vmatmul.bf16.gmra.mxu0 %v1611
      %v2696 = vpop.f32.mrf.mxu0
      %v2697 = vadd.f32 %v2608, %v2696
      %v2698 = vpop.f32.mrf.mxu0
      %v2699 = vadd.f32 %v2610, %v2698
      %2700 = vmatmul.bf16.gmra.mxu0 %v1618
      %v2701 = vpop.f32.mrf.mxu0
      %v2702 = vadd.f32 %v2613, %v2701
      %v2703 = vpop.f32.mrf.mxu0
      %v2704 = vadd.f32 %v2615, %v2703
      %2705 = vmatmul.bf16.gmra.mxu0 %v1625
      %v2706 = vpop.f32.mrf.mxu0
      %v2707 = vadd.f32 %v2618, %v2706
      %v2708 = vpop.f32.mrf.mxu0
      %v2709 = vadd.f32 %v2620, %v2708
      %2710 = vdwg.mxu0
      %2711 = vmatpush.bf16.msra.mxu0 %v2088
      %2712 = vmatpush.bf16.msra.mxu0 %v2087
      %2713 = vmatpush.bf16.msra.mxu0 %v2086
      %2714 = vmatpush.bf16.msra.mxu0 %v2085
      %2715 = vmatpush.bf16.msra.mxu0 %v2084
      %2716 = vmatpush.bf16.msra.mxu0 %v2083
      %2717 = vmatpush.bf16.msra.mxu0 %v2082
      %2718 = vmatpush.bf16.msra.mxu0 %v2081
      %2719 = vmatmul.bf16.gmra.mxu0 %v1519
      %v2720 = vpop.f32.mrf.mxu0
      %v2721 = vadd.f32 %v2632, %v2720
      %v2722 = vpop.f32.mrf.mxu0
      %v2723 = vadd.f32 %v2634, %v2722
      %2724 = vmatmul.bf16.gmra.mxu0 %v1528
      %v2725 = vpop.f32.mrf.mxu0
      %v2726 = vadd.f32 %v2637, %v2725
      %v2727 = vpop.f32.mrf.mxu0
      %v2728 = vadd.f32 %v2639, %v2727
      %2729 = vmatmul.bf16.gmra.mxu0 %v1535
      %v2730 = vpop.f32.mrf.mxu0
      %v2731 = vadd.f32 %v2642, %v2730
      %v2732 = vpop.f32.mrf.mxu0
      %v2733 = vadd.f32 %v2644, %v2732
      %2734 = vmatmul.bf16.gmra.mxu0 %v1542
      %v2735 = vpop.f32.mrf.mxu0
      %v2736 = vadd.f32 %v2647, %v2735
      %v2737 = vpop.f32.mrf.mxu0
      %v2738 = vadd.f32 %v2649, %v2737
      %2739 = vmatmul.bf16.gmra.mxu0 %v1549
      %v2740 = vpop.f32.mrf.mxu0
      %v2741 = vadd.f32 %v2652, %v2740
      %v2742 = vpop.f32.mrf.mxu0
      %v2743 = vadd.f32 %v2654, %v2742
      %2744 = vmatmul.bf16.gmra.mxu0 %v1556
      %v2745 = vpop.f32.mrf.mxu0
      %v2746 = vadd.f32 %v2657, %v2745
      %v2747 = vpop.f32.mrf.mxu0
      %v2748 = vadd.f32 %v2659, %v2747
      %2749 = vmatmul.bf16.gmra.mxu0 %v1563
      %v2750 = vpop.f32.mrf.mxu0
      %v2751 = vadd.f32 %v2662, %v2750
      %v2752 = vpop.f32.mrf.mxu0
      %v2753 = vadd.f32 %v2664, %v2752
      %2754 = vmatmul.bf16.gmra.mxu0 %v1570
      %v2755 = vpop.f32.mrf.mxu0
      %v2756 = vadd.f32 %v2667, %v2755
      %v2757 = vpop.f32.mrf.mxu0
      %v2758 = vadd.f32 %v2669, %v2757
      %2759 = vmatmul.bf16.gmra.mxu0 %v1577
      %v2760 = vpop.f32.mrf.mxu0
      %v2761 = vadd.f32 %v2672, %v2760
      %v2762 = vpop.f32.mrf.mxu0
      %v2763 = vadd.f32 %v2674, %v2762
      %2764 = vmatmul.bf16.gmra.mxu0 %v1584
      %v2765 = vpop.f32.mrf.mxu0
      %v2766 = vadd.f32 %v2677, %v2765
      %v2767 = vpop.f32.mrf.mxu0
      %v2768 = vadd.f32 %v2679, %v2767
      %2769 = vmatmul.bf16.gmra.mxu0 %v1591
      %v2770 = vpop.f32.mrf.mxu0
      %v2771 = vadd.f32 %v2682, %v2770
      %v2772 = vpop.f32.mrf.mxu0
      %v2773 = vadd.f32 %v2684, %v2772
      %2774 = vmatmul.bf16.gmra.mxu0 %v1598
      %v2775 = vpop.f32.mrf.mxu0
      %v2776 = vadd.f32 %v2687, %v2775
      %v2777 = vpop.f32.mrf.mxu0
      %v2778 = vadd.f32 %v2689, %v2777
      %2779 = vmatmul.bf16.gmra.mxu0 %v1605
      %v2780 = vpop.f32.mrf.mxu0
      %v2781 = vadd.f32 %v2692, %v2780
      %v2782 = vpop.f32.mrf.mxu0
      %v2783 = vadd.f32 %v2694, %v2782
      %2784 = vmatmul.bf16.gmra.mxu0 %v1612
      %v2785 = vpop.f32.mrf.mxu0
      %v2786 = vadd.f32 %v2697, %v2785
      %v2787 = vpop.f32.mrf.mxu0
      %v2788 = vadd.f32 %v2699, %v2787
      %2789 = vmatmul.bf16.gmra.mxu0 %v1619
      %v2790 = vpop.f32.mrf.mxu0
      %v2791 = vadd.f32 %v2702, %v2790
      %v2792 = vpop.f32.mrf.mxu0
      %v2793 = vadd.f32 %v2704, %v2792
      %2794 = vmatmul.bf16.gmra.mxu0 %v1626
      %v2795 = vpop.f32.mrf.mxu0
      %v2796 = vadd.f32 %v2707, %v2795
      %v2797 = vpop.f32.mrf.mxu0
      %v2798 = vadd.f32 %v2709, %v2797
      %2799 = vdwg.mxu0
      %2800 = vmatpush.bf16.msra.mxu0 %v2096
      %2801 = vmatpush.bf16.msra.mxu0 %v2095
      %2802 = vmatpush.bf16.msra.mxu0 %v2094
      %2803 = vmatpush.bf16.msra.mxu0 %v2093
      %2804 = vmatpush.bf16.msra.mxu0 %v2092
      %2805 = vmatpush.bf16.msra.mxu0 %v2091
      %2806 = vmatpush.bf16.msra.mxu0 %v2090
      %2807 = vmatpush.bf16.msra.mxu0 %v2089
      %2808 = vmatmul.bf16.gmra.mxu0 %v1520
      %v2809 = vpop.f32.mrf.mxu0
      %v2810 = vadd.f32 %v2721, %v2809
      %v2811 = vpop.f32.mrf.mxu0
      %v2812 = vadd.f32 %v2723, %v2811
      %2813 = vmatmul.bf16.gmra.mxu0 %v1529
      %v2814 = vpop.f32.mrf.mxu0
      %v2815 = vadd.f32 %v2726, %v2814
      %v2816 = vpop.f32.mrf.mxu0
      %v2817 = vadd.f32 %v2728, %v2816
      %2818 = vmatmul.bf16.gmra.mxu0 %v1536
      %v2819 = vpop.f32.mrf.mxu0
      %v2820 = vadd.f32 %v2731, %v2819
      %v2821 = vpop.f32.mrf.mxu0
      %v2822 = vadd.f32 %v2733, %v2821
      %2823 = vmatmul.bf16.gmra.mxu0 %v1543
      %v2824 = vpop.f32.mrf.mxu0
      %v2825 = vadd.f32 %v2736, %v2824
      %v2826 = vpop.f32.mrf.mxu0
      %v2827 = vadd.f32 %v2738, %v2826
      %2828 = vmatmul.bf16.gmra.mxu0 %v1550
      %v2829 = vpop.f32.mrf.mxu0
      %v2830 = vadd.f32 %v2741, %v2829
      %v2831 = vpop.f32.mrf.mxu0
      %v2832 = vadd.f32 %v2743, %v2831
      %2833 = vmatmul.bf16.gmra.mxu0 %v1557
      %v2834 = vpop.f32.mrf.mxu0
      %v2835 = vadd.f32 %v2746, %v2834
      %v2836 = vpop.f32.mrf.mxu0
      %v2837 = vadd.f32 %v2748, %v2836
      %2838 = vmatmul.bf16.gmra.mxu0 %v1564
      %v2839 = vpop.f32.mrf.mxu0
      %v2840 = vadd.f32 %v2751, %v2839
      %v2841 = vpop.f32.mrf.mxu0
      %v2842 = vadd.f32 %v2753, %v2841
      %2843 = vmatmul.bf16.gmra.mxu0 %v1571
      %v2844 = vpop.f32.mrf.mxu0
      %v2845 = vadd.f32 %v2756, %v2844
      %v2846 = vpop.f32.mrf.mxu0
      %v2847 = vadd.f32 %v2758, %v2846
      %2848 = vmatmul.bf16.gmra.mxu0 %v1578
      %v2849 = vpop.f32.mrf.mxu0
      %v2850 = vadd.f32 %v2761, %v2849
      %v2851 = vpop.f32.mrf.mxu0
      %v2852 = vadd.f32 %v2763, %v2851
      %2853 = vmatmul.bf16.gmra.mxu0 %v1585
      %v2854 = vpop.f32.mrf.mxu0
      %v2855 = vadd.f32 %v2766, %v2854
      %v2856 = vpop.f32.mrf.mxu0
      %v2857 = vadd.f32 %v2768, %v2856
      %2858 = vmatmul.bf16.gmra.mxu0 %v1592
      %v2859 = vpop.f32.mrf.mxu0
      %v2860 = vadd.f32 %v2771, %v2859
      %v2861 = vpop.f32.mrf.mxu0
      %v2862 = vadd.f32 %v2773, %v2861
      %2863 = vmatmul.bf16.gmra.mxu0 %v1599
      %v2864 = vpop.f32.mrf.mxu0
      %v2865 = vadd.f32 %v2776, %v2864
      %v2866 = vpop.f32.mrf.mxu0
      %v2867 = vadd.f32 %v2778, %v2866
      %2868 = vmatmul.bf16.gmra.mxu0 %v1606
      %v2869 = vpop.f32.mrf.mxu0
      %v2870 = vadd.f32 %v2781, %v2869
      %v2871 = vpop.f32.mrf.mxu0
      %v2872 = vadd.f32 %v2783, %v2871
      %2873 = vmatmul.bf16.gmra.mxu0 %v1613
      %v2874 = vpop.f32.mrf.mxu0
      %v2875 = vadd.f32 %v2786, %v2874
      %v2876 = vpop.f32.mrf.mxu0
      %v2877 = vadd.f32 %v2788, %v2876
      %2878 = vmatmul.bf16.gmra.mxu0 %v1620
      %v2879 = vpop.f32.mrf.mxu0
      %v2880 = vadd.f32 %v2791, %v2879
      %v2881 = vpop.f32.mrf.mxu0
      %v2882 = vadd.f32 %v2793, %v2881
      %2883 = vmatmul.bf16.gmra.mxu0 %v1627
      %v2884 = vpop.f32.mrf.mxu0
      %v2885 = vadd.f32 %v2796, %v2884
      %v2886 = vpop.f32.mrf.mxu0
      %v2887 = vadd.f32 %v2798, %v2886
      %2888 = vdwg.mxu0
      %2889 = vmatpush.bf16.msra.mxu0 %v2104
      %2890 = vmatpush.bf16.msra.mxu0 %v2103
      %2891 = vmatpush.bf16.msra.mxu0 %v2102
      %2892 = vmatpush.bf16.msra.mxu0 %v2101
      %2893 = vmatpush.bf16.msra.mxu0 %v2100
      %2894 = vmatpush.bf16.msra.mxu0 %v2099
      %2895 = vmatpush.bf16.msra.mxu0 %v2098
      %2896 = vmatpush.bf16.msra.mxu0 %v2097
      %2897 = vmatmul.bf16.gmra.mxu0 %v1521
      %v2898 = vpop.f32.mrf.mxu0
      %v2899 = vadd.f32 %v2810, %v2898
      %v2900 = vpop.f32.mrf.mxu0
      %v2901 = vadd.f32 %v2812, %v2900
      %2902 = vmatmul.bf16.gmra.mxu0 %v1530
      %v2903 = vpop.f32.mrf.mxu0
      %v2904 = vadd.f32 %v2815, %v2903
      %v2905 = vpop.f32.mrf.mxu0
      %v2906 = vadd.f32 %v2817, %v2905
      %2907 = vmatmul.bf16.gmra.mxu0 %v1537
      %v2908 = vpop.f32.mrf.mxu0
      %v2909 = vadd.f32 %v2820, %v2908
      %v2910 = vpop.f32.mrf.mxu0
      %v2911 = vadd.f32 %v2822, %v2910
      %2912 = vmatmul.bf16.gmra.mxu0 %v1544
      %v2913 = vpop.f32.mrf.mxu0
      %v2914 = vadd.f32 %v2825, %v2913
      %v2915 = vpop.f32.mrf.mxu0
      %v2916 = vadd.f32 %v2827, %v2915
      %2917 = vmatmul.bf16.gmra.mxu0 %v1551
      %v2918 = vpop.f32.mrf.mxu0
      %v2919 = vadd.f32 %v2830, %v2918
      %v2920 = vpop.f32.mrf.mxu0
      %v2921 = vadd.f32 %v2832, %v2920
      %2922 = vmatmul.bf16.gmra.mxu0 %v1558
      %v2923 = vpop.f32.mrf.mxu0
      %v2924 = vadd.f32 %v2835, %v2923
      %v2925 = vpop.f32.mrf.mxu0
      %v2926 = vadd.f32 %v2837, %v2925
      %2927 = vmatmul.bf16.gmra.mxu0 %v1565
      %v2928 = vpop.f32.mrf.mxu0
      %v2929 = vadd.f32 %v2840, %v2928
      %v2930 = vpop.f32.mrf.mxu0
      %v2931 = vadd.f32 %v2842, %v2930
      %2932 = vmatmul.bf16.gmra.mxu0 %v1572
      %v2933 = vpop.f32.mrf.mxu0
      %v2934 = vadd.f32 %v2845, %v2933
      %v2935 = vpop.f32.mrf.mxu0
      %v2936 = vadd.f32 %v2847, %v2935
      %2937 = vmatmul.bf16.gmra.mxu0 %v1579
      %v2938 = vpop.f32.mrf.mxu0
      %v2939 = vadd.f32 %v2850, %v2938
      %v2940 = vpop.f32.mrf.mxu0
      %v2941 = vadd.f32 %v2852, %v2940
      %2942 = vmatmul.bf16.gmra.mxu0 %v1586
      %v2943 = vpop.f32.mrf.mxu0
      %v2944 = vadd.f32 %v2855, %v2943
      %v2945 = vpop.f32.mrf.mxu0
      %v2946 = vadd.f32 %v2857, %v2945
      %2947 = vmatmul.bf16.gmra.mxu0 %v1593
      %v2948 = vpop.f32.mrf.mxu0
      %v2949 = vadd.f32 %v2860, %v2948
      %v2950 = vpop.f32.mrf.mxu0
      %v2951 = vadd.f32 %v2862, %v2950
      %2952 = vmatmul.bf16.gmra.mxu0 %v1600
      %v2953 = vpop.f32.mrf.mxu0
      %v2954 = vadd.f32 %v2865, %v2953
      %v2955 = vpop.f32.mrf.mxu0
      %v2956 = vadd.f32 %v2867, %v2955
      %2957 = vmatmul.bf16.gmra.mxu0 %v1607
      %v2958 = vpop.f32.mrf.mxu0
      %v2959 = vadd.f32 %v2870, %v2958
      %v2960 = vpop.f32.mrf.mxu0
      %v2961 = vadd.f32 %v2872, %v2960
      %2962 = vmatmul.bf16.gmra.mxu0 %v1614
      %v2963 = vpop.f32.mrf.mxu0
      %v2964 = vadd.f32 %v2875, %v2963
      %v2965 = vpop.f32.mrf.mxu0
      %v2966 = vadd.f32 %v2877, %v2965
      %2967 = vmatmul.bf16.gmra.mxu0 %v1621
      %v2968 = vpop.f32.mrf.mxu0
      %v2969 = vadd.f32 %v2880, %v2968
      %v2970 = vpop.f32.mrf.mxu0
      %v2971 = vadd.f32 %v2882, %v2970
      %2972 = vmatmul.bf16.gmra.mxu0 %v1628
      %v2973 = vpop.f32.mrf.mxu0
      %v2974 = vadd.f32 %v2885, %v2973
      %v2975 = vpop.f32.mrf.mxu0
      %v2976 = vadd.f32 %v2887, %v2975
      %2977 = vdwg.mxu0
      %2978 = vst [vmem:[%s259] sm:$0xff] %v2899
      %2979 = vst [vmem:[%s259 + $0x8] sm:$0xff] %v2901
      %2980 = vst [vmem:[%s259 + $0x10] sm:$0xff] %v2904
      %2981 = vst [vmem:[%s259 + $0x18] sm:$0xff] %v2906
      %2982 = vst [vmem:[%s259 + $0x20] sm:$0xff] %v2909
      %2983 = vst [vmem:[%s259 + $0x28] sm:$0xff] %v2911
      %2984 = vst [vmem:[%s259 + $0x30] sm:$0xff] %v2914
      %2985 = vst [vmem:[%s259 + $0x38] sm:$0xff] %v2916
      %2986 = vst [vmem:[%s259 + $0x40] sm:$0xff] %v2919
      %2987 = vst [vmem:[%s259 + $0x48] sm:$0xff] %v2921
      %2988 = vst [vmem:[%s259 + $0x50] sm:$0xff] %v2924
      %2989 = vst [vmem:[%s259 + $0x58] sm:$0xff] %v2926
      %2990 = vst [vmem:[%s259 + $0x60] sm:$0xff] %v2929
      %2991 = vst [vmem:[%s259 + $0x68] sm:$0xff] %v2931
      %2992 = vst [vmem:[%s259 + $0x70] sm:$0xff] %v2934
      %2993 = vst [vmem:[%s259 + $0x78] sm:$0xff] %v2936
      %2994 = vst [vmem:[%s259 + $0x80] sm:$0xff] %v2939
      %2995 = vst [vmem:[%s259 + $0x88] sm:$0xff] %v2941
      %2996 = vst [vmem:[%s259 + $0x90] sm:$0xff] %v2944
      %2997 = vst [vmem:[%s259 + $0x98] sm:$0xff] %v2946
      %2998 = vst [vmem:[%s259 + $0xa0] sm:$0xff] %v2949
      %2999 = vst [vmem:[%s259 + $0xa8] sm:$0xff] %v2951
      %3000 = vst [vmem:[%s259 + $0xb0] sm:$0xff] %v2954
      %3001 = vst [vmem:[%s259 + $0xb8] sm:$0xff] %v2956
      %3002 = vst [vmem:[%s259 + $0xc0] sm:$0xff] %v2959
      %3003 = vst [vmem:[%s259 + $0xc8] sm:$0xff] %v2961
      %3004 = vst [vmem:[%s259 + $0xd0] sm:$0xff] %v2964
      %3005 = vst [vmem:[%s259 + $0xd8] sm:$0xff] %v2966
      %3006 = vst [vmem:[%s259 + $0xe0] sm:$0xff] %v2969
      %3007 = vst [vmem:[%s259 + $0xe8] sm:$0xff] %v2971
      %3008 = vst [vmem:[%s259 + $0xf0] sm:$0xff] %v2974
      %3009 = vst [vmem:[%s259 + $0xf8] sm:$0xff] %v2976
      %v3010 = vpack.c.bf16 %v514, %v514
      %v3011 = vpack.c.bf16 %v515, %v515
      %v3012 = vpack.c.bf16 %v516, %v516
      %v3013 = vpack.c.bf16 %v517, %v517
      %v3014 = vpack.c.bf16 %v518, %v518
      %v3015 = vpack.c.bf16 %v519, %v519
      %v3016 = vpack.c.bf16 %v520, %v520
      %v3017 = vpack.c.bf16 %v521, %v521
      %v3018 = vpack.c.bf16 %v522, %v522
      %v3019 = vpack.c.bf16 %v523, %v523
      %v3020 = vpack.c.bf16 %v524, %v524
      %v3021 = vpack.c.bf16 %v525, %v525
      %v3022 = vpack.c.bf16 %v526, %v526
      %v3023 = vpack.c.bf16 %v527, %v527
      %v3024 = vpack.c.bf16 %v528, %v528
      %v3025 = vpack.c.bf16 %v529, %v529
      %v3026 = vpack.c.bf16 %v530, %v530
      %v3027 = vpack.c.bf16 %v531, %v531
      %v3028 = vpack.c.bf16 %v532, %v532
      %v3029 = vpack.c.bf16 %v533, %v533
      %v3030 = vpack.c.bf16 %v534, %v534
      %v3031 = vpack.c.bf16 %v535, %v535
      %v3032 = vpack.c.bf16 %v536, %v536
      %v3033 = vpack.c.bf16 %v537, %v537
      %v3034 = vpack.c.bf16 %v538, %v538
      %v3035 = vpack.c.bf16 %v539, %v539
      %v3036 = vpack.c.bf16 %v540, %v540
      %v3037 = vpack.c.bf16 %v541, %v541
      %v3038 = vpack.c.bf16 %v542, %v542
      %v3039 = vpack.c.bf16 %v543, %v543
      %v3040 = vpack.c.bf16 %v544, %v544
      %v3041 = vpack.c.bf16 %v545, %v545
      %v3042 = vpack.c.bf16 %v546, %v546
      %v3043 = vpack.c.bf16 %v547, %v547
      %v3044 = vpack.c.bf16 %v548, %v548
      %v3045 = vpack.c.bf16 %v549, %v549
      %v3046 = vpack.c.bf16 %v550, %v550
      %v3047 = vpack.c.bf16 %v551, %v551
      %v3048 = vpack.c.bf16 %v552, %v552
      %v3049 = vpack.c.bf16 %v553, %v553
      %v3050 = vpack.c.bf16 %v554, %v554
      %v3051 = vpack.c.bf16 %v555, %v555
      %v3052 = vpack.c.bf16 %v556, %v556
      %v3053 = vpack.c.bf16 %v557, %v557
      %v3054 = vpack.c.bf16 %v558, %v558
      %v3055 = vpack.c.bf16 %v559, %v559
      %v3056 = vpack.c.bf16 %v560, %v560
      %v3057 = vpack.c.bf16 %v561, %v561
      %vm3058 = vsmask.f32 3328
      %vm3059 = vsmask.f32 7440
      %vm3060 = vmor %vm3058, %vm3059
      %v3062 = vshrl.u32 %v3010, 16
      %v3064 = vrot.slane %v3062, 4
      %v3065 = vshll.u32 %v3010, 16
      %v3067 = vrot.slane %v3065, 5
      %v3068 = vor.u32 %v3064, %v3067
      %v3069 = vrot.slane %v3068, 4
      %v3071 = vshll.u32 %v3011, 16
      %v3073 = vrot.slane %v3071, 5
      %v3074 = vsel %vm3060, %v3069, %v3073
      %v3075 = vshrl.u32 %v3011, 16
      %v3077 = vrot.slane %v3075, 4
      %v3078 = vor.u32 %v3077, %v3073
      %v3079 = vrot.slane %v3078, 4
      %v3081 = vshll.u32 %v3012, 16
      %v3083 = vrot.slane %v3081, 5
      %v3084 = vsel %vm3060, %v3079, %v3083
      %v3086 = vshrl.u32 %v3013, 16
      %v3088 = vrot.slane %v3086, 4
      %v3089 = vshll.u32 %v3013, 16
      %v3091 = vrot.slane %v3089, 5
      %v3092 = vor.u32 %v3088, %v3091
      %v3093 = vrot.slane %v3092, 4
      %v3095 = vshll.u32 %v3014, 16
      %v3097 = vrot.slane %v3095, 5
      %v3098 = vsel %vm3060, %v3093, %v3097
      %v3099 = vshrl.u32 %v3014, 16
      %v3101 = vrot.slane %v3099, 4
      %v3102 = vor.u32 %v3101, %v3097
      %v3103 = vrot.slane %v3102, 4
      %v3105 = vshll.u32 %v3015, 16
      %v3107 = vrot.slane %v3105, 5
      %v3108 = vsel %vm3060, %v3103, %v3107
      %v3110 = vshrl.u32 %v3016, 16
      %v3112 = vrot.slane %v3110, 4
      %v3113 = vshll.u32 %v3016, 16
      %v3115 = vrot.slane %v3113, 5
      %v3116 = vor.u32 %v3112, %v3115
      %v3117 = vrot.slane %v3116, 4
      %v3119 = vshll.u32 %v3017, 16
      %v3121 = vrot.slane %v3119, 5
      %v3122 = vsel %vm3060, %v3117, %v3121
      %v3123 = vshrl.u32 %v3017, 16
      %v3125 = vrot.slane %v3123, 4
      %v3126 = vor.u32 %v3125, %v3121
      %v3127 = vrot.slane %v3126, 4
      %v3129 = vshll.u32 %v3018, 16
      %v3131 = vrot.slane %v3129, 5
      %v3132 = vsel %vm3060, %v3127, %v3131
      %v3134 = vshrl.u32 %v3019, 16
      %v3136 = vrot.slane %v3134, 4
      %v3137 = vshll.u32 %v3019, 16
      %v3139 = vrot.slane %v3137, 5
      %v3140 = vor.u32 %v3136, %v3139
      %v3141 = vrot.slane %v3140, 4
      %v3143 = vshll.u32 %v3020, 16
      %v3145 = vrot.slane %v3143, 5
      %v3146 = vsel %vm3060, %v3141, %v3145
      %v3147 = vshrl.u32 %v3020, 16
      %v3149 = vrot.slane %v3147, 4
      %v3150 = vor.u32 %v3149, %v3145
      %v3151 = vrot.slane %v3150, 4
      %v3153 = vshll.u32 %v3021, 16
      %v3155 = vrot.slane %v3153, 5
      %v3156 = vsel %vm3060, %v3151, %v3155
      %v3158 = vshrl.u32 %v3022, 16
      %v3160 = vrot.slane %v3158, 4
      %v3161 = vshll.u32 %v3022, 16
      %v3163 = vrot.slane %v3161, 5
      %v3164 = vor.u32 %v3160, %v3163
      %v3165 = vrot.slane %v3164, 4
      %v3167 = vshll.u32 %v3023, 16
      %v3169 = vrot.slane %v3167, 5
      %v3170 = vsel %vm3060, %v3165, %v3169
      %v3171 = vshrl.u32 %v3023, 16
      %v3173 = vrot.slane %v3171, 4
      %v3174 = vor.u32 %v3173, %v3169
      %v3175 = vrot.slane %v3174, 4
      %v3177 = vshll.u32 %v3024, 16
      %v3179 = vrot.slane %v3177, 5
      %v3180 = vsel %vm3060, %v3175, %v3179
      %v3182 = vshrl.u32 %v3025, 16
      %v3184 = vrot.slane %v3182, 4
      %v3185 = vshll.u32 %v3025, 16
      %v3187 = vrot.slane %v3185, 5
      %v3188 = vor.u32 %v3184, %v3187
      %v3189 = vrot.slane %v3188, 4
      %v3191 = vshll.u32 %v3026, 16
      %v3193 = vrot.slane %v3191, 5
      %v3194 = vsel %vm3060, %v3189, %v3193
      %v3195 = vshrl.u32 %v3026, 16
      %v3197 = vrot.slane %v3195, 4
      %v3198 = vor.u32 %v3197, %v3193
      %v3199 = vrot.slane %v3198, 4
      %v3201 = vshll.u32 %v3027, 16
      %v3203 = vrot.slane %v3201, 5
      %v3204 = vsel %vm3060, %v3199, %v3203
      %v3206 = vshrl.u32 %v3028, 16
      %v3208 = vrot.slane %v3206, 4
      %v3209 = vshll.u32 %v3028, 16
      %v3211 = vrot.slane %v3209, 5
      %v3212 = vor.u32 %v3208, %v3211
      %v3213 = vrot.slane %v3212, 4
      %v3215 = vshll.u32 %v3029, 16
      %v3217 = vrot.slane %v3215, 5
      %v3218 = vsel %vm3060, %v3213, %v3217
      %v3219 = vshrl.u32 %v3029, 16
      %v3221 = vrot.slane %v3219, 4
      %v3222 = vor.u32 %v3221, %v3217
      %v3223 = vrot.slane %v3222, 4
      %v3225 = vshll.u32 %v3030, 16
      %v3227 = vrot.slane %v3225, 5
      %v3228 = vsel %vm3060, %v3223, %v3227
      %v3230 = vshrl.u32 %v3031, 16
      %v3232 = vrot.slane %v3230, 4
      %v3233 = vshll.u32 %v3031, 16
      %v3235 = vrot.slane %v3233, 5
      %v3236 = vor.u32 %v3232, %v3235
      %v3237 = vrot.slane %v3236, 4
      %v3239 = vshll.u32 %v3032, 16
      %v3241 = vrot.slane %v3239, 5
      %v3242 = vsel %vm3060, %v3237, %v3241
      %v3243 = vshrl.u32 %v3032, 16
      %v3245 = vrot.slane %v3243, 4
      %v3246 = vor.u32 %v3245, %v3241
      %v3247 = vrot.slane %v3246, 4
      %v3249 = vshll.u32 %v3033, 16
      %v3251 = vrot.slane %v3249, 5
      %v3252 = vsel %vm3060, %v3247, %v3251
      %v3254 = vshrl.u32 %v3034, 16
      %v3256 = vrot.slane %v3254, 4
      %v3257 = vshll.u32 %v3034, 16
      %v3259 = vrot.slane %v3257, 5
      %v3260 = vor.u32 %v3256, %v3259
      %v3261 = vrot.slane %v3260, 4
      %v3263 = vshll.u32 %v3035, 16
      %v3265 = vrot.slane %v3263, 5
      %v3266 = vsel %vm3060, %v3261, %v3265
      %v3267 = vshrl.u32 %v3035, 16
      %v3269 = vrot.slane %v3267, 4
      %v3270 = vor.u32 %v3269, %v3265
      %v3271 = vrot.slane %v3270, 4
      %v3273 = vshll.u32 %v3036, 16
      %v3275 = vrot.slane %v3273, 5
      %v3276 = vsel %vm3060, %v3271, %v3275
      %v3278 = vshrl.u32 %v3037, 16
      %v3280 = vrot.slane %v3278, 4
      %v3281 = vshll.u32 %v3037, 16
      %v3283 = vrot.slane %v3281, 5
      %v3284 = vor.u32 %v3280, %v3283
      %v3285 = vrot.slane %v3284, 4
      %v3287 = vshll.u32 %v3038, 16
      %v3289 = vrot.slane %v3287, 5
      %v3290 = vsel %vm3060, %v3285, %v3289
      %v3291 = vshrl.u32 %v3038, 16
      %v3293 = vrot.slane %v3291, 4
      %v3294 = vor.u32 %v3293, %v3289
      %v3295 = vrot.slane %v3294, 4
      %v3297 = vshll.u32 %v3039, 16
      %v3299 = vrot.slane %v3297, 5
      %v3300 = vsel %vm3060, %v3295, %v3299
      %v3302 = vshrl.u32 %v3040, 16
      %v3304 = vrot.slane %v3302, 4
      %v3305 = vshll.u32 %v3040, 16
      %v3307 = vrot.slane %v3305, 5
      %v3308 = vor.u32 %v3304, %v3307
      %v3309 = vrot.slane %v3308, 4
      %v3311 = vshll.u32 %v3041, 16
      %v3313 = vrot.slane %v3311, 5
      %v3314 = vsel %vm3060, %v3309, %v3313
      %v3315 = vshrl.u32 %v3041, 16
      %v3317 = vrot.slane %v3315, 4
      %v3318 = vor.u32 %v3317, %v3313
      %v3319 = vrot.slane %v3318, 4
      %v3321 = vshll.u32 %v3042, 16
      %v3323 = vrot.slane %v3321, 5
      %v3324 = vsel %vm3060, %v3319, %v3323
      %v3326 = vshrl.u32 %v3043, 16
      %v3328 = vrot.slane %v3326, 4
      %v3329 = vshll.u32 %v3043, 16
      %v3331 = vrot.slane %v3329, 5
      %v3332 = vor.u32 %v3328, %v3331
      %v3333 = vrot.slane %v3332, 4
      %v3335 = vshll.u32 %v3044, 16
      %v3337 = vrot.slane %v3335, 5
      %v3338 = vsel %vm3060, %v3333, %v3337
      %v3339 = vshrl.u32 %v3044, 16
      %v3341 = vrot.slane %v3339, 4
      %v3342 = vor.u32 %v3341, %v3337
      %v3343 = vrot.slane %v3342, 4
      %v3345 = vshll.u32 %v3045, 16
      %v3347 = vrot.slane %v3345, 5
      %v3348 = vsel %vm3060, %v3343, %v3347
      %v3350 = vshrl.u32 %v3046, 16
      %v3352 = vrot.slane %v3350, 4
      %v3353 = vshll.u32 %v3046, 16
      %v3355 = vrot.slane %v3353, 5
      %v3356 = vor.u32 %v3352, %v3355
      %v3357 = vrot.slane %v3356, 4
      %v3359 = vshll.u32 %v3047, 16
      %v3361 = vrot.slane %v3359, 5
      %v3362 = vsel %vm3060, %v3357, %v3361
      %v3363 = vshrl.u32 %v3047, 16
      %v3365 = vrot.slane %v3363, 4
      %v3366 = vor.u32 %v3365, %v3361
      %v3367 = vrot.slane %v3366, 4
      %v3369 = vshll.u32 %v3048, 16
      %v3371 = vrot.slane %v3369, 5
      %v3372 = vsel %vm3060, %v3367, %v3371
      %v3374 = vshrl.u32 %v3049, 16
      %v3376 = vrot.slane %v3374, 4
      %v3377 = vshll.u32 %v3049, 16
      %v3379 = vrot.slane %v3377, 5
      %v3380 = vor.u32 %v3376, %v3379
      %v3381 = vrot.slane %v3380, 4
      %v3383 = vshll.u32 %v3050, 16
      %v3385 = vrot.slane %v3383, 5
      %v3386 = vsel %vm3060, %v3381, %v3385
      %v3387 = vshrl.u32 %v3050, 16
      %v3389 = vrot.slane %v3387, 4
      %v3390 = vor.u32 %v3389, %v3385
      %v3391 = vrot.slane %v3390, 4
      %v3393 = vshll.u32 %v3051, 16
      %v3395 = vrot.slane %v3393, 5
      %v3396 = vsel %vm3060, %v3391, %v3395
      %v3398 = vshrl.u32 %v3052, 16
      %v3400 = vrot.slane %v3398, 4
      %v3401 = vshll.u32 %v3052, 16
      %v3403 = vrot.slane %v3401, 5
      %v3404 = vor.u32 %v3400, %v3403
      %v3405 = vrot.slane %v3404, 4
      %v3407 = vshll.u32 %v3053, 16
      %v3409 = vrot.slane %v3407, 5
      %v3410 = vsel %vm3060, %v3405, %v3409
      %v3411 = vshrl.u32 %v3053, 16
      %v3413 = vrot.slane %v3411, 4
      %v3414 = vor.u32 %v3413, %v3409
      %v3415 = vrot.slane %v3414, 4
      %v3417 = vshll.u32 %v3054, 16
      %v3419 = vrot.slane %v3417, 5
      %v3420 = vsel %vm3060, %v3415, %v3419
      %v3422 = vshrl.u32 %v3055, 16
      %v3424 = vrot.slane %v3422, 4
      %v3425 = vshll.u32 %v3055, 16
      %v3427 = vrot.slane %v3425, 5
      %v3428 = vor.u32 %v3424, %v3427
      %v3429 = vrot.slane %v3428, 4
      %v3431 = vshll.u32 %v3056, 16
      %v3433 = vrot.slane %v3431, 5
      %v3434 = vsel %vm3060, %v3429, %v3433
      %v3435 = vshrl.u32 %v3056, 16
      %v3437 = vrot.slane %v3435, 4
      %v3438 = vor.u32 %v3437, %v3433
      %v3439 = vrot.slane %v3438, 4
      %v3441 = vshll.u32 %v3057, 16
      %v3443 = vrot.slane %v3441, 5
      %v3444 = vsel %vm3060, %v3439, %v3443
      %v3445 = vld [vmem:[%s4] sm:$0xf]
      %v3446 = vld [vmem:[%s4 + $0x4] sm:$0xf]
      %v3447 = vld [vmem:[%s4 + $0x8] sm:$0xf]
      %v3448 = vld [vmem:[%s4 + $0xc] sm:$0xf]
      %v3449 = vld [vmem:[%s4 + $0x10] sm:$0xf]
      %v3450 = vld [vmem:[%s4 + $0x14] sm:$0xf]
      %v3451 = vld [vmem:[%s4 + $0x18] sm:$0xf]
      %v3452 = vld [vmem:[%s4 + $0x1c] sm:$0xf]
      %v3453 = vld [vmem:[%s4 + $0x20] sm:$0xf]
      %v3454 = vld [vmem:[%s4 + $0x24] sm:$0xf]
      %v3455 = vld [vmem:[%s4 + $0x28] sm:$0xf]
      %v3456 = vld [vmem:[%s4 + $0x2c] sm:$0xf]
      %v3457 = vld [vmem:[%s4 + $0x30] sm:$0xf]
      %v3458 = vld [vmem:[%s4 + $0x34] sm:$0xf]
      %v3459 = vld [vmem:[%s4 + $0x38] sm:$0xf]
      %v3460 = vld [vmem:[%s4 + $0x3c] sm:$0xf]
      %v3461 = vunpack.c.l.b16 %v3074
      %v3462 = vunpack.c.l.b16 %v3084
      %v3463 = vunpack.c.l.b16 %v3098
      %v3464 = vunpack.c.l.b16 %v3108
      %v3465 = vunpack.c.l.b16 %v3122
      %v3466 = vunpack.c.l.b16 %v3132
      %v3467 = vunpack.c.l.b16 %v3146
      %v3468 = vunpack.c.l.b16 %v3156
      %v3469 = vunpack.c.l.b16 %v3170
      %v3470 = vunpack.c.l.b16 %v3180
      %v3471 = vunpack.c.l.b16 %v3194
      %v3472 = vunpack.c.l.b16 %v3204
      %v3473 = vunpack.c.l.b16 %v3218
      %v3474 = vunpack.c.l.b16 %v3228
      %v3475 = vunpack.c.l.b16 %v3242
      %v3476 = vunpack.c.l.b16 %v3252
      %v3477 = vunpack.c.l.b16 %v3266
      %v3478 = vunpack.c.l.b16 %v3276
      %v3479 = vunpack.c.l.b16 %v3290
      %v3480 = vunpack.c.l.b16 %v3300
      %v3481 = vunpack.c.l.b16 %v3314
      %v3482 = vunpack.c.l.b16 %v3324
      %v3483 = vunpack.c.l.b16 %v3338
      %v3484 = vunpack.c.l.b16 %v3348
      %v3485 = vunpack.c.l.b16 %v3362
      %v3486 = vunpack.c.l.b16 %v3372
      %v3487 = vunpack.c.l.b16 %v3386
      %v3488 = vunpack.c.l.b16 %v3396
      %v3489 = vunpack.c.l.b16 %v3410
      %v3490 = vunpack.c.l.b16 %v3420
      %v3491 = vunpack.c.l.b16 %v3434
      %v3492 = vunpack.c.l.b16 %v3444
      %v3493 = vpack.c.b16 %v3462, %v3461
      %v3494 = vpack.c.b16 %v3464, %v3463
      %v3495 = vpack.c.b16 %v3466, %v3465
      %v3496 = vpack.c.b16 %v3468, %v3467
      %v3497 = vpack.c.b16 %v3470, %v3469
      %v3498 = vpack.c.b16 %v3472, %v3471
      %v3499 = vpack.c.b16 %v3474, %v3473
      %v3500 = vpack.c.b16 %v3476, %v3475
      %v3501 = vpack.c.b16 %v3478, %v3477
      %v3502 = vpack.c.b16 %v3480, %v3479
      %v3503 = vpack.c.b16 %v3482, %v3481
      %v3504 = vpack.c.b16 %v3484, %v3483
      %v3505 = vpack.c.b16 %v3486, %v3485
      %v3506 = vpack.c.b16 %v3488, %v3487
      %v3507 = vpack.c.b16 %v3490, %v3489
      %v3508 = vpack.c.b16 %v3492, %v3491
      %v3541 = vunpack.c.l.b16 %v3445
      %v3542 = vunpack.c.l.b16 %v3446
      %v3543 = vunpack.c.l.b16 %v3447
      %v3544 = vunpack.c.l.b16 %v3448
      %v3545 = vunpack.c.l.b16 %v3449
      %v3546 = vunpack.c.l.b16 %v3450
      %v3547 = vunpack.c.l.b16 %v3451
      %v3548 = vunpack.c.l.b16 %v3452
      %v3549 = vunpack.c.l.b16 %v3453
      %v3550 = vunpack.c.l.b16 %v3454
      %v3551 = vunpack.c.l.b16 %v3455
      %v3552 = vunpack.c.l.b16 %v3456
      %v3553 = vunpack.c.l.b16 %v3457
      %v3554 = vunpack.c.l.b16 %v3458
      %v3555 = vunpack.c.l.b16 %v3459
      %v3556 = vunpack.c.l.b16 %v3460
      %v3557 = vpack.c.b16 %v3542, %v3541
      %v3558 = vpack.c.b16 %v3544, %v3543
      %v3559 = vpack.c.b16 %v3546, %v3545
      %v3560 = vpack.c.b16 %v3548, %v3547
      %v3561 = vpack.c.b16 %v3550, %v3549
      %v3562 = vpack.c.b16 %v3552, %v3551
      %v3563 = vpack.c.b16 %v3554, %v3553
      %v3564 = vpack.c.b16 %v3556, %v3555
      %3573 = vmatpush.bf16.msra.mxu0 %v3564
      %3574 = vmatpush.bf16.msra.mxu0 %v3563
      %3575 = vmatpush.bf16.msra.mxu0 %v3562
      %3576 = vmatpush.bf16.msra.mxu0 %v3561
      %3577 = vmatpush.bf16.msra.mxu0 %v3560
      %3578 = vmatpush.bf16.msra.mxu0 %v3559
      %3579 = vmatpush.bf16.msra.mxu0 %v3558
      %3580 = vmatpush.bf16.msra.mxu0 %v3557
      %3581 = vmatmul.bf16.gmra.mxu0 %v3493
      %v3582 = vpop.f32.mrf.mxu0
      %v3583 = vadd.f32 0.0, %v3582
      %v3584 = vpop.f32.mrf.mxu0
      %v3585 = vadd.f32 0.0, %v3584
      %3586 = vmatmul.bf16.gmra.mxu0 %v3494
      %v3587 = vpop.f32.mrf.mxu0
      %v3588 = vadd.f32 0.0, %v3587
      %v3589 = vpop.f32.mrf.mxu0
      %v3590 = vadd.f32 0.0, %v3589
      %3591 = vmatmul.bf16.gmra.mxu0 %v3495
      %v3592 = vpop.f32.mrf.mxu0
      %v3593 = vadd.f32 0.0, %v3592
      %v3594 = vpop.f32.mrf.mxu0
      %v3595 = vadd.f32 0.0, %v3594
      %3596 = vmatmul.bf16.gmra.mxu0 %v3496
      %v3597 = vpop.f32.mrf.mxu0
      %v3598 = vadd.f32 0.0, %v3597
      %v3599 = vpop.f32.mrf.mxu0
      %v3600 = vadd.f32 0.0, %v3599
      %3601 = vmatmul.bf16.gmra.mxu0 %v3497
      %v3602 = vpop.f32.mrf.mxu0
      %v3603 = vadd.f32 0.0, %v3602
      %v3604 = vpop.f32.mrf.mxu0
      %v3605 = vadd.f32 0.0, %v3604
      %3606 = vmatmul.bf16.gmra.mxu0 %v3498
      %v3607 = vpop.f32.mrf.mxu0
      %v3608 = vadd.f32 0.0, %v3607
      %v3609 = vpop.f32.mrf.mxu0
      %v3610 = vadd.f32 0.0, %v3609
      %3611 = vmatmul.bf16.gmra.mxu0 %v3499
      %v3612 = vpop.f32.mrf.mxu0
      %v3613 = vadd.f32 0.0, %v3612
      %v3614 = vpop.f32.mrf.mxu0
      %v3615 = vadd.f32 0.0, %v3614
      %3616 = vmatmul.bf16.gmra.mxu0 %v3500
      %v3617 = vpop.f32.mrf.mxu0
      %v3618 = vadd.f32 0.0, %v3617
      %v3619 = vpop.f32.mrf.mxu0
      %v3620 = vadd.f32 0.0, %v3619
      %3621 = vmatmul.bf16.gmra.mxu0 %v3501
      %v3622 = vpop.f32.mrf.mxu0
      %v3623 = vadd.f32 0.0, %v3622
      %v3624 = vpop.f32.mrf.mxu0
      %v3625 = vadd.f32 0.0, %v3624
      %3626 = vmatmul.bf16.gmra.mxu0 %v3502
      %v3627 = vpop.f32.mrf.mxu0
      %v3628 = vadd.f32 0.0, %v3627
      %v3629 = vpop.f32.mrf.mxu0
      %v3630 = vadd.f32 0.0, %v3629
      %3631 = vmatmul.bf16.gmra.mxu0 %v3503
      %v3632 = vpop.f32.mrf.mxu0
      %v3633 = vadd.f32 0.0, %v3632
      %v3634 = vpop.f32.mrf.mxu0
      %v3635 = vadd.f32 0.0, %v3634
      %3636 = vmatmul.bf16.gmra.mxu0 %v3504
      %v3637 = vpop.f32.mrf.mxu0
      %v3638 = vadd.f32 0.0, %v3637
      %v3639 = vpop.f32.mrf.mxu0
      %v3640 = vadd.f32 0.0, %v3639
      %3641 = vmatmul.bf16.gmra.mxu0 %v3505
      %v3642 = vpop.f32.mrf.mxu0
      %v3643 = vadd.f32 0.0, %v3642
      %v3644 = vpop.f32.mrf.mxu0
      %v3645 = vadd.f32 0.0, %v3644
      %3646 = vmatmul.bf16.gmra.mxu0 %v3506
      %v3647 = vpop.f32.mrf.mxu0
      %v3648 = vadd.f32 0.0, %v3647
      %v3649 = vpop.f32.mrf.mxu0
      %v3650 = vadd.f32 0.0, %v3649
      %3651 = vmatmul.bf16.gmra.mxu0 %v3507
      %v3652 = vpop.f32.mrf.mxu0
      %v3653 = vadd.f32 0.0, %v3652
      %v3654 = vpop.f32.mrf.mxu0
      %v3655 = vadd.f32 0.0, %v3654
      %3656 = vmatmul.bf16.gmra.mxu0 %v3508
      %v3657 = vpop.f32.mrf.mxu0
      %v3658 = vadd.f32 0.0, %v3657
      %v3659 = vpop.f32.mrf.mxu0
      %v3660 = vadd.f32 0.0, %v3659
      %3661 = vdwg.mxu0
      %3662 = vst [vmem:[%s264] sm:$0xff] %v3583
      %3663 = vst [vmem:[%s264 + $0x8] sm:$0xff] %v3585
      %3664 = vst [vmem:[%s264 + $0x10] sm:$0xff] %v3588
      %3665 = vst [vmem:[%s264 + $0x18] sm:$0xff] %v3590
      %3666 = vst [vmem:[%s264 + $0x20] sm:$0xff] %v3593
      %3667 = vst [vmem:[%s264 + $0x28] sm:$0xff] %v3595
      %3668 = vst [vmem:[%s264 + $0x30] sm:$0xff] %v3598
      %3669 = vst [vmem:[%s264 + $0x38] sm:$0xff] %v3600
      %3670 = vst [vmem:[%s264 + $0x40] sm:$0xff] %v3603
      %3671 = vst [vmem:[%s264 + $0x48] sm:$0xff] %v3605
      %3672 = vst [vmem:[%s264 + $0x50] sm:$0xff] %v3608
      %3673 = vst [vmem:[%s264 + $0x58] sm:$0xff] %v3610
      %3674 = vst [vmem:[%s264 + $0x60] sm:$0xff] %v3613
      %3675 = vst [vmem:[%s264 + $0x68] sm:$0xff] %v3615
      %3676 = vst [vmem:[%s264 + $0x70] sm:$0xff] %v3618
      %3677 = vst [vmem:[%s264 + $0x78] sm:$0xff] %v3620
      %3678 = vst [vmem:[%s264 + $0x80] sm:$0xff] %v3623
      %3679 = vst [vmem:[%s264 + $0x88] sm:$0xff] %v3625
      %3680 = vst [vmem:[%s264 + $0x90] sm:$0xff] %v3628
      %3681 = vst [vmem:[%s264 + $0x98] sm:$0xff] %v3630
      %3682 = vst [vmem:[%s264 + $0xa0] sm:$0xff] %v3633
      %3683 = vst [vmem:[%s264 + $0xa8] sm:$0xff] %v3635
      %3684 = vst [vmem:[%s264 + $0xb0] sm:$0xff] %v3638
      %3685 = vst [vmem:[%s264 + $0xb8] sm:$0xff] %v3640
      %3686 = vst [vmem:[%s264 + $0xc0] sm:$0xff] %v3643
      %3687 = vst [vmem:[%s264 + $0xc8] sm:$0xff] %v3645
      %3688 = vst [vmem:[%s264 + $0xd0] sm:$0xff] %v3648
      %3689 = vst [vmem:[%s264 + $0xd8] sm:$0xff] %v3650
      %3690 = vst [vmem:[%s264 + $0xe0] sm:$0xff] %v3653
      %3691 = vst [vmem:[%s264 + $0xe8] sm:$0xff] %v3655
      %3692 = vst [vmem:[%s264 + $0xf0] sm:$0xff] %v3658
      %3693 = vst [vmem:[%s264 + $0xf8] sm:$0xff] %v3660
      %p3694 = scmp.lt.s32.totalorder %s18, 1
      %s3695 = scalar_select %p3694, %s18, 1
      %s3696 = smul.addr %s3695, 32
      %s3697 = smul.addr %s3696, 8
      %s3698 = scalar_lea.vmem %s5, %s3697
      %p3699 = scmp.lt.s32.totalorder %s18, 1
      %s3700 = scalar_select %p3699, %s18, 1
      %s3701 = smul.addr %s3700, 32
      %s3702 = smul.addr %s3701, 8
      %s3703 = scalar_lea.vmem %s6, %s3702
      // Predicated region
      $region41: #{preact_block.5} parent=39 // pred_check
        %p3704 = pneg %p146
      $region42: #{preact_block.5} parent=39 // pred_check_branch
        %3706 = sbr.rel (%p3704) target = $region44
      $region43: #{preact_block.5} parent=39 // pred_region
        _
      $region44: #{preact_block.5} parent=39 // pred_fallthru
        _
      // Predicated region
      $region45: #{preact_block.5} parent=39 // pred_check
        %p3707 = pneg %p172
      $region46: #{preact_block.5} parent=39 // pred_check_branch
        %3709 = sbr.rel (%p3707) target = $region48
      $region47: #{preact_block.5} parent=39 // pred_region
        _
      $region48: #{preact_block.5} parent=39 // pred_fallthru
        _
    $region40: #{preact_block.5} parent=5 // pred_fallthru
      _
    %p3710 = scmp.le.s32.totalorder 2, %s13
    // Predicated region
    $region49: #{preact_block.5} parent=5 // pred_check
      %p3711 = pneg %p3710
    $region50: #{preact_block.5} parent=5 // pred_check_branch
      %3713 = sbr.rel (%p3711) target = $region52
    $region51: #{preact_block.5} parent=5 // pred_region
      %s3714 = ssub.s32 %s13, 2
      // Predicated region
      $region53: #{preact_block.5} parent=51 // pred_check
        %p3715 = pneg %p152
      $region54: #{preact_block.5} parent=51 // pred_check_branch
        %3717 = sbr.rel (%p3715) target = $region56
      $region55: #{preact_block.5} parent=51 // pred_region
        %p3718 = scmp.lt.s32.totalorder %s19, 1
        %s3719 = scalar_select %p3718, %s19, 1
        %s3720 = smul.addr %s3719, 32
        %s3721 = smul.addr %s3720, 8
        %s3722 = scalar_lea.vmem %s5, %s3721
      $region56: #{preact_block.5} parent=51 // pred_fallthru
        _
      // Predicated region
      $region57: #{preact_block.5} parent=51 // pred_check
        %p3723 = pneg %p178
      $region58: #{preact_block.5} parent=51 // pred_check_branch
        %3725 = sbr.rel (%p3723) target = $region60
      $region59: #{preact_block.5} parent=51 // pred_region
        %p3726 = scmp.lt.s32.totalorder %s19, 1
        %s3727 = scalar_select %p3726, %s19, 1
        %s3728 = smul.addr %s3727, 32
        %s3729 = smul.addr %s3728, 8
        %s3730 = scalar_lea.vmem %s6, %s3729
      $region60: #{preact_block.5} parent=51 // pred_fallthru
        _
    $region52: #{preact_block.5} parent=5 // pred_fallthru
      _
  $region6: #{preact_block.5} parent=0 // loop_footer
    %s17 = sadd.s32 1, %s13
  $region7: #{preact_block.5} parent=0 // loop_footer_branch
    %12 = sbr.rel target = $region3
  $region8: #{preact_block.5} parent=0 // loop_exit
    _

// kernel: preact_block.7
$region0: #{preact_block.7}
  #allocation0 [shape = 'u32[]', space=smem, size = 0x4, offset = 0x4, fixed_abs, tag = 'smem constant byte address 0x4 - core index']
  #allocation1 [shape = 'u32[72,128]{1,0:T(1,128)}', space=vmem, size = 0x9000, scoped, tag = 'internal scratch']
  %s0 = inlined_call_operand.vmem [shape: f32[2,18,18,128], index: 0, kind: input, shape index: {}]
  %s1 = inlined_call_operand.vmem [shape: f32[1,128], index: 1, kind: input, shape index: {}]
  %s2 = inlined_call_operand.vmem [shape: f32[1,128], index: 2, kind: input, shape index: {}]
  %s3 = inlined_call_operand.vmem [shape: bf16[1152,128], index: 3, kind: input, shape index: {}]
  %s4 = inlined_call_operand.vmem [shape: f32[2,16,16,128], index: 4, kind: input, shape index: {}]
  %s5 = inlined_call_operand.vmem [shape: f32[2,16,16,128], index: 5, kind: output, shape index: {}]
  %s6 = sld [smem:[#allocation0]]
  $region53: #{preact_block.7} parent=0
    _
  %s8 = ssub.s32 1, %s6
  %s9 = scalar_select 0, %s8, %s6
  loop: start=0, step=1, limit=4
  $region2: #{preact_block.7} parent=0 // loop_pre_header
    _
  $region3: #{preact_block.7} parent=0 // loop_header
    %s11 = sphi 0, %s15
    %p12 = scmp.ge.s32.totalorder %s11, 4
    %s21 = sphi 0, %s23
    %s24 = sphi 0, %s21
    %s25 = sphi 0, %s24
    %s41 = sphi 0, %s25
    %s45 = sphi 0, %s45
    %s47 = sphi 0, %s45
    %s48 = sphi 0, %s47
    %s62 = sphi 0, %s48
    %s66 = sphi 0, %s66
    %s68 = sphi 0, %s66
    %s69 = sphi 0, %s68
    %s83 = sphi 0, %s69
    %s87 = sphi 0, %s87
    %s89 = sphi 0, %s87
    %s90 = sphi 0, %s89
    %s104 = sphi 0, %s90
    %s110 = sphi 0, %s112
    %s113 = sphi 0, %s110
    %s114 = sphi 0, %s113
    %s130 = sphi 0, %s114
    %s136 = sphi 0, %s138
    %s139 = sphi 0, %s136
    %s140 = sphi 0, %s139
    %s156 = sphi 0, %s140
  $region4: #{preact_block.7} parent=0 // loop_header_branch
    %14 = sbr.rel (%p12) target = $region8
  $region5: #{preact_block.7} parent=0 // loop_body
    %s16 = ssub.s32 %s11, 1
    %s17 = ssub.s32 %s11, 2
    %s18 = sadd.s32 %s11, 1
    %s19 = ssub.s32 %s11, %s18
    %p20 = scmp.eq.s32.totalorder %s19, 0
    %s22 = sadd.s32 %s21, 1
    %s23 = scalar_select %p20, %s21, %s22
    %p26 = pneg %p20
    %p27 = scmp.eq.s32.totalorder %s11, 1
    %p28 = por %p26, %p27
    %p29 = scmp.ne.s32.totalorder %s21, %s24
    %p30 = scmp.eq.s32.totalorder %s11, 0
    %p31 = por %p29, %p30
    %p32 = scmp.ne.s32.totalorder %s21, %s24
    %p33 = scmp.eq.s32.totalorder %s16, 1
    %p34 = por %p32, %p33
    %p35 = scmp.ne.s32.totalorder %s24, %s25
    %p36 = scmp.eq.s32.totalorder %s16, 0
    %p37 = por %p35, %p36
    %p38 = scmp.ne.s32.totalorder %s24, %s25
    %p39 = scmp.eq.s32.totalorder %s17, 1
    %p40 = por %p38, %p39
    %p42 = scmp.ne.s32.totalorder %s25, %s41
    %p43 = scmp.eq.s32.totalorder %s17, 0
    %p44 = por %p42, %p43
    %s46 = sadd.s32 %s45, 1
    %p49 = scmp.eq.s32.totalorder %s11, 1
    %p50 = scmp.ne.s32.totalorder %s45, %s47
    %p51 = scmp.eq.s32.totalorder %s11, 0
    %p52 = por %p50, %p51
    %p53 = scmp.ne.s32.totalorder %s45, %s47
    %p54 = scmp.eq.s32.totalorder %s16, 1
    %p55 = por %p53, %p54
    %p56 = scmp.ne.s32.totalorder %s47, %s48
    %p57 = scmp.eq.s32.totalorder %s16, 0
    %p58 = por %p56, %p57
    %p59 = scmp.ne.s32.totalorder %s47, %s48
    %p60 = scmp.eq.s32.totalorder %s17, 1
    %p61 = por %p59, %p60
    %p63 = scmp.ne.s32.totalorder %s48, %s62
    %p64 = scmp.eq.s32.totalorder %s17, 0
    %p65 = por %p63, %p64
    %s67 = sadd.s32 %s66, 1
    %p70 = scmp.eq.s32.totalorder %s11, 1
    %p71 = scmp.ne.s32.totalorder %s66, %s68
    %p72 = scmp.eq.s32.totalorder %s11, 0
    %p73 = por %p71, %p72
    %p74 = scmp.ne.s32.totalorder %s66, %s68
    %p75 = scmp.eq.s32.totalorder %s16, 1
    %p76 = por %p74, %p75
    %p77 = scmp.ne.s32.totalorder %s68, %s69
    %p78 = scmp.eq.s32.totalorder %s16, 0
    %p79 = por %p77, %p78
    %p80 = scmp.ne.s32.totalorder %s68, %s69
    %p81 = scmp.eq.s32.totalorder %s17, 1
    %p82 = por %p80, %p81
    %p84 = scmp.ne.s32.totalorder %s69, %s83
    %p85 = scmp.eq.s32.totalorder %s17, 0
    %p86 = por %p84, %p85
    %s88 = sadd.s32 %s87, 1
    %p91 = scmp.eq.s32.totalorder %s11, 1
    %p92 = scmp.ne.s32.totalorder %s87, %s89
    %p93 = scmp.eq.s32.totalorder %s11, 0
    %p94 = por %p92, %p93
    %p95 = scmp.ne.s32.totalorder %s87, %s89
    %p96 = scmp.eq.s32.totalorder %s16, 1
    %p97 = por %p95, %p96
    %p98 = scmp.ne.s32.totalorder %s89, %s90
    %p99 = scmp.eq.s32.totalorder %s16, 0
    %p100 = por %p98, %p99
    %p101 = scmp.ne.s32.totalorder %s89, %s90
    %p102 = scmp.eq.s32.totalorder %s17, 1
    %p103 = por %p101, %p102
    %p105 = scmp.ne.s32.totalorder %s90, %s104
    %p106 = scmp.eq.s32.totalorder %s17, 0
    %p107 = por %p105, %p106
    %s108 = ssub.s32 %s11, %s18
    %p109 = scmp.eq.s32.totalorder %s108, 0
    %s111 = sadd.s32 %s110, 1
    %s112 = scalar_select %p109, %s110, %s111
    %p115 = pneg %p109
    %p116 = scmp.eq.s32.totalorder %s11, 1
    %p117 = por %p115, %p116
    %p118 = scmp.ne.s32.totalorder %s110, %s113
    %p119 = scmp.eq.s32.totalorder %s11, 0
    %p120 = por %p118, %p119
    %p121 = scmp.ne.s32.totalorder %s110, %s113
    %p122 = scmp.eq.s32.totalorder %s16, 1
    %p123 = por %p121, %p122
    %p124 = scmp.ne.s32.totalorder %s113, %s114
    %p125 = scmp.eq.s32.totalorder %s16, 0
    %p126 = por %p124, %p125
    %p127 = scmp.ne.s32.totalorder %s113, %s114
    %p128 = scmp.eq.s32.totalorder %s17, 1
    %p129 = por %p127, %p128
    %p131 = scmp.ne.s32.totalorder %s114, %s130
    %p132 = scmp.eq.s32.totalorder %s17, 0
    %p133 = por %p131, %p132
    %s134 = ssub.s32 %s11, %s18
    %p135 = scmp.eq.s32.totalorder %s134, 0
    %s137 = sadd.s32 %s136, 1
    %s138 = scalar_select %p135, %s136, %s137
    %p141 = pneg %p135
    %p142 = scmp.eq.s32.totalorder %s11, 1
    %p143 = por %p141, %p142
    %p144 = scmp.ne.s32.totalorder %s136, %s139
    %p145 = scmp.eq.s32.totalorder %s11, 0
    %p146 = por %p144, %p145
    %p147 = scmp.ne.s32.totalorder %s136, %s139
    %p148 = scmp.eq.s32.totalorder %s16, 1
    %p149 = por %p147, %p148
    %p150 = scmp.ne.s32.totalorder %s139, %s140
    %p151 = scmp.eq.s32.totalorder %s16, 0
    %p152 = por %p150, %p151
    %p153 = scmp.ne.s32.totalorder %s139, %s140
    %p154 = scmp.eq.s32.totalorder %s17, 1
    %p155 = por %p153, %p154
    %p157 = scmp.ne.s32.totalorder %s140, %s156
    %p158 = scmp.eq.s32.totalorder %s17, 0
    %p159 = por %p157, %p158
    %p160 = scmp.le.s32.totalorder 1, %s11
    %p161 = scmp.lt.s32.totalorder %s11, 3
    %p162 = pnand %p160, %p161
    %p163 = pneg %p162
    // Predicated region
    $region9: #{preact_block.7} parent=5 // pred_check
      _
    $region10: #{preact_block.7} parent=5 // pred_check_branch
      %165 = sbr.rel (%p162) target = $region12
    $region11: #{preact_block.7} parent=5 // pred_region
      %s166 = ssub.s32 %s11, 1
      // Predicated region
      $region13: #{preact_block.7} parent=11 // pred_check
        %p167 = pneg %p58
      $region14: #{preact_block.7} parent=11 // pred_check_branch
        %169 = sbr.rel (%p167) target = $region16
      $region15: #{preact_block.7} parent=11 // pred_region
        _
      $region16: #{preact_block.7} parent=11 // pred_fallthru
        _
      // Predicated region
      $region17: #{preact_block.7} parent=11 // pred_check
        %p170 = pneg %p79
      $region18: #{preact_block.7} parent=11 // pred_check_branch
        %172 = sbr.rel (%p170) target = $region20
      $region19: #{preact_block.7} parent=11 // pred_region
        _
      $region20: #{preact_block.7} parent=11 // pred_fallthru
        _
      // Predicated region
      $region21: #{preact_block.7} parent=11 // pred_check
        %p173 = pneg %p100
      $region22: #{preact_block.7} parent=11 // pred_check_branch
        %175 = sbr.rel (%p173) target = $region24
      $region23: #{preact_block.7} parent=11 // pred_region
        _
      $region24: #{preact_block.7} parent=11 // pred_fallthru
        _
    $region12: #{preact_block.7} parent=5 // pred_fallthru
      _
    %p176 = scmp.lt.s32.totalorder %s11, 2
    // Predicated region
    $region25: #{preact_block.7} parent=5 // pred_check
      %p177 = pneg %p176
    $region26: #{preact_block.7} parent=5 // pred_check_branch
      %179 = sbr.rel (%p177) target = $region28
    $region27: #{preact_block.7} parent=5 // pred_region
      // Predicated region
      $region29: #{preact_block.7} parent=27 // pred_check
        %p180 = pneg %p31
      $region30: #{preact_block.7} parent=27 // pred_check_branch
        %182 = sbr.rel (%p180) target = $region32
      $region31: #{preact_block.7} parent=27 // pred_region
        %p183 = scmp.lt.s32.totalorder %s11, 1
        %s184 = scalar_select %p183, %s11, 1
        %s185 = smul.addr %s184, 54
        %s186 = smul.addr %s185, 8
        %s187 = scalar_lea.vmem %s0, %s186
      $region32: #{preact_block.7} parent=27 // pred_fallthru
        _
      // Predicated region
      $region33: #{preact_block.7} parent=27 // pred_check
        %p188 = pneg %p120
      $region34: #{preact_block.7} parent=27 // pred_check_branch
        %190 = sbr.rel (%p188) target = $region36
      $region35: #{preact_block.7} parent=27 // pred_region
        %p191 = scmp.lt.s32.totalorder %s11, 1
        %s192 = scalar_select %p191, %s11, 1
        %s193 = smul.addr %s192, 32
        %s194 = smul.addr %s193, 8
        %s195 = scalar_lea.vmem %s4, %s194
      $region36: #{preact_block.7} parent=27 // pred_fallthru
        _
    $region28: #{preact_block.7} parent=5 // pred_fallthru
      _
    %p196 = scmp.le.s32.totalorder 1, %s11
    %p197 = scmp.lt.s32.totalorder %s11, 3
    %p198 = pnand %p196, %p197
    %p199 = pneg %p198
    // Predicated region
    $region37: #{preact_block.7} parent=5 // pred_check
      _
    $region38: #{preact_block.7} parent=5 // pred_check_branch
      %201 = sbr.rel (%p198) target = $region40
    $region39: #{preact_block.7} parent=5 // pred_region
      %s202 = ssub.s32 %s11, 1
      %p203 = scmp.lt.s32.totalorder %s16, 1
      %s204 = scalar_select %p203, %s16, 1
      %s205 = smul.addr %s204, 54
      %s206 = smul.addr %s205, 8
      %s207 = scalar_lea.vmem %s0, %s206
      %p208 = pneg %p37
      %p209 = pneg %p34
      %p210 = pneg %p58
      %p211 = pneg %p55
      %p212 = pneg %p79
      %p213 = pneg %p76
      %p214 = pneg %p100
      %p215 = pneg %p97
      %p216 = scmp.lt.s32.totalorder %s16, 1
      %s217 = scalar_select %p216, %s16, 1
      %s218 = smul.addr %s217, 32
      %s219 = smul.addr %s218, 8
      %s220 = scalar_lea.vmem %s4, %s219
      %p221 = pneg %p126
      %p222 = pneg %p123
      %p223 = pneg %p152
      %p224 = pneg %p149
      %p225 = scmp.lt.s32.totalorder %s16, 1
      %s226 = scalar_select %p225, %s16, 1
      %s227 = smul.addr %s226, 32
      %s228 = smul.addr %s227, 8
      %s229 = scalar_lea.vmem %s5, %s228
      %p230 = scmp.lt.s32.totalorder %s16, 1
      %s231 = scalar_select %p230, %s16, 1
      %s232 = smul.addr %s231, 54
      %s233 = smul.addr %s232, 8
      %s234 = scalar_lea.vmem %s0, %s233
      %p235 = scmp.lt.s32.totalorder %s16, 1
      %s236 = scalar_select %p235, %s16, 1
      %s237 = smul.addr %s236, 32
      %s238 = smul.addr %s237, 8
      %s239 = scalar_lea.vmem %s4, %s238
      %p240 = scmp.lt.s32.totalorder %s16, 1
      %s241 = scalar_select %p240, %s16, 1
      %s242 = smul.addr %s241, 32
      %s243 = smul.addr %s242, 8
      %s244 = scalar_lea.vmem %s5, %s243
      %v245 = vld [vmem:[%s234] sm:$0xff]
      %v246 = vld [vmem:[%s234 + $0x8] sm:$0xff]
      %v247 = vld [vmem:[%s234 + $0x10] sm:$0x3]
      %v248 = vld [vmem:[%s234 + $0x18] sm:$0xff]
      %v249 = vld [vmem:[%s234 + $0x20] sm:$0xff]
      %v250 = vld [vmem:[%s234 + $0x28] sm:$0x3]
      %v251 = vld [vmem:[%s234 + $0x30] sm:$0xff]
      %v252 = vld [vmem:[%s234 + $0x38] sm:$0xff]
      %v253 = vld [vmem:[%s234 + $0x40] sm:$0x3]
      %v254 = vld [vmem:[%s234 + $0x48] sm:$0xff]
      %v255 = vld [vmem:[%s234 + $0x50] sm:$0xff]
      %v256 = vld [vmem:[%s234 + $0x58] sm:$0x3]
      %v257 = vld [vmem:[%s234 + $0x60] sm:$0xff]
      %v258 = vld [vmem:[%s234 + $0x68] sm:$0xff]
      %v259 = vld [vmem:[%s234 + $0x70] sm:$0x3]
      %v260 = vld [vmem:[%s234 + $0x78] sm:$0xff]
      %v261 = vld [vmem:[%s234 + $0x80] sm:$0xff]
      %v262 = vld [vmem:[%s234 + $0x88] sm:$0x3]
      %v263 = vld [vmem:[%s234 + $0x90] sm:$0xff]
      %v264 = vld [vmem:[%s234 + $0x98] sm:$0xff]
      %v265 = vld [vmem:[%s234 + $0xa0] sm:$0x3]
      %v266 = vld [vmem:[%s234 + $0xa8] sm:$0xff]
      %v267 = vld [vmem:[%s234 + $0xb0] sm:$0xff]
      %v268 = vld [vmem:[%s234 + $0xb8] sm:$0x3]
      %v269 = vld [vmem:[%s234 + $0xc0] sm:$0xff]
      %v270 = vld [vmem:[%s234 + $0xc8] sm:$0xff]
      %v271 = vld [vmem:[%s234 + $0xd0] sm:$0x3]
      %v272 = vld [vmem:[%s234 + $0xd8] sm:$0xff]
      %v273 = vld [vmem:[%s234 + $0xe0] sm:$0xff]
      %v274 = vld [vmem:[%s234 + $0xe8] sm:$0x3]
      %v275 = vld [vmem:[%s234 + $0xf0] sm:$0xff]
      %v276 = vld [vmem:[%s234 + $0xf8] sm:$0xff]
      %v277 = vld [vmem:[%s234 + $0x100] sm:$0x3]
      %v278 = vld [vmem:[%s234 + $0x108] sm:$0xff]
      %v279 = vld [vmem:[%s234 + $0x110] sm:$0xff]
      %v280 = vld [vmem:[%s234 + $0x118] sm:$0x3]
      %v281 = vld [vmem:[%s234 + $0x120] sm:$0xff]
      %v282 = vld [vmem:[%s234 + $0x128] sm:$0xff]
      %v283 = vld [vmem:[%s234 + $0x130] sm:$0x3]
      %v284 = vld [vmem:[%s234 + $0x138] sm:$0xff]
      %v285 = vld [vmem:[%s234 + $0x140] sm:$0xff]
      %v286 = vld [vmem:[%s234 + $0x148] sm:$0x3]
      %v287 = vld [vmem:[%s234 + $0x150] sm:$0xff]
      %v288 = vld [vmem:[%s234 + $0x158] sm:$0xff]
      %v289 = vld [vmem:[%s234 + $0x160] sm:$0x3]
      %v290 = vld [vmem:[%s234 + $0x168] sm:$0xff]
      %v291 = vld [vmem:[%s234 + $0x170] sm:$0xff]
      %v292 = vld [vmem:[%s234 + $0x178] sm:$0x3]
      %v293 = vld [vmem:[%s234 + $0x180] sm:$0xff]
      %v294 = vld [vmem:[%s234 + $0x188] sm:$0xff]
      %v295 = vld [vmem:[%s234 + $0x190] sm:$0x3]
      %v296 = vld [vmem:[%s234 + $0x198] sm:$0xff]
      %v297 = vld [vmem:[%s234 + $0x1a0] sm:$0xff]
      %v298 = vld [vmem:[%s234 + $0x1a8] sm:$0x3]
      %v299 = vld [vmem:[%s1] sm:$0x1]
      %v301 = vperm.slane %v299, 0
      %v303 = vmul.f32 %v245, %v301
      %v304 = vmul.f32 %v246, %v301
      %v305 = vmul.f32 %v247, %v301
      %v306 = vmul.f32 %v248, %v301
      %v307 = vmul.f32 %v249, %v301
      %v308 = vmul.f32 %v250, %v301
      %v309 = vmul.f32 %v251, %v301
      %v310 = vmul.f32 %v252, %v301
      %v311 = vmul.f32 %v253, %v301
      %v312 = vmul.f32 %v254, %v301
      %v313 = vmul.f32 %v255, %v301
      %v314 = vmul.f32 %v256, %v301
      %v315 = vmul.f32 %v257, %v301
      %v316 = vmul.f32 %v258, %v301
      %v317 = vmul.f32 %v259, %v301
      %v318 = vmul.f32 %v260, %v301
      %v319 = vmul.f32 %v261, %v301
      %v320 = vmul.f32 %v262, %v301
      %v321 = vmul.f32 %v263, %v301
      %v322 = vmul.f32 %v264, %v301
      %v323 = vmul.f32 %v265, %v301
      %v324 = vmul.f32 %v266, %v301
      %v325 = vmul.f32 %v267, %v301
      %v326 = vmul.f32 %v268, %v301
      %v327 = vmul.f32 %v269, %v301
      %v328 = vmul.f32 %v270, %v301
      %v329 = vmul.f32 %v271, %v301
      %v330 = vmul.f32 %v272, %v301
      %v331 = vmul.f32 %v273, %v301
      %v332 = vmul.f32 %v274, %v301
      %v333 = vmul.f32 %v275, %v301
      %v334 = vmul.f32 %v276, %v301
      %v335 = vmul.f32 %v277, %v301
      %v336 = vmul.f32 %v278, %v301
      %v337 = vmul.f32 %v279, %v301
      %v338 = vmul.f32 %v280, %v301
      %v339 = vmul.f32 %v281, %v301
      %v340 = vmul.f32 %v282, %v301
      %v341 = vmul.f32 %v283, %v301
      %v342 = vmul.f32 %v284, %v301
      %v343 = vmul.f32 %v285, %v301
      %v344 = vmul.f32 %v286, %v301
      %v345 = vmul.f32 %v287, %v301
      %v346 = vmul.f32 %v288, %v301
      %v347 = vmul.f32 %v289, %v301
      %v348 = vmul.f32 %v290, %v301
      %v349 = vmul.f32 %v291, %v301
      %v350 = vmul.f32 %v292, %v301
      %v351 = vmul.f32 %v293, %v301
      %v352 = vmul.f32 %v294, %v301
      %v353 = vmul.f32 %v295, %v301
      %v354 = vmul.f32 %v296, %v301
      %v355 = vmul.f32 %v297, %v301
      %v356 = vmul.f32 %v298, %v301
      %v357 = vld [vmem:[%s2] sm:$0x1]
      %v359 = vperm.slane %v357, 0
      %v361 = vadd.f32 %v303, %v359
      %v362 = vadd.f32 %v304, %v359
      %v363 = vadd.f32 %v305, %v359
      %v364 = vadd.f32 %v306, %v359
      %v365 = vadd.f32 %v307, %v359
      %v366 = vadd.f32 %v308, %v359
      %v367 = vadd.f32 %v309, %v359
      %v368 = vadd.f32 %v310, %v359
      %v369 = vadd.f32 %v311, %v359
      %v370 = vadd.f32 %v312, %v359
      %v371 = vadd.f32 %v313, %v359
      %v372 = vadd.f32 %v314, %v359
      %v373 = vadd.f32 %v315, %v359
      %v374 = vadd.f32 %v316, %v359
      %v375 = vadd.f32 %v317, %v359
      %v376 = vadd.f32 %v318, %v359
      %v377 = vadd.f32 %v319, %v359
      %v378 = vadd.f32 %v320, %v359
      %v379 = vadd.f32 %v321, %v359
      %v380 = vadd.f32 %v322, %v359
      %v381 = vadd.f32 %v323, %v359
      %v382 = vadd.f32 %v324, %v359
      %v383 = vadd.f32 %v325, %v359
      %v384 = vadd.f32 %v326, %v359
      %v385 = vadd.f32 %v327, %v359
      %v386 = vadd.f32 %v328, %v359
      %v387 = vadd.f32 %v329, %v359
      %v388 = vadd.f32 %v330, %v359
      %v389 = vadd.f32 %v331, %v359
      %v390 = vadd.f32 %v332, %v359
      %v391 = vadd.f32 %v333, %v359
      %v392 = vadd.f32 %v334, %v359
      %v393 = vadd.f32 %v335, %v359
      %v394 = vadd.f32 %v336, %v359
      %v395 = vadd.f32 %v337, %v359
      %v396 = vadd.f32 %v338, %v359
      %v397 = vadd.f32 %v339, %v359
      %v398 = vadd.f32 %v340, %v359
      %v399 = vadd.f32 %v341, %v359
      %v400 = vadd.f32 %v342, %v359
      %v401 = vadd.f32 %v343, %v359
      %v402 = vadd.f32 %v344, %v359
      %v403 = vadd.f32 %v345, %v359
      %v404 = vadd.f32 %v346, %v359
      %v405 = vadd.f32 %v347, %v359
      %v406 = vadd.f32 %v348, %v359
      %v407 = vadd.f32 %v349, %v359
      %v408 = vadd.f32 %v350, %v359
      %v409 = vadd.f32 %v351, %v359
      %v410 = vadd.f32 %v352, %v359
      %v411 = vadd.f32 %v353, %v359
      %v412 = vadd.f32 %v354, %v359
      %v413 = vadd.f32 %v355, %v359
      %v414 = vadd.f32 %v356, %v359
      %v415 = vmax.f32 %v361, 0.0
      %v416 = vmax.f32 %v362, 0.0
      %v417 = vmax.f32 %v363, 0.0
      %v418 = vmax.f32 %v364, 0.0
      %v419 = vmax.f32 %v365, 0.0
      %v420 = vmax.f32 %v366, 0.0
      %v421 = vmax.f32 %v367, 0.0
      %v422 = vmax.f32 %v368, 0.0
      %v423 = vmax.f32 %v369, 0.0
      %v424 = vmax.f32 %v370, 0.0
      %v425 = vmax.f32 %v371, 0.0
      %v426 = vmax.f32 %v372, 0.0
      %v427 = vmax.f32 %v373, 0.0
      %v428 = vmax.f32 %v374, 0.0
      %v429 = vmax.f32 %v375, 0.0
      %v430 = vmax.f32 %v376, 0.0
      %v431 = vmax.f32 %v377, 0.0
      %v432 = vmax.f32 %v378, 0.0
      %v433 = vmax.f32 %v379, 0.0
      %v434 = vmax.f32 %v380, 0.0
      %v435 = vmax.f32 %v381, 0.0
      %v436 = vmax.f32 %v382, 0.0
      %v437 = vmax.f32 %v383, 0.0
      %v438 = vmax.f32 %v384, 0.0
      %v439 = vmax.f32 %v385, 0.0
      %v440 = vmax.f32 %v386, 0.0
      %v441 = vmax.f32 %v387, 0.0
      %v442 = vmax.f32 %v388, 0.0
      %v443 = vmax.f32 %v389, 0.0
      %v444 = vmax.f32 %v390, 0.0
      %v445 = vmax.f32 %v391, 0.0
      %v446 = vmax.f32 %v392, 0.0
      %v447 = vmax.f32 %v393, 0.0
      %v448 = vmax.f32 %v394, 0.0
      %v449 = vmax.f32 %v395, 0.0
      %v450 = vmax.f32 %v396, 0.0
      %v451 = vmax.f32 %v397, 0.0
      %v452 = vmax.f32 %v398, 0.0
      %v453 = vmax.f32 %v399, 0.0
      %v454 = vmax.f32 %v400, 0.0
      %v455 = vmax.f32 %v401, 0.0
      %v456 = vmax.f32 %v402, 0.0
      %v457 = vmax.f32 %v403, 0.0
      %v458 = vmax.f32 %v404, 0.0
      %v459 = vmax.f32 %v405, 0.0
      %v460 = vmax.f32 %v406, 0.0
      %v461 = vmax.f32 %v407, 0.0
      %v462 = vmax.f32 %v408, 0.0
      %v463 = vmax.f32 %v409, 0.0
      %v464 = vmax.f32 %v410, 0.0
      %v465 = vmax.f32 %v411, 0.0
      %v466 = vmax.f32 %v412, 0.0
      %v467 = vmax.f32 %v413, 0.0
      %v468 = vmax.f32 %v414, 0.0
      %v469 = vlaneseq
      %v470 = vshrl.u32 %v469, 7
      %v471 = vadd.s32 %v470, 8
      %v472 = vadd.s32 %v470, 16
      %vm473 = vcmp.ge.s32.totalorder %v470, 1
      %vm474 = vcmp.ge.s32.totalorder %v471, 1
      %vm475 = vcmp.ge.s32.totalorder %v472, 1
      %vm476 = vmand 0, %vm473
      %vm477 = vmand 0, %vm474
      %vm478 = vmand 0, %vm475
      %vm479 = vmand 1, %vm473
      %vm480 = vmand 1, %vm474
      %vm481 = vmand 1, %vm475
      %vm482 = vcmp.le.s32.totalorder %v470, 16
      %vm483 = vcmp.le.s32.totalorder %v471, 16
      %vm484 = vcmp.le.s32.totalorder %v472, 16
      %vm485 = vmand %vm476, %vm482
      %vm486 = vmand %vm477, %vm483
      %vm487 = vmand %vm478, %vm484
      %vm488 = vmand %vm479, %vm482
      %vm489 = vmand %vm480, %vm483
      %vm490 = vmand %vm481, %vm484
      %v491 = vsel %vm485, %v415, 0.0
      %v492 = vsel %vm486, %v416, 0.0
      %v493 = vsel %vm487, %v417, 0.0
      %v494 = vsel %vm488, %v418, 0.0
      %v495 = vsel %vm489, %v419, 0.0
      %v496 = vsel %vm490, %v420, 0.0
      %v497 = vsel %vm488, %v421, 0.0
      %v498 = vsel %vm489, %v422, 0.0
      %v499 = vsel %vm490, %v423, 0.0
      %v500 = vsel %vm488, %v424, 0.0
      %v501 = vsel %vm489, %v425, 0.0
      %v502 = vsel %vm490, %v426, 0.0
      %v503 = vsel %vm488, %v427, 0.0
      %v504 = vsel %vm489, %v428, 0.0
      %v505 = vsel %vm490, %v429, 0.0
      %v506 = vsel %vm488, %v430, 0.0
      %v507 = vsel %vm489, %v431, 0.0
      %v508 = vsel %vm490, %v432, 0.0
      %v509 = vsel %vm488, %v433, 0.0
      %v510 = vsel %vm489, %v434, 0.0
      %v511 = vsel %vm490, %v435, 0.0
      %v512 = vsel %vm488, %v436, 0.0
      %v513 = vsel %vm489, %v437, 0.0
      %v514 = vsel %vm490, %v438, 0.0
      %v515 = vsel %vm488, %v439, 0.0
      %v516 = vsel %vm489, %v440, 0.0
      %v517 = vsel %vm490, %v441, 0.0
      %v518 = vsel %vm488, %v442, 0.0
      %v519 = vsel %vm489, %v443, 0.0
      %v520 = vsel %vm490, %v444, 0.0
      %v521 = vsel %vm488, %v445, 0.0
      %v522 = vsel %vm489, %v446, 0.0
      %v523 = vsel %vm490, %v447, 0.0
      %v524 = vsel %vm488, %v448, 0.0
      %v525 = vsel %vm489, %v449, 0.0
      %v526 = vsel %vm490, %v450, 0.0
      %v527 = vsel %vm488, %v451, 0.0
      %v528 = vsel %vm489, %v452, 0.0
      %v529 = vsel %vm490, %v453, 0.0
      %v530 = vsel %vm488, %v454, 0.0
      %v531 = vsel %vm489, %v455, 0.0
      %v532 = vsel %vm490, %v456, 0.0
      %v533 = vsel %vm488, %v457, 0.0
      %v534 = vsel %vm489, %v458, 0.0
      %v535 = vsel %vm490, %v459, 0.0
      %v536 = vsel %vm488, %v460, 0.0
      %v537 = vsel %vm489, %v461, 0.0
      %v538 = vsel %vm490, %v462, 0.0
      %v539 = vsel %vm488, %v463, 0.0
      %v540 = vsel %vm489, %v464, 0.0
      %v541 = vsel %vm490, %v465, 0.0
      %v542 = vsel %vm485, %v466, 0.0
      %v543 = vsel %vm486, %v467, 0.0
      %v544 = vsel %vm487, %v468, 0.0
      %vm593 = vcmask 1046528
      %v594 = vrot.slane %v491, 1
      %v595 = vrot.slane %v492, 1
      %v596 = vsel %vm593, %v594, %v595
      %v597 = vrot.slane %v493, 1
      %v598 = vsel %vm593, %v595, %v597
      %v599 = vrot.slane %v494, 1
      %v600 = vrot.slane %v495, 1
      %v601 = vsel %vm593, %v599, %v600
      %v602 = vrot.slane %v496, 1
      %v603 = vsel %vm593, %v600, %v602
      %v604 = vrot.slane %v497, 1
      %v605 = vrot.slane %v498, 1
      %v606 = vsel %vm593, %v604, %v605
      %v607 = vrot.slane %v499, 1
      %v608 = vsel %vm593, %v605, %v607
      %v609 = vrot.slane %v500, 1
      %v610 = vrot.slane %v501, 1
      %v611 = vsel %vm593, %v609, %v610
      %v612 = vrot.slane %v502, 1
      %v613 = vsel %vm593, %v610, %v612
      %v614 = vrot.slane %v503, 1
      %v615 = vrot.slane %v504, 1
      %v616 = vsel %vm593, %v614, %v615
      %v617 = vrot.slane %v505, 1
      %v618 = vsel %vm593, %v615, %v617
      %v619 = vrot.slane %v506, 1
      %v620 = vrot.slane %v507, 1
      %v621 = vsel %vm593, %v619, %v620
      %v622 = vrot.slane %v508, 1
      %v623 = vsel %vm593, %v620, %v622
      %v624 = vrot.slane %v509, 1
      %v625 = vrot.slane %v510, 1
      %v626 = vsel %vm593, %v624, %v625
      %v627 = vrot.slane %v511, 1
      %v628 = vsel %vm593, %v625, %v627
      %v629 = vrot.slane %v512, 1
      %v630 = vrot.slane %v513, 1
      %v631 = vsel %vm593, %v629, %v630
      %v632 = vrot.slane %v514, 1
      %v633 = vsel %vm593, %v630, %v632
      %v634 = vrot.slane %v515, 1
      %v635 = vrot.slane %v516, 1
      %v636 = vsel %vm593, %v634, %v635
      %v637 = vrot.slane %v517, 1
      %v638 = vsel %vm593, %v635, %v637
      %v639 = vrot.slane %v518, 1
      %v640 = vrot.slane %v519, 1
      %v641 = vsel %vm593, %v639, %v640
      %v642 = vrot.slane %v520, 1
      %v643 = vsel %vm593, %v640, %v642
      %v644 = vrot.slane %v521, 1
      %v645 = vrot.slane %v522, 1
      %v646 = vsel %vm593, %v644, %v645
      %v647 = vrot.slane %v523, 1
      %v648 = vsel %vm593, %v645, %v647
      %v649 = vrot.slane %v524, 1
      %v650 = vrot.slane %v525, 1
      %v651 = vsel %vm593, %v649, %v650
      %v652 = vrot.slane %v526, 1
      %v653 = vsel %vm593, %v650, %v652
      %v654 = vrot.slane %v527, 1
      %v655 = vrot.slane %v528, 1
      %v656 = vsel %vm593, %v654, %v655
      %v657 = vrot.slane %v529, 1
      %v658 = vsel %vm593, %v655, %v657
      %v659 = vrot.slane %v530, 1
      %v660 = vrot.slane %v531, 1
      %v661 = vsel %vm593, %v659, %v660
      %v662 = vrot.slane %v532, 1
      %v663 = vsel %vm593, %v660, %v662
      %v664 = vrot.slane %v533, 1
      %v665 = vrot.slane %v534, 1
      %v666 = vsel %vm593, %v664, %v665
      %v667 = vrot.slane %v535, 1
      %v668 = vsel %vm593, %v665, %v667
      %v669 = vrot.slane %v536, 1
      %v670 = vrot.slane %v537, 1
      %v671 = vsel %vm593, %v669, %v670
      %v672 = vrot.slane %v538, 1
      %v673 = vsel %vm593, %v670, %v672
      %vm706 = vcmask 1045504
      %v707 = vrot.slane %v491, 2
      %v708 = vrot.slane %v492, 2
      %v709 = vsel %vm706, %v707, %v708
      %v710 = vrot.slane %v493, 2
      %v711 = vsel %vm706, %v708, %v710
      %v712 = vrot.slane %v494, 2
      %v713 = vrot.slane %v495, 2
      %v714 = vsel %vm706, %v712, %v713
      %v715 = vrot.slane %v496, 2
      %v716 = vsel %vm706, %v713, %v715
      %v717 = vrot.slane %v497, 2
      %v718 = vrot.slane %v498, 2
      %v719 = vsel %vm706, %v717, %v718
      %v720 = vrot.slane %v499, 2
      %v721 = vsel %vm706, %v718, %v720
      %v722 = vrot.slane %v500, 2
      %v723 = vrot.slane %v501, 2
      %v724 = vsel %vm706, %v722, %v723
      %v725 = vrot.slane %v502, 2
      %v726 = vsel %vm706, %v723, %v725
      %v727 = vrot.slane %v503, 2
      %v728 = vrot.slane %v504, 2
      %v729 = vsel %vm706, %v727, %v728
      %v730 = vrot.slane %v505, 2
      %v731 = vsel %vm706, %v728, %v730
      %v732 = vrot.slane %v506, 2
      %v733 = vrot.slane %v507, 2
      %v734 = vsel %vm706, %v732, %v733
      %v735 = vrot.slane %v508, 2
      %v736 = vsel %vm706, %v733, %v735
      %v737 = vrot.slane %v509, 2
      %v738 = vrot.slane %v510, 2
      %v739 = vsel %vm706, %v737, %v738
      %v740 = vrot.slane %v511, 2
      %v741 = vsel %vm706, %v738, %v740
      %v742 = vrot.slane %v512, 2
      %v743 = vrot.slane %v513, 2
      %v744 = vsel %vm706, %v742, %v743
      %v745 = vrot.slane %v514, 2
      %v746 = vsel %vm706, %v743, %v745
      %v747 = vrot.slane %v515, 2
      %v748 = vrot.slane %v516, 2
      %v749 = vsel %vm706, %v747, %v748
      %v750 = vrot.slane %v517, 2
      %v751 = vsel %vm706, %v748, %v750
      %v752 = vrot.slane %v518, 2
      %v753 = vrot.slane %v519, 2
      %v754 = vsel %vm706, %v752, %v753
      %v755 = vrot.slane %v520, 2
      %v756 = vsel %vm706, %v753, %v755
      %v757 = vrot.slane %v521, 2
      %v758 = vrot.slane %v522, 2
      %v759 = vsel %vm706, %v757, %v758
      %v760 = vrot.slane %v523, 2
      %v761 = vsel %vm706, %v758, %v760
      %v762 = vrot.slane %v524, 2
      %v763 = vrot.slane %v525, 2
      %v764 = vsel %vm706, %v762, %v763
      %v765 = vrot.slane %v526, 2
      %v766 = vsel %vm706, %v763, %v765
      %v767 = vrot.slane %v527, 2
      %v768 = vrot.slane %v528, 2
      %v769 = vsel %vm706, %v767, %v768
      %v770 = vrot.slane %v529, 2
      %v771 = vsel %vm706, %v768, %v770
      %v772 = vrot.slane %v530, 2
      %v773 = vrot.slane %v531, 2
      %v774 = vsel %vm706, %v772, %v773
      %v775 = vrot.slane %v532, 2
      %v776 = vsel %vm706, %v773, %v775
      %v777 = vrot.slane %v533, 2
      %v778 = vrot.slane %v534, 2
      %v779 = vsel %vm706, %v777, %v778
      %v780 = vrot.slane %v535, 2
      %v781 = vsel %vm706, %v778, %v780
      %v782 = vrot.slane %v536, 2
      %v783 = vrot.slane %v537, 2
      %v784 = vsel %vm706, %v782, %v783
      %v785 = vrot.slane %v538, 2
      %v786 = vsel %vm706, %v783, %v785
      %v822 = vrot.slane %v539, 1
      %v823 = vrot.slane %v540, 1
      %v824 = vsel %vm593, %v822, %v823
      %v825 = vrot.slane %v541, 1
      %v826 = vsel %vm593, %v823, %v825
      %v829 = vrot.slane %v539, 2
      %v830 = vrot.slane %v540, 2
      %v831 = vsel %vm706, %v829, %v830
      %v832 = vrot.slane %v541, 2
      %v833 = vsel %vm706, %v830, %v832
      %v839 = vrot.slane %v542, 1
      %v840 = vrot.slane %v543, 1
      %v841 = vsel %vm593, %v839, %v840
      %v842 = vrot.slane %v544, 1
      %v843 = vsel %vm593, %v840, %v842
      %v846 = vrot.slane %v542, 2
      %v847 = vrot.slane %v543, 2
      %v848 = vsel %vm706, %v846, %v847
      %v849 = vrot.slane %v544, 2
      %v850 = vsel %vm706, %v847, %v849
      %v853 = vpack.c.bf16 %v596, %v491
      %v854 = vpack.c.bf16 %v494, %v709
      %v855 = vpack.c.bf16 %v714, %v601
      %v856 = vpack.c.bf16 %v606, %v497
      %v857 = vpack.c.bf16 %v719, %v719
      %v858 = vpack.c.bf16 %v598, %v492
      %v859 = vpack.c.bf16 %v495, %v711
      %v860 = vpack.c.bf16 %v716, %v603
      %v861 = vpack.c.bf16 %v608, %v498
      %v862 = vpack.c.bf16 %v721, %v721
      %v863 = vpack.c.bf16 %v601, %v494
      %v864 = vpack.c.bf16 %v497, %v714
      %v865 = vpack.c.bf16 %v719, %v606
      %v866 = vpack.c.bf16 %v611, %v500
      %v867 = vpack.c.bf16 %v724, %v724
      %v868 = vpack.c.bf16 %v603, %v495
      %v869 = vpack.c.bf16 %v498, %v716
      %v870 = vpack.c.bf16 %v721, %v608
      %v871 = vpack.c.bf16 %v613, %v501
      %v872 = vpack.c.bf16 %v726, %v726
      %v873 = vpack.c.bf16 %v500, %v719
      %v874 = vpack.c.bf16 %v724, %v611
      %v875 = vpack.c.bf16 %v616, %v503
      %v876 = vpack.c.bf16 %v729, %v729
      %v877 = vpack.c.bf16 %v501, %v721
      %v878 = vpack.c.bf16 %v726, %v613
      %v879 = vpack.c.bf16 %v618, %v504
      %v880 = vpack.c.bf16 %v731, %v731
      %v881 = vpack.c.bf16 %v503, %v724
      %v882 = vpack.c.bf16 %v729, %v616
      %v883 = vpack.c.bf16 %v621, %v506
      %v884 = vpack.c.bf16 %v734, %v734
      %v885 = vpack.c.bf16 %v504, %v726
      %v886 = vpack.c.bf16 %v731, %v618
      %v887 = vpack.c.bf16 %v623, %v507
      %v888 = vpack.c.bf16 %v736, %v736
      %v889 = vpack.c.bf16 %v506, %v729
      %v890 = vpack.c.bf16 %v734, %v621
      %v891 = vpack.c.bf16 %v626, %v509
      %v892 = vpack.c.bf16 %v739, %v739
      %v893 = vpack.c.bf16 %v507, %v731
      %v894 = vpack.c.bf16 %v736, %v623
      %v895 = vpack.c.bf16 %v628, %v510
      %v896 = vpack.c.bf16 %v741, %v741
      %v897 = vpack.c.bf16 %v509, %v734
      %v898 = vpack.c.bf16 %v739, %v626
      %v899 = vpack.c.bf16 %v631, %v512
      %v900 = vpack.c.bf16 %v744, %v744
      %v901 = vpack.c.bf16 %v510, %v736
      %v902 = vpack.c.bf16 %v741, %v628
      %v903 = vpack.c.bf16 %v633, %v513
      %v904 = vpack.c.bf16 %v746, %v746
      %v905 = vpack.c.bf16 %v512, %v739
      %v906 = vpack.c.bf16 %v744, %v631
      %v907 = vpack.c.bf16 %v636, %v515
      %v908 = vpack.c.bf16 %v749, %v749
      %v909 = vpack.c.bf16 %v513, %v741
      %v910 = vpack.c.bf16 %v746, %v633
      %v911 = vpack.c.bf16 %v638, %v516
      %v912 = vpack.c.bf16 %v751, %v751
      %v913 = vpack.c.bf16 %v515, %v744
      %v914 = vpack.c.bf16 %v749, %v636
      %v915 = vpack.c.bf16 %v641, %v518
      %v916 = vpack.c.bf16 %v754, %v754
      %v917 = vpack.c.bf16 %v516, %v746
      %v918 = vpack.c.bf16 %v751, %v638
      %v919 = vpack.c.bf16 %v643, %v519
      %v920 = vpack.c.bf16 %v756, %v756
      %v921 = vpack.c.bf16 %v518, %v749
      %v922 = vpack.c.bf16 %v754, %v641
      %v923 = vpack.c.bf16 %v646, %v521
      %v924 = vpack.c.bf16 %v759, %v759
      %v925 = vpack.c.bf16 %v519, %v751
      %v926 = vpack.c.bf16 %v756, %v643
      %v927 = vpack.c.bf16 %v648, %v522
      %v928 = vpack.c.bf16 %v761, %v761
      %v929 = vpack.c.bf16 %v521, %v754
      %v930 = vpack.c.bf16 %v759, %v646
      %v931 = vpack.c.bf16 %v651, %v524
      %v932 = vpack.c.bf16 %v764, %v764
      %v933 = vpack.c.bf16 %v522, %v756
      %v934 = vpack.c.bf16 %v761, %v648
      %v935 = vpack.c.bf16 %v653, %v525
      %v936 = vpack.c.bf16 %v766, %v766
      %v937 = vpack.c.bf16 %v524, %v759
      %v938 = vpack.c.bf16 %v764, %v651
      %v939 = vpack.c.bf16 %v656, %v527
      %v940 = vpack.c.bf16 %v769, %v769
      %v941 = vpack.c.bf16 %v525, %v761
      %v942 = vpack.c.bf16 %v766, %v653
      %v943 = vpack.c.bf16 %v658, %v528
      %v944 = vpack.c.bf16 %v771, %v771
      %v945 = vpack.c.bf16 %v527, %v764
      %v946 = vpack.c.bf16 %v769, %v656
      %v947 = vpack.c.bf16 %v661, %v530
      %v948 = vpack.c.bf16 %v774, %v774
      %v949 = vpack.c.bf16 %v528, %v766
      %v950 = vpack.c.bf16 %v771, %v658
      %v951 = vpack.c.bf16 %v663, %v531
      %v952 = vpack.c.bf16 %v776, %v776
      %v953 = vpack.c.bf16 %v530, %v769
      %v954 = vpack.c.bf16 %v774, %v661
      %v955 = vpack.c.bf16 %v666, %v533
      %v956 = vpack.c.bf16 %v779, %v779
      %v957 = vpack.c.bf16 %v531, %v771
      %v958 = vpack.c.bf16 %v776, %v663
      %v959 = vpack.c.bf16 %v668, %v534
      %v960 = vpack.c.bf16 %v781, %v781
      %v961 = vpack.c.bf16 %v533, %v774
      %v962 = vpack.c.bf16 %v779, %v666
      %v963 = vpack.c.bf16 %v671, %v536
      %v964 = vpack.c.bf16 %v784, %v784
      %v965 = vpack.c.bf16 %v534, %v776
      %v966 = vpack.c.bf16 %v781, %v668
      %v967 = vpack.c.bf16 %v673, %v537
      %v968 = vpack.c.bf16 %v786, %v786
      %v969 = vpack.c.bf16 %v536, %v779
      %v970 = vpack.c.bf16 %v784, %v671
      %v971 = vpack.c.bf16 %v824, %v539
      %v972 = vpack.c.bf16 %v831, %v831
      %v973 = vpack.c.bf16 %v537, %v781
      %v974 = vpack.c.bf16 %v786, %v673
      %v975 = vpack.c.bf16 %v826, %v540
      %v976 = vpack.c.bf16 %v833, %v833
      %v977 = vpack.c.bf16 %v539, %v784
      %v978 = vpack.c.bf16 %v831, %v824
      %v979 = vpack.c.bf16 %v841, %v542
      %v980 = vpack.c.bf16 %v848, %v848
      %v981 = vpack.c.bf16 %v540, %v786
      %v982 = vpack.c.bf16 %v833, %v826
      %v983 = vpack.c.bf16 %v843, %v543
      %v984 = vpack.c.bf16 %v850, %v850
      %v985 = vld [vmem:[%s3] sm:$0xf]
      %v986 = vld [vmem:[%s3 + $0x4] sm:$0xf]
      %v987 = vld [vmem:[%s3 + $0x8] sm:$0xf]
      %v988 = vld [vmem:[%s3 + $0xc] sm:$0xf]
      %v989 = vld [vmem:[%s3 + $0x10] sm:$0xf]
      %v990 = vld [vmem:[%s3 + $0x14] sm:$0xf]
      %v991 = vld [vmem:[%s3 + $0x18] sm:$0xf]
      %v992 = vld [vmem:[%s3 + $0x1c] sm:$0xf]
      %v993 = vld [vmem:[%s3 + $0x20] sm:$0xf]
      %v994 = vld [vmem:[%s3 + $0x24] sm:$0xf]
      %v995 = vld [vmem:[%s3 + $0x28] sm:$0xf]
      %v996 = vld [vmem:[%s3 + $0x2c] sm:$0xf]
      %v997 = vld [vmem:[%s3 + $0x30] sm:$0xf]
      %v998 = vld [vmem:[%s3 + $0x34] sm:$0xf]
      %v999 = vld [vmem:[%s3 + $0x38] sm:$0xf]
      %v1000 = vld [vmem:[%s3 + $0x3c] sm:$0xf]
      %v1001 = vld [vmem:[%s3 + $0x40] sm:$0xf]
      %v1002 = vld [vmem:[%s3 + $0x44] sm:$0xf]
      %v1003 = vld [vmem:[%s3 + $0x48] sm:$0xf]
      %v1004 = vld [vmem:[%s3 + $0x4c] sm:$0xf]
      %v1005 = vld [vmem:[%s3 + $0x50] sm:$0xf]
      %v1006 = vld [vmem:[%s3 + $0x54] sm:$0xf]
      %v1007 = vld [vmem:[%s3 + $0x58] sm:$0xf]
      %v1008 = vld [vmem:[%s3 + $0x5c] sm:$0xf]
      %v1009 = vld [vmem:[%s3 + $0x60] sm:$0xf]
      %v1010 = vld [vmem:[%s3 + $0x64] sm:$0xf]
      %v1011 = vld [vmem:[%s3 + $0x68] sm:$0xf]
      %v1012 = vld [vmem:[%s3 + $0x6c] sm:$0xf]
      %v1013 = vld [vmem:[%s3 + $0x70] sm:$0xf]
      %v1014 = vld [vmem:[%s3 + $0x74] sm:$0xf]
      %v1015 = vld [vmem:[%s3 + $0x78] sm:$0xf]
      %v1016 = vld [vmem:[%s3 + $0x7c] sm:$0xf]
      %v1017 = vld [vmem:[%s3 + $0x80] sm:$0xf]
      %v1018 = vld [vmem:[%s3 + $0x84] sm:$0xf]
      %v1019 = vld [vmem:[%s3 + $0x88] sm:$0xf]
      %v1020 = vld [vmem:[%s3 + $0x8c] sm:$0xf]
      %v1021 = vld [vmem:[%s3 + $0x90] sm:$0xf]
      %v1022 = vld [vmem:[%s3 + $0x94] sm:$0xf]
      %v1023 = vld [vmem:[%s3 + $0x98] sm:$0xf]
      %v1024 = vld [vmem:[%s3 + $0x9c] sm:$0xf]
      %v1025 = vld [vmem:[%s3 + $0xa0] sm:$0xf]
      %v1026 = vld [vmem:[%s3 + $0xa4] sm:$0xf]
      %v1027 = vld [vmem:[%s3 + $0xa8] sm:$0xf]
      %v1028 = vld [vmem:[%s3 + $0xac] sm:$0xf]
      %v1029 = vld [vmem:[%s3 + $0xb0] sm:$0xf]
      %v1030 = vld [vmem:[%s3 + $0xb4] sm:$0xf]
      %v1031 = vld [vmem:[%s3 + $0xb8] sm:$0xf]
      %v1032 = vld [vmem:[%s3 + $0xbc] sm:$0xf]
      %v1033 = vld [vmem:[%s3 + $0xc0] sm:$0xf]
      %v1034 = vld [vmem:[%s3 + $0xc4] sm:$0xf]
      %v1035 = vld [vmem:[%s3 + $0xc8] sm:$0xf]
      %v1036 = vld [vmem:[%s3 + $0xcc] sm:$0xf]
      %v1037 = vld [vmem:[%s3 + $0xd0] sm:$0xf]
      %v1038 = vld [vmem:[%s3 + $0xd4] sm:$0xf]
      %v1039 = vld [vmem:[%s3 + $0xd8] sm:$0xf]
      %v1040 = vld [vmem:[%s3 + $0xdc] sm:$0xf]
      %v1041 = vld [vmem:[%s3 + $0xe0] sm:$0xf]
      %v1042 = vld [vmem:[%s3 + $0xe4] sm:$0xf]
      %v1043 = vld [vmem:[%s3 + $0xe8] sm:$0xf]
      %v1044 = vld [vmem:[%s3 + $0xec] sm:$0xf]
      %v1045 = vld [vmem:[%s3 + $0xf0] sm:$0xf]
      %v1046 = vld [vmem:[%s3 + $0xf4] sm:$0xf]
      %v1047 = vld [vmem:[%s3 + $0xf8] sm:$0xf]
      %v1048 = vld [vmem:[%s3 + $0xfc] sm:$0xf]
      %v1049 = vld [vmem:[%s3 + $0x100] sm:$0xf]
      %v1050 = vld [vmem:[%s3 + $0x104] sm:$0xf]
      %v1051 = vld [vmem:[%s3 + $0x108] sm:$0xf]
      %v1052 = vld [vmem:[%s3 + $0x10c] sm:$0xf]
      %v1053 = vld [vmem:[%s3 + $0x110] sm:$0xf]
      %v1054 = vld [vmem:[%s3 + $0x114] sm:$0xf]
      %v1055 = vld [vmem:[%s3 + $0x118] sm:$0xf]
      %v1056 = vld [vmem:[%s3 + $0x11c] sm:$0xf]
      %v1057 = vld [vmem:[%s3 + $0x120] sm:$0xf]
      %v1058 = vld [vmem:[%s3 + $0x124] sm:$0xf]
      %v1059 = vld [vmem:[%s3 + $0x128] sm:$0xf]
      %v1060 = vld [vmem:[%s3 + $0x12c] sm:$0xf]
      %v1061 = vld [vmem:[%s3 + $0x130] sm:$0xf]
      %v1062 = vld [vmem:[%s3 + $0x134] sm:$0xf]
      %v1063 = vld [vmem:[%s3 + $0x138] sm:$0xf]
      %v1064 = vld [vmem:[%s3 + $0x13c] sm:$0xf]
      %v1065 = vld [vmem:[%s3 + $0x140] sm:$0xf]
      %v1066 = vld [vmem:[%s3 + $0x144] sm:$0xf]
      %v1067 = vld [vmem:[%s3 + $0x148] sm:$0xf]
      %v1068 = vld [vmem:[%s3 + $0x14c] sm:$0xf]
      %v1069 = vld [vmem:[%s3 + $0x150] sm:$0xf]
      %v1070 = vld [vmem:[%s3 + $0x154] sm:$0xf]
      %v1071 = vld [vmem:[%s3 + $0x158] sm:$0xf]
      %v1072 = vld [vmem:[%s3 + $0x15c] sm:$0xf]
      %v1073 = vld [vmem:[%s3 + $0x160] sm:$0xf]
      %v1074 = vld [vmem:[%s3 + $0x164] sm:$0xf]
      %v1075 = vld [vmem:[%s3 + $0x168] sm:$0xf]
      %v1076 = vld [vmem:[%s3 + $0x16c] sm:$0xf]
      %v1077 = vld [vmem:[%s3 + $0x170] sm:$0xf]
      %v1078 = vld [vmem:[%s3 + $0x174] sm:$0xf]
      %v1079 = vld [vmem:[%s3 + $0x178] sm:$0xf]
      %v1080 = vld [vmem:[%s3 + $0x17c] sm:$0xf]
      %v1081 = vld [vmem:[%s3 + $0x180] sm:$0xf]
      %v1082 = vld [vmem:[%s3 + $0x184] sm:$0xf]
      %v1083 = vld [vmem:[%s3 + $0x188] sm:$0xf]
      %v1084 = vld [vmem:[%s3 + $0x18c] sm:$0xf]
      %v1085 = vld [vmem:[%s3 + $0x190] sm:$0xf]
      %v1086 = vld [vmem:[%s3 + $0x194] sm:$0xf]
      %v1087 = vld [vmem:[%s3 + $0x198] sm:$0xf]
      %v1088 = vld [vmem:[%s3 + $0x19c] sm:$0xf]
      %v1089 = vld [vmem:[%s3 + $0x1a0] sm:$0xf]
      %v1090 = vld [vmem:[%s3 + $0x1a4] sm:$0xf]
      %v1091 = vld [vmem:[%s3 + $0x1a8] sm:$0xf]
      %v1092 = vld [vmem:[%s3 + $0x1ac] sm:$0xf]
      %v1093 = vld [vmem:[%s3 + $0x1b0] sm:$0xf]
      %v1094 = vld [vmem:[%s3 + $0x1b4] sm:$0xf]
      %v1095 = vld [vmem:[%s3 + $0x1b8] sm:$0xf]
      %v1096 = vld [vmem:[%s3 + $0x1bc] sm:$0xf]
      %v1097 = vld [vmem:[%s3 + $0x1c0] sm:$0xf]
      %v1098 = vld [vmem:[%s3 + $0x1c4] sm:$0xf]
      %v1099 = vld [vmem:[%s3 + $0x1c8] sm:$0xf]
      %v1100 = vld [vmem:[%s3 + $0x1cc] sm:$0xf]
      %v1101 = vld [vmem:[%s3 + $0x1d0] sm:$0xf]
      %v1102 = vld [vmem:[%s3 + $0x1d4] sm:$0xf]
      %v1103 = vld [vmem:[%s3 + $0x1d8] sm:$0xf]
      %v1104 = vld [vmem:[%s3 + $0x1dc] sm:$0xf]
      %v1105 = vld [vmem:[%s3 + $0x1e0] sm:$0xf]
      %v1106 = vld [vmem:[%s3 + $0x1e4] sm:$0xf]
      %v1107 = vld [vmem:[%s3 + $0x1e8] sm:$0xf]
      %v1108 = vld [vmem:[%s3 + $0x1ec] sm:$0xf]
      %v1109 = vld [vmem:[%s3 + $0x1f0] sm:$0xf]
      %v1110 = vld [vmem:[%s3 + $0x1f4] sm:$0xf]
      %v1111 = vld [vmem:[%s3 + $0x1f8] sm:$0xf]
      %v1112 = vld [vmem:[%s3 + $0x1fc] sm:$0xf]
      %v1113 = vld [vmem:[%s3 + $0x200] sm:$0xf]
      %v1114 = vld [vmem:[%s3 + $0x204] sm:$0xf]
      %v1115 = vld [vmem:[%s3 + $0x208] sm:$0xf]
      %v1116 = vld [vmem:[%s3 + $0x20c] sm:$0xf]
      %v1117 = vld [vmem:[%s3 + $0x210] sm:$0xf]
      %v1118 = vld [vmem:[%s3 + $0x214] sm:$0xf]
      %v1119 = vld [vmem:[%s3 + $0x218] sm:$0xf]
      %v1120 = vld [vmem:[%s3 + $0x21c] sm:$0xf]
      %v1121 = vld [vmem:[%s3 + $0x220] sm:$0xf]
      %v1122 = vld [vmem:[%s3 + $0x224] sm:$0xf]
      %v1123 = vld [vmem:[%s3 + $0x228] sm:$0xf]
      %v1124 = vld [vmem:[%s3 + $0x22c] sm:$0xf]
      %v1125 = vld [vmem:[%s3 + $0x230] sm:$0xf]
      %v1126 = vld [vmem:[%s3 + $0x234] sm:$0xf]
      %v1127 = vld [vmem:[%s3 + $0x238] sm:$0xf]
      %v1128 = vld [vmem:[%s3 + $0x23c] sm:$0xf]
      %v1261 = vunpack.c.l.b16 %v853
      %v1262 = vunpack.c.h.b16 %v853
      %v1263 = vunpack.c.l.b16 %v854
      %v1264 = vunpack.c.h.b16 %v854
      %v1265 = vunpack.c.l.b16 %v855
      %v1266 = vunpack.c.h.b16 %v855
      %v1267 = vunpack.c.l.b16 %v856
      %v1268 = vunpack.c.h.b16 %v856
      %v1269 = vunpack.c.l.b16 %v857
      %v1270 = vunpack.c.l.b16 %v858
      %v1271 = vunpack.c.h.b16 %v858
      %v1272 = vunpack.c.l.b16 %v859
      %v1273 = vunpack.c.h.b16 %v859
      %v1274 = vunpack.c.l.b16 %v860
      %v1275 = vunpack.c.h.b16 %v860
      %v1276 = vunpack.c.l.b16 %v861
      %v1277 = vunpack.c.h.b16 %v861
      %v1278 = vunpack.c.l.b16 %v862
      %v1279 = vunpack.c.l.b16 %v863
      %v1280 = vunpack.c.h.b16 %v863
      %v1281 = vunpack.c.l.b16 %v864
      %v1282 = vunpack.c.h.b16 %v864
      %v1283 = vunpack.c.l.b16 %v865
      %v1284 = vunpack.c.h.b16 %v865
      %v1285 = vunpack.c.l.b16 %v866
      %v1286 = vunpack.c.h.b16 %v866
      %v1287 = vunpack.c.l.b16 %v867
      %v1288 = vunpack.c.l.b16 %v868
      %v1289 = vunpack.c.h.b16 %v868
      %v1290 = vunpack.c.l.b16 %v869
      %v1291 = vunpack.c.h.b16 %v869
      %v1292 = vunpack.c.l.b16 %v870
      %v1293 = vunpack.c.h.b16 %v870
      %v1294 = vunpack.c.l.b16 %v871
      %v1295 = vunpack.c.h.b16 %v871
      %v1296 = vunpack.c.l.b16 %v872
      %v1297 = vunpack.c.l.b16 %v873
      %v1298 = vunpack.c.h.b16 %v873
      %v1299 = vunpack.c.l.b16 %v874
      %v1300 = vunpack.c.h.b16 %v874
      %v1301 = vunpack.c.l.b16 %v875
      %v1302 = vunpack.c.h.b16 %v875
      %v1303 = vunpack.c.l.b16 %v876
      %v1304 = vunpack.c.l.b16 %v877
      %v1305 = vunpack.c.h.b16 %v877
      %v1306 = vunpack.c.l.b16 %v878
      %v1307 = vunpack.c.h.b16 %v878
      %v1308 = vunpack.c.l.b16 %v879
      %v1309 = vunpack.c.h.b16 %v879
      %v1310 = vunpack.c.l.b16 %v880
      %v1311 = vunpack.c.l.b16 %v881
      %v1312 = vunpack.c.h.b16 %v881
      %v1313 = vunpack.c.l.b16 %v882
      %v1314 = vunpack.c.h.b16 %v882
      %v1315 = vunpack.c.l.b16 %v883
      %v1316 = vunpack.c.h.b16 %v883
      %v1317 = vunpack.c.l.b16 %v884
      %v1318 = vunpack.c.l.b16 %v885
      %v1319 = vunpack.c.h.b16 %v885
      %v1320 = vunpack.c.l.b16 %v886
      %v1321 = vunpack.c.h.b16 %v886
      %v1322 = vunpack.c.l.b16 %v887
      %v1323 = vunpack.c.h.b16 %v887
      %v1324 = vunpack.c.l.b16 %v888
      %v1325 = vunpack.c.l.b16 %v889
      %v1326 = vunpack.c.h.b16 %v889
      %v1327 = vunpack.c.l.b16 %v890
      %v1328 = vunpack.c.h.b16 %v890
      %v1329 = vunpack.c.l.b16 %v891
      %v1330 = vunpack.c.h.b16 %v891
      %v1331 = vunpack.c.l.b16 %v892
      %v1332 = vunpack.c.l.b16 %v893
      %v1333 = vunpack.c.h.b16 %v893
      %v1334 = vunpack.c.l.b16 %v894
      %v1335 = vunpack.c.h.b16 %v894
      %v1336 = vunpack.c.l.b16 %v895
      %v1337 = vunpack.c.h.b16 %v895
      %v1338 = vunpack.c.l.b16 %v896
      %v1339 = vunpack.c.l.b16 %v897
      %v1340 = vunpack.c.h.b16 %v897
      %v1341 = vunpack.c.l.b16 %v898
      %v1342 = vunpack.c.h.b16 %v898
      %v1343 = vunpack.c.l.b16 %v899
      %v1344 = vunpack.c.h.b16 %v899
      %v1345 = vunpack.c.l.b16 %v900
      %v1346 = vunpack.c.l.b16 %v901
      %v1347 = vunpack.c.h.b16 %v901
      %v1348 = vunpack.c.l.b16 %v902
      %v1349 = vunpack.c.h.b16 %v902
      %v1350 = vunpack.c.l.b16 %v903
      %v1351 = vunpack.c.h.b16 %v903
      %v1352 = vunpack.c.l.b16 %v904
      %v1353 = vunpack.c.l.b16 %v905
      %v1354 = vunpack.c.h.b16 %v905
      %v1355 = vunpack.c.l.b16 %v906
      %v1356 = vunpack.c.h.b16 %v906
      %v1357 = vunpack.c.l.b16 %v907
      %v1358 = vunpack.c.h.b16 %v907
      %v1359 = vunpack.c.l.b16 %v908
      %v1360 = vunpack.c.l.b16 %v909
      %v1361 = vunpack.c.h.b16 %v909
      %v1362 = vunpack.c.l.b16 %v910
      %v1363 = vunpack.c.h.b16 %v910
      %v1364 = vunpack.c.l.b16 %v911
      %v1365 = vunpack.c.h.b16 %v911
      %v1366 = vunpack.c.l.b16 %v912
      %v1367 = vunpack.c.l.b16 %v913
      %v1368 = vunpack.c.h.b16 %v913
      %v1369 = vunpack.c.l.b16 %v914
      %v1370 = vunpack.c.h.b16 %v914
      %v1371 = vunpack.c.l.b16 %v915
      %v1372 = vunpack.c.h.b16 %v915
      %v1373 = vunpack.c.l.b16 %v916
      %v1374 = vunpack.c.l.b16 %v917
      %v1375 = vunpack.c.h.b16 %v917
      %v1376 = vunpack.c.l.b16 %v918
      %v1377 = vunpack.c.h.b16 %v918
      %v1378 = vunpack.c.l.b16 %v919
      %v1379 = vunpack.c.h.b16 %v919
      %v1380 = vunpack.c.l.b16 %v920
      %v1381 = vunpack.c.l.b16 %v921
      %v1382 = vunpack.c.h.b16 %v921
      %v1383 = vunpack.c.l.b16 %v922
      %v1384 = vunpack.c.h.b16 %v922
      %v1385 = vunpack.c.l.b16 %v923
      %v1386 = vunpack.c.h.b16 %v923
      %v1387 = vunpack.c.l.b16 %v924
      %v1388 = vunpack.c.l.b16 %v925
      %v1389 = vunpack.c.h.b16 %v925
      %v1390 = vunpack.c.l.b16 %v926
      %v1391 = vunpack.c.h.b16 %v926
      %v1392 = vunpack.c.l.b16 %v927
      %v1393 = vunpack.c.h.b16 %v927
      %v1394 = vunpack.c.l.b16 %v928
      %v1395 = vunpack.c.l.b16 %v929
      %v1396 = vunpack.c.h.b16 %v929
      %v1397 = vunpack.c.l.b16 %v930
      %v1398 = vunpack.c.h.b16 %v930
      %v1399 = vunpack.c.l.b16 %v931
      %v1400 = vunpack.c.h.b16 %v931
      %v1401 = vunpack.c.l.b16 %v932
      %v1402 = vunpack.c.l.b16 %v933
      %v1403 = vunpack.c.h.b16 %v933
      %v1404 = vunpack.c.l.b16 %v934
      %v1405 = vunpack.c.h.b16 %v934
      %v1406 = vunpack.c.l.b16 %v935
      %v1407 = vunpack.c.h.b16 %v935
      %v1408 = vunpack.c.l.b16 %v936
      %v1409 = vunpack.c.l.b16 %v937
      %v1410 = vunpack.c.h.b16 %v937
      %v1411 = vunpack.c.l.b16 %v938
      %v1412 = vunpack.c.h.b16 %v938
      %v1413 = vunpack.c.l.b16 %v939
      %v1414 = vunpack.c.h.b16 %v939
      %v1415 = vunpack.c.l.b16 %v940
      %v1416 = vunpack.c.l.b16 %v941
      %v1417 = vunpack.c.h.b16 %v941
      %v1418 = vunpack.c.l.b16 %v942
      %v1419 = vunpack.c.h.b16 %v942
      %v1420 = vunpack.c.l.b16 %v943
      %v1421 = vunpack.c.h.b16 %v943
      %v1422 = vunpack.c.l.b16 %v944
      %v1423 = vunpack.c.l.b16 %v945
      %v1424 = vunpack.c.h.b16 %v945
      %v1425 = vunpack.c.l.b16 %v946
      %v1426 = vunpack.c.h.b16 %v946
      %v1427 = vunpack.c.l.b16 %v947
      %v1428 = vunpack.c.h.b16 %v947
      %v1429 = vunpack.c.l.b16 %v948
      %v1430 = vunpack.c.l.b16 %v949
      %v1431 = vunpack.c.h.b16 %v949
      %v1432 = vunpack.c.l.b16 %v950
      %v1433 = vunpack.c.h.b16 %v950
      %v1434 = vunpack.c.l.b16 %v951
      %v1435 = vunpack.c.h.b16 %v951
      %v1436 = vunpack.c.l.b16 %v952
      %v1437 = vunpack.c.l.b16 %v953
      %v1438 = vunpack.c.h.b16 %v953
      %v1439 = vunpack.c.l.b16 %v954
      %v1440 = vunpack.c.h.b16 %v954
      %v1441 = vunpack.c.l.b16 %v955
      %v1442 = vunpack.c.h.b16 %v955
      %v1443 = vunpack.c.l.b16 %v956
      %v1444 = vunpack.c.l.b16 %v957
      %v1445 = vunpack.c.h.b16 %v957
      %v1446 = vunpack.c.l.b16 %v958
      %v1447 = vunpack.c.h.b16 %v958
      %v1448 = vunpack.c.l.b16 %v959
      %v1449 = vunpack.c.h.b16 %v959
      %v1450 = vunpack.c.l.b16 %v960
      %v1451 = vunpack.c.l.b16 %v961
      %v1452 = vunpack.c.h.b16 %v961
      %v1453 = vunpack.c.l.b16 %v962
      %v1454 = vunpack.c.h.b16 %v962
      %v1455 = vunpack.c.l.b16 %v963
      %v1456 = vunpack.c.h.b16 %v963
      %v1457 = vunpack.c.l.b16 %v964
      %v1458 = vunpack.c.l.b16 %v965
      %v1459 = vunpack.c.h.b16 %v965
      %v1460 = vunpack.c.l.b16 %v966
      %v1461 = vunpack.c.h.b16 %v966
      %v1462 = vunpack.c.l.b16 %v967
      %v1463 = vunpack.c.h.b16 %v967
      %v1464 = vunpack.c.l.b16 %v968
      %v1465 = vunpack.c.l.b16 %v969
      %v1466 = vunpack.c.h.b16 %v969
      %v1467 = vunpack.c.l.b16 %v970
      %v1468 = vunpack.c.h.b16 %v970
      %v1469 = vunpack.c.l.b16 %v971
      %v1470 = vunpack.c.h.b16 %v971
      %v1471 = vunpack.c.l.b16 %v972
      %v1472 = vunpack.c.l.b16 %v973
      %v1473 = vunpack.c.h.b16 %v973
      %v1474 = vunpack.c.l.b16 %v974
      %v1475 = vunpack.c.h.b16 %v974
      %v1476 = vunpack.c.l.b16 %v975
      %v1477 = vunpack.c.h.b16 %v975
      %v1478 = vunpack.c.l.b16 %v976
      %v1479 = vunpack.c.l.b16 %v977
      %v1480 = vunpack.c.h.b16 %v977
      %v1481 = vunpack.c.l.b16 %v978
      %v1482 = vunpack.c.h.b16 %v978
      %v1483 = vunpack.c.l.b16 %v979
      %v1484 = vunpack.c.h.b16 %v979
      %v1485 = vunpack.c.l.b16 %v980
      %v1486 = vunpack.c.l.b16 %v981
      %v1487 = vunpack.c.h.b16 %v981
      %v1488 = vunpack.c.l.b16 %v982
      %v1489 = vunpack.c.h.b16 %v982
      %v1490 = vunpack.c.l.b16 %v983
      %v1491 = vunpack.c.h.b16 %v983
      %v1492 = vunpack.c.l.b16 %v984
      %v1493 = vpack.c.b16 %v1270, %v1261
      %v1494 = vpack.c.b16 %v1271, %v1262
      %v1495 = vpack.c.b16 %v1272, %v1263
      %v1496 = vpack.c.b16 %v1273, %v1264
      %v1497 = vpack.c.b16 %v1274, %v1265
      %v1498 = vpack.c.b16 %v1275, %v1266
      %v1499 = vpack.c.b16 %v1276, %v1267
      %v1500 = vpack.c.b16 %v1277, %v1268
      %v1501 = vpack.c.b16 %v1278, %v1269
      %v1502 = vpack.c.b16 %v1288, %v1279
      %v1503 = vpack.c.b16 %v1289, %v1280
      %v1504 = vpack.c.b16 %v1290, %v1281
      %v1505 = vpack.c.b16 %v1291, %v1282
      %v1506 = vpack.c.b16 %v1292, %v1283
      %v1507 = vpack.c.b16 %v1293, %v1284
      %v1508 = vpack.c.b16 %v1294, %v1285
      %v1509 = vpack.c.b16 %v1295, %v1286
      %v1510 = vpack.c.b16 %v1296, %v1287
      %v1511 = vpack.c.b16 %v1304, %v1297
      %v1512 = vpack.c.b16 %v1305, %v1298
      %v1513 = vpack.c.b16 %v1306, %v1299
      %v1514 = vpack.c.b16 %v1307, %v1300
      %v1515 = vpack.c.b16 %v1308, %v1301
      %v1516 = vpack.c.b16 %v1309, %v1302
      %v1517 = vpack.c.b16 %v1310, %v1303
      %v1518 = vpack.c.b16 %v1318, %v1311
      %v1519 = vpack.c.b16 %v1319, %v1312
      %v1520 = vpack.c.b16 %v1320, %v1313
      %v1521 = vpack.c.b16 %v1321, %v1314
      %v1522 = vpack.c.b16 %v1322, %v1315
      %v1523 = vpack.c.b16 %v1323, %v1316
      %v1524 = vpack.c.b16 %v1324, %v1317
      %v1525 = vpack.c.b16 %v1332, %v1325
      %v1526 = vpack.c.b16 %v1333, %v1326
      %v1527 = vpack.c.b16 %v1334, %v1327
      %v1528 = vpack.c.b16 %v1335, %v1328
      %v1529 = vpack.c.b16 %v1336, %v1329
      %v1530 = vpack.c.b16 %v1337, %v1330
      %v1531 = vpack.c.b16 %v1338, %v1331
      %v1532 = vpack.c.b16 %v1346, %v1339
      %v1533 = vpack.c.b16 %v1347, %v1340
      %v1534 = vpack.c.b16 %v1348, %v1341
      %v1535 = vpack.c.b16 %v1349, %v1342
      %v1536 = vpack.c.b16 %v1350, %v1343
      %v1537 = vpack.c.b16 %v1351, %v1344
      %v1538 = vpack.c.b16 %v1352, %v1345
      %v1539 = vpack.c.b16 %v1360, %v1353
      %v1540 = vpack.c.b16 %v1361, %v1354
      %v1541 = vpack.c.b16 %v1362, %v1355
      %v1542 = vpack.c.b16 %v1363, %v1356
      %v1543 = vpack.c.b16 %v1364, %v1357
      %v1544 = vpack.c.b16 %v1365, %v1358
      %v1545 = vpack.c.b16 %v1366, %v1359
      %v1546 = vpack.c.b16 %v1374, %v1367
      %v1547 = vpack.c.b16 %v1375, %v1368
      %v1548 = vpack.c.b16 %v1376, %v1369
      %v1549 = vpack.c.b16 %v1377, %v1370
      %v1550 = vpack.c.b16 %v1378, %v1371
      %v1551 = vpack.c.b16 %v1379, %v1372
      %v1552 = vpack.c.b16 %v1380, %v1373
      %v1553 = vpack.c.b16 %v1388, %v1381
      %v1554 = vpack.c.b16 %v1389, %v1382
      %v1555 = vpack.c.b16 %v1390, %v1383
      %v1556 = vpack.c.b16 %v1391, %v1384
      %v1557 = vpack.c.b16 %v1392, %v1385
      %v1558 = vpack.c.b16 %v1393, %v1386
      %v1559 = vpack.c.b16 %v1394, %v1387
      %v1560 = vpack.c.b16 %v1402, %v1395
      %v1561 = vpack.c.b16 %v1403, %v1396
      %v1562 = vpack.c.b16 %v1404, %v1397
      %v1563 = vpack.c.b16 %v1405, %v1398
      %v1564 = vpack.c.b16 %v1406, %v1399
      %v1565 = vpack.c.b16 %v1407, %v1400
      %v1566 = vpack.c.b16 %v1408, %v1401
      %v1567 = vpack.c.b16 %v1416, %v1409
      %v1568 = vpack.c.b16 %v1417, %v1410
      %v1569 = vpack.c.b16 %v1418, %v1411
      %v1570 = vpack.c.b16 %v1419, %v1412
      %v1571 = vpack.c.b16 %v1420, %v1413
      %v1572 = vpack.c.b16 %v1421, %v1414
      %v1573 = vpack.c.b16 %v1422, %v1415
      %v1574 = vpack.c.b16 %v1430, %v1423
      %v1575 = vpack.c.b16 %v1431, %v1424
      %v1576 = vpack.c.b16 %v1432, %v1425
      %v1577 = vpack.c.b16 %v1433, %v1426
      %v1578 = vpack.c.b16 %v1434, %v1427
      %v1579 = vpack.c.b16 %v1435, %v1428
      %v1580 = vpack.c.b16 %v1436, %v1429
      %v1581 = vpack.c.b16 %v1444, %v1437
      %v1582 = vpack.c.b16 %v1445, %v1438
      %v1583 = vpack.c.b16 %v1446, %v1439
      %v1584 = vpack.c.b16 %v1447, %v1440
      %v1585 = vpack.c.b16 %v1448, %v1441
      %v1586 = vpack.c.b16 %v1449, %v1442
      %v1587 = vpack.c.b16 %v1450, %v1443
      %v1588 = vpack.c.b16 %v1458, %v1451
      %v1589 = vpack.c.b16 %v1459, %v1452
      %v1590 = vpack.c.b16 %v1460, %v1453
      %v1591 = vpack.c.b16 %v1461, %v1454
      %v1592 = vpack.c.b16 %v1462, %v1455
      %v1593 = vpack.c.b16 %v1463, %v1456
      %v1594 = vpack.c.b16 %v1464, %v1457
      %v1595 = vpack.c.b16 %v1472, %v1465
      %v1596 = vpack.c.b16 %v1473, %v1466
      %v1597 = vpack.c.b16 %v1474, %v1467
      %v1598 = vpack.c.b16 %v1475, %v1468
      %v1599 = vpack.c.b16 %v1476, %v1469
      %v1600 = vpack.c.b16 %v1477, %v1470
      %v1601 = vpack.c.b16 %v1478, %v1471
      %v1602 = vpack.c.b16 %v1486, %v1479
      %v1603 = vpack.c.b16 %v1487, %v1480
      %v1604 = vpack.c.b16 %v1488, %v1481
      %v1605 = vpack.c.b16 %v1489, %v1482
      %v1606 = vpack.c.b16 %v1490, %v1483
      %v1607 = vpack.c.b16 %v1491, %v1484
      %v1608 = vpack.c.b16 %v1492, %v1485
      %v1869 = vunpack.c.l.b16 %v985
      %v1870 = vunpack.c.l.b16 %v986
      %v1871 = vunpack.c.l.b16 %v987
      %v1872 = vunpack.c.l.b16 %v988
      %v1873 = vunpack.c.l.b16 %v989
      %v1874 = vunpack.c.l.b16 %v990
      %v1875 = vunpack.c.l.b16 %v991
      %v1876 = vunpack.c.l.b16 %v992
      %v1877 = vunpack.c.l.b16 %v993
      %v1878 = vunpack.c.l.b16 %v994
      %v1879 = vunpack.c.l.b16 %v995
      %v1880 = vunpack.c.l.b16 %v996
      %v1881 = vunpack.c.l.b16 %v997
      %v1882 = vunpack.c.l.b16 %v998
      %v1883 = vunpack.c.l.b16 %v999
      %v1884 = vunpack.c.l.b16 %v1000
      %v1885 = vunpack.c.l.b16 %v1001
      %v1886 = vunpack.c.l.b16 %v1002
      %v1887 = vunpack.c.l.b16 %v1003
      %v1888 = vunpack.c.l.b16 %v1004
      %v1889 = vunpack.c.l.b16 %v1005
      %v1890 = vunpack.c.l.b16 %v1006
      %v1891 = vunpack.c.l.b16 %v1007
      %v1892 = vunpack.c.l.b16 %v1008
      %v1893 = vunpack.c.l.b16 %v1009
      %v1894 = vunpack.c.l.b16 %v1010
      %v1895 = vunpack.c.l.b16 %v1011
      %v1896 = vunpack.c.l.b16 %v1012
      %v1897 = vunpack.c.l.b16 %v1013
      %v1898 = vunpack.c.l.b16 %v1014
      %v1899 = vunpack.c.l.b16 %v1015
      %v1900 = vunpack.c.l.b16 %v1016
      %v1901 = vunpack.c.l.b16 %v1017
      %v1902 = vunpack.c.l.b16 %v1018
      %v1903 = vunpack.c.l.b16 %v1019
      %v1904 = vunpack.c.l.b16 %v1020
      %v1905 = vunpack.c.l.b16 %v1021
      %v1906 = vunpack.c.l.b16 %v1022
      %v1907 = vunpack.c.l.b16 %v1023
      %v1908 = vunpack.c.l.b16 %v1024
      %v1909 = vunpack.c.l.b16 %v1025
      %v1910 = vunpack.c.l.b16 %v1026
      %v1911 = vunpack.c.l.b16 %v1027
      %v1912 = vunpack.c.l.b16 %v1028
      %v1913 = vunpack.c.l.b16 %v1029
      %v1914 = vunpack.c.l.b16 %v1030
      %v1915 = vunpack.c.l.b16 %v1031
      %v1916 = vunpack.c.l.b16 %v1032
      %v1917 = vunpack.c.l.b16 %v1033
      %v1918 = vunpack.c.l.b16 %v1034
      %v1919 = vunpack.c.l.b16 %v1035
      %v1920 = vunpack.c.l.b16 %v1036
      %v1921 = vunpack.c.l.b16 %v1037
      %v1922 = vunpack.c.l.b16 %v1038
      %v1923 = vunpack.c.l.b16 %v1039
      %v1924 = vunpack.c.l.b16 %v1040
      %v1925 = vunpack.c.l.b16 %v1041
      %v1926 = vunpack.c.l.b16 %v1042
      %v1927 = vunpack.c.l.b16 %v1043
      %v1928 = vunpack.c.l.b16 %v1044
      %v1929 = vunpack.c.l.b16 %v1045
      %v1930 = vunpack.c.l.b16 %v1046
      %v1931 = vunpack.c.l.b16 %v1047
      %v1932 = vunpack.c.l.b16 %v1048
      %v1933 = vunpack.c.l.b16 %v1049
      %v1934 = vunpack.c.l.b16 %v1050
      %v1935 = vunpack.c.l.b16 %v1051
      %v1936 = vunpack.c.l.b16 %v1052
      %v1937 = vunpack.c.l.b16 %v1053
      %v1938 = vunpack.c.l.b16 %v1054
      %v1939 = vunpack.c.l.b16 %v1055
      %v1940 = vunpack.c.l.b16 %v1056
      %v1941 = vunpack.c.l.b16 %v1057
      %v1942 = vunpack.c.l.b16 %v1058
      %v1943 = vunpack.c.l.b16 %v1059
      %v1944 = vunpack.c.l.b16 %v1060
      %v1945 = vunpack.c.l.b16 %v1061
      %v1946 = vunpack.c.l.b16 %v1062
      %v1947 = vunpack.c.l.b16 %v1063
      %v1948 = vunpack.c.l.b16 %v1064
      %v1949 = vunpack.c.l.b16 %v1065
      %v1950 = vunpack.c.l.b16 %v1066
      %v1951 = vunpack.c.l.b16 %v1067
      %v1952 = vunpack.c.l.b16 %v1068
      %v1953 = vunpack.c.l.b16 %v1069
      %v1954 = vunpack.c.l.b16 %v1070
      %v1955 = vunpack.c.l.b16 %v1071
      %v1956 = vunpack.c.l.b16 %v1072
      %v1957 = vunpack.c.l.b16 %v1073
      %v1958 = vunpack.c.l.b16 %v1074
      %v1959 = vunpack.c.l.b16 %v1075
      %v1960 = vunpack.c.l.b16 %v1076
      %v1961 = vunpack.c.l.b16 %v1077
      %v1962 = vunpack.c.l.b16 %v1078
      %v1963 = vunpack.c.l.b16 %v1079
      %v1964 = vunpack.c.l.b16 %v1080
      %v1965 = vunpack.c.l.b16 %v1081
      %v1966 = vunpack.c.l.b16 %v1082
      %v1967 = vunpack.c.l.b16 %v1083
      %v1968 = vunpack.c.l.b16 %v1084
      %v1969 = vunpack.c.l.b16 %v1085
      %v1970 = vunpack.c.l.b16 %v1086
      %v1971 = vunpack.c.l.b16 %v1087
      %v1972 = vunpack.c.l.b16 %v1088
      %v1973 = vunpack.c.l.b16 %v1089
      %v1974 = vunpack.c.l.b16 %v1090
      %v1975 = vunpack.c.l.b16 %v1091
      %v1976 = vunpack.c.l.b16 %v1092
      %v1977 = vunpack.c.l.b16 %v1093
      %v1978 = vunpack.c.l.b16 %v1094
      %v1979 = vunpack.c.l.b16 %v1095
      %v1980 = vunpack.c.l.b16 %v1096
      %v1981 = vunpack.c.l.b16 %v1097
      %v1982 = vunpack.c.l.b16 %v1098
      %v1983 = vunpack.c.l.b16 %v1099
      %v1984 = vunpack.c.l.b16 %v1100
      %v1985 = vunpack.c.l.b16 %v1101
      %v1986 = vunpack.c.l.b16 %v1102
      %v1987 = vunpack.c.l.b16 %v1103
      %v1988 = vunpack.c.l.b16 %v1104
      %v1989 = vunpack.c.l.b16 %v1105
      %v1990 = vunpack.c.l.b16 %v1106
      %v1991 = vunpack.c.l.b16 %v1107
      %v1992 = vunpack.c.l.b16 %v1108
      %v1993 = vunpack.c.l.b16 %v1109
      %v1994 = vunpack.c.l.b16 %v1110
      %v1995 = vunpack.c.l.b16 %v1111
      %v1996 = vunpack.c.l.b16 %v1112
      %v1997 = vunpack.c.l.b16 %v1113
      %v1998 = vunpack.c.l.b16 %v1114
      %v1999 = vunpack.c.l.b16 %v1115
      %v2000 = vunpack.c.l.b16 %v1116
      %v2001 = vunpack.c.l.b16 %v1117
      %v2002 = vunpack.c.l.b16 %v1118
      %v2003 = vunpack.c.l.b16 %v1119
      %v2004 = vunpack.c.l.b16 %v1120
      %v2005 = vunpack.c.l.b16 %v1121
      %v2006 = vunpack.c.l.b16 %v1122
      %v2007 = vunpack.c.l.b16 %v1123
      %v2008 = vunpack.c.l.b16 %v1124
      %v2009 = vunpack.c.l.b16 %v1125
      %v2010 = vunpack.c.l.b16 %v1126
      %v2011 = vunpack.c.l.b16 %v1127
      %v2012 = vunpack.c.l.b16 %v1128
      %v2013 = vpack.c.b16 %v1870, %v1869
      %v2014 = vpack.c.b16 %v1872, %v1871
      %v2015 = vpack.c.b16 %v1874, %v1873
      %v2016 = vpack.c.b16 %v1876, %v1875
      %v2017 = vpack.c.b16 %v1878, %v1877
      %v2018 = vpack.c.b16 %v1880, %v1879
      %v2019 = vpack.c.b16 %v1882, %v1881
      %v2020 = vpack.c.b16 %v1884, %v1883
      %v2021 = vpack.c.b16 %v1886, %v1885
      %v2022 = vpack.c.b16 %v1888, %v1887
      %v2023 = vpack.c.b16 %v1890, %v1889
      %v2024 = vpack.c.b16 %v1892, %v1891
      %v2025 = vpack.c.b16 %v1894, %v1893
      %v2026 = vpack.c.b16 %v1896, %v1895
      %v2027 = vpack.c.b16 %v1898, %v1897
      %v2028 = vpack.c.b16 %v1900, %v1899
      %v2029 = vpack.c.b16 %v1902, %v1901
      %v2030 = vpack.c.b16 %v1904, %v1903
      %v2031 = vpack.c.b16 %v1906, %v1905
      %v2032 = vpack.c.b16 %v1908, %v1907
      %v2033 = vpack.c.b16 %v1910, %v1909
      %v2034 = vpack.c.b16 %v1912, %v1911
      %v2035 = vpack.c.b16 %v1914, %v1913
      %v2036 = vpack.c.b16 %v1916, %v1915
      %v2037 = vpack.c.b16 %v1918, %v1917
      %v2038 = vpack.c.b16 %v1920, %v1919
      %v2039 = vpack.c.b16 %v1922, %v1921
      %v2040 = vpack.c.b16 %v1924, %v1923
      %v2041 = vpack.c.b16 %v1926, %v1925
      %v2042 = vpack.c.b16 %v1928, %v1927
      %v2043 = vpack.c.b16 %v1930, %v1929
      %v2044 = vpack.c.b16 %v1932, %v1931
      %v2045 = vpack.c.b16 %v1934, %v1933
      %v2046 = vpack.c.b16 %v1936, %v1935
      %v2047 = vpack.c.b16 %v1938, %v1937
      %v2048 = vpack.c.b16 %v1940, %v1939
      %v2049 = vpack.c.b16 %v1942, %v1941
      %v2050 = vpack.c.b16 %v1944, %v1943
      %v2051 = vpack.c.b16 %v1946, %v1945
      %v2052 = vpack.c.b16 %v1948, %v1947
      %v2053 = vpack.c.b16 %v1950, %v1949
      %v2054 = vpack.c.b16 %v1952, %v1951
      %v2055 = vpack.c.b16 %v1954, %v1953
      %v2056 = vpack.c.b16 %v1956, %v1955
      %v2057 = vpack.c.b16 %v1958, %v1957
      %v2058 = vpack.c.b16 %v1960, %v1959
      %v2059 = vpack.c.b16 %v1962, %v1961
      %v2060 = vpack.c.b16 %v1964, %v1963
      %v2061 = vpack.c.b16 %v1966, %v1965
      %v2062 = vpack.c.b16 %v1968, %v1967
      %v2063 = vpack.c.b16 %v1970, %v1969
      %v2064 = vpack.c.b16 %v1972, %v1971
      %v2065 = vpack.c.b16 %v1974, %v1973
      %v2066 = vpack.c.b16 %v1976, %v1975
      %v2067 = vpack.c.b16 %v1978, %v1977
      %v2068 = vpack.c.b16 %v1980, %v1979
      %v2069 = vpack.c.b16 %v1982, %v1981
      %v2070 = vpack.c.b16 %v1984, %v1983
      %v2071 = vpack.c.b16 %v1986, %v1985
      %v2072 = vpack.c.b16 %v1988, %v1987
      %v2073 = vpack.c.b16 %v1990, %v1989
      %v2074 = vpack.c.b16 %v1992, %v1991
      %v2075 = vpack.c.b16 %v1994, %v1993
      %v2076 = vpack.c.b16 %v1996, %v1995
      %v2077 = vpack.c.b16 %v1998, %v1997
      %v2078 = vpack.c.b16 %v2000, %v1999
      %v2079 = vpack.c.b16 %v2002, %v2001
      %v2080 = vpack.c.b16 %v2004, %v2003
      %v2081 = vpack.c.b16 %v2006, %v2005
      %v2082 = vpack.c.b16 %v2008, %v2007
      %v2083 = vpack.c.b16 %v2010, %v2009
      %v2084 = vpack.c.b16 %v2012, %v2011
      %2157 = vmatpush.bf16.msra.mxu0 %v2020
      %2158 = vmatpush.bf16.msra.mxu0 %v2019
      %2159 = vmatpush.bf16.msra.mxu0 %v2018
      %2160 = vmatpush.bf16.msra.mxu0 %v2017
      %2161 = vmatpush.bf16.msra.mxu0 %v2016
      %2162 = vmatpush.bf16.msra.mxu0 %v2015
      %2163 = vmatpush.bf16.msra.mxu0 %v2014
      %2164 = vmatpush.bf16.msra.mxu0 %v2013
      %2165 = vmatmul.bf16.gmra.mxu0 %v1493
      %v2166 = vpop.f32.mrf.mxu0
      %v2167 = vadd.f32 0.0, %v2166
      %v2168 = vpop.f32.mrf.mxu0
      %v2169 = vadd.f32 0.0, %v2168
      %2170 = vmatmul.bf16.gmra.mxu0 %v1502
      %v2171 = vpop.f32.mrf.mxu0
      %v2172 = vadd.f32 0.0, %v2171
      %v2173 = vpop.f32.mrf.mxu0
      %v2174 = vadd.f32 0.0, %v2173
      %2175 = vmatmul.bf16.gmra.mxu0 %v1499
      %v2176 = vpop.f32.mrf.mxu0
      %v2177 = vadd.f32 0.0, %v2176
      %v2178 = vpop.f32.mrf.mxu0
      %v2179 = vadd.f32 0.0, %v2178
      %2180 = vmatmul.bf16.gmra.mxu0 %v1508
      %v2181 = vpop.f32.mrf.mxu0
      %v2182 = vadd.f32 0.0, %v2181
      %v2183 = vpop.f32.mrf.mxu0
      %v2184 = vadd.f32 0.0, %v2183
      %2185 = vmatmul.bf16.gmra.mxu0 %v1515
      %v2186 = vpop.f32.mrf.mxu0
      %v2187 = vadd.f32 0.0, %v2186
      %v2188 = vpop.f32.mrf.mxu0
      %v2189 = vadd.f32 0.0, %v2188
      %2190 = vmatmul.bf16.gmra.mxu0 %v1522
      %v2191 = vpop.f32.mrf.mxu0
      %v2192 = vadd.f32 0.0, %v2191
      %v2193 = vpop.f32.mrf.mxu0
      %v2194 = vadd.f32 0.0, %v2193
      %2195 = vmatmul.bf16.gmra.mxu0 %v1529
      %v2196 = vpop.f32.mrf.mxu0
      %v2197 = vadd.f32 0.0, %v2196
      %v2198 = vpop.f32.mrf.mxu0
      %v2199 = vadd.f32 0.0, %v2198
      %2200 = vmatmul.bf16.gmra.mxu0 %v1536
      %v2201 = vpop.f32.mrf.mxu0
      %v2202 = vadd.f32 0.0, %v2201
      %v2203 = vpop.f32.mrf.mxu0
      %v2204 = vadd.f32 0.0, %v2203
      %2205 = vmatmul.bf16.gmra.mxu0 %v1543
      %v2206 = vpop.f32.mrf.mxu0
      %v2207 = vadd.f32 0.0, %v2206
      %v2208 = vpop.f32.mrf.mxu0
      %v2209 = vadd.f32 0.0, %v2208
      %2210 = vmatmul.bf16.gmra.mxu0 %v1550
      %v2211 = vpop.f32.mrf.mxu0
      %v2212 = vadd.f32 0.0, %v2211
      %v2213 = vpop.f32.mrf.mxu0
      %v2214 = vadd.f32 0.0, %v2213
      %2215 = vmatmul.bf16.gmra.mxu0 %v1557
      %v2216 = vpop.f32.mrf.mxu0
      %v2217 = vadd.f32 0.0, %v2216
      %v2218 = vpop.f32.mrf.mxu0
      %v2219 = vadd.f32 0.0, %v2218
      %2220 = vmatmul.bf16.gmra.mxu0 %v1564
      %v2221 = vpop.f32.mrf.mxu0
      %v2222 = vadd.f32 0.0, %v2221
      %v2223 = vpop.f32.mrf.mxu0
      %v2224 = vadd.f32 0.0, %v2223
      %2225 = vmatmul.bf16.gmra.mxu0 %v1571
      %v2226 = vpop.f32.mrf.mxu0
      %v2227 = vadd.f32 0.0, %v2226
      %v2228 = vpop.f32.mrf.mxu0
      %v2229 = vadd.f32 0.0, %v2228
      %2230 = vmatmul.bf16.gmra.mxu0 %v1578
      %v2231 = vpop.f32.mrf.mxu0
      %v2232 = vadd.f32 0.0, %v2231
      %v2233 = vpop.f32.mrf.mxu0
      %v2234 = vadd.f32 0.0, %v2233
      %2235 = vmatmul.bf16.gmra.mxu0 %v1585
      %v2236 = vpop.f32.mrf.mxu0
      %v2237 = vadd.f32 0.0, %v2236
      %v2238 = vpop.f32.mrf.mxu0
      %v2239 = vadd.f32 0.0, %v2238
      %2240 = vmatmul.bf16.gmra.mxu0 %v1592
      %v2241 = vpop.f32.mrf.mxu0
      %v2242 = vadd.f32 0.0, %v2241
      %v2243 = vpop.f32.mrf.mxu0
      %v2244 = vadd.f32 0.0, %v2243
      %2245 = vdwg.mxu0
      %2246 = vmatpush.bf16.msra.mxu0 %v2028
      %2247 = vmatpush.bf16.msra.mxu0 %v2027
      %2248 = vmatpush.bf16.msra.mxu0 %v2026
      %2249 = vmatpush.bf16.msra.mxu0 %v2025
      %2250 = vmatpush.bf16.msra.mxu0 %v2024
      %2251 = vmatpush.bf16.msra.mxu0 %v2023
      %2252 = vmatpush.bf16.msra.mxu0 %v2022
      %2253 = vmatpush.bf16.msra.mxu0 %v2021
      %2254 = vmatmul.bf16.gmra.mxu0 %v1494
      %v2255 = vpop.f32.mrf.mxu0
      %v2256 = vadd.f32 %v2167, %v2255
      %v2257 = vpop.f32.mrf.mxu0
      %v2258 = vadd.f32 %v2169, %v2257
      %2259 = vmatmul.bf16.gmra.mxu0 %v1503
      %v2260 = vpop.f32.mrf.mxu0
      %v2261 = vadd.f32 %v2172, %v2260
      %v2262 = vpop.f32.mrf.mxu0
      %v2263 = vadd.f32 %v2174, %v2262
      %2264 = vmatmul.bf16.gmra.mxu0 %v1500
      %v2265 = vpop.f32.mrf.mxu0
      %v2266 = vadd.f32 %v2177, %v2265
      %v2267 = vpop.f32.mrf.mxu0
      %v2268 = vadd.f32 %v2179, %v2267
      %2269 = vmatmul.bf16.gmra.mxu0 %v1509
      %v2270 = vpop.f32.mrf.mxu0
      %v2271 = vadd.f32 %v2182, %v2270
      %v2272 = vpop.f32.mrf.mxu0
      %v2273 = vadd.f32 %v2184, %v2272
      %2274 = vmatmul.bf16.gmra.mxu0 %v1516
      %v2275 = vpop.f32.mrf.mxu0
      %v2276 = vadd.f32 %v2187, %v2275
      %v2277 = vpop.f32.mrf.mxu0
      %v2278 = vadd.f32 %v2189, %v2277
      %2279 = vmatmul.bf16.gmra.mxu0 %v1523
      %v2280 = vpop.f32.mrf.mxu0
      %v2281 = vadd.f32 %v2192, %v2280
      %v2282 = vpop.f32.mrf.mxu0
      %v2283 = vadd.f32 %v2194, %v2282
      %2284 = vmatmul.bf16.gmra.mxu0 %v1530
      %v2285 = vpop.f32.mrf.mxu0
      %v2286 = vadd.f32 %v2197, %v2285
      %v2287 = vpop.f32.mrf.mxu0
      %v2288 = vadd.f32 %v2199, %v2287
      %2289 = vmatmul.bf16.gmra.mxu0 %v1537
      %v2290 = vpop.f32.mrf.mxu0
      %v2291 = vadd.f32 %v2202, %v2290
      %v2292 = vpop.f32.mrf.mxu0
      %v2293 = vadd.f32 %v2204, %v2292
      %2294 = vmatmul.bf16.gmra.mxu0 %v1544
      %v2295 = vpop.f32.mrf.mxu0
      %v2296 = vadd.f32 %v2207, %v2295
      %v2297 = vpop.f32.mrf.mxu0
      %v2298 = vadd.f32 %v2209, %v2297
      %2299 = vmatmul.bf16.gmra.mxu0 %v1551
      %v2300 = vpop.f32.mrf.mxu0
      %v2301 = vadd.f32 %v2212, %v2300
      %v2302 = vpop.f32.mrf.mxu0
      %v2303 = vadd.f32 %v2214, %v2302
      %2304 = vmatmul.bf16.gmra.mxu0 %v1558
      %v2305 = vpop.f32.mrf.mxu0
      %v2306 = vadd.f32 %v2217, %v2305
      %v2307 = vpop.f32.mrf.mxu0
      %v2308 = vadd.f32 %v2219, %v2307
      %2309 = vmatmul.bf16.gmra.mxu0 %v1565
      %v2310 = vpop.f32.mrf.mxu0
      %v2311 = vadd.f32 %v2222, %v2310
      %v2312 = vpop.f32.mrf.mxu0
      %v2313 = vadd.f32 %v2224, %v2312
      %2314 = vmatmul.bf16.gmra.mxu0 %v1572
      %v2315 = vpop.f32.mrf.mxu0
      %v2316 = vadd.f32 %v2227, %v2315
      %v2317 = vpop.f32.mrf.mxu0
      %v2318 = vadd.f32 %v2229, %v2317
      %2319 = vmatmul.bf16.gmra.mxu0 %v1579
      %v2320 = vpop.f32.mrf.mxu0
      %v2321 = vadd.f32 %v2232, %v2320
      %v2322 = vpop.f32.mrf.mxu0
      %v2323 = vadd.f32 %v2234, %v2322
      %2324 = vmatmul.bf16.gmra.mxu0 %v1586
      %v2325 = vpop.f32.mrf.mxu0
      %v2326 = vadd.f32 %v2237, %v2325
      %v2327 = vpop.f32.mrf.mxu0
      %v2328 = vadd.f32 %v2239, %v2327
      %2329 = vmatmul.bf16.gmra.mxu0 %v1593
      %v2330 = vpop.f32.mrf.mxu0
      %v2331 = vadd.f32 %v2242, %v2330
      %v2332 = vpop.f32.mrf.mxu0
      %v2333 = vadd.f32 %v2244, %v2332
      %2334 = vdwg.mxu0
      %2335 = vmatpush.bf16.msra.mxu0 %v2036
      %2336 = vmatpush.bf16.msra.mxu0 %v2035
      %2337 = vmatpush.bf16.msra.mxu0 %v2034
      %2338 = vmatpush.bf16.msra.mxu0 %v2033
      %2339 = vmatpush.bf16.msra.mxu0 %v2032
      %2340 = vmatpush.bf16.msra.mxu0 %v2031
      %2341 = vmatpush.bf16.msra.mxu0 %v2030
      %2342 = vmatpush.bf16.msra.mxu0 %v2029
      %2343 = vmatmul.bf16.gmra.mxu0 %v1495
      %v2344 = vpop.f32.mrf.mxu0
      %v2345 = vadd.f32 %v2256, %v2344
      %v2346 = vpop.f32.mrf.mxu0
      %v2347 = vadd.f32 %v2258, %v2346
      %2348 = vmatmul.bf16.gmra.mxu0 %v1504
      %v2349 = vpop.f32.mrf.mxu0
      %v2350 = vadd.f32 %v2261, %v2349
      %v2351 = vpop.f32.mrf.mxu0
      %v2352 = vadd.f32 %v2263, %v2351
      %2353 = vmatmul.bf16.gmra.mxu0 %v1511
      %v2354 = vpop.f32.mrf.mxu0
      %v2355 = vadd.f32 %v2266, %v2354
      %v2356 = vpop.f32.mrf.mxu0
      %v2357 = vadd.f32 %v2268, %v2356
      %2358 = vmatmul.bf16.gmra.mxu0 %v1518
      %v2359 = vpop.f32.mrf.mxu0
      %v2360 = vadd.f32 %v2271, %v2359
      %v2361 = vpop.f32.mrf.mxu0
      %v2362 = vadd.f32 %v2273, %v2361
      %2363 = vmatmul.bf16.gmra.mxu0 %v1525
      %v2364 = vpop.f32.mrf.mxu0
      %v2365 = vadd.f32 %v2276, %v2364
      %v2366 = vpop.f32.mrf.mxu0
      %v2367 = vadd.f32 %v2278, %v2366
      %2368 = vmatmul.bf16.gmra.mxu0 %v1532
      %v2369 = vpop.f32.mrf.mxu0
      %v2370 = vadd.f32 %v2281, %v2369
      %v2371 = vpop.f32.mrf.mxu0
      %v2372 = vadd.f32 %v2283, %v2371
      %2373 = vmatmul.bf16.gmra.mxu0 %v1539
      %v2374 = vpop.f32.mrf.mxu0
      %v2375 = vadd.f32 %v2286, %v2374
      %v2376 = vpop.f32.mrf.mxu0
      %v2377 = vadd.f32 %v2288, %v2376
      %2378 = vmatmul.bf16.gmra.mxu0 %v1546
      %v2379 = vpop.f32.mrf.mxu0
      %v2380 = vadd.f32 %v2291, %v2379
      %v2381 = vpop.f32.mrf.mxu0
      %v2382 = vadd.f32 %v2293, %v2381
      %2383 = vmatmul.bf16.gmra.mxu0 %v1553
      %v2384 = vpop.f32.mrf.mxu0
      %v2385 = vadd.f32 %v2296, %v2384
      %v2386 = vpop.f32.mrf.mxu0
      %v2387 = vadd.f32 %v2298, %v2386
      %2388 = vmatmul.bf16.gmra.mxu0 %v1560
      %v2389 = vpop.f32.mrf.mxu0
      %v2390 = vadd.f32 %v2301, %v2389
      %v2391 = vpop.f32.mrf.mxu0
      %v2392 = vadd.f32 %v2303, %v2391
      %2393 = vmatmul.bf16.gmra.mxu0 %v1567
      %v2394 = vpop.f32.mrf.mxu0
      %v2395 = vadd.f32 %v2306, %v2394
      %v2396 = vpop.f32.mrf.mxu0
      %v2397 = vadd.f32 %v2308, %v2396
      %2398 = vmatmul.bf16.gmra.mxu0 %v1574
      %v2399 = vpop.f32.mrf.mxu0
      %v2400 = vadd.f32 %v2311, %v2399
      %v2401 = vpop.f32.mrf.mxu0
      %v2402 = vadd.f32 %v2313, %v2401
      %2403 = vmatmul.bf16.gmra.mxu0 %v1581
      %v2404 = vpop.f32.mrf.mxu0
      %v2405 = vadd.f32 %v2316, %v2404
      %v2406 = vpop.f32.mrf.mxu0
      %v2407 = vadd.f32 %v2318, %v2406
      %2408 = vmatmul.bf16.gmra.mxu0 %v1588
      %v2409 = vpop.f32.mrf.mxu0
      %v2410 = vadd.f32 %v2321, %v2409
      %v2411 = vpop.f32.mrf.mxu0
      %v2412 = vadd.f32 %v2323, %v2411
      %2413 = vmatmul.bf16.gmra.mxu0 %v1595
      %v2414 = vpop.f32.mrf.mxu0
      %v2415 = vadd.f32 %v2326, %v2414
      %v2416 = vpop.f32.mrf.mxu0
      %v2417 = vadd.f32 %v2328, %v2416
      %2418 = vmatmul.bf16.gmra.mxu0 %v1602
      %v2419 = vpop.f32.mrf.mxu0
      %v2420 = vadd.f32 %v2331, %v2419
      %v2421 = vpop.f32.mrf.mxu0
      %v2422 = vadd.f32 %v2333, %v2421
      %2423 = vdwg.mxu0
      %2424 = vmatpush.bf16.msra.mxu0 %v2044
      %2425 = vmatpush.bf16.msra.mxu0 %v2043
      %2426 = vmatpush.bf16.msra.mxu0 %v2042
      %2427 = vmatpush.bf16.msra.mxu0 %v2041
      %2428 = vmatpush.bf16.msra.mxu0 %v2040
      %2429 = vmatpush.bf16.msra.mxu0 %v2039
      %2430 = vmatpush.bf16.msra.mxu0 %v2038
      %2431 = vmatpush.bf16.msra.mxu0 %v2037
      %2432 = vmatmul.bf16.gmra.mxu0 %v1496
      %v2433 = vpop.f32.mrf.mxu0
      %v2434 = vadd.f32 %v2345, %v2433
      %v2435 = vpop.f32.mrf.mxu0
      %v2436 = vadd.f32 %v2347, %v2435
      %2437 = vmatmul.bf16.gmra.mxu0 %v1505
      %v2438 = vpop.f32.mrf.mxu0
      %v2439 = vadd.f32 %v2350, %v2438
      %v2440 = vpop.f32.mrf.mxu0
      %v2441 = vadd.f32 %v2352, %v2440
      %2442 = vmatmul.bf16.gmra.mxu0 %v1512
      %v2443 = vpop.f32.mrf.mxu0
      %v2444 = vadd.f32 %v2355, %v2443
      %v2445 = vpop.f32.mrf.mxu0
      %v2446 = vadd.f32 %v2357, %v2445
      %2447 = vmatmul.bf16.gmra.mxu0 %v1519
      %v2448 = vpop.f32.mrf.mxu0
      %v2449 = vadd.f32 %v2360, %v2448
      %v2450 = vpop.f32.mrf.mxu0
      %v2451 = vadd.f32 %v2362, %v2450
      %2452 = vmatmul.bf16.gmra.mxu0 %v1526
      %v2453 = vpop.f32.mrf.mxu0
      %v2454 = vadd.f32 %v2365, %v2453
      %v2455 = vpop.f32.mrf.mxu0
      %v2456 = vadd.f32 %v2367, %v2455
      %2457 = vmatmul.bf16.gmra.mxu0 %v1533
      %v2458 = vpop.f32.mrf.mxu0
      %v2459 = vadd.f32 %v2370, %v2458
      %v2460 = vpop.f32.mrf.mxu0
      %v2461 = vadd.f32 %v2372, %v2460
      %2462 = vmatmul.bf16.gmra.mxu0 %v1540
      %v2463 = vpop.f32.mrf.mxu0
      %v2464 = vadd.f32 %v2375, %v2463
      %v2465 = vpop.f32.mrf.mxu0
      %v2466 = vadd.f32 %v2377, %v2465
      %2467 = vmatmul.bf16.gmra.mxu0 %v1547
      %v2468 = vpop.f32.mrf.mxu0
      %v2469 = vadd.f32 %v2380, %v2468
      %v2470 = vpop.f32.mrf.mxu0
      %v2471 = vadd.f32 %v2382, %v2470
      %2472 = vmatmul.bf16.gmra.mxu0 %v1554
      %v2473 = vpop.f32.mrf.mxu0
      %v2474 = vadd.f32 %v2385, %v2473
      %v2475 = vpop.f32.mrf.mxu0
      %v2476 = vadd.f32 %v2387, %v2475
      %2477 = vmatmul.bf16.gmra.mxu0 %v1561
      %v2478 = vpop.f32.mrf.mxu0
      %v2479 = vadd.f32 %v2390, %v2478
      %v2480 = vpop.f32.mrf.mxu0
      %v2481 = vadd.f32 %v2392, %v2480
      %2482 = vmatmul.bf16.gmra.mxu0 %v1568
      %v2483 = vpop.f32.mrf.mxu0
      %v2484 = vadd.f32 %v2395, %v2483
      %v2485 = vpop.f32.mrf.mxu0
      %v2486 = vadd.f32 %v2397, %v2485
      %2487 = vmatmul.bf16.gmra.mxu0 %v1575
      %v2488 = vpop.f32.mrf.mxu0
      %v2489 = vadd.f32 %v2400, %v2488
      %v2490 = vpop.f32.mrf.mxu0
      %v2491 = vadd.f32 %v2402, %v2490
      %2492 = vmatmul.bf16.gmra.mxu0 %v1582
      %v2493 = vpop.f32.mrf.mxu0
      %v2494 = vadd.f32 %v2405, %v2493
      %v2495 = vpop.f32.mrf.mxu0
      %v2496 = vadd.f32 %v2407, %v2495
      %2497 = vmatmul.bf16.gmra.mxu0 %v1589
      %v2498 = vpop.f32.mrf.mxu0
      %v2499 = vadd.f32 %v2410, %v2498
      %v2500 = vpop.f32.mrf.mxu0
      %v2501 = vadd.f32 %v2412, %v2500
      %2502 = vmatmul.bf16.gmra.mxu0 %v1596
      %v2503 = vpop.f32.mrf.mxu0
      %v2504 = vadd.f32 %v2415, %v2503
      %v2505 = vpop.f32.mrf.mxu0
      %v2506 = vadd.f32 %v2417, %v2505
      %2507 = vmatmul.bf16.gmra.mxu0 %v1603
      %v2508 = vpop.f32.mrf.mxu0
      %v2509 = vadd.f32 %v2420, %v2508
      %v2510 = vpop.f32.mrf.mxu0
      %v2511 = vadd.f32 %v2422, %v2510
      %2512 = vdwg.mxu0
      %2513 = vmatpush.bf16.msra.mxu0 %v2052
      %2514 = vmatpush.bf16.msra.mxu0 %v2051
      %2515 = vmatpush.bf16.msra.mxu0 %v2050
      %2516 = vmatpush.bf16.msra.mxu0 %v2049
      %2517 = vmatpush.bf16.msra.mxu0 %v2048
      %2518 = vmatpush.bf16.msra.mxu0 %v2047
      %2519 = vmatpush.bf16.msra.mxu0 %v2046
      %2520 = vmatpush.bf16.msra.mxu0 %v2045
      %2521 = vmatmul.bf16.gmra.mxu0 %v1497
      %v2522 = vpop.f32.mrf.mxu0
      %v2523 = vadd.f32 %v2434, %v2522
      %v2524 = vpop.f32.mrf.mxu0
      %v2525 = vadd.f32 %v2436, %v2524
      %2526 = vmatmul.bf16.gmra.mxu0 %v1506
      %v2527 = vpop.f32.mrf.mxu0
      %v2528 = vadd.f32 %v2439, %v2527
      %v2529 = vpop.f32.mrf.mxu0
      %v2530 = vadd.f32 %v2441, %v2529
      %2531 = vmatmul.bf16.gmra.mxu0 %v1513
      %v2532 = vpop.f32.mrf.mxu0
      %v2533 = vadd.f32 %v2444, %v2532
      %v2534 = vpop.f32.mrf.mxu0
      %v2535 = vadd.f32 %v2446, %v2534
      %2536 = vmatmul.bf16.gmra.mxu0 %v1520
      %v2537 = vpop.f32.mrf.mxu0
      %v2538 = vadd.f32 %v2449, %v2537
      %v2539 = vpop.f32.mrf.mxu0
      %v2540 = vadd.f32 %v2451, %v2539
      %2541 = vmatmul.bf16.gmra.mxu0 %v1527
      %v2542 = vpop.f32.mrf.mxu0
      %v2543 = vadd.f32 %v2454, %v2542
      %v2544 = vpop.f32.mrf.mxu0
      %v2545 = vadd.f32 %v2456, %v2544
      %2546 = vmatmul.bf16.gmra.mxu0 %v1534
      %v2547 = vpop.f32.mrf.mxu0
      %v2548 = vadd.f32 %v2459, %v2547
      %v2549 = vpop.f32.mrf.mxu0
      %v2550 = vadd.f32 %v2461, %v2549
      %2551 = vmatmul.bf16.gmra.mxu0 %v1541
      %v2552 = vpop.f32.mrf.mxu0
      %v2553 = vadd.f32 %v2464, %v2552
      %v2554 = vpop.f32.mrf.mxu0
      %v2555 = vadd.f32 %v2466, %v2554
      %2556 = vmatmul.bf16.gmra.mxu0 %v1548
      %v2557 = vpop.f32.mrf.mxu0
      %v2558 = vadd.f32 %v2469, %v2557
      %v2559 = vpop.f32.mrf.mxu0
      %v2560 = vadd.f32 %v2471, %v2559
      %2561 = vmatmul.bf16.gmra.mxu0 %v1555
      %v2562 = vpop.f32.mrf.mxu0
      %v2563 = vadd.f32 %v2474, %v2562
      %v2564 = vpop.f32.mrf.mxu0
      %v2565 = vadd.f32 %v2476, %v2564
      %2566 = vmatmul.bf16.gmra.mxu0 %v1562
      %v2567 = vpop.f32.mrf.mxu0
      %v2568 = vadd.f32 %v2479, %v2567
      %v2569 = vpop.f32.mrf.mxu0
      %v2570 = vadd.f32 %v2481, %v2569
      %2571 = vmatmul.bf16.gmra.mxu0 %v1569
      %v2572 = vpop.f32.mrf.mxu0
      %v2573 = vadd.f32 %v2484, %v2572
      %v2574 = vpop.f32.mrf.mxu0
      %v2575 = vadd.f32 %v2486, %v2574
      %2576 = vmatmul.bf16.gmra.mxu0 %v1576
      %v2577 = vpop.f32.mrf.mxu0
      %v2578 = vadd.f32 %v2489, %v2577
      %v2579 = vpop.f32.mrf.mxu0
      %v2580 = vadd.f32 %v2491, %v2579
      %2581 = vmatmul.bf16.gmra.mxu0 %v1583
      %v2582 = vpop.f32.mrf.mxu0
      %v2583 = vadd.f32 %v2494, %v2582
      %v2584 = vpop.f32.mrf.mxu0
      %v2585 = vadd.f32 %v2496, %v2584
      %2586 = vmatmul.bf16.gmra.mxu0 %v1590
      %v2587 = vpop.f32.mrf.mxu0
      %v2588 = vadd.f32 %v2499, %v2587
      %v2589 = vpop.f32.mrf.mxu0
      %v2590 = vadd.f32 %v2501, %v2589
      %2591 = vmatmul.bf16.gmra.mxu0 %v1597
      %v2592 = vpop.f32.mrf.mxu0
      %v2593 = vadd.f32 %v2504, %v2592
      %v2594 = vpop.f32.mrf.mxu0
      %v2595 = vadd.f32 %v2506, %v2594
      %2596 = vmatmul.bf16.gmra.mxu0 %v1604
      %v2597 = vpop.f32.mrf.mxu0
      %v2598 = vadd.f32 %v2509, %v2597
      %v2599 = vpop.f32.mrf.mxu0
      %v2600 = vadd.f32 %v2511, %v2599
      %2601 = vdwg.mxu0
      %2602 = vmatpush.bf16.msra.mxu0 %v2060
      %2603 = vmatpush.bf16.msra.mxu0 %v2059
      %2604 = vmatpush.bf16.msra.mxu0 %v2058
      %2605 = vmatpush.bf16.msra.mxu0 %v2057
      %2606 = vmatpush.bf16.msra.mxu0 %v2056
      %2607 = vmatpush.bf16.msra.mxu0 %v2055
      %2608 = vmatpush.bf16.msra.mxu0 %v2054
      %2609 = vmatpush.bf16.msra.mxu0 %v2053
      %2610 = vmatmul.bf16.gmra.mxu0 %v1498
      %v2611 = vpop.f32.mrf.mxu0
      %v2612 = vadd.f32 %v2523, %v2611
      %v2613 = vpop.f32.mrf.mxu0
      %v2614 = vadd.f32 %v2525, %v2613
      %2615 = vmatmul.bf16.gmra.mxu0 %v1507
      %v2616 = vpop.f32.mrf.mxu0
      %v2617 = vadd.f32 %v2528, %v2616
      %v2618 = vpop.f32.mrf.mxu0
      %v2619 = vadd.f32 %v2530, %v2618
      %2620 = vmatmul.bf16.gmra.mxu0 %v1514
      %v2621 = vpop.f32.mrf.mxu0
      %v2622 = vadd.f32 %v2533, %v2621
      %v2623 = vpop.f32.mrf.mxu0
      %v2624 = vadd.f32 %v2535, %v2623
      %2625 = vmatmul.bf16.gmra.mxu0 %v1521
      %v2626 = vpop.f32.mrf.mxu0
      %v2627 = vadd.f32 %v2538, %v2626
      %v2628 = vpop.f32.mrf.mxu0
      %v2629 = vadd.f32 %v2540, %v2628
      %2630 = vmatmul.bf16.gmra.mxu0 %v1528
      %v2631 = vpop.f32.mrf.mxu0
      %v2632 = vadd.f32 %v2543, %v2631
      %v2633 = vpop.f32.mrf.mxu0
      %v2634 = vadd.f32 %v2545, %v2633
      %2635 = vmatmul.bf16.gmra.mxu0 %v1535
      %v2636 = vpop.f32.mrf.mxu0
      %v2637 = vadd.f32 %v2548, %v2636
      %v2638 = vpop.f32.mrf.mxu0
      %v2639 = vadd.f32 %v2550, %v2638
      %2640 = vmatmul.bf16.gmra.mxu0 %v1542
      %v2641 = vpop.f32.mrf.mxu0
      %v2642 = vadd.f32 %v2553, %v2641
      %v2643 = vpop.f32.mrf.mxu0
      %v2644 = vadd.f32 %v2555, %v2643
      %2645 = vmatmul.bf16.gmra.mxu0 %v1549
      %v2646 = vpop.f32.mrf.mxu0
      %v2647 = vadd.f32 %v2558, %v2646
      %v2648 = vpop.f32.mrf.mxu0
      %v2649 = vadd.f32 %v2560, %v2648
      %2650 = vmatmul.bf16.gmra.mxu0 %v1556
      %v2651 = vpop.f32.mrf.mxu0
      %v2652 = vadd.f32 %v2563, %v2651
      %v2653 = vpop.f32.mrf.mxu0
      %v2654 = vadd.f32 %v2565, %v2653
      %2655 = vmatmul.bf16.gmra.mxu0 %v1563
      %v2656 = vpop.f32.mrf.mxu0
      %v2657 = vadd.f32 %v2568, %v2656
      %v2658 = vpop.f32.mrf.mxu0
      %v2659 = vadd.f32 %v2570, %v2658
      %2660 = vmatmul.bf16.gmra.mxu0 %v1570
      %v2661 = vpop.f32.mrf.mxu0
      %v2662 = vadd.f32 %v2573, %v2661
      %v2663 = vpop.f32.mrf.mxu0
      %v2664 = vadd.f32 %v2575, %v2663
      %2665 = vmatmul.bf16.gmra.mxu0 %v1577
      %v2666 = vpop.f32.mrf.mxu0
      %v2667 = vadd.f32 %v2578, %v2666
      %v2668 = vpop.f32.mrf.mxu0
      %v2669 = vadd.f32 %v2580, %v2668
      %2670 = vmatmul.bf16.gmra.mxu0 %v1584
      %v2671 = vpop.f32.mrf.mxu0
      %v2672 = vadd.f32 %v2583, %v2671
      %v2673 = vpop.f32.mrf.mxu0
      %v2674 = vadd.f32 %v2585, %v2673
      %2675 = vmatmul.bf16.gmra.mxu0 %v1591
      %v2676 = vpop.f32.mrf.mxu0
      %v2677 = vadd.f32 %v2588, %v2676
      %v2678 = vpop.f32.mrf.mxu0
      %v2679 = vadd.f32 %v2590, %v2678
      %2680 = vmatmul.bf16.gmra.mxu0 %v1598
      %v2681 = vpop.f32.mrf.mxu0
      %v2682 = vadd.f32 %v2593, %v2681
      %v2683 = vpop.f32.mrf.mxu0
      %v2684 = vadd.f32 %v2595, %v2683
      %2685 = vmatmul.bf16.gmra.mxu0 %v1605
      %v2686 = vpop.f32.mrf.mxu0
      %v2687 = vadd.f32 %v2598, %v2686
      %v2688 = vpop.f32.mrf.mxu0
      %v2689 = vadd.f32 %v2600, %v2688
      %2690 = vdwg.mxu0
      %2691 = vmatpush.bf16.msra.mxu0 %v2068
      %2692 = vmatpush.bf16.msra.mxu0 %v2067
      %2693 = vmatpush.bf16.msra.mxu0 %v2066
      %2694 = vmatpush.bf16.msra.mxu0 %v2065
      %2695 = vmatpush.bf16.msra.mxu0 %v2064
      %2696 = vmatpush.bf16.msra.mxu0 %v2063
      %2697 = vmatpush.bf16.msra.mxu0 %v2062
      %2698 = vmatpush.bf16.msra.mxu0 %v2061
      %2699 = vmatmul.bf16.gmra.mxu0 %v1499
      %v2700 = vpop.f32.mrf.mxu0
      %v2701 = vadd.f32 %v2612, %v2700
      %v2702 = vpop.f32.mrf.mxu0
      %v2703 = vadd.f32 %v2614, %v2702
      %2704 = vmatmul.bf16.gmra.mxu0 %v1508
      %v2705 = vpop.f32.mrf.mxu0
      %v2706 = vadd.f32 %v2617, %v2705
      %v2707 = vpop.f32.mrf.mxu0
      %v2708 = vadd.f32 %v2619, %v2707
      %2709 = vmatmul.bf16.gmra.mxu0 %v1515
      %v2710 = vpop.f32.mrf.mxu0
      %v2711 = vadd.f32 %v2622, %v2710
      %v2712 = vpop.f32.mrf.mxu0
      %v2713 = vadd.f32 %v2624, %v2712
      %2714 = vmatmul.bf16.gmra.mxu0 %v1522
      %v2715 = vpop.f32.mrf.mxu0
      %v2716 = vadd.f32 %v2627, %v2715
      %v2717 = vpop.f32.mrf.mxu0
      %v2718 = vadd.f32 %v2629, %v2717
      %2719 = vmatmul.bf16.gmra.mxu0 %v1529
      %v2720 = vpop.f32.mrf.mxu0
      %v2721 = vadd.f32 %v2632, %v2720
      %v2722 = vpop.f32.mrf.mxu0
      %v2723 = vadd.f32 %v2634, %v2722
      %2724 = vmatmul.bf16.gmra.mxu0 %v1536
      %v2725 = vpop.f32.mrf.mxu0
      %v2726 = vadd.f32 %v2637, %v2725
      %v2727 = vpop.f32.mrf.mxu0
      %v2728 = vadd.f32 %v2639, %v2727
      %2729 = vmatmul.bf16.gmra.mxu0 %v1543
      %v2730 = vpop.f32.mrf.mxu0
      %v2731 = vadd.f32 %v2642, %v2730
      %v2732 = vpop.f32.mrf.mxu0
      %v2733 = vadd.f32 %v2644, %v2732
      %2734 = vmatmul.bf16.gmra.mxu0 %v1550
      %v2735 = vpop.f32.mrf.mxu0
      %v2736 = vadd.f32 %v2647, %v2735
      %v2737 = vpop.f32.mrf.mxu0
      %v2738 = vadd.f32 %v2649, %v2737
      %2739 = vmatmul.bf16.gmra.mxu0 %v1557
      %v2740 = vpop.f32.mrf.mxu0
      %v2741 = vadd.f32 %v2652, %v2740
      %v2742 = vpop.f32.mrf.mxu0
      %v2743 = vadd.f32 %v2654, %v2742
      %2744 = vmatmul.bf16.gmra.mxu0 %v1564
      %v2745 = vpop.f32.mrf.mxu0
      %v2746 = vadd.f32 %v2657, %v2745
      %v2747 = vpop.f32.mrf.mxu0
      %v2748 = vadd.f32 %v2659, %v2747
      %2749 = vmatmul.bf16.gmra.mxu0 %v1571
      %v2750 = vpop.f32.mrf.mxu0
      %v2751 = vadd.f32 %v2662, %v2750
      %v2752 = vpop.f32.mrf.mxu0
      %v2753 = vadd.f32 %v2664, %v2752
      %2754 = vmatmul.bf16.gmra.mxu0 %v1578
      %v2755 = vpop.f32.mrf.mxu0
      %v2756 = vadd.f32 %v2667, %v2755
      %v2757 = vpop.f32.mrf.mxu0
      %v2758 = vadd.f32 %v2669, %v2757
      %2759 = vmatmul.bf16.gmra.mxu0 %v1585
      %v2760 = vpop.f32.mrf.mxu0
      %v2761 = vadd.f32 %v2672, %v2760
      %v2762 = vpop.f32.mrf.mxu0
      %v2763 = vadd.f32 %v2674, %v2762
      %2764 = vmatmul.bf16.gmra.mxu0 %v1592
      %v2765 = vpop.f32.mrf.mxu0
      %v2766 = vadd.f32 %v2677, %v2765
      %v2767 = vpop.f32.mrf.mxu0
      %v2768 = vadd.f32 %v2679, %v2767
      %2769 = vmatmul.bf16.gmra.mxu0 %v1599
      %v2770 = vpop.f32.mrf.mxu0
      %v2771 = vadd.f32 %v2682, %v2770
      %v2772 = vpop.f32.mrf.mxu0
      %v2773 = vadd.f32 %v2684, %v2772
      %2774 = vmatmul.bf16.gmra.mxu0 %v1606
      %v2775 = vpop.f32.mrf.mxu0
      %v2776 = vadd.f32 %v2687, %v2775
      %v2777 = vpop.f32.mrf.mxu0
      %v2778 = vadd.f32 %v2689, %v2777
      %2779 = vdwg.mxu0
      %2780 = vmatpush.bf16.msra.mxu0 %v2076
      %2781 = vmatpush.bf16.msra.mxu0 %v2075
      %2782 = vmatpush.bf16.msra.mxu0 %v2074
      %2783 = vmatpush.bf16.msra.mxu0 %v2073
      %2784 = vmatpush.bf16.msra.mxu0 %v2072
      %2785 = vmatpush.bf16.msra.mxu0 %v2071
      %2786 = vmatpush.bf16.msra.mxu0 %v2070
      %2787 = vmatpush.bf16.msra.mxu0 %v2069
      %2788 = vmatmul.bf16.gmra.mxu0 %v1500
      %v2789 = vpop.f32.mrf.mxu0
      %v2790 = vadd.f32 %v2701, %v2789
      %v2791 = vpop.f32.mrf.mxu0
      %v2792 = vadd.f32 %v2703, %v2791
      %2793 = vmatmul.bf16.gmra.mxu0 %v1509
      %v2794 = vpop.f32.mrf.mxu0
      %v2795 = vadd.f32 %v2706, %v2794
      %v2796 = vpop.f32.mrf.mxu0
      %v2797 = vadd.f32 %v2708, %v2796
      %2798 = vmatmul.bf16.gmra.mxu0 %v1516
      %v2799 = vpop.f32.mrf.mxu0
      %v2800 = vadd.f32 %v2711, %v2799
      %v2801 = vpop.f32.mrf.mxu0
      %v2802 = vadd.f32 %v2713, %v2801
      %2803 = vmatmul.bf16.gmra.mxu0 %v1523
      %v2804 = vpop.f32.mrf.mxu0
      %v2805 = vadd.f32 %v2716, %v2804
      %v2806 = vpop.f32.mrf.mxu0
      %v2807 = vadd.f32 %v2718, %v2806
      %2808 = vmatmul.bf16.gmra.mxu0 %v1530
      %v2809 = vpop.f32.mrf.mxu0
      %v2810 = vadd.f32 %v2721, %v2809
      %v2811 = vpop.f32.mrf.mxu0
      %v2812 = vadd.f32 %v2723, %v2811
      %2813 = vmatmul.bf16.gmra.mxu0 %v1537
      %v2814 = vpop.f32.mrf.mxu0
      %v2815 = vadd.f32 %v2726, %v2814
      %v2816 = vpop.f32.mrf.mxu0
      %v2817 = vadd.f32 %v2728, %v2816
      %2818 = vmatmul.bf16.gmra.mxu0 %v1544
      %v2819 = vpop.f32.mrf.mxu0
      %v2820 = vadd.f32 %v2731, %v2819
      %v2821 = vpop.f32.mrf.mxu0
      %v2822 = vadd.f32 %v2733, %v2821
      %2823 = vmatmul.bf16.gmra.mxu0 %v1551
      %v2824 = vpop.f32.mrf.mxu0
      %v2825 = vadd.f32 %v2736, %v2824
      %v2826 = vpop.f32.mrf.mxu0
      %v2827 = vadd.f32 %v2738, %v2826
      %2828 = vmatmul.bf16.gmra.mxu0 %v1558
      %v2829 = vpop.f32.mrf.mxu0
      %v2830 = vadd.f32 %v2741, %v2829
      %v2831 = vpop.f32.mrf.mxu0
      %v2832 = vadd.f32 %v2743, %v2831
      %2833 = vmatmul.bf16.gmra.mxu0 %v1565
      %v2834 = vpop.f32.mrf.mxu0
      %v2835 = vadd.f32 %v2746, %v2834
      %v2836 = vpop.f32.mrf.mxu0
      %v2837 = vadd.f32 %v2748, %v2836
      %2838 = vmatmul.bf16.gmra.mxu0 %v1572
      %v2839 = vpop.f32.mrf.mxu0
      %v2840 = vadd.f32 %v2751, %v2839
      %v2841 = vpop.f32.mrf.mxu0
      %v2842 = vadd.f32 %v2753, %v2841
      %2843 = vmatmul.bf16.gmra.mxu0 %v1579
      %v2844 = vpop.f32.mrf.mxu0
      %v2845 = vadd.f32 %v2756, %v2844
      %v2846 = vpop.f32.mrf.mxu0
      %v2847 = vadd.f32 %v2758, %v2846
      %2848 = vmatmul.bf16.gmra.mxu0 %v1586
      %v2849 = vpop.f32.mrf.mxu0
      %v2850 = vadd.f32 %v2761, %v2849
      %v2851 = vpop.f32.mrf.mxu0
      %v2852 = vadd.f32 %v2763, %v2851
      %2853 = vmatmul.bf16.gmra.mxu0 %v1593
      %v2854 = vpop.f32.mrf.mxu0
      %v2855 = vadd.f32 %v2766, %v2854
      %v2856 = vpop.f32.mrf.mxu0
      %v2857 = vadd.f32 %v2768, %v2856
      %2858 = vmatmul.bf16.gmra.mxu0 %v1600
      %v2859 = vpop.f32.mrf.mxu0
      %v2860 = vadd.f32 %v2771, %v2859
      %v2861 = vpop.f32.mrf.mxu0
      %v2862 = vadd.f32 %v2773, %v2861
      %2863 = vmatmul.bf16.gmra.mxu0 %v1607
      %v2864 = vpop.f32.mrf.mxu0
      %v2865 = vadd.f32 %v2776, %v2864
      %v2866 = vpop.f32.mrf.mxu0
      %v2867 = vadd.f32 %v2778, %v2866
      %2868 = vdwg.mxu0
      %2869 = vmatpush.bf16.msra.mxu0 %v2084
      %2870 = vmatpush.bf16.msra.mxu0 %v2083
      %2871 = vmatpush.bf16.msra.mxu0 %v2082
      %2872 = vmatpush.bf16.msra.mxu0 %v2081
      %2873 = vmatpush.bf16.msra.mxu0 %v2080
      %2874 = vmatpush.bf16.msra.mxu0 %v2079
      %2875 = vmatpush.bf16.msra.mxu0 %v2078
      %2876 = vmatpush.bf16.msra.mxu0 %v2077
      %2877 = vmatmul.bf16.gmra.mxu0 %v1501
      %v2878 = vpop.f32.mrf.mxu0
      %v2879 = vadd.f32 %v2790, %v2878
      %v2880 = vpop.f32.mrf.mxu0
      %v2881 = vadd.f32 %v2792, %v2880
      %2882 = vmatmul.bf16.gmra.mxu0 %v1510
      %v2883 = vpop.f32.mrf.mxu0
      %v2884 = vadd.f32 %v2795, %v2883
      %v2885 = vpop.f32.mrf.mxu0
      %v2886 = vadd.f32 %v2797, %v2885
      %2887 = vmatmul.bf16.gmra.mxu0 %v1517
      %v2888 = vpop.f32.mrf.mxu0
      %v2889 = vadd.f32 %v2800, %v2888
      %v2890 = vpop.f32.mrf.mxu0
      %v2891 = vadd.f32 %v2802, %v2890
      %2892 = vmatmul.bf16.gmra.mxu0 %v1524
      %v2893 = vpop.f32.mrf.mxu0
      %v2894 = vadd.f32 %v2805, %v2893
      %v2895 = vpop.f32.mrf.mxu0
      %v2896 = vadd.f32 %v2807, %v2895
      %2897 = vmatmul.bf16.gmra.mxu0 %v1531
      %v2898 = vpop.f32.mrf.mxu0
      %v2899 = vadd.f32 %v2810, %v2898
      %v2900 = vpop.f32.mrf.mxu0
      %v2901 = vadd.f32 %v2812, %v2900
      %2902 = vmatmul.bf16.gmra.mxu0 %v1538
      %v2903 = vpop.f32.mrf.mxu0
      %v2904 = vadd.f32 %v2815, %v2903
      %v2905 = vpop.f32.mrf.mxu0
      %v2906 = vadd.f32 %v2817, %v2905
      %2907 = vmatmul.bf16.gmra.mxu0 %v1545
      %v2908 = vpop.f32.mrf.mxu0
      %v2909 = vadd.f32 %v2820, %v2908
      %v2910 = vpop.f32.mrf.mxu0
      %v2911 = vadd.f32 %v2822, %v2910
      %2912 = vmatmul.bf16.gmra.mxu0 %v1552
      %v2913 = vpop.f32.mrf.mxu0
      %v2914 = vadd.f32 %v2825, %v2913
      %v2915 = vpop.f32.mrf.mxu0
      %v2916 = vadd.f32 %v2827, %v2915
      %2917 = vmatmul.bf16.gmra.mxu0 %v1559
      %v2918 = vpop.f32.mrf.mxu0
      %v2919 = vadd.f32 %v2830, %v2918
      %v2920 = vpop.f32.mrf.mxu0
      %v2921 = vadd.f32 %v2832, %v2920
      %2922 = vmatmul.bf16.gmra.mxu0 %v1566
      %v2923 = vpop.f32.mrf.mxu0
      %v2924 = vadd.f32 %v2835, %v2923
      %v2925 = vpop.f32.mrf.mxu0
      %v2926 = vadd.f32 %v2837, %v2925
      %2927 = vmatmul.bf16.gmra.mxu0 %v1573
      %v2928 = vpop.f32.mrf.mxu0
      %v2929 = vadd.f32 %v2840, %v2928
      %v2930 = vpop.f32.mrf.mxu0
      %v2931 = vadd.f32 %v2842, %v2930
      %2932 = vmatmul.bf16.gmra.mxu0 %v1580
      %v2933 = vpop.f32.mrf.mxu0
      %v2934 = vadd.f32 %v2845, %v2933
      %v2935 = vpop.f32.mrf.mxu0
      %v2936 = vadd.f32 %v2847, %v2935
      %2937 = vmatmul.bf16.gmra.mxu0 %v1587
      %v2938 = vpop.f32.mrf.mxu0
      %v2939 = vadd.f32 %v2850, %v2938
      %v2940 = vpop.f32.mrf.mxu0
      %v2941 = vadd.f32 %v2852, %v2940
      %2942 = vmatmul.bf16.gmra.mxu0 %v1594
      %v2943 = vpop.f32.mrf.mxu0
      %v2944 = vadd.f32 %v2855, %v2943
      %v2945 = vpop.f32.mrf.mxu0
      %v2946 = vadd.f32 %v2857, %v2945
      %2947 = vmatmul.bf16.gmra.mxu0 %v1601
      %v2948 = vpop.f32.mrf.mxu0
      %v2949 = vadd.f32 %v2860, %v2948
      %v2950 = vpop.f32.mrf.mxu0
      %v2951 = vadd.f32 %v2862, %v2950
      %2952 = vmatmul.bf16.gmra.mxu0 %v1608
      %v2953 = vpop.f32.mrf.mxu0
      %v2954 = vadd.f32 %v2865, %v2953
      %v2955 = vpop.f32.mrf.mxu0
      %v2956 = vadd.f32 %v2867, %v2955
      %2957 = vdwg.mxu0
      %v2958 = vld [vmem:[%s239] sm:$0xff]
      %v2959 = vld [vmem:[%s239 + $0x8] sm:$0xff]
      %v2960 = vld [vmem:[%s239 + $0x10] sm:$0xff]
      %v2961 = vld [vmem:[%s239 + $0x18] sm:$0xff]
      %v2962 = vld [vmem:[%s239 + $0x20] sm:$0xff]
      %v2963 = vld [vmem:[%s239 + $0x28] sm:$0xff]
      %v2964 = vld [vmem:[%s239 + $0x30] sm:$0xff]
      %v2965 = vld [vmem:[%s239 + $0x38] sm:$0xff]
      %v2966 = vld [vmem:[%s239 + $0x40] sm:$0xff]
      %v2967 = vld [vmem:[%s239 + $0x48] sm:$0xff]
      %v2968 = vld [vmem:[%s239 + $0x50] sm:$0xff]
      %v2969 = vld [vmem:[%s239 + $0x58] sm:$0xff]
      %v2970 = vld [vmem:[%s239 + $0x60] sm:$0xff]
      %v2971 = vld [vmem:[%s239 + $0x68] sm:$0xff]
      %v2972 = vld [vmem:[%s239 + $0x70] sm:$0xff]
      %v2973 = vld [vmem:[%s239 + $0x78] sm:$0xff]
      %v2974 = vld [vmem:[%s239 + $0x80] sm:$0xff]
      %v2975 = vld [vmem:[%s239 + $0x88] sm:$0xff]
      %v2976 = vld [vmem:[%s239 + $0x90] sm:$0xff]
      %v2977 = vld [vmem:[%s239 + $0x98] sm:$0xff]
      %v2978 = vld [vmem:[%s239 + $0xa0] sm:$0xff]
      %v2979 = vld [vmem:[%s239 + $0xa8] sm:$0xff]
      %v2980 = vld [vmem:[%s239 + $0xb0] sm:$0xff]
      %v2981 = vld [vmem:[%s239 + $0xb8] sm:$0xff]
      %v2982 = vld [vmem:[%s239 + $0xc0] sm:$0xff]
      %v2983 = vld [vmem:[%s239 + $0xc8] sm:$0xff]
      %v2984 = vld [vmem:[%s239 + $0xd0] sm:$0xff]
      %v2985 = vld [vmem:[%s239 + $0xd8] sm:$0xff]
      %v2986 = vld [vmem:[%s239 + $0xe0] sm:$0xff]
      %v2987 = vld [vmem:[%s239 + $0xe8] sm:$0xff]
      %v2988 = vld [vmem:[%s239 + $0xf0] sm:$0xff]
      %v2989 = vld [vmem:[%s239 + $0xf8] sm:$0xff]
      %v2990 = vadd.f32 %v2879, %v2958
      %v2991 = vadd.f32 %v2881, %v2959
      %v2992 = vadd.f32 %v2884, %v2960
      %v2993 = vadd.f32 %v2886, %v2961
      %v2994 = vadd.f32 %v2889, %v2962
      %v2995 = vadd.f32 %v2891, %v2963
      %v2996 = vadd.f32 %v2894, %v2964
      %v2997 = vadd.f32 %v2896, %v2965
      %v2998 = vadd.f32 %v2899, %v2966
      %v2999 = vadd.f32 %v2901, %v2967
      %v3000 = vadd.f32 %v2904, %v2968
      %v3001 = vadd.f32 %v2906, %v2969
      %v3002 = vadd.f32 %v2909, %v2970
      %v3003 = vadd.f32 %v2911, %v2971
      %v3004 = vadd.f32 %v2914, %v2972
      %v3005 = vadd.f32 %v2916, %v2973
      %v3006 = vadd.f32 %v2919, %v2974
      %v3007 = vadd.f32 %v2921, %v2975
      %v3008 = vadd.f32 %v2924, %v2976
      %v3009 = vadd.f32 %v2926, %v2977
      %v3010 = vadd.f32 %v2929, %v2978
      %v3011 = vadd.f32 %v2931, %v2979
      %v3012 = vadd.f32 %v2934, %v2980
      %v3013 = vadd.f32 %v2936, %v2981
      %v3014 = vadd.f32 %v2939, %v2982
      %v3015 = vadd.f32 %v2941, %v2983
      %v3016 = vadd.f32 %v2944, %v2984
      %v3017 = vadd.f32 %v2946, %v2985
      %v3018 = vadd.f32 %v2949, %v2986
      %v3019 = vadd.f32 %v2951, %v2987
      %v3020 = vadd.f32 %v2954, %v2988
      %v3021 = vadd.f32 %v2956, %v2989
      %3022 = vst [vmem:[%s244] sm:$0xff] %v2990
      %3023 = vst [vmem:[%s244 + $0x8] sm:$0xff] %v2991
      %3024 = vst [vmem:[%s244 + $0x10] sm:$0xff] %v2992
      %3025 = vst [vmem:[%s244 + $0x18] sm:$0xff] %v2993
      %3026 = vst [vmem:[%s244 + $0x20] sm:$0xff] %v2994
      %3027 = vst [vmem:[%s244 + $0x28] sm:$0xff] %v2995
      %3028 = vst [vmem:[%s244 + $0x30] sm:$0xff] %v2996
      %3029 = vst [vmem:[%s244 + $0x38] sm:$0xff] %v2997
      %3030 = vst [vmem:[%s244 + $0x40] sm:$0xff] %v2998
      %3031 = vst [vmem:[%s244 + $0x48] sm:$0xff] %v2999
      %3032 = vst [vmem:[%s244 + $0x50] sm:$0xff] %v3000
      %3033 = vst [vmem:[%s244 + $0x58] sm:$0xff] %v3001
      %3034 = vst [vmem:[%s244 + $0x60] sm:$0xff] %v3002
      %3035 = vst [vmem:[%s244 + $0x68] sm:$0xff] %v3003
      %3036 = vst [vmem:[%s244 + $0x70] sm:$0xff] %v3004
      %3037 = vst [vmem:[%s244 + $0x78] sm:$0xff] %v3005
      %3038 = vst [vmem:[%s244 + $0x80] sm:$0xff] %v3006
      %3039 = vst [vmem:[%s244 + $0x88] sm:$0xff] %v3007
      %3040 = vst [vmem:[%s244 + $0x90] sm:$0xff] %v3008
      %3041 = vst [vmem:[%s244 + $0x98] sm:$0xff] %v3009
      %3042 = vst [vmem:[%s244 + $0xa0] sm:$0xff] %v3010
      %3043 = vst [vmem:[%s244 + $0xa8] sm:$0xff] %v3011
      %3044 = vst [vmem:[%s244 + $0xb0] sm:$0xff] %v3012
      %3045 = vst [vmem:[%s244 + $0xb8] sm:$0xff] %v3013
      %3046 = vst [vmem:[%s244 + $0xc0] sm:$0xff] %v3014
      %3047 = vst [vmem:[%s244 + $0xc8] sm:$0xff] %v3015
      %3048 = vst [vmem:[%s244 + $0xd0] sm:$0xff] %v3016
      %3049 = vst [vmem:[%s244 + $0xd8] sm:$0xff] %v3017
      %3050 = vst [vmem:[%s244 + $0xe0] sm:$0xff] %v3018
      %3051 = vst [vmem:[%s244 + $0xe8] sm:$0xff] %v3019
      %3052 = vst [vmem:[%s244 + $0xf0] sm:$0xff] %v3020
      %3053 = vst [vmem:[%s244 + $0xf8] sm:$0xff] %v3021
      %p3054 = scmp.lt.s32.totalorder %s16, 1
      %s3055 = scalar_select %p3054, %s16, 1
      %s3056 = smul.addr %s3055, 32
      %s3057 = smul.addr %s3056, 8
      %s3058 = scalar_lea.vmem %s5, %s3057
      // Predicated region
      $region41: #{preact_block.7} parent=39 // pred_check
        %p3059 = pneg %p149
      $region42: #{preact_block.7} parent=39 // pred_check_branch
        %3061 = sbr.rel (%p3059) target = $region44
      $region43: #{preact_block.7} parent=39 // pred_region
        _
      $region44: #{preact_block.7} parent=39 // pred_fallthru
        _
    $region40: #{preact_block.7} parent=5 // pred_fallthru
      _
    %p3062 = scmp.le.s32.totalorder 2, %s11
    // Predicated region
    $region45: #{preact_block.7} parent=5 // pred_check
      %p3063 = pneg %p3062
    $region46: #{preact_block.7} parent=5 // pred_check_branch
      %3065 = sbr.rel (%p3063) target = $region48
    $region47: #{preact_block.7} parent=5 // pred_region
      %s3066 = ssub.s32 %s11, 2
      // Predicated region
      $region49: #{preact_block.7} parent=47 // pred_check
        %p3067 = pneg %p155
      $region50: #{preact_block.7} parent=47 // pred_check_branch
        %3069 = sbr.rel (%p3067) target = $region52
      $region51: #{preact_block.7} parent=47 // pred_region
        %p3070 = scmp.lt.s32.totalorder %s17, 1
        %s3071 = scalar_select %p3070, %s17, 1
        %s3072 = smul.addr %s3071, 32
        %s3073 = smul.addr %s3072, 8
        %s3074 = scalar_lea.vmem %s5, %s3073
      $region52: #{preact_block.7} parent=47 // pred_fallthru
        _
    $region48: #{preact_block.7} parent=5 // pred_fallthru
      _
  $region6: #{preact_block.7} parent=0 // loop_footer
    %s15 = sadd.s32 1, %s11
  $region7: #{preact_block.7} parent=0 // loop_footer_branch
    %10 = sbr.rel target = $region3
  $region8: #{preact_block.7} parent=0 // loop_exit
    _

</llo_original>
